<compile_context>
chip_gen: v7x
topology: tpu7x:2x2x1
jax: 0.10.0
libtpu: 0.0.40
codegen_flags: <defaults>
</compile_context>

<pallas_src>
import math

import jax
import jax.numpy as jnp
from jax.experimental import pallas as pl
from jax.experimental.pallas import tpu as pltpu


def brits_kernel(values_ref, masks_ref, deltas_ref,
                 WhT_ref, bh_ref,            # temp_decay_h   (pre-transposed)
                 WxdT_ref, bx_ref,           # temp_decay_x   (diag-masked, pre-T)
                 WhistT_ref, bhist_ref,      # hist_reg       (pre-transposed)
                 WfeatT_ref, bfeat_ref,      # feat_reg       ((1-eye)-masked, pre-T)
                 WcgxT_ref, WcmT_ref, bcomb_ref,      # weight_combine split halves
                 WihCc4_ref, WihM4_ref, Whh4_ref, bgate4_ref,   # fused 4H LSTM weights
                 imput_ref, loss_ref,
                 h_sc, c_sc, loss_sc,
                 gh_sc, alpha_sc, gm_sc, mw_sc):
    f32 = jnp.float32
    Bp, H = h_sc.shape
    NB, D = values_ref.shape           # NB = Tt * Bp
    Tt = NB // Bp
    chunk = pl.program_id(0)

    @pl.when(chunk == 0)
    def _():
        h_sc[...] = jnp.zeros_like(h_sc)
        c_sc[...] = jnp.zeros_like(c_sc)
        loss_sc[...] = jnp.zeros_like(loss_sc)

    # ---------- Phase 1: chunk-batched precompute (off the recurrent chain) ----------
    d_all = deltas_ref[...]            # (Tt*Bp, D)
    m_all = masks_ref[...]             # (Tt*Bp, D)

    # TemporalDecay (hidden + diagonal-x variants): gamma = exp(-relu(d W^T + b))
    gh_sc[...] = jnp.exp(-jax.nn.relu(
        jnp.dot(d_all, WhT_ref[...], preferred_element_type=f32) + bh_ref[...]))
    gamma_x = jnp.exp(-jax.nn.relu(
        jnp.dot(d_all, WxdT_ref[...], preferred_element_type=f32) + bx_ref[...]))

    # alpha = [gamma_x, m] @ Wcomb^T + bcomb   (concat-free, fully d/m dependent)
    alpha_sc[...] = (jnp.dot(gamma_x, WcgxT_ref[...], preferred_element_type=f32)
                     + jnp.dot(m_all, WcmT_ref[...], preferred_element_type=f32)
                     + bcomb_ref[...])

    # m-half of the fused LSTM gate pre-activation (+ both gate biases folded in)
    gm_sc[...] = (jnp.dot(m_all, WihM4_ref[...], preferred_element_type=f32)
                  + bgate4_ref[...])

    # mask scaled by the per-timestep 1/denominator -> no per-step reduction/divide
    m3 = m_all.reshape(Tt, Bp, D)
    den = jnp.sum(jnp.sum(m3, axis=2, keepdims=True), axis=1, keepdims=True) + 1e-5
    mw_sc[...] = (m3 * (1.0 / den)).reshape(NB, D)

    # ---------- Phase 2: recurrent loop (4 MXU pushes / step) ----------
    WhistT = WhistT_ref[...]                                   # (H, D)
    WfeatT = WfeatT_ref[...]                                   # (D, D)
    WihCc4 = WihCc4_ref[...]                                   # (D, 4H)
    Whh4 = Whh4_ref[...]                                       # (H, 4H)
    bhist = jnp.broadcast_to(bhist_ref[...], (Bp, D))          # broadcast once
    bfeat = jnp.broadcast_to(bfeat_ref[...], (Bp, D))

    h = h_sc[...]
    c = c_sc[...]
    loss_acc = jnp.zeros((Bp, D), f32)

    # Full unroll with Python ints -> all slices static (values, scratch slabs,
    # and the lane-offset imputation stores).  For much larger Tt/H/D this
    # should become a lax.fori_loop with partial unroll.
    for i in range(Tt):
        r0 = i * Bp
        x = values_ref[r0:r0 + Bp, :]          # (Bp, D)
        m = masks_ref[r0:r0 + Bp, :]
        mw = mw_sc[r0:r0 + Bp, :]

        h = h * gh_sc[r0:r0 + Bp, :]           # temporal decay of hidden state

        # History regression
        x_h = jnp.dot(h, WhistT, preferred_element_type=f32) + bhist
        x_c = m * x + (1.0 - m) * x_h

        # Feature regression (off-diagonal weights masked in wrapper)
        z_h = jnp.dot(x_c, WfeatT, preferred_element_type=f32) + bfeat

        alpha = alpha_sc[r0:r0 + Bp, :]
        c_h = alpha * z_h + (1.0 - alpha) * x_h

        # Fused masked-L1 loss; reduction deferred to chunk end
        loss_acc = loss_acc + (jnp.abs(x - x_h) + jnp.abs(x - z_h)
                               + jnp.abs(x - c_h)) * mw

        c_c = m * x + (1.0 - m) * c_h
        imput_ref[:, i * D:(i + 1) * D] = c_c   # static 8-lane write; dense block DMA

        # LSTMCell: one fused (·,4H) dot per operand; m-term + biases precomputed
        gates = (jnp.dot(c_c, WihCc4, preferred_element_type=f32)
                 + jnp.dot(h, Whh4, preferred_element_type=f32)
                 + gm_sc[r0:r0 + Bp, :])
        sg = jax.nn.sigmoid(gates)
        i_g = sg[:, 0:H]
        f_g = sg[:, H:2 * H]
        o_g = sg[:, 3 * H:4 * H]
        g_g = jnp.tanh(gates[:, 2 * H:3 * H])

        c = f_g * c + i_g * g_g
        h = o_g * jnp.tanh(c)

    h_sc[...] = h
    c_sc[...] = c
    total = loss_sc[...] + jnp.sum(loss_acc, keepdims=True)    # (1, 1)
    loss_sc[...] = total
    loss_ref[...] = total            # written every chunk (robust; block idx constant)


def brits_forward(values, masks, deltas, params, *, tt=16):
    """values/masks/deltas: (B, T, D) float32. Returns dict(loss, imputations)."""
    B, T, D = values.shape
    H = params["Wh"].shape[0]
    f32 = jnp.float32

    # --- shape plumbing: time chunking + sublane-padded batch.
    Tt = min(tt, T)
    if (Tt * D) % 128 != 0:
        Tt = T                               # single chunk -> block == full lane extent
    num_chunks = -(-T // Tt)
    T_pad = num_chunks * Tt
    Bp = max(8, ((B + 7) // 8) * 8)

    def prep_seq(a):
        a = jnp.transpose(a.astype(f32), (1, 0, 2))               # (T, B, D)
        a = jnp.pad(a, ((0, T_pad - T), (0, Bp - B), (0, 0)))     # mask-0 padding
        return a.reshape(T_pad * Bp, D)                           # 2D, tile-aligned

    v_t, m_t, d_t = prep_seq(values), prep_seq(masks), prep_seq(deltas)

    # --- weight prep (pure glue): diag / off-diag masking, pre-transpose,
    #     split concat halves, fuse LSTM gate weights along 4H output lanes.
    eye = jnp.eye(D, dtype=f32)
    row = lambda v: v.astype(f32).reshape(1, -1)

    WhT = params["Wh"].astype(f32).T                               # (D, H)
    WxdT = (params["Wx"].astype(f32) * eye).T                      # (D, D)
    WhistT = params["Whist"].astype(f32).T                         # (H, D)
    WfeatT = (params["Wfeat"].astype(f32) * (1.0 - eye)).T         # (D, D)
    Wcomb = params["Wcomb"].astype(f32)                            # (D, 2D)
    WcgxT, WcmT = Wcomb[:, :D].T, Wcomb[:, D:].T                   # (D, D) each
    Wih = params["Wih"].astype(f32)                                # (4H, 2D)
    WihCc4 = Wih[:, :D].T                                          # (D, 4H)
    WihM4 = Wih[:, D:].T                                           # (D, 4H)
    Whh4 = params["Whh"].astype(f32).T                             # (H, 4H)
    bgate4 = (params["bih"].astype(f32)
              + params["bhh"].astype(f32)).reshape(1, 4 * H)       # (1, 4H)

    weights = [
        WhT, row(params["bh"]),
        WxdT, row(params["bx"]),
        WhistT, row(params["bhist"]),
        WfeatT, row(params["bfeat"]),
        WcgxT, WcmT, row(params["bcomb"]),
        WihCc4, WihM4, Whh4, bgate4,
    ]

    seq_spec = pl.BlockSpec((Tt * Bp, D), lambda c: (c, 0))

    def full_spec(arr):
        nd = arr.ndim
        return pl.BlockSpec(arr.shape, lambda c, _nd=nd: (0,) * _nd)

    in_specs = [seq_spec, seq_spec, seq_spec] + [full_spec(w) for w in weights]

    out_shapes = (
        jax.ShapeDtypeStruct((Bp, T_pad * D), f32),   # imputations, lane-dense
        jax.ShapeDtypeStruct((1, 1), f32),            # loss
    )
    out_specs = (
        pl.BlockSpec((Bp, Tt * D), lambda c: (0, c)),
        pl.BlockSpec((1, 1), lambda c: (0, 0)),
    )

    imput_flat, loss = pl.pallas_call(
        brits_kernel,
        out_shape=out_shapes,
        grid_spec=pltpu.PrefetchScalarGridSpec(
            num_scalar_prefetch=0,
            grid=(num_chunks,),
            in_specs=in_specs,
            out_specs=out_specs,
            scratch_shapes=[
                pltpu.VMEM((Bp, H), f32),              # h  (carried across chunks)
                pltpu.VMEM((Bp, H), f32),              # c  (carried across chunks)
                pltpu.VMEM((1, 1), f32),               # running loss
                pltpu.VMEM((Tt * Bp, H), f32),         # gamma_h slab
                pltpu.VMEM((Tt * Bp, D), f32),         # alpha slab
                pltpu.VMEM((Tt * Bp, 4 * H), f32),     # m-gate + bias slab
                pltpu.VMEM((Tt * Bp, D), f32),         # mask * 1/denom slab
            ],
        ),
        compiler_params=pltpu.CompilerParams(
            dimension_semantics=("arbitrary",)),
    )(v_t, m_t, d_t, *weights)

    imput = imput_flat.reshape(Bp, T_pad, D)[:B, :T, :]   # free reshape, no transpose
    return {"loss": loss[0, 0], "imputations": imput}


def init_params(key, seq_dim, rnn_hid_size):
    D, H = seq_dim, rnn_hid_size
    ks = jax.random.split(key, 16)

    def unif(k, shape, stdv):
        return jax.random.uniform(k, shape, jnp.float32, -stdv, stdv)

    p = {}
    s = 1.0 / math.sqrt(H)
    p["Wh"] = unif(ks[0], (H, D), s)          # TemporalDecay (hidden)
    p["bh"] = unif(ks[1], (H,), s)
    s = 1.0 / math.sqrt(D)
    p["Wx"] = unif(ks[2], (D, D), s)          # TemporalDecay (diag)
    p["bx"] = unif(ks[3], (D,), s)
    s = 1.0 / math.sqrt(H)
    p["Whist"] = unif(ks[4], (D, H), s)       # hist_reg: Linear(H, D)
    p["bhist"] = unif(ks[5], (D,), s)
    s = 1.0 / math.sqrt(D)
    p["Wfeat"] = unif(ks[6], (D, D), s)       # feat_reg
    p["bfeat"] = unif(ks[7], (D,), s)
    s = 1.0 / math.sqrt(2 * D)
    p["Wcomb"] = unif(ks[8], (D, 2 * D), s)   # weight_combine: Linear(2D, D)
    p["bcomb"] = unif(ks[9], (D,), s)
    s = 1.0 / math.sqrt(H)
    p["Wih"] = unif(ks[10], (4 * H, 2 * D), s)   # LSTMCell(2D, H)
    p["Whh"] = unif(ks[11], (4 * H, H), s)
    p["bih"] = unif(ks[12], (4 * H,), s)
    p["bhh"] = unif(ks[13], (4 * H,), s)
    return p


def brits_reference(values, masks, deltas, params):
    """Pure-JAX mirror of the PyTorch forward, for correctness checking."""
    B, T, D = values.shape
    H = params["Wh"].shape[0]
    Wxd = params["Wx"] * jnp.eye(D, dtype=jnp.float32)
    Wfeat = params["Wfeat"] * (1.0 - jnp.eye(D, dtype=jnp.float32))

    h = jnp.zeros((B, H), jnp.float32)
    c = jnp.zeros((B, H), jnp.float32)
    loss = 0.0
    imps = []
    for t in range(T):
        x, m, d = values[:, t, :], masks[:, t, :], deltas[:, t, :]
        gamma_h = jnp.exp(-jax.nn.relu(d @ params["Wh"].T + params["bh"]))
        gamma_x = jnp.exp(-jax.nn.relu(d @ Wxd.T + params["bx"]))
        h = h * gamma_h
        x_h = h @ params["Whist"].T + params["bhist"]
        denom = jnp.sum(m) + 1e-5
        loss = loss + jnp.sum(jnp.abs(x - x_h) * m) / denom
        x_c = m * x + (1 - m) * x_h
        z_h = x_c @ Wfeat.T + params["bfeat"]
        loss = loss + jnp.sum(jnp.abs(x - z_h) * m) / denom
        alpha = jnp.concatenate([gamma_x, m], 1) @ params["Wcomb"].T + params["bcomb"]
        c_h = alpha * z_h + (1 - alpha) * x_h
        loss = loss + jnp.sum(jnp.abs(x - c_h) * m) / denom
        c_c = m * x + (1 - m) * c_h
        inp = jnp.concatenate([c_c, m], 1)
        gates = inp @ params["Wih"].T + params["bih"] + h @ params["Whh"].T + params["bhh"]
        i_g = jax.nn.sigmoid(gates[:, :H])
        f_g = jax.nn.sigmoid(gates[:, H:2 * H])
        g_g = jnp.tanh(gates[:, 2 * H:3 * H])
        o_g = jax.nn.sigmoid(gates[:, 3 * H:])
        c = f_g * c + i_g * g_g
        h = o_g * jnp.tanh(c)
        imps.append(c_c[:, None, :])
    return {"loss": loss, "imputations": jnp.concatenate(imps, axis=1)}


if __name__ == "__main__":
    B, T, D, H = 2, 32, 8, 32   # batch, seq_len, seq_dim, rnn_hid_size (4H = 128)

    key = jax.random.PRNGKey(0)
    kp, kv, km, kd = jax.random.split(key, 4)
    params = init_params(kp, D, H)

    values = jax.random.normal(kv, (B, T, D), jnp.float32)
    masks = (jax.random.uniform(km, (B, T, D)) > 0.3).astype(jnp.float32)
    deltas = jax.random.uniform(kd, (B, T, D), jnp.float32)

    out = brits_forward(values, masks, deltas, params)
    jax.block_until_ready(out)

    ref = brits_reference(values, masks, deltas, params)
    assert jnp.allclose(out["imputations"], ref["imputations"], atol=1e-4, rtol=1e-4)
    assert jnp.allclose(out["loss"], ref["loss"], atol=1e-4, rtol=1e-4)

    print("KERNEL_OK")
</pallas_src>

<mosaic_0001>
module attributes {stable_mosaic.version = 11 : i64} {
  func.func @brits_kernel(%arg0: i32, %arg1: memref<128x8xf32, #tpu.memory_space<vmem>>, %arg2: memref<128x8xf32, #tpu.memory_space<vmem>>, %arg3: memref<128x8xf32, #tpu.memory_space<vmem>>, %arg4: memref<8x32xf32, #tpu.memory_space<vmem>>, %arg5: memref<1x32xf32, #tpu.memory_space<vmem>>, %arg6: memref<8x8xf32, #tpu.memory_space<vmem>>, %arg7: memref<1x8xf32, #tpu.memory_space<vmem>>, %arg8: memref<32x8xf32, #tpu.memory_space<vmem>>, %arg9: memref<1x8xf32, #tpu.memory_space<vmem>>, %arg10: memref<8x8xf32, #tpu.memory_space<vmem>>, %arg11: memref<1x8xf32, #tpu.memory_space<vmem>>, %arg12: memref<8x8xf32, #tpu.memory_space<vmem>>, %arg13: memref<8x8xf32, #tpu.memory_space<vmem>>, %arg14: memref<1x8xf32, #tpu.memory_space<vmem>>, %arg15: memref<8x128xf32, #tpu.memory_space<vmem>>, %arg16: memref<8x128xf32, #tpu.memory_space<vmem>>, %arg17: memref<32x128xf32, #tpu.memory_space<vmem>>, %arg18: memref<1x128xf32, #tpu.memory_space<vmem>>, %arg19: memref<8x128xf32, #tpu.memory_space<vmem>>, %arg20: memref<1x1xf32, #tpu.memory_space<vmem>>, %arg21: memref<8x32xf32, #tpu.memory_space<vmem>>, %arg22: memref<8x32xf32, #tpu.memory_space<vmem>>, %arg23: memref<1x1xf32, #tpu.memory_space<vmem>>, %arg24: memref<128x32xf32, #tpu.memory_space<vmem>>, %arg25: memref<128x8xf32, #tpu.memory_space<vmem>>, %arg26: memref<128x128xf32, #tpu.memory_space<vmem>>, %arg27: memref<128x8xf32, #tpu.memory_space<vmem>>) attributes {dimension_semantics = [#tpu.dimension_semantics<arbitrary>], iteration_bounds = array<i64: 2>, scalar_prefetch = 0 : i64, scratch_operands = 7 : i64, tpu.core_type = #tpu.core_type<tc>, window_params = [{transform_indices = @transform_0, window_bounds = array<i64: 128, 8>}, {transform_indices = @transform_1, window_bounds = array<i64: 128, 8>}, {transform_indices = @transform_2, window_bounds = array<i64: 128, 8>}, {pipeline_mode = #tpu.pipeline_mode<synchronous>, transform_indices = @transform_3, window_bounds = array<i64: 8, 32>}, {pipeline_mode = #tpu.pipeline_mode<synchronous>, transform_indices = @transform_4, window_bounds = array<i64: 1, 32>}, {pipeline_mode = #tpu.pipeline_mode<synchronous>, transform_indices = @transform_5, window_bounds = array<i64: 8, 8>}, {pipeline_mode = #tpu.pipeline_mode<synchronous>, transform_indices = @transform_6, window_bounds = array<i64: 1, 8>}, {pipeline_mode = #tpu.pipeline_mode<synchronous>, transform_indices = @transform_7, window_bounds = array<i64: 32, 8>}, {pipeline_mode = #tpu.pipeline_mode<synchronous>, transform_indices = @transform_8, window_bounds = array<i64: 1, 8>}, {pipeline_mode = #tpu.pipeline_mode<synchronous>, transform_indices = @transform_9, window_bounds = array<i64: 8, 8>}, {pipeline_mode = #tpu.pipeline_mode<synchronous>, transform_indices = @transform_10, window_bounds = array<i64: 1, 8>}, {pipeline_mode = #tpu.pipeline_mode<synchronous>, transform_indices = @transform_11, window_bounds = array<i64: 8, 8>}, {pipeline_mode = #tpu.pipeline_mode<synchronous>, transform_indices = @transform_12, window_bounds = array<i64: 8, 8>}, {pipeline_mode = #tpu.pipeline_mode<synchronous>, transform_indices = @transform_13, window_bounds = array<i64: 1, 8>}, {pipeline_mode = #tpu.pipeline_mode<synchronous>, transform_indices = @transform_14, window_bounds = array<i64: 8, 128>}, {pipeline_mode = #tpu.pipeline_mode<synchronous>, transform_indices = @transform_15, window_bounds = array<i64: 8, 128>}, {pipeline_mode = #tpu.pipeline_mode<synchronous>, transform_indices = @transform_16, window_bounds = array<i64: 32, 128>}, {pipeline_mode = #tpu.pipeline_mode<synchronous>, transform_indices = @transform_17, window_bounds = array<i64: 1, 128>}, {transform_indices = @transform_18, window_bounds = array<i64: 8, 128>}, {pipeline_mode = #tpu.pipeline_mode<synchronous>, transform_indices = @transform_19, window_bounds = array<i64: 1, 1>}]} {
    %c0_i32 = arith.constant 0 : i32
    %0 = arith.cmpi eq, %arg0, %c0_i32 : i32
    %1 = arith.extui %0 : i1 to i32
    %c0_i32_0 = arith.constant 0 : i32
    %2 = arith.cmpi ne, %1, %c0_i32_0 : i32
    scf.if %2 {
      %cst_407 = arith.constant 0.000000e+00 : f32
      %974 = vector.broadcast %cst_407 : f32 to vector<8x32xf32>
      %c0_408 = arith.constant 0 : index
      %c0_409 = arith.constant 0 : index
      %975 = vector.load %arg21[%c0_408, %c0_409] : memref<8x32xf32, #tpu.memory_space<vmem>>, vector<8x32xf32>
      tpu.vector_store %arg21[%c0_408, %c0_409], %974 {strides = array<i32>} : memref<8x32xf32, #tpu.memory_space<vmem>>, vector<8x32xf32>,
      %cst_410 = arith.constant 0.000000e+00 : f32
      %976 = vector.broadcast %cst_410 : f32 to vector<8x32xf32>
      %c0_411 = arith.constant 0 : index
      %c0_412 = arith.constant 0 : index
      %977 = vector.load %arg22[%c0_411, %c0_412] : memref<8x32xf32, #tpu.memory_space<vmem>>, vector<8x32xf32>
      tpu.vector_store %arg22[%c0_411, %c0_412], %976 {strides = array<i32>} : memref<8x32xf32, #tpu.memory_space<vmem>>, vector<8x32xf32>,
      %cst_413 = arith.constant 0.000000e+00 : f32
      %978 = vector.broadcast %cst_413 : f32 to vector<1x1xf32>
      %c0_414 = arith.constant 0 : index
      %c0_415 = arith.constant 0 : index
      %979 = vector.load %arg23[%c0_414, %c0_415] : memref<1x1xf32, #tpu.memory_space<vmem>>, vector<1x1xf32>
      tpu.vector_store %arg23[%c0_414, %c0_415], %978 {strides = array<i32>} : memref<1x1xf32, #tpu.memory_space<vmem>>, vector<1x1xf32>,
    } else {
    }
    %c0 = arith.constant 0 : index
    %c0_1 = arith.constant 0 : index
    %3 = vector.load %arg3[%c0, %c0_1] : memref<128x8xf32, #tpu.memory_space<vmem>>, vector<128x8xf32>
    %c0_2 = arith.constant 0 : index
    %c0_3 = arith.constant 0 : index
    %4 = vector.load %arg2[%c0_2, %c0_3] : memref<128x8xf32, #tpu.memory_space<vmem>>, vector<128x8xf32>
    %c0_4 = arith.constant 0 : index
    %c0_5 = arith.constant 0 : index
    %5 = vector.load %arg4[%c0_4, %c0_5] : memref<8x32xf32, #tpu.memory_space<vmem>>, vector<8x32xf32>
    %cst = arith.constant dense<0.000000e+00> : vector<128x32xf32>
    %6 = tpu.matmul %3, %5, %cst {dimension_numbers = #tpu.dot_dimension_numbers<[1], [0], [0], [1], [0, 0, 1, 1], [], []>} : vector<128x8xf32>, vector<8x32xf32>, vector<128x32xf32> -> vector<128x32xf32>
    %c0_6 = arith.constant 0 : index
    %c0_7 = arith.constant 0 : index
    %7 = vector.load %arg5[%c0_6, %c0_7] : memref<1x32xf32, #tpu.memory_space<vmem>>, vector<1x32xf32>
    %8 = vector.broadcast %7 : vector<1x32xf32> to vector<128x32xf32>
    %9 = arith.addf %6, %8 : vector<128x32xf32>
    %cst_8 = arith.constant 0.000000e+00 : f32
    %10 = vector.broadcast %cst_8 : f32 to vector<128x32xf32>
    %11 = arith.maximumf %9, %10 : vector<128x32xf32>
    %cst_9 = arith.constant 0.000000e+00 : f32
    %12 = vector.broadcast %cst_9 : f32 to vector<128x32xf32>
    %13 = arith.subf %12, %11 : vector<128x32xf32>
    %14 = math.exp %13 : vector<128x32xf32>
    %c0_10 = arith.constant 0 : index
    %c0_11 = arith.constant 0 : index
    %15 = vector.load %arg24[%c0_10, %c0_11] : memref<128x32xf32, #tpu.memory_space<vmem>>, vector<128x32xf32>
    tpu.vector_store %arg24[%c0_10, %c0_11], %14 {strides = array<i32>} : memref<128x32xf32, #tpu.memory_space<vmem>>, vector<128x32xf32>,
    %c0_12 = arith.constant 0 : index
    %c0_13 = arith.constant 0 : index
    %16 = vector.load %arg6[%c0_12, %c0_13] : memref<8x8xf32, #tpu.memory_space<vmem>>, vector<8x8xf32>
    %cst_14 = arith.constant dense<0.000000e+00> : vector<128x8xf32>
    %17 = tpu.matmul %3, %16, %cst_14 {dimension_numbers = #tpu.dot_dimension_numbers<[1], [0], [0], [1], [0, 0, 1, 1], [], []>} : vector<128x8xf32>, vector<8x8xf32>, vector<128x8xf32> -> vector<128x8xf32>
    %c0_15 = arith.constant 0 : index
    %c0_16 = arith.constant 0 : index
    %18 = vector.load %arg7[%c0_15, %c0_16] : memref<1x8xf32, #tpu.memory_space<vmem>>, vector<1x8xf32>
    %19 = vector.broadcast %18 : vector<1x8xf32> to vector<128x8xf32>
    %20 = arith.addf %17, %19 : vector<128x8xf32>
    %cst_17 = arith.constant 0.000000e+00 : f32
    %21 = vector.broadcast %cst_17 : f32 to vector<128x8xf32>
    %22 = arith.maximumf %20, %21 : vector<128x8xf32>
    %cst_18 = arith.constant 0.000000e+00 : f32
    %23 = vector.broadcast %cst_18 : f32 to vector<128x8xf32>
    %24 = arith.subf %23, %22 : vector<128x8xf32>
    %25 = math.exp %24 : vector<128x8xf32>
    %c0_19 = arith.constant 0 : index
    %c0_20 = arith.constant 0 : index
    %26 = vector.load %arg12[%c0_19, %c0_20] : memref<8x8xf32, #tpu.memory_space<vmem>>, vector<8x8xf32>
    %cst_21 = arith.constant dense<0.000000e+00> : vector<128x8xf32>
    %27 = tpu.matmul %25, %26, %cst_21 {dimension_numbers = #tpu.dot_dimension_numbers<[1], [0], [0], [1], [0, 0, 1, 1], [], []>} : vector<128x8xf32>, vector<8x8xf32>, vector<128x8xf32> -> vector<128x8xf32>
    %c0_22 = arith.constant 0 : index
    %c0_23 = arith.constant 0 : index
    %28 = vector.load %arg13[%c0_22, %c0_23] : memref<8x8xf32, #tpu.memory_space<vmem>>, vector<8x8xf32>
    %cst_24 = arith.constant dense<0.000000e+00> : vector<128x8xf32>
    %29 = tpu.matmul %4, %28, %cst_24 {dimension_numbers = #tpu.dot_dimension_numbers<[1], [0], [0], [1], [0, 0, 1, 1], [], []>} : vector<128x8xf32>, vector<8x8xf32>, vector<128x8xf32> -> vector<128x8xf32>
    %30 = arith.addf %27, %29 : vector<128x8xf32>
    %c0_25 = arith.constant 0 : index
    %c0_26 = arith.constant 0 : index
    %31 = vector.load %arg14[%c0_25, %c0_26] : memref<1x8xf32, #tpu.memory_space<vmem>>, vector<1x8xf32>
    %32 = vector.broadcast %31 : vector<1x8xf32> to vector<128x8xf32>
    %33 = arith.addf %30, %32 : vector<128x8xf32>
    %c0_27 = arith.constant 0 : index
    %c0_28 = arith.constant 0 : index
    %34 = vector.load %arg25[%c0_27, %c0_28] : memref<128x8xf32, #tpu.memory_space<vmem>>, vector<128x8xf32>
    tpu.vector_store %arg25[%c0_27, %c0_28], %33 {strides = array<i32>} : memref<128x8xf32, #tpu.memory_space<vmem>>, vector<128x8xf32>,
    %c0_29 = arith.constant 0 : index
    %c0_30 = arith.constant 0 : index
    %35 = vector.load %arg16[%c0_29, %c0_30] : memref<8x128xf32, #tpu.memory_space<vmem>>, vector<8x128xf32>
    %cst_31 = arith.constant dense<0.000000e+00> : vector<128x128xf32>
    %36 = tpu.matmul %4, %35, %cst_31 {dimension_numbers = #tpu.dot_dimension_numbers<[1], [0], [0], [1], [0, 0, 1, 1], [], []>} : vector<128x8xf32>, vector<8x128xf32>, vector<128x128xf32> -> vector<128x128xf32>
    %c0_32 = arith.constant 0 : index
    %c0_33 = arith.constant 0 : index
    %37 = vector.load %arg18[%c0_32, %c0_33] : memref<1x128xf32, #tpu.memory_space<vmem>>, vector<1x128xf32>
    %38 = vector.broadcast %37 : vector<1x128xf32> to vector<128x128xf32>
    %39 = arith.addf %36, %38 : vector<128x128xf32>
    %c0_34 = arith.constant 0 : index
    %c0_35 = arith.constant 0 : index
    %40 = vector.load %arg26[%c0_34, %c0_35] : memref<128x128xf32, #tpu.memory_space<vmem>>, vector<128x128xf32>
    tpu.vector_store %arg26[%c0_34, %c0_35], %39 {strides = array<i32>} : memref<128x128xf32, #tpu.memory_space<vmem>>, vector<128x128xf32>,
    %41 = vector.shape_cast %4 : vector<128x8xf32> to vector<16x8x8xf32>
    %cst_36 = arith.constant dense<0.000000e+00> : vector<16x8xf32>
    %42 = vector.multi_reduction <add>, %41, %cst_36 [2] : vector<16x8x8xf32> to vector<16x8xf32>
    %43 = vector.shape_cast %42 : vector<16x8xf32> to vector<16x8x1xf32>
    %cst_37 = arith.constant dense<0.000000e+00> : vector<16x1xf32>
    %44 = vector.multi_reduction <add>, %43, %cst_37 [1] : vector<16x8x1xf32> to vector<16x1xf32>
    %45 = vector.shape_cast %44 : vector<16x1xf32> to vector<16x1x1xf32>
    %cst_38 = arith.constant 9.99999974E-6 : f32
    %46 = vector.broadcast %cst_38 : f32 to vector<16x1x1xf32>
    %47 = arith.addf %45, %46 : vector<16x1x1xf32>
    %cst_39 = arith.constant 1.000000e+00 : f32
    %48 = vector.broadcast %cst_39 : f32 to vector<16x1x1xf32>
    %49 = arith.divf %48, %47 : vector<16x1x1xf32>
    %50 = vector.broadcast %49 : vector<16x1x1xf32> to vector<16x8x8xf32>
    %51 = arith.mulf %41, %50 : vector<16x8x8xf32>
    %52 = vector.shape_cast %51 : vector<16x8x8xf32> to vector<128x8xf32>
    %c0_40 = arith.constant 0 : index
    %c0_41 = arith.constant 0 : index
    %53 = vector.load %arg27[%c0_40, %c0_41] : memref<128x8xf32, #tpu.memory_space<vmem>>, vector<128x8xf32>
    tpu.vector_store %arg27[%c0_40, %c0_41], %52 {strides = array<i32>} : memref<128x8xf32, #tpu.memory_space<vmem>>, vector<128x8xf32>,
    %c0_42 = arith.constant 0 : index
    %c0_43 = arith.constant 0 : index
    %54 = vector.load %arg8[%c0_42, %c0_43] : memref<32x8xf32, #tpu.memory_space<vmem>>, vector<32x8xf32>
    %c0_44 = arith.constant 0 : index
    %c0_45 = arith.constant 0 : index
    %55 = vector.load %arg10[%c0_44, %c0_45] : memref<8x8xf32, #tpu.memory_space<vmem>>, vector<8x8xf32>
    %c0_46 = arith.constant 0 : index
    %c0_47 = arith.constant 0 : index
    %56 = vector.load %arg15[%c0_46, %c0_47] : memref<8x128xf32, #tpu.memory_space<vmem>>, vector<8x128xf32>
    %c0_48 = arith.constant 0 : index
    %c0_49 = arith.constant 0 : index
    %57 = vector.load %arg17[%c0_48, %c0_49] : memref<32x128xf32, #tpu.memory_space<vmem>>, vector<32x128xf32>
    %c0_50 = arith.constant 0 : index
    %c0_51 = arith.constant 0 : index
    %58 = vector.load %arg9[%c0_50, %c0_51] : memref<1x8xf32, #tpu.memory_space<vmem>>, vector<1x8xf32>
    %59 = vector.shape_cast %58 : vector<1x8xf32> to vector<1x8xf32>
    %60 = vector.broadcast %59 : vector<1x8xf32> to vector<8x8xf32>
    %c0_52 = arith.constant 0 : index
    %c0_53 = arith.constant 0 : index
    %61 = vector.load %arg11[%c0_52, %c0_53] : memref<1x8xf32, #tpu.memory_space<vmem>>, vector<1x8xf32>
    %62 = vector.shape_cast %61 : vector<1x8xf32> to vector<1x8xf32>
    %63 = vector.broadcast %62 : vector<1x8xf32> to vector<8x8xf32>
    %c0_54 = arith.constant 0 : index
    %c0_55 = arith.constant 0 : index
    %64 = vector.load %arg21[%c0_54, %c0_55] : memref<8x32xf32, #tpu.memory_space<vmem>>, vector<8x32xf32>
    %c0_56 = arith.constant 0 : index
    %c0_57 = arith.constant 0 : index
    %65 = vector.load %arg22[%c0_56, %c0_57] : memref<8x32xf32, #tpu.memory_space<vmem>>, vector<8x32xf32>
    %cst_58 = arith.constant 0.000000e+00 : f32
    %66 = vector.broadcast %cst_58 : f32 to vector<8x8xf32>
    %c0_59 = arith.constant 0 : index
    %c0_60 = arith.constant 0 : index
    %67 = vector.load %arg1[%c0_59, %c0_60] : memref<128x8xf32, #tpu.memory_space<vmem>>, vector<8x8xf32>
    %c0_61 = arith.constant 0 : index
    %c0_62 = arith.constant 0 : index
    %68 = vector.load %arg2[%c0_61, %c0_62] : memref<128x8xf32, #tpu.memory_space<vmem>>, vector<8x8xf32>
    %c0_63 = arith.constant 0 : index
    %c0_64 = arith.constant 0 : index
    %69 = vector.load %arg27[%c0_63, %c0_64] : memref<128x8xf32, #tpu.memory_space<vmem>>, vector<8x8xf32>
    %c0_65 = arith.constant 0 : index
    %c0_66 = arith.constant 0 : index
    %70 = vector.load %arg24[%c0_65, %c0_66] : memref<128x32xf32, #tpu.memory_space<vmem>>, vector<8x32xf32>
    %71 = arith.mulf %64, %70 : vector<8x32xf32>
    %cst_67 = arith.constant dense<0.000000e+00> : vector<8x8xf32>
    %72 = tpu.matmul %71, %54, %cst_67 {dimension_numbers = #tpu.dot_dimension_numbers<[1], [0], [0], [1], [0, 0, 1, 1], [], []>} : vector<8x32xf32>, vector<32x8xf32>, vector<8x8xf32> -> vector<8x8xf32>
    %73 = arith.addf %72, %60 : vector<8x8xf32>
    %74 = arith.mulf %68, %67 : vector<8x8xf32>
    %cst_68 = arith.constant 1.000000e+00 : f32
    %75 = vector.broadcast %cst_68 : f32 to vector<8x8xf32>
    %76 = arith.subf %75, %68 : vector<8x8xf32>
    %77 = arith.mulf %76, %73 : vector<8x8xf32>
    %78 = arith.addf %74, %77 : vector<8x8xf32>
    %cst_69 = arith.constant dense<0.000000e+00> : vector<8x8xf32>
    %79 = tpu.matmul %78, %55, %cst_69 {dimension_numbers = #tpu.dot_dimension_numbers<[1], [0], [0], [1], [0, 0, 1, 1], [], []>} : vector<8x8xf32>, vector<8x8xf32>, vector<8x8xf32> -> vector<8x8xf32>
    %80 = arith.addf %79, %63 : vector<8x8xf32>
    %c0_70 = arith.constant 0 : index
    %c0_71 = arith.constant 0 : index
    %81 = vector.load %arg25[%c0_70, %c0_71] : memref<128x8xf32, #tpu.memory_space<vmem>>, vector<8x8xf32>
    %82 = arith.mulf %81, %80 : vector<8x8xf32>
    %cst_72 = arith.constant 1.000000e+00 : f32
    %83 = vector.broadcast %cst_72 : f32 to vector<8x8xf32>
    %84 = arith.subf %83, %81 : vector<8x8xf32>
    %85 = arith.mulf %84, %73 : vector<8x8xf32>
    %86 = arith.addf %82, %85 : vector<8x8xf32>
    %87 = arith.subf %67, %73 : vector<8x8xf32>
    %88 = math.absf %87 : vector<8x8xf32>
    %89 = arith.subf %67, %80 : vector<8x8xf32>
    %90 = math.absf %89 : vector<8x8xf32>
    %91 = arith.addf %88, %90 : vector<8x8xf32>
    %92 = arith.subf %67, %86 : vector<8x8xf32>
    %93 = math.absf %92 : vector<8x8xf32>
    %94 = arith.addf %91, %93 : vector<8x8xf32>
    %95 = arith.mulf %94, %69 : vector<8x8xf32>
    %96 = arith.addf %66, %95 : vector<8x8xf32>
    %97 = arith.mulf %68, %67 : vector<8x8xf32>
    %cst_73 = arith.constant 1.000000e+00 : f32
    %98 = vector.broadcast %cst_73 : f32 to vector<8x8xf32>
    %99 = arith.subf %98, %68 : vector<8x8xf32>
    %100 = arith.mulf %99, %86 : vector<8x8xf32>
    %101 = arith.addf %97, %100 : vector<8x8xf32>
    %c0_74 = arith.constant 0 : index
    %c0_75 = arith.constant 0 : index
    %102 = vector.load %arg19[%c0_74, %c0_75] : memref<8x128xf32, #tpu.memory_space<vmem>>, vector<8x8xf32>
    tpu.vector_store %arg19[%c0_74, %c0_75], %101 {strides = array<i32>} : memref<8x128xf32, #tpu.memory_space<vmem>>, vector<8x8xf32>,
    %cst_76 = arith.constant dense<0.000000e+00> : vector<8x128xf32>
    %103 = tpu.matmul %101, %56, %cst_76 {dimension_numbers = #tpu.dot_dimension_numbers<[1], [0], [0], [1], [0, 0, 1, 1], [], []>} : vector<8x8xf32>, vector<8x128xf32>, vector<8x128xf32> -> vector<8x128xf32>
    %cst_77 = arith.constant dense<0.000000e+00> : vector<8x128xf32>
    %104 = tpu.matmul %71, %57, %cst_77 {dimension_numbers = #tpu.dot_dimension_numbers<[1], [0], [0], [1], [0, 0, 1, 1], [], []>} : vector<8x32xf32>, vector<32x128xf32>, vector<8x128xf32> -> vector<8x128xf32>
    %105 = arith.addf %103, %104 : vector<8x128xf32>
    %c0_78 = arith.constant 0 : index
    %c0_79 = arith.constant 0 : index
    %106 = vector.load %arg26[%c0_78, %c0_79] : memref<128x128xf32, #tpu.memory_space<vmem>>, vector<8x128xf32>
    %107 = arith.addf %105, %106 : vector<8x128xf32>
    %108 = arith.negf %107 : vector<8x128xf32>
    %109 = math.exp %108 : vector<8x128xf32>
    %cst_80 = arith.constant 1.000000e+00 : f32
    %110 = vector.broadcast %cst_80 : f32 to vector<8x128xf32>
    %111 = arith.addf %110, %109 : vector<8x128xf32>
    %112 = arith.divf %110, %111 : vector<8x128xf32>
    %113 = vector.extract_strided_slice %112 {offsets = [0, 0], sizes = [8, 32], strides = [1, 1]} : vector<8x128xf32> to vector<8x32xf32>
    %114 = vector.extract_strided_slice %112 {offsets = [0, 32], sizes = [8, 32], strides = [1, 1]} : vector<8x128xf32> to vector<8x32xf32>
    %115 = vector.extract_strided_slice %112 {offsets = [0, 96], sizes = [8, 32], strides = [1, 1]} : vector<8x128xf32> to vector<8x32xf32>
    %116 = vector.extract_strided_slice %107 {offsets = [0, 64], sizes = [8, 32], strides = [1, 1]} : vector<8x128xf32> to vector<8x32xf32>
    %117 = math.tanh %116 : vector<8x32xf32>
    %118 = arith.mulf %114, %65 : vector<8x32xf32>
    %119 = arith.mulf %113, %117 : vector<8x32xf32>
    %120 = arith.addf %118, %119 : vector<8x32xf32>
    %121 = math.tanh %120 : vector<8x32xf32>
    %122 = arith.mulf %115, %121 : vector<8x32xf32>
    %c8 = arith.constant 8 : index
    %c0_81 = arith.constant 0 : index
    %123 = vector.load %arg1[%c8, %c0_81] : memref<128x8xf32, #tpu.memory_space<vmem>>, vector<8x8xf32>
    %c8_82 = arith.constant 8 : index
    %c0_83 = arith.constant 0 : index
    %124 = vector.load %arg2[%c8_82, %c0_83] : memref<128x8xf32, #tpu.memory_space<vmem>>, vector<8x8xf32>
    %c8_84 = arith.constant 8 : index
    %c0_85 = arith.constant 0 : index
    %125 = vector.load %arg27[%c8_84, %c0_85] : memref<128x8xf32, #tpu.memory_space<vmem>>, vector<8x8xf32>
    %c8_86 = arith.constant 8 : index
    %c0_87 = arith.constant 0 : index
    %126 = vector.load %arg24[%c8_86, %c0_87] : memref<128x32xf32, #tpu.memory_space<vmem>>, vector<8x32xf32>
    %127 = arith.mulf %122, %126 : vector<8x32xf32>
    %cst_88 = arith.constant dense<0.000000e+00> : vector<8x8xf32>
    %128 = tpu.matmul %127, %54, %cst_88 {dimension_numbers = #tpu.dot_dimension_numbers<[1], [0], [0], [1], [0, 0, 1, 1], [], []>} : vector<8x32xf32>, vector<32x8xf32>, vector<8x8xf32> -> vector<8x8xf32>
    %129 = arith.addf %128, %60 : vector<8x8xf32>
    %130 = arith.mulf %124, %123 : vector<8x8xf32>
    %cst_89 = arith.constant 1.000000e+00 : f32
    %131 = vector.broadcast %cst_89 : f32 to vector<8x8xf32>
    %132 = arith.subf %131, %124 : vector<8x8xf32>
    %133 = arith.mulf %132, %129 : vector<8x8xf32>
    %134 = arith.addf %130, %133 : vector<8x8xf32>
    %cst_90 = arith.constant dense<0.000000e+00> : vector<8x8xf32>
    %135 = tpu.matmul %134, %55, %cst_90 {dimension_numbers = #tpu.dot_dimension_numbers<[1], [0], [0], [1], [0, 0, 1, 1], [], []>} : vector<8x8xf32>, vector<8x8xf32>, vector<8x8xf32> -> vector<8x8xf32>
    %136 = arith.addf %135, %63 : vector<8x8xf32>
    %c8_91 = arith.constant 8 : index
    %c0_92 = arith.constant 0 : index
    %137 = vector.load %arg25[%c8_91, %c0_92] : memref<128x8xf32, #tpu.memory_space<vmem>>, vector<8x8xf32>
    %138 = arith.mulf %137, %136 : vector<8x8xf32>
    %cst_93 = arith.constant 1.000000e+00 : f32
    %139 = vector.broadcast %cst_93 : f32 to vector<8x8xf32>
    %140 = arith.subf %139, %137 : vector<8x8xf32>
    %141 = arith.mulf %140, %129 : vector<8x8xf32>
    %142 = arith.addf %138, %141 : vector<8x8xf32>
    %143 = arith.subf %123, %129 : vector<8x8xf32>
    %144 = math.absf %143 : vector<8x8xf32>
    %145 = arith.subf %123, %136 : vector<8x8xf32>
    %146 = math.absf %145 : vector<8x8xf32>
    %147 = arith.addf %144, %146 : vector<8x8xf32>
    %148 = arith.subf %123, %142 : vector<8x8xf32>
    %149 = math.absf %148 : vector<8x8xf32>
    %150 = arith.addf %147, %149 : vector<8x8xf32>
    %151 = arith.mulf %150, %125 : vector<8x8xf32>
    %152 = arith.addf %96, %151 : vector<8x8xf32>
    %153 = arith.mulf %124, %123 : vector<8x8xf32>
    %cst_94 = arith.constant 1.000000e+00 : f32
    %154 = vector.broadcast %cst_94 : f32 to vector<8x8xf32>
    %155 = arith.subf %154, %124 : vector<8x8xf32>
    %156 = arith.mulf %155, %142 : vector<8x8xf32>
    %157 = arith.addf %153, %156 : vector<8x8xf32>
    %c0_95 = arith.constant 0 : index
    %c8_96 = arith.constant 8 : index
    %158 = vector.load %arg19[%c0_95, %c8_96] : memref<8x128xf32, #tpu.memory_space<vmem>>, vector<8x8xf32>
    tpu.vector_store %arg19[%c0_95, %c8_96], %157 {strides = array<i32>} : memref<8x128xf32, #tpu.memory_space<vmem>>, vector<8x8xf32>,
    %cst_97 = arith.constant dense<0.000000e+00> : vector<8x128xf32>
    %159 = tpu.matmul %157, %56, %cst_97 {dimension_numbers = #tpu.dot_dimension_numbers<[1], [0], [0], [1], [0, 0, 1, 1], [], []>} : vector<8x8xf32>, vector<8x128xf32>, vector<8x128xf32> -> vector<8x128xf32>
    %cst_98 = arith.constant dense<0.000000e+00> : vector<8x128xf32>
    %160 = tpu.matmul %127, %57, %cst_98 {dimension_numbers = #tpu.dot_dimension_numbers<[1], [0], [0], [1], [0, 0, 1, 1], [], []>} : vector<8x32xf32>, vector<32x128xf32>, vector<8x128xf32> -> vector<8x128xf32>
    %161 = arith.addf %159, %160 : vector<8x128xf32>
    %c8_99 = arith.constant 8 : index
    %c0_100 = arith.constant 0 : index
    %162 = vector.load %arg26[%c8_99, %c0_100] : memref<128x128xf32, #tpu.memory_space<vmem>>, vector<8x128xf32>
    %163 = arith.addf %161, %162 : vector<8x128xf32>
    %164 = arith.negf %163 : vector<8x128xf32>
    %165 = math.exp %164 : vector<8x128xf32>
    %cst_101 = arith.constant 1.000000e+00 : f32
    %166 = vector.broadcast %cst_101 : f32 to vector<8x128xf32>
    %167 = arith.addf %166, %165 : vector<8x128xf32>
    %168 = arith.divf %166, %167 : vector<8x128xf32>
    %169 = vector.extract_strided_slice %168 {offsets = [0, 0], sizes = [8, 32], strides = [1, 1]} : vector<8x128xf32> to vector<8x32xf32>
    %170 = vector.extract_strided_slice %168 {offsets = [0, 32], sizes = [8, 32], strides = [1, 1]} : vector<8x128xf32> to vector<8x32xf32>
    %171 = vector.extract_strided_slice %168 {offsets = [0, 96], sizes = [8, 32], strides = [1, 1]} : vector<8x128xf32> to vector<8x32xf32>
    %172 = vector.extract_strided_slice %163 {offsets = [0, 64], sizes = [8, 32], strides = [1, 1]} : vector<8x128xf32> to vector<8x32xf32>
    %173 = math.tanh %172 : vector<8x32xf32>
    %174 = arith.mulf %170, %120 : vector<8x32xf32>
    %175 = arith.mulf %169, %173 : vector<8x32xf32>
    %176 = arith.addf %174, %175 : vector<8x32xf32>
    %177 = math.tanh %176 : vector<8x32xf32>
    %178 = arith.mulf %171, %177 : vector<8x32xf32>
    %c16 = arith.constant 16 : index
    %c0_102 = arith.constant 0 : index
    %179 = vector.load %arg1[%c16, %c0_102] : memref<128x8xf32, #tpu.memory_space<vmem>>, vector<8x8xf32>
    %c16_103 = arith.constant 16 : index
    %c0_104 = arith.constant 0 : index
    %180 = vector.load %arg2[%c16_103, %c0_104] : memref<128x8xf32, #tpu.memory_space<vmem>>, vector<8x8xf32>
    %c16_105 = arith.constant 16 : index
    %c0_106 = arith.constant 0 : index
    %181 = vector.load %arg27[%c16_105, %c0_106] : memref<128x8xf32, #tpu.memory_space<vmem>>, vector<8x8xf32>
    %c16_107 = arith.constant 16 : index
    %c0_108 = arith.constant 0 : index
    %182 = vector.load %arg24[%c16_107, %c0_108] : memref<128x32xf32, #tpu.memory_space<vmem>>, vector<8x32xf32>
    %183 = arith.mulf %178, %182 : vector<8x32xf32>
    %cst_109 = arith.constant dense<0.000000e+00> : vector<8x8xf32>
    %184 = tpu.matmul %183, %54, %cst_109 {dimension_numbers = #tpu.dot_dimension_numbers<[1], [0], [0], [1], [0, 0, 1, 1], [], []>} : vector<8x32xf32>, vector<32x8xf32>, vector<8x8xf32> -> vector<8x8xf32>
    %185 = arith.addf %184, %60 : vector<8x8xf32>
    %186 = arith.mulf %180, %179 : vector<8x8xf32>
    %cst_110 = arith.constant 1.000000e+00 : f32
    %187 = vector.broadcast %cst_110 : f32 to vector<8x8xf32>
    %188 = arith.subf %187, %180 : vector<8x8xf32>
    %189 = arith.mulf %188, %185 : vector<8x8xf32>
    %190 = arith.addf %186, %189 : vector<8x8xf32>
    %cst_111 = arith.constant dense<0.000000e+00> : vector<8x8xf32>
    %191 = tpu.matmul %190, %55, %cst_111 {dimension_numbers = #tpu.dot_dimension_numbers<[1], [0], [0], [1], [0, 0, 1, 1], [], []>} : vector<8x8xf32>, vector<8x8xf32>, vector<8x8xf32> -> vector<8x8xf32>
    %192 = arith.addf %191, %63 : vector<8x8xf32>
    %c16_112 = arith.constant 16 : index
    %c0_113 = arith.constant 0 : index
    %193 = vector.load %arg25[%c16_112, %c0_113] : memref<128x8xf32, #tpu.memory_space<vmem>>, vector<8x8xf32>
    %194 = arith.mulf %193, %192 : vector<8x8xf32>
    %cst_114 = arith.constant 1.000000e+00 : f32
    %195 = vector.broadcast %cst_114 : f32 to vector<8x8xf32>
    %196 = arith.subf %195, %193 : vector<8x8xf32>
    %197 = arith.mulf %196, %185 : vector<8x8xf32>
    %198 = arith.addf %194, %197 : vector<8x8xf32>
    %199 = arith.subf %179, %185 : vector<8x8xf32>
    %200 = math.absf %199 : vector<8x8xf32>
    %201 = arith.subf %179, %192 : vector<8x8xf32>
    %202 = math.absf %201 : vector<8x8xf32>
    %203 = arith.addf %200, %202 : vector<8x8xf32>
    %204 = arith.subf %179, %198 : vector<8x8xf32>
    %205 = math.absf %204 : vector<8x8xf32>
    %206 = arith.addf %203, %205 : vector<8x8xf32>
    %207 = arith.mulf %206, %181 : vector<8x8xf32>
    %208 = arith.addf %152, %207 : vector<8x8xf32>
    %209 = arith.mulf %180, %179 : vector<8x8xf32>
    %cst_115 = arith.constant 1.000000e+00 : f32
    %210 = vector.broadcast %cst_115 : f32 to vector<8x8xf32>
    %211 = arith.subf %210, %180 : vector<8x8xf32>
    %212 = arith.mulf %211, %198 : vector<8x8xf32>
    %213 = arith.addf %209, %212 : vector<8x8xf32>
    %c0_116 = arith.constant 0 : index
    %c16_117 = arith.constant 16 : index
    %214 = vector.load %arg19[%c0_116, %c16_117] : memref<8x128xf32, #tpu.memory_space<vmem>>, vector<8x8xf32>
    tpu.vector_store %arg19[%c0_116, %c16_117], %213 {strides = array<i32>} : memref<8x128xf32, #tpu.memory_space<vmem>>, vector<8x8xf32>,
    %cst_118 = arith.constant dense<0.000000e+00> : vector<8x128xf32>
    %215 = tpu.matmul %213, %56, %cst_118 {dimension_numbers = #tpu.dot_dimension_numbers<[1], [0], [0], [1], [0, 0, 1, 1], [], []>} : vector<8x8xf32>, vector<8x128xf32>, vector<8x128xf32> -> vector<8x128xf32>
    %cst_119 = arith.constant dense<0.000000e+00> : vector<8x128xf32>
    %216 = tpu.matmul %183, %57, %cst_119 {dimension_numbers = #tpu.dot_dimension_numbers<[1], [0], [0], [1], [0, 0, 1, 1], [], []>} : vector<8x32xf32>, vector<32x128xf32>, vector<8x128xf32> -> vector<8x128xf32>
    %217 = arith.addf %215, %216 : vector<8x128xf32>
    %c16_120 = arith.constant 16 : index
    %c0_121 = arith.constant 0 : index
    %218 = vector.load %arg26[%c16_120, %c0_121] : memref<128x128xf32, #tpu.memory_space<vmem>>, vector<8x128xf32>
    %219 = arith.addf %217, %218 : vector<8x128xf32>
    %220 = arith.negf %219 : vector<8x128xf32>
    %221 = math.exp %220 : vector<8x128xf32>
    %cst_122 = arith.constant 1.000000e+00 : f32
    %222 = vector.broadcast %cst_122 : f32 to vector<8x128xf32>
    %223 = arith.addf %222, %221 : vector<8x128xf32>
    %224 = arith.divf %222, %223 : vector<8x128xf32>
    %225 = vector.extract_strided_slice %224 {offsets = [0, 0], sizes = [8, 32], strides = [1, 1]} : vector<8x128xf32> to vector<8x32xf32>
    %226 = vector.extract_strided_slice %224 {offsets = [0, 32], sizes = [8, 32], strides = [1, 1]} : vector<8x128xf32> to vector<8x32xf32>
    %227 = vector.extract_strided_slice %224 {offsets = [0, 96], sizes = [8, 32], strides = [1, 1]} : vector<8x128xf32> to vector<8x32xf32>
    %228 = vector.extract_strided_slice %219 {offsets = [0, 64], sizes = [8, 32], strides = [1, 1]} : vector<8x128xf32> to vector<8x32xf32>
    %229 = math.tanh %228 : vector<8x32xf32>
    %230 = arith.mulf %226, %176 : vector<8x32xf32>
    %231 = arith.mulf %225, %229 : vector<8x32xf32>
    %232 = arith.addf %230, %231 : vector<8x32xf32>
    %233 = math.tanh %232 : vector<8x32xf32>
    %234 = arith.mulf %227, %233 : vector<8x32xf32>
    %c24 = arith.constant 24 : index
    %c0_123 = arith.constant 0 : index
    %235 = vector.load %arg1[%c24, %c0_123] : memref<128x8xf32, #tpu.memory_space<vmem>>, vector<8x8xf32>
    %c24_124 = arith.constant 24 : index
    %c0_125 = arith.constant 0 : index
    %236 = vector.load %arg2[%c24_124, %c0_125] : memref<128x8xf32, #tpu.memory_space<vmem>>, vector<8x8xf32>
    %c24_126 = arith.constant 24 : index
    %c0_127 = arith.constant 0 : index
    %237 = vector.load %arg27[%c24_126, %c0_127] : memref<128x8xf32, #tpu.memory_space<vmem>>, vector<8x8xf32>
    %c24_128 = arith.constant 24 : index
    %c0_129 = arith.constant 0 : index
    %238 = vector.load %arg24[%c24_128, %c0_129] : memref<128x32xf32, #tpu.memory_space<vmem>>, vector<8x32xf32>
    %239 = arith.mulf %234, %238 : vector<8x32xf32>
    %cst_130 = arith.constant dense<0.000000e+00> : vector<8x8xf32>
    %240 = tpu.matmul %239, %54, %cst_130 {dimension_numbers = #tpu.dot_dimension_numbers<[1], [0], [0], [1], [0, 0, 1, 1], [], []>} : vector<8x32xf32>, vector<32x8xf32>, vector<8x8xf32> -> vector<8x8xf32>
    %241 = arith.addf %240, %60 : vector<8x8xf32>
    %242 = arith.mulf %236, %235 : vector<8x8xf32>
    %cst_131 = arith.constant 1.000000e+00 : f32
    %243 = vector.broadcast %cst_131 : f32 to vector<8x8xf32>
    %244 = arith.subf %243, %236 : vector<8x8xf32>
    %245 = arith.mulf %244, %241 : vector<8x8xf32>
    %246 = arith.addf %242, %245 : vector<8x8xf32>
    %cst_132 = arith.constant dense<0.000000e+00> : vector<8x8xf32>
    %247 = tpu.matmul %246, %55, %cst_132 {dimension_numbers = #tpu.dot_dimension_numbers<[1], [0], [0], [1], [0, 0, 1, 1], [], []>} : vector<8x8xf32>, vector<8x8xf32>, vector<8x8xf32> -> vector<8x8xf32>
    %248 = arith.addf %247, %63 : vector<8x8xf32>
    %c24_133 = arith.constant 24 : index
    %c0_134 = arith.constant 0 : index
    %249 = vector.load %arg25[%c24_133, %c0_134] : memref<128x8xf32, #tpu.memory_space<vmem>>, vector<8x8xf32>
    %250 = arith.mulf %249, %248 : vector<8x8xf32>
    %cst_135 = arith.constant 1.000000e+00 : f32
    %251 = vector.broadcast %cst_135 : f32 to vector<8x8xf32>
    %252 = arith.subf %251, %249 : vector<8x8xf32>
    %253 = arith.mulf %252, %241 : vector<8x8xf32>
    %254 = arith.addf %250, %253 : vector<8x8xf32>
    %255 = arith.subf %235, %241 : vector<8x8xf32>
    %256 = math.absf %255 : vector<8x8xf32>
    %257 = arith.subf %235, %248 : vector<8x8xf32>
    %258 = math.absf %257 : vector<8x8xf32>
    %259 = arith.addf %256, %258 : vector<8x8xf32>
    %260 = arith.subf %235, %254 : vector<8x8xf32>
    %261 = math.absf %260 : vector<8x8xf32>
    %262 = arith.addf %259, %261 : vector<8x8xf32>
    %263 = arith.mulf %262, %237 : vector<8x8xf32>
    %264 = arith.addf %208, %263 : vector<8x8xf32>
    %265 = arith.mulf %236, %235 : vector<8x8xf32>
    %cst_136 = arith.constant 1.000000e+00 : f32
    %266 = vector.broadcast %cst_136 : f32 to vector<8x8xf32>
    %267 = arith.subf %266, %236 : vector<8x8xf32>
    %268 = arith.mulf %267, %254 : vector<8x8xf32>
    %269 = arith.addf %265, %268 : vector<8x8xf32>
    %c0_137 = arith.constant 0 : index
    %c24_138 = arith.constant 24 : index
    %270 = vector.load %arg19[%c0_137, %c24_138] : memref<8x128xf32, #tpu.memory_space<vmem>>, vector<8x8xf32>
    tpu.vector_store %arg19[%c0_137, %c24_138], %269 {strides = array<i32>} : memref<8x128xf32, #tpu.memory_space<vmem>>, vector<8x8xf32>,
    %cst_139 = arith.constant dense<0.000000e+00> : vector<8x128xf32>
    %271 = tpu.matmul %269, %56, %cst_139 {dimension_numbers = #tpu.dot_dimension_numbers<[1], [0], [0], [1], [0, 0, 1, 1], [], []>} : vector<8x8xf32>, vector<8x128xf32>, vector<8x128xf32> -> vector<8x128xf32>
    %cst_140 = arith.constant dense<0.000000e+00> : vector<8x128xf32>
    %272 = tpu.matmul %239, %57, %cst_140 {dimension_numbers = #tpu.dot_dimension_numbers<[1], [0], [0], [1], [0, 0, 1, 1], [], []>} : vector<8x32xf32>, vector<32x128xf32>, vector<8x128xf32> -> vector<8x128xf32>
    %273 = arith.addf %271, %272 : vector<8x128xf32>
    %c24_141 = arith.constant 24 : index
    %c0_142 = arith.constant 0 : index
    %274 = vector.load %arg26[%c24_141, %c0_142] : memref<128x128xf32, #tpu.memory_space<vmem>>, vector<8x128xf32>
    %275 = arith.addf %273, %274 : vector<8x128xf32>
    %276 = arith.negf %275 : vector<8x128xf32>
    %277 = math.exp %276 : vector<8x128xf32>
    %cst_143 = arith.constant 1.000000e+00 : f32
    %278 = vector.broadcast %cst_143 : f32 to vector<8x128xf32>
    %279 = arith.addf %278, %277 : vector<8x128xf32>
    %280 = arith.divf %278, %279 : vector<8x128xf32>
    %281 = vector.extract_strided_slice %280 {offsets = [0, 0], sizes = [8, 32], strides = [1, 1]} : vector<8x128xf32> to vector<8x32xf32>
    %282 = vector.extract_strided_slice %280 {offsets = [0, 32], sizes = [8, 32], strides = [1, 1]} : vector<8x128xf32> to vector<8x32xf32>
    %283 = vector.extract_strided_slice %280 {offsets = [0, 96], sizes = [8, 32], strides = [1, 1]} : vector<8x128xf32> to vector<8x32xf32>
    %284 = vector.extract_strided_slice %275 {offsets = [0, 64], sizes = [8, 32], strides = [1, 1]} : vector<8x128xf32> to vector<8x32xf32>
    %285 = math.tanh %284 : vector<8x32xf32>
    %286 = arith.mulf %282, %232 : vector<8x32xf32>
    %287 = arith.mulf %281, %285 : vector<8x32xf32>
    %288 = arith.addf %286, %287 : vector<8x32xf32>
    %289 = math.tanh %288 : vector<8x32xf32>
    %290 = arith.mulf %283, %289 : vector<8x32xf32>
    %c32 = arith.constant 32 : index
    %c0_144 = arith.constant 0 : index
    %291 = vector.load %arg1[%c32, %c0_144] : memref<128x8xf32, #tpu.memory_space<vmem>>, vector<8x8xf32>
    %c32_145 = arith.constant 32 : index
    %c0_146 = arith.constant 0 : index
    %292 = vector.load %arg2[%c32_145, %c0_146] : memref<128x8xf32, #tpu.memory_space<vmem>>, vector<8x8xf32>
    %c32_147 = arith.constant 32 : index
    %c0_148 = arith.constant 0 : index
    %293 = vector.load %arg27[%c32_147, %c0_148] : memref<128x8xf32, #tpu.memory_space<vmem>>, vector<8x8xf32>
    %c32_149 = arith.constant 32 : index
    %c0_150 = arith.constant 0 : index
    %294 = vector.load %arg24[%c32_149, %c0_150] : memref<128x32xf32, #tpu.memory_space<vmem>>, vector<8x32xf32>
    %295 = arith.mulf %290, %294 : vector<8x32xf32>
    %cst_151 = arith.constant dense<0.000000e+00> : vector<8x8xf32>
    %296 = tpu.matmul %295, %54, %cst_151 {dimension_numbers = #tpu.dot_dimension_numbers<[1], [0], [0], [1], [0, 0, 1, 1], [], []>} : vector<8x32xf32>, vector<32x8xf32>, vector<8x8xf32> -> vector<8x8xf32>
    %297 = arith.addf %296, %60 : vector<8x8xf32>
    %298 = arith.mulf %292, %291 : vector<8x8xf32>
    %cst_152 = arith.constant 1.000000e+00 : f32
    %299 = vector.broadcast %cst_152 : f32 to vector<8x8xf32>
    %300 = arith.subf %299, %292 : vector<8x8xf32>
    %301 = arith.mulf %300, %297 : vector<8x8xf32>
    %302 = arith.addf %298, %301 : vector<8x8xf32>
    %cst_153 = arith.constant dense<0.000000e+00> : vector<8x8xf32>
    %303 = tpu.matmul %302, %55, %cst_153 {dimension_numbers = #tpu.dot_dimension_numbers<[1], [0], [0], [1], [0, 0, 1, 1], [], []>} : vector<8x8xf32>, vector<8x8xf32>, vector<8x8xf32> -> vector<8x8xf32>
    %304 = arith.addf %303, %63 : vector<8x8xf32>
    %c32_154 = arith.constant 32 : index
    %c0_155 = arith.constant 0 : index
    %305 = vector.load %arg25[%c32_154, %c0_155] : memref<128x8xf32, #tpu.memory_space<vmem>>, vector<8x8xf32>
    %306 = arith.mulf %305, %304 : vector<8x8xf32>
    %cst_156 = arith.constant 1.000000e+00 : f32
    %307 = vector.broadcast %cst_156 : f32 to vector<8x8xf32>
    %308 = arith.subf %307, %305 : vector<8x8xf32>
    %309 = arith.mulf %308, %297 : vector<8x8xf32>
    %310 = arith.addf %306, %309 : vector<8x8xf32>
    %311 = arith.subf %291, %297 : vector<8x8xf32>
    %312 = math.absf %311 : vector<8x8xf32>
    %313 = arith.subf %291, %304 : vector<8x8xf32>
    %314 = math.absf %313 : vector<8x8xf32>
    %315 = arith.addf %312, %314 : vector<8x8xf32>
    %316 = arith.subf %291, %310 : vector<8x8xf32>
    %317 = math.absf %316 : vector<8x8xf32>
    %318 = arith.addf %315, %317 : vector<8x8xf32>
    %319 = arith.mulf %318, %293 : vector<8x8xf32>
    %320 = arith.addf %264, %319 : vector<8x8xf32>
    %321 = arith.mulf %292, %291 : vector<8x8xf32>
    %cst_157 = arith.constant 1.000000e+00 : f32
    %322 = vector.broadcast %cst_157 : f32 to vector<8x8xf32>
    %323 = arith.subf %322, %292 : vector<8x8xf32>
    %324 = arith.mulf %323, %310 : vector<8x8xf32>
    %325 = arith.addf %321, %324 : vector<8x8xf32>
    %c0_158 = arith.constant 0 : index
    %c32_159 = arith.constant 32 : index
    %326 = vector.load %arg19[%c0_158, %c32_159] : memref<8x128xf32, #tpu.memory_space<vmem>>, vector<8x8xf32>
    tpu.vector_store %arg19[%c0_158, %c32_159], %325 {strides = array<i32>} : memref<8x128xf32, #tpu.memory_space<vmem>>, vector<8x8xf32>,
    %cst_160 = arith.constant dense<0.000000e+00> : vector<8x128xf32>
    %327 = tpu.matmul %325, %56, %cst_160 {dimension_numbers = #tpu.dot_dimension_numbers<[1], [0], [0], [1], [0, 0, 1, 1], [], []>} : vector<8x8xf32>, vector<8x128xf32>, vector<8x128xf32> -> vector<8x128xf32>
    %cst_161 = arith.constant dense<0.000000e+00> : vector<8x128xf32>
    %328 = tpu.matmul %295, %57, %cst_161 {dimension_numbers = #tpu.dot_dimension_numbers<[1], [0], [0], [1], [0, 0, 1, 1], [], []>} : vector<8x32xf32>, vector<32x128xf32>, vector<8x128xf32> -> vector<8x128xf32>
    %329 = arith.addf %327, %328 : vector<8x128xf32>
    %c32_162 = arith.constant 32 : index
    %c0_163 = arith.constant 0 : index
    %330 = vector.load %arg26[%c32_162, %c0_163] : memref<128x128xf32, #tpu.memory_space<vmem>>, vector<8x128xf32>
    %331 = arith.addf %329, %330 : vector<8x128xf32>
    %332 = arith.negf %331 : vector<8x128xf32>
    %333 = math.exp %332 : vector<8x128xf32>
    %cst_164 = arith.constant 1.000000e+00 : f32
    %334 = vector.broadcast %cst_164 : f32 to vector<8x128xf32>
    %335 = arith.addf %334, %333 : vector<8x128xf32>
    %336 = arith.divf %334, %335 : vector<8x128xf32>
    %337 = vector.extract_strided_slice %336 {offsets = [0, 0], sizes = [8, 32], strides = [1, 1]} : vector<8x128xf32> to vector<8x32xf32>
    %338 = vector.extract_strided_slice %336 {offsets = [0, 32], sizes = [8, 32], strides = [1, 1]} : vector<8x128xf32> to vector<8x32xf32>
    %339 = vector.extract_strided_slice %336 {offsets = [0, 96], sizes = [8, 32], strides = [1, 1]} : vector<8x128xf32> to vector<8x32xf32>
    %340 = vector.extract_strided_slice %331 {offsets = [0, 64], sizes = [8, 32], strides = [1, 1]} : vector<8x128xf32> to vector<8x32xf32>
    %341 = math.tanh %340 : vector<8x32xf32>
    %342 = arith.mulf %338, %288 : vector<8x32xf32>
    %343 = arith.mulf %337, %341 : vector<8x32xf32>
    %344 = arith.addf %342, %343 : vector<8x32xf32>
    %345 = math.tanh %344 : vector<8x32xf32>
    %346 = arith.mulf %339, %345 : vector<8x32xf32>
    %c40 = arith.constant 40 : index
    %c0_165 = arith.constant 0 : index
    %347 = vector.load %arg1[%c40, %c0_165] : memref<128x8xf32, #tpu.memory_space<vmem>>, vector<8x8xf32>
    %c40_166 = arith.constant 40 : index
    %c0_167 = arith.constant 0 : index
    %348 = vector.load %arg2[%c40_166, %c0_167] : memref<128x8xf32, #tpu.memory_space<vmem>>, vector<8x8xf32>
    %c40_168 = arith.constant 40 : index
    %c0_169 = arith.constant 0 : index
    %349 = vector.load %arg27[%c40_168, %c0_169] : memref<128x8xf32, #tpu.memory_space<vmem>>, vector<8x8xf32>
    %c40_170 = arith.constant 40 : index
    %c0_171 = arith.constant 0 : index
    %350 = vector.load %arg24[%c40_170, %c0_171] : memref<128x32xf32, #tpu.memory_space<vmem>>, vector<8x32xf32>
    %351 = arith.mulf %346, %350 : vector<8x32xf32>
    %cst_172 = arith.constant dense<0.000000e+00> : vector<8x8xf32>
    %352 = tpu.matmul %351, %54, %cst_172 {dimension_numbers = #tpu.dot_dimension_numbers<[1], [0], [0], [1], [0, 0, 1, 1], [], []>} : vector<8x32xf32>, vector<32x8xf32>, vector<8x8xf32> -> vector<8x8xf32>
    %353 = arith.addf %352, %60 : vector<8x8xf32>
    %354 = arith.mulf %348, %347 : vector<8x8xf32>
    %cst_173 = arith.constant 1.000000e+00 : f32
    %355 = vector.broadcast %cst_173 : f32 to vector<8x8xf32>
    %356 = arith.subf %355, %348 : vector<8x8xf32>
    %357 = arith.mulf %356, %353 : vector<8x8xf32>
    %358 = arith.addf %354, %357 : vector<8x8xf32>
    %cst_174 = arith.constant dense<0.000000e+00> : vector<8x8xf32>
    %359 = tpu.matmul %358, %55, %cst_174 {dimension_numbers = #tpu.dot_dimension_numbers<[1], [0], [0], [1], [0, 0, 1, 1], [], []>} : vector<8x8xf32>, vector<8x8xf32>, vector<8x8xf32> -> vector<8x8xf32>
    %360 = arith.addf %359, %63 : vector<8x8xf32>
    %c40_175 = arith.constant 40 : index
    %c0_176 = arith.constant 0 : index
    %361 = vector.load %arg25[%c40_175, %c0_176] : memref<128x8xf32, #tpu.memory_space<vmem>>, vector<8x8xf32>
    %362 = arith.mulf %361, %360 : vector<8x8xf32>
    %cst_177 = arith.constant 1.000000e+00 : f32
    %363 = vector.broadcast %cst_177 : f32 to vector<8x8xf32>
    %364 = arith.subf %363, %361 : vector<8x8xf32>
    %365 = arith.mulf %364, %353 : vector<8x8xf32>
    %366 = arith.addf %362, %365 : vector<8x8xf32>
    %367 = arith.subf %347, %353 : vector<8x8xf32>
    %368 = math.absf %367 : vector<8x8xf32>
    %369 = arith.subf %347, %360 : vector<8x8xf32>
    %370 = math.absf %369 : vector<8x8xf32>
    %371 = arith.addf %368, %370 : vector<8x8xf32>
    %372 = arith.subf %347, %366 : vector<8x8xf32>
    %373 = math.absf %372 : vector<8x8xf32>
    %374 = arith.addf %371, %373 : vector<8x8xf32>
    %375 = arith.mulf %374, %349 : vector<8x8xf32>
    %376 = arith.addf %320, %375 : vector<8x8xf32>
    %377 = arith.mulf %348, %347 : vector<8x8xf32>
    %cst_178 = arith.constant 1.000000e+00 : f32
    %378 = vector.broadcast %cst_178 : f32 to vector<8x8xf32>
    %379 = arith.subf %378, %348 : vector<8x8xf32>
    %380 = arith.mulf %379, %366 : vector<8x8xf32>
    %381 = arith.addf %377, %380 : vector<8x8xf32>
    %c0_179 = arith.constant 0 : index
    %c40_180 = arith.constant 40 : index
    %382 = vector.load %arg19[%c0_179, %c40_180] : memref<8x128xf32, #tpu.memory_space<vmem>>, vector<8x8xf32>
    tpu.vector_store %arg19[%c0_179, %c40_180], %381 {strides = array<i32>} : memref<8x128xf32, #tpu.memory_space<vmem>>, vector<8x8xf32>,
    %cst_181 = arith.constant dense<0.000000e+00> : vector<8x128xf32>
    %383 = tpu.matmul %381, %56, %cst_181 {dimension_numbers = #tpu.dot_dimension_numbers<[1], [0], [0], [1], [0, 0, 1, 1], [], []>} : vector<8x8xf32>, vector<8x128xf32>, vector<8x128xf32> -> vector<8x128xf32>
    %cst_182 = arith.constant dense<0.000000e+00> : vector<8x128xf32>
    %384 = tpu.matmul %351, %57, %cst_182 {dimension_numbers = #tpu.dot_dimension_numbers<[1], [0], [0], [1], [0, 0, 1, 1], [], []>} : vector<8x32xf32>, vector<32x128xf32>, vector<8x128xf32> -> vector<8x128xf32>
    %385 = arith.addf %383, %384 : vector<8x128xf32>
    %c40_183 = arith.constant 40 : index
    %c0_184 = arith.constant 0 : index
    %386 = vector.load %arg26[%c40_183, %c0_184] : memref<128x128xf32, #tpu.memory_space<vmem>>, vector<8x128xf32>
    %387 = arith.addf %385, %386 : vector<8x128xf32>
    %388 = arith.negf %387 : vector<8x128xf32>
    %389 = math.exp %388 : vector<8x128xf32>
    %cst_185 = arith.constant 1.000000e+00 : f32
    %390 = vector.broadcast %cst_185 : f32 to vector<8x128xf32>
    %391 = arith.addf %390, %389 : vector<8x128xf32>
    %392 = arith.divf %390, %391 : vector<8x128xf32>
    %393 = vector.extract_strided_slice %392 {offsets = [0, 0], sizes = [8, 32], strides = [1, 1]} : vector<8x128xf32> to vector<8x32xf32>
    %394 = vector.extract_strided_slice %392 {offsets = [0, 32], sizes = [8, 32], strides = [1, 1]} : vector<8x128xf32> to vector<8x32xf32>
    %395 = vector.extract_strided_slice %392 {offsets = [0, 96], sizes = [8, 32], strides = [1, 1]} : vector<8x128xf32> to vector<8x32xf32>
    %396 = vector.extract_strided_slice %387 {offsets = [0, 64], sizes = [8, 32], strides = [1, 1]} : vector<8x128xf32> to vector<8x32xf32>
    %397 = math.tanh %396 : vector<8x32xf32>
    %398 = arith.mulf %394, %344 : vector<8x32xf32>
    %399 = arith.mulf %393, %397 : vector<8x32xf32>
    %400 = arith.addf %398, %399 : vector<8x32xf32>
    %401 = math.tanh %400 : vector<8x32xf32>
    %402 = arith.mulf %395, %401 : vector<8x32xf32>
    %c48 = arith.constant 48 : index
    %c0_186 = arith.constant 0 : index
    %403 = vector.load %arg1[%c48, %c0_186] : memref<128x8xf32, #tpu.memory_space<vmem>>, vector<8x8xf32>
    %c48_187 = arith.constant 48 : index
    %c0_188 = arith.constant 0 : index
    %404 = vector.load %arg2[%c48_187, %c0_188] : memref<128x8xf32, #tpu.memory_space<vmem>>, vector<8x8xf32>
    %c48_189 = arith.constant 48 : index
    %c0_190 = arith.constant 0 : index
    %405 = vector.load %arg27[%c48_189, %c0_190] : memref<128x8xf32, #tpu.memory_space<vmem>>, vector<8x8xf32>
    %c48_191 = arith.constant 48 : index
    %c0_192 = arith.constant 0 : index
    %406 = vector.load %arg24[%c48_191, %c0_192] : memref<128x32xf32, #tpu.memory_space<vmem>>, vector<8x32xf32>
    %407 = arith.mulf %402, %406 : vector<8x32xf32>
    %cst_193 = arith.constant dense<0.000000e+00> : vector<8x8xf32>
    %408 = tpu.matmul %407, %54, %cst_193 {dimension_numbers = #tpu.dot_dimension_numbers<[1], [0], [0], [1], [0, 0, 1, 1], [], []>} : vector<8x32xf32>, vector<32x8xf32>, vector<8x8xf32> -> vector<8x8xf32>
    %409 = arith.addf %408, %60 : vector<8x8xf32>
    %410 = arith.mulf %404, %403 : vector<8x8xf32>
    %cst_194 = arith.constant 1.000000e+00 : f32
    %411 = vector.broadcast %cst_194 : f32 to vector<8x8xf32>
    %412 = arith.subf %411, %404 : vector<8x8xf32>
    %413 = arith.mulf %412, %409 : vector<8x8xf32>
    %414 = arith.addf %410, %413 : vector<8x8xf32>
    %cst_195 = arith.constant dense<0.000000e+00> : vector<8x8xf32>
    %415 = tpu.matmul %414, %55, %cst_195 {dimension_numbers = #tpu.dot_dimension_numbers<[1], [0], [0], [1], [0, 0, 1, 1], [], []>} : vector<8x8xf32>, vector<8x8xf32>, vector<8x8xf32> -> vector<8x8xf32>
    %416 = arith.addf %415, %63 : vector<8x8xf32>
    %c48_196 = arith.constant 48 : index
    %c0_197 = arith.constant 0 : index
    %417 = vector.load %arg25[%c48_196, %c0_197] : memref<128x8xf32, #tpu.memory_space<vmem>>, vector<8x8xf32>
    %418 = arith.mulf %417, %416 : vector<8x8xf32>
    %cst_198 = arith.constant 1.000000e+00 : f32
    %419 = vector.broadcast %cst_198 : f32 to vector<8x8xf32>
    %420 = arith.subf %419, %417 : vector<8x8xf32>
    %421 = arith.mulf %420, %409 : vector<8x8xf32>
    %422 = arith.addf %418, %421 : vector<8x8xf32>
    %423 = arith.subf %403, %409 : vector<8x8xf32>
    %424 = math.absf %423 : vector<8x8xf32>
    %425 = arith.subf %403, %416 : vector<8x8xf32>
    %426 = math.absf %425 : vector<8x8xf32>
    %427 = arith.addf %424, %426 : vector<8x8xf32>
    %428 = arith.subf %403, %422 : vector<8x8xf32>
    %429 = math.absf %428 : vector<8x8xf32>
    %430 = arith.addf %427, %429 : vector<8x8xf32>
    %431 = arith.mulf %430, %405 : vector<8x8xf32>
    %432 = arith.addf %376, %431 : vector<8x8xf32>
    %433 = arith.mulf %404, %403 : vector<8x8xf32>
    %cst_199 = arith.constant 1.000000e+00 : f32
    %434 = vector.broadcast %cst_199 : f32 to vector<8x8xf32>
    %435 = arith.subf %434, %404 : vector<8x8xf32>
    %436 = arith.mulf %435, %422 : vector<8x8xf32>
    %437 = arith.addf %433, %436 : vector<8x8xf32>
    %c0_200 = arith.constant 0 : index
    %c48_201 = arith.constant 48 : index
    %438 = vector.load %arg19[%c0_200, %c48_201] : memref<8x128xf32, #tpu.memory_space<vmem>>, vector<8x8xf32>
    tpu.vector_store %arg19[%c0_200, %c48_201], %437 {strides = array<i32>} : memref<8x128xf32, #tpu.memory_space<vmem>>, vector<8x8xf32>,
    %cst_202 = arith.constant dense<0.000000e+00> : vector<8x128xf32>
    %439 = tpu.matmul %437, %56, %cst_202 {dimension_numbers = #tpu.dot_dimension_numbers<[1], [0], [0], [1], [0, 0, 1, 1], [], []>} : vector<8x8xf32>, vector<8x128xf32>, vector<8x128xf32> -> vector<8x128xf32>
    %cst_203 = arith.constant dense<0.000000e+00> : vector<8x128xf32>
    %440 = tpu.matmul %407, %57, %cst_203 {dimension_numbers = #tpu.dot_dimension_numbers<[1], [0], [0], [1], [0, 0, 1, 1], [], []>} : vector<8x32xf32>, vector<32x128xf32>, vector<8x128xf32> -> vector<8x128xf32>
    %441 = arith.addf %439, %440 : vector<8x128xf32>
    %c48_204 = arith.constant 48 : index
    %c0_205 = arith.constant 0 : index
    %442 = vector.load %arg26[%c48_204, %c0_205] : memref<128x128xf32, #tpu.memory_space<vmem>>, vector<8x128xf32>
    %443 = arith.addf %441, %442 : vector<8x128xf32>
    %444 = arith.negf %443 : vector<8x128xf32>
    %445 = math.exp %444 : vector<8x128xf32>
    %cst_206 = arith.constant 1.000000e+00 : f32
    %446 = vector.broadcast %cst_206 : f32 to vector<8x128xf32>
    %447 = arith.addf %446, %445 : vector<8x128xf32>
    %448 = arith.divf %446, %447 : vector<8x128xf32>
    %449 = vector.extract_strided_slice %448 {offsets = [0, 0], sizes = [8, 32], strides = [1, 1]} : vector<8x128xf32> to vector<8x32xf32>
    %450 = vector.extract_strided_slice %448 {offsets = [0, 32], sizes = [8, 32], strides = [1, 1]} : vector<8x128xf32> to vector<8x32xf32>
    %451 = vector.extract_strided_slice %448 {offsets = [0, 96], sizes = [8, 32], strides = [1, 1]} : vector<8x128xf32> to vector<8x32xf32>
    %452 = vector.extract_strided_slice %443 {offsets = [0, 64], sizes = [8, 32], strides = [1, 1]} : vector<8x128xf32> to vector<8x32xf32>
    %453 = math.tanh %452 : vector<8x32xf32>
    %454 = arith.mulf %450, %400 : vector<8x32xf32>
    %455 = arith.mulf %449, %453 : vector<8x32xf32>
    %456 = arith.addf %454, %455 : vector<8x32xf32>
    %457 = math.tanh %456 : vector<8x32xf32>
    %458 = arith.mulf %451, %457 : vector<8x32xf32>
    %c56 = arith.constant 56 : index
    %c0_207 = arith.constant 0 : index
    %459 = vector.load %arg1[%c56, %c0_207] : memref<128x8xf32, #tpu.memory_space<vmem>>, vector<8x8xf32>
    %c56_208 = arith.constant 56 : index
    %c0_209 = arith.constant 0 : index
    %460 = vector.load %arg2[%c56_208, %c0_209] : memref<128x8xf32, #tpu.memory_space<vmem>>, vector<8x8xf32>
    %c56_210 = arith.constant 56 : index
    %c0_211 = arith.constant 0 : index
    %461 = vector.load %arg27[%c56_210, %c0_211] : memref<128x8xf32, #tpu.memory_space<vmem>>, vector<8x8xf32>
    %c56_212 = arith.constant 56 : index
    %c0_213 = arith.constant 0 : index
    %462 = vector.load %arg24[%c56_212, %c0_213] : memref<128x32xf32, #tpu.memory_space<vmem>>, vector<8x32xf32>
    %463 = arith.mulf %458, %462 : vector<8x32xf32>
    %cst_214 = arith.constant dense<0.000000e+00> : vector<8x8xf32>
    %464 = tpu.matmul %463, %54, %cst_214 {dimension_numbers = #tpu.dot_dimension_numbers<[1], [0], [0], [1], [0, 0, 1, 1], [], []>} : vector<8x32xf32>, vector<32x8xf32>, vector<8x8xf32> -> vector<8x8xf32>
    %465 = arith.addf %464, %60 : vector<8x8xf32>
    %466 = arith.mulf %460, %459 : vector<8x8xf32>
    %cst_215 = arith.constant 1.000000e+00 : f32
    %467 = vector.broadcast %cst_215 : f32 to vector<8x8xf32>
    %468 = arith.subf %467, %460 : vector<8x8xf32>
    %469 = arith.mulf %468, %465 : vector<8x8xf32>
    %470 = arith.addf %466, %469 : vector<8x8xf32>
    %cst_216 = arith.constant dense<0.000000e+00> : vector<8x8xf32>
    %471 = tpu.matmul %470, %55, %cst_216 {dimension_numbers = #tpu.dot_dimension_numbers<[1], [0], [0], [1], [0, 0, 1, 1], [], []>} : vector<8x8xf32>, vector<8x8xf32>, vector<8x8xf32> -> vector<8x8xf32>
    %472 = arith.addf %471, %63 : vector<8x8xf32>
    %c56_217 = arith.constant 56 : index
    %c0_218 = arith.constant 0 : index
    %473 = vector.load %arg25[%c56_217, %c0_218] : memref<128x8xf32, #tpu.memory_space<vmem>>, vector<8x8xf32>
    %474 = arith.mulf %473, %472 : vector<8x8xf32>
    %cst_219 = arith.constant 1.000000e+00 : f32
    %475 = vector.broadcast %cst_219 : f32 to vector<8x8xf32>
    %476 = arith.subf %475, %473 : vector<8x8xf32>
    %477 = arith.mulf %476, %465 : vector<8x8xf32>
    %478 = arith.addf %474, %477 : vector<8x8xf32>
    %479 = arith.subf %459, %465 : vector<8x8xf32>
    %480 = math.absf %479 : vector<8x8xf32>
    %481 = arith.subf %459, %472 : vector<8x8xf32>
    %482 = math.absf %481 : vector<8x8xf32>
    %483 = arith.addf %480, %482 : vector<8x8xf32>
    %484 = arith.subf %459, %478 : vector<8x8xf32>
    %485 = math.absf %484 : vector<8x8xf32>
    %486 = arith.addf %483, %485 : vector<8x8xf32>
    %487 = arith.mulf %486, %461 : vector<8x8xf32>
    %488 = arith.addf %432, %487 : vector<8x8xf32>
    %489 = arith.mulf %460, %459 : vector<8x8xf32>
    %cst_220 = arith.constant 1.000000e+00 : f32
    %490 = vector.broadcast %cst_220 : f32 to vector<8x8xf32>
    %491 = arith.subf %490, %460 : vector<8x8xf32>
    %492 = arith.mulf %491, %478 : vector<8x8xf32>
    %493 = arith.addf %489, %492 : vector<8x8xf32>
    %c0_221 = arith.constant 0 : index
    %c56_222 = arith.constant 56 : index
    %494 = vector.load %arg19[%c0_221, %c56_222] : memref<8x128xf32, #tpu.memory_space<vmem>>, vector<8x8xf32>
    tpu.vector_store %arg19[%c0_221, %c56_222], %493 {strides = array<i32>} : memref<8x128xf32, #tpu.memory_space<vmem>>, vector<8x8xf32>,
    %cst_223 = arith.constant dense<0.000000e+00> : vector<8x128xf32>
    %495 = tpu.matmul %493, %56, %cst_223 {dimension_numbers = #tpu.dot_dimension_numbers<[1], [0], [0], [1], [0, 0, 1, 1], [], []>} : vector<8x8xf32>, vector<8x128xf32>, vector<8x128xf32> -> vector<8x128xf32>
    %cst_224 = arith.constant dense<0.000000e+00> : vector<8x128xf32>
    %496 = tpu.matmul %463, %57, %cst_224 {dimension_numbers = #tpu.dot_dimension_numbers<[1], [0], [0], [1], [0, 0, 1, 1], [], []>} : vector<8x32xf32>, vector<32x128xf32>, vector<8x128xf32> -> vector<8x128xf32>
    %497 = arith.addf %495, %496 : vector<8x128xf32>
    %c56_225 = arith.constant 56 : index
    %c0_226 = arith.constant 0 : index
    %498 = vector.load %arg26[%c56_225, %c0_226] : memref<128x128xf32, #tpu.memory_space<vmem>>, vector<8x128xf32>
    %499 = arith.addf %497, %498 : vector<8x128xf32>
    %500 = arith.negf %499 : vector<8x128xf32>
    %501 = math.exp %500 : vector<8x128xf32>
    %cst_227 = arith.constant 1.000000e+00 : f32
    %502 = vector.broadcast %cst_227 : f32 to vector<8x128xf32>
    %503 = arith.addf %502, %501 : vector<8x128xf32>
    %504 = arith.divf %502, %503 : vector<8x128xf32>
    %505 = vector.extract_strided_slice %504 {offsets = [0, 0], sizes = [8, 32], strides = [1, 1]} : vector<8x128xf32> to vector<8x32xf32>
    %506 = vector.extract_strided_slice %504 {offsets = [0, 32], sizes = [8, 32], strides = [1, 1]} : vector<8x128xf32> to vector<8x32xf32>
    %507 = vector.extract_strided_slice %504 {offsets = [0, 96], sizes = [8, 32], strides = [1, 1]} : vector<8x128xf32> to vector<8x32xf32>
    %508 = vector.extract_strided_slice %499 {offsets = [0, 64], sizes = [8, 32], strides = [1, 1]} : vector<8x128xf32> to vector<8x32xf32>
    %509 = math.tanh %508 : vector<8x32xf32>
    %510 = arith.mulf %506, %456 : vector<8x32xf32>
    %511 = arith.mulf %505, %509 : vector<8x32xf32>
    %512 = arith.addf %510, %511 : vector<8x32xf32>
    %513 = math.tanh %512 : vector<8x32xf32>
    %514 = arith.mulf %507, %513 : vector<8x32xf32>
    %c64 = arith.constant 64 : index
    %c0_228 = arith.constant 0 : index
    %515 = vector.load %arg1[%c64, %c0_228] : memref<128x8xf32, #tpu.memory_space<vmem>>, vector<8x8xf32>
    %c64_229 = arith.constant 64 : index
    %c0_230 = arith.constant 0 : index
    %516 = vector.load %arg2[%c64_229, %c0_230] : memref<128x8xf32, #tpu.memory_space<vmem>>, vector<8x8xf32>
    %c64_231 = arith.constant 64 : index
    %c0_232 = arith.constant 0 : index
    %517 = vector.load %arg27[%c64_231, %c0_232] : memref<128x8xf32, #tpu.memory_space<vmem>>, vector<8x8xf32>
    %c64_233 = arith.constant 64 : index
    %c0_234 = arith.constant 0 : index
    %518 = vector.load %arg24[%c64_233, %c0_234] : memref<128x32xf32, #tpu.memory_space<vmem>>, vector<8x32xf32>
    %519 = arith.mulf %514, %518 : vector<8x32xf32>
    %cst_235 = arith.constant dense<0.000000e+00> : vector<8x8xf32>
    %520 = tpu.matmul %519, %54, %cst_235 {dimension_numbers = #tpu.dot_dimension_numbers<[1], [0], [0], [1], [0, 0, 1, 1], [], []>} : vector<8x32xf32>, vector<32x8xf32>, vector<8x8xf32> -> vector<8x8xf32>
    %521 = arith.addf %520, %60 : vector<8x8xf32>
    %522 = arith.mulf %516, %515 : vector<8x8xf32>
    %cst_236 = arith.constant 1.000000e+00 : f32
    %523 = vector.broadcast %cst_236 : f32 to vector<8x8xf32>
    %524 = arith.subf %523, %516 : vector<8x8xf32>
    %525 = arith.mulf %524, %521 : vector<8x8xf32>
    %526 = arith.addf %522, %525 : vector<8x8xf32>
    %cst_237 = arith.constant dense<0.000000e+00> : vector<8x8xf32>
    %527 = tpu.matmul %526, %55, %cst_237 {dimension_numbers = #tpu.dot_dimension_numbers<[1], [0], [0], [1], [0, 0, 1, 1], [], []>} : vector<8x8xf32>, vector<8x8xf32>, vector<8x8xf32> -> vector<8x8xf32>
    %528 = arith.addf %527, %63 : vector<8x8xf32>
    %c64_238 = arith.constant 64 : index
    %c0_239 = arith.constant 0 : index
    %529 = vector.load %arg25[%c64_238, %c0_239] : memref<128x8xf32, #tpu.memory_space<vmem>>, vector<8x8xf32>
    %530 = arith.mulf %529, %528 : vector<8x8xf32>
    %cst_240 = arith.constant 1.000000e+00 : f32
    %531 = vector.broadcast %cst_240 : f32 to vector<8x8xf32>
    %532 = arith.subf %531, %529 : vector<8x8xf32>
    %533 = arith.mulf %532, %521 : vector<8x8xf32>
    %534 = arith.addf %530, %533 : vector<8x8xf32>
    %535 = arith.subf %515, %521 : vector<8x8xf32>
    %536 = math.absf %535 : vector<8x8xf32>
    %537 = arith.subf %515, %528 : vector<8x8xf32>
    %538 = math.absf %537 : vector<8x8xf32>
    %539 = arith.addf %536, %538 : vector<8x8xf32>
    %540 = arith.subf %515, %534 : vector<8x8xf32>
    %541 = math.absf %540 : vector<8x8xf32>
    %542 = arith.addf %539, %541 : vector<8x8xf32>
    %543 = arith.mulf %542, %517 : vector<8x8xf32>
    %544 = arith.addf %488, %543 : vector<8x8xf32>
    %545 = arith.mulf %516, %515 : vector<8x8xf32>
    %cst_241 = arith.constant 1.000000e+00 : f32
    %546 = vector.broadcast %cst_241 : f32 to vector<8x8xf32>
    %547 = arith.subf %546, %516 : vector<8x8xf32>
    %548 = arith.mulf %547, %534 : vector<8x8xf32>
    %549 = arith.addf %545, %548 : vector<8x8xf32>
    %c0_242 = arith.constant 0 : index
    %c64_243 = arith.constant 64 : index
    %550 = vector.load %arg19[%c0_242, %c64_243] : memref<8x128xf32, #tpu.memory_space<vmem>>, vector<8x8xf32>
    tpu.vector_store %arg19[%c0_242, %c64_243], %549 {strides = array<i32>} : memref<8x128xf32, #tpu.memory_space<vmem>>, vector<8x8xf32>,
    %cst_244 = arith.constant dense<0.000000e+00> : vector<8x128xf32>
    %551 = tpu.matmul %549, %56, %cst_244 {dimension_numbers = #tpu.dot_dimension_numbers<[1], [0], [0], [1], [0, 0, 1, 1], [], []>} : vector<8x8xf32>, vector<8x128xf32>, vector<8x128xf32> -> vector<8x128xf32>
    %cst_245 = arith.constant dense<0.000000e+00> : vector<8x128xf32>
    %552 = tpu.matmul %519, %57, %cst_245 {dimension_numbers = #tpu.dot_dimension_numbers<[1], [0], [0], [1], [0, 0, 1, 1], [], []>} : vector<8x32xf32>, vector<32x128xf32>, vector<8x128xf32> -> vector<8x128xf32>
    %553 = arith.addf %551, %552 : vector<8x128xf32>
    %c64_246 = arith.constant 64 : index
    %c0_247 = arith.constant 0 : index
    %554 = vector.load %arg26[%c64_246, %c0_247] : memref<128x128xf32, #tpu.memory_space<vmem>>, vector<8x128xf32>
    %555 = arith.addf %553, %554 : vector<8x128xf32>
    %556 = arith.negf %555 : vector<8x128xf32>
    %557 = math.exp %556 : vector<8x128xf32>
    %cst_248 = arith.constant 1.000000e+00 : f32
    %558 = vector.broadcast %cst_248 : f32 to vector<8x128xf32>
    %559 = arith.addf %558, %557 : vector<8x128xf32>
    %560 = arith.divf %558, %559 : vector<8x128xf32>
    %561 = vector.extract_strided_slice %560 {offsets = [0, 0], sizes = [8, 32], strides = [1, 1]} : vector<8x128xf32> to vector<8x32xf32>
    %562 = vector.extract_strided_slice %560 {offsets = [0, 32], sizes = [8, 32], strides = [1, 1]} : vector<8x128xf32> to vector<8x32xf32>
    %563 = vector.extract_strided_slice %560 {offsets = [0, 96], sizes = [8, 32], strides = [1, 1]} : vector<8x128xf32> to vector<8x32xf32>
    %564 = vector.extract_strided_slice %555 {offsets = [0, 64], sizes = [8, 32], strides = [1, 1]} : vector<8x128xf32> to vector<8x32xf32>
    %565 = math.tanh %564 : vector<8x32xf32>
    %566 = arith.mulf %562, %512 : vector<8x32xf32>
    %567 = arith.mulf %561, %565 : vector<8x32xf32>
    %568 = arith.addf %566, %567 : vector<8x32xf32>
    %569 = math.tanh %568 : vector<8x32xf32>
    %570 = arith.mulf %563, %569 : vector<8x32xf32>
    %c72 = arith.constant 72 : index
    %c0_249 = arith.constant 0 : index
    %571 = vector.load %arg1[%c72, %c0_249] : memref<128x8xf32, #tpu.memory_space<vmem>>, vector<8x8xf32>
    %c72_250 = arith.constant 72 : index
    %c0_251 = arith.constant 0 : index
    %572 = vector.load %arg2[%c72_250, %c0_251] : memref<128x8xf32, #tpu.memory_space<vmem>>, vector<8x8xf32>
    %c72_252 = arith.constant 72 : index
    %c0_253 = arith.constant 0 : index
    %573 = vector.load %arg27[%c72_252, %c0_253] : memref<128x8xf32, #tpu.memory_space<vmem>>, vector<8x8xf32>
    %c72_254 = arith.constant 72 : index
    %c0_255 = arith.constant 0 : index
    %574 = vector.load %arg24[%c72_254, %c0_255] : memref<128x32xf32, #tpu.memory_space<vmem>>, vector<8x32xf32>
    %575 = arith.mulf %570, %574 : vector<8x32xf32>
    %cst_256 = arith.constant dense<0.000000e+00> : vector<8x8xf32>
    %576 = tpu.matmul %575, %54, %cst_256 {dimension_numbers = #tpu.dot_dimension_numbers<[1], [0], [0], [1], [0, 0, 1, 1], [], []>} : vector<8x32xf32>, vector<32x8xf32>, vector<8x8xf32> -> vector<8x8xf32>
    %577 = arith.addf %576, %60 : vector<8x8xf32>
    %578 = arith.mulf %572, %571 : vector<8x8xf32>
    %cst_257 = arith.constant 1.000000e+00 : f32
    %579 = vector.broadcast %cst_257 : f32 to vector<8x8xf32>
    %580 = arith.subf %579, %572 : vector<8x8xf32>
    %581 = arith.mulf %580, %577 : vector<8x8xf32>
    %582 = arith.addf %578, %581 : vector<8x8xf32>
    %cst_258 = arith.constant dense<0.000000e+00> : vector<8x8xf32>
    %583 = tpu.matmul %582, %55, %cst_258 {dimension_numbers = #tpu.dot_dimension_numbers<[1], [0], [0], [1], [0, 0, 1, 1], [], []>} : vector<8x8xf32>, vector<8x8xf32>, vector<8x8xf32> -> vector<8x8xf32>
    %584 = arith.addf %583, %63 : vector<8x8xf32>
    %c72_259 = arith.constant 72 : index
    %c0_260 = arith.constant 0 : index
    %585 = vector.load %arg25[%c72_259, %c0_260] : memref<128x8xf32, #tpu.memory_space<vmem>>, vector<8x8xf32>
    %586 = arith.mulf %585, %584 : vector<8x8xf32>
    %cst_261 = arith.constant 1.000000e+00 : f32
    %587 = vector.broadcast %cst_261 : f32 to vector<8x8xf32>
    %588 = arith.subf %587, %585 : vector<8x8xf32>
    %589 = arith.mulf %588, %577 : vector<8x8xf32>
    %590 = arith.addf %586, %589 : vector<8x8xf32>
    %591 = arith.subf %571, %577 : vector<8x8xf32>
    %592 = math.absf %591 : vector<8x8xf32>
    %593 = arith.subf %571, %584 : vector<8x8xf32>
    %594 = math.absf %593 : vector<8x8xf32>
    %595 = arith.addf %592, %594 : vector<8x8xf32>
    %596 = arith.subf %571, %590 : vector<8x8xf32>
    %597 = math.absf %596 : vector<8x8xf32>
    %598 = arith.addf %595, %597 : vector<8x8xf32>
    %599 = arith.mulf %598, %573 : vector<8x8xf32>
    %600 = arith.addf %544, %599 : vector<8x8xf32>
    %601 = arith.mulf %572, %571 : vector<8x8xf32>
    %cst_262 = arith.constant 1.000000e+00 : f32
    %602 = vector.broadcast %cst_262 : f32 to vector<8x8xf32>
    %603 = arith.subf %602, %572 : vector<8x8xf32>
    %604 = arith.mulf %603, %590 : vector<8x8xf32>
    %605 = arith.addf %601, %604 : vector<8x8xf32>
    %c0_263 = arith.constant 0 : index
    %c72_264 = arith.constant 72 : index
    %606 = vector.load %arg19[%c0_263, %c72_264] : memref<8x128xf32, #tpu.memory_space<vmem>>, vector<8x8xf32>
    tpu.vector_store %arg19[%c0_263, %c72_264], %605 {strides = array<i32>} : memref<8x128xf32, #tpu.memory_space<vmem>>, vector<8x8xf32>,
    %cst_265 = arith.constant dense<0.000000e+00> : vector<8x128xf32>
    %607 = tpu.matmul %605, %56, %cst_265 {dimension_numbers = #tpu.dot_dimension_numbers<[1], [0], [0], [1], [0, 0, 1, 1], [], []>} : vector<8x8xf32>, vector<8x128xf32>, vector<8x128xf32> -> vector<8x128xf32>
    %cst_266 = arith.constant dense<0.000000e+00> : vector<8x128xf32>
    %608 = tpu.matmul %575, %57, %cst_266 {dimension_numbers = #tpu.dot_dimension_numbers<[1], [0], [0], [1], [0, 0, 1, 1], [], []>} : vector<8x32xf32>, vector<32x128xf32>, vector<8x128xf32> -> vector<8x128xf32>
    %609 = arith.addf %607, %608 : vector<8x128xf32>
    %c72_267 = arith.constant 72 : index
    %c0_268 = arith.constant 0 : index
    %610 = vector.load %arg26[%c72_267, %c0_268] : memref<128x128xf32, #tpu.memory_space<vmem>>, vector<8x128xf32>
    %611 = arith.addf %609, %610 : vector<8x128xf32>
    %612 = arith.negf %611 : vector<8x128xf32>
    %613 = math.exp %612 : vector<8x128xf32>
    %cst_269 = arith.constant 1.000000e+00 : f32
    %614 = vector.broadcast %cst_269 : f32 to vector<8x128xf32>
    %615 = arith.addf %614, %613 : vector<8x128xf32>
    %616 = arith.divf %614, %615 : vector<8x128xf32>
    %617 = vector.extract_strided_slice %616 {offsets = [0, 0], sizes = [8, 32], strides = [1, 1]} : vector<8x128xf32> to vector<8x32xf32>
    %618 = vector.extract_strided_slice %616 {offsets = [0, 32], sizes = [8, 32], strides = [1, 1]} : vector<8x128xf32> to vector<8x32xf32>
    %619 = vector.extract_strided_slice %616 {offsets = [0, 96], sizes = [8, 32], strides = [1, 1]} : vector<8x128xf32> to vector<8x32xf32>
    %620 = vector.extract_strided_slice %611 {offsets = [0, 64], sizes = [8, 32], strides = [1, 1]} : vector<8x128xf32> to vector<8x32xf32>
    %621 = math.tanh %620 : vector<8x32xf32>
    %622 = arith.mulf %618, %568 : vector<8x32xf32>
    %623 = arith.mulf %617, %621 : vector<8x32xf32>
    %624 = arith.addf %622, %623 : vector<8x32xf32>
    %625 = math.tanh %624 : vector<8x32xf32>
    %626 = arith.mulf %619, %625 : vector<8x32xf32>
    %c80 = arith.constant 80 : index
    %c0_270 = arith.constant 0 : index
    %627 = vector.load %arg1[%c80, %c0_270] : memref<128x8xf32, #tpu.memory_space<vmem>>, vector<8x8xf32>
    %c80_271 = arith.constant 80 : index
    %c0_272 = arith.constant 0 : index
    %628 = vector.load %arg2[%c80_271, %c0_272] : memref<128x8xf32, #tpu.memory_space<vmem>>, vector<8x8xf32>
    %c80_273 = arith.constant 80 : index
    %c0_274 = arith.constant 0 : index
    %629 = vector.load %arg27[%c80_273, %c0_274] : memref<128x8xf32, #tpu.memory_space<vmem>>, vector<8x8xf32>
    %c80_275 = arith.constant 80 : index
    %c0_276 = arith.constant 0 : index
    %630 = vector.load %arg24[%c80_275, %c0_276] : memref<128x32xf32, #tpu.memory_space<vmem>>, vector<8x32xf32>
    %631 = arith.mulf %626, %630 : vector<8x32xf32>
    %cst_277 = arith.constant dense<0.000000e+00> : vector<8x8xf32>
    %632 = tpu.matmul %631, %54, %cst_277 {dimension_numbers = #tpu.dot_dimension_numbers<[1], [0], [0], [1], [0, 0, 1, 1], [], []>} : vector<8x32xf32>, vector<32x8xf32>, vector<8x8xf32> -> vector<8x8xf32>
    %633 = arith.addf %632, %60 : vector<8x8xf32>
    %634 = arith.mulf %628, %627 : vector<8x8xf32>
    %cst_278 = arith.constant 1.000000e+00 : f32
    %635 = vector.broadcast %cst_278 : f32 to vector<8x8xf32>
    %636 = arith.subf %635, %628 : vector<8x8xf32>
    %637 = arith.mulf %636, %633 : vector<8x8xf32>
    %638 = arith.addf %634, %637 : vector<8x8xf32>
    %cst_279 = arith.constant dense<0.000000e+00> : vector<8x8xf32>
    %639 = tpu.matmul %638, %55, %cst_279 {dimension_numbers = #tpu.dot_dimension_numbers<[1], [0], [0], [1], [0, 0, 1, 1], [], []>} : vector<8x8xf32>, vector<8x8xf32>, vector<8x8xf32> -> vector<8x8xf32>
    %640 = arith.addf %639, %63 : vector<8x8xf32>
    %c80_280 = arith.constant 80 : index
    %c0_281 = arith.constant 0 : index
    %641 = vector.load %arg25[%c80_280, %c0_281] : memref<128x8xf32, #tpu.memory_space<vmem>>, vector<8x8xf32>
    %642 = arith.mulf %641, %640 : vector<8x8xf32>
    %cst_282 = arith.constant 1.000000e+00 : f32
    %643 = vector.broadcast %cst_282 : f32 to vector<8x8xf32>
    %644 = arith.subf %643, %641 : vector<8x8xf32>
    %645 = arith.mulf %644, %633 : vector<8x8xf32>
    %646 = arith.addf %642, %645 : vector<8x8xf32>
    %647 = arith.subf %627, %633 : vector<8x8xf32>
    %648 = math.absf %647 : vector<8x8xf32>
    %649 = arith.subf %627, %640 : vector<8x8xf32>
    %650 = math.absf %649 : vector<8x8xf32>
    %651 = arith.addf %648, %650 : vector<8x8xf32>
    %652 = arith.subf %627, %646 : vector<8x8xf32>
    %653 = math.absf %652 : vector<8x8xf32>
    %654 = arith.addf %651, %653 : vector<8x8xf32>
    %655 = arith.mulf %654, %629 : vector<8x8xf32>
    %656 = arith.addf %600, %655 : vector<8x8xf32>
    %657 = arith.mulf %628, %627 : vector<8x8xf32>
    %cst_283 = arith.constant 1.000000e+00 : f32
    %658 = vector.broadcast %cst_283 : f32 to vector<8x8xf32>
    %659 = arith.subf %658, %628 : vector<8x8xf32>
    %660 = arith.mulf %659, %646 : vector<8x8xf32>
    %661 = arith.addf %657, %660 : vector<8x8xf32>
    %c0_284 = arith.constant 0 : index
    %c80_285 = arith.constant 80 : index
    %662 = vector.load %arg19[%c0_284, %c80_285] : memref<8x128xf32, #tpu.memory_space<vmem>>, vector<8x8xf32>
    tpu.vector_store %arg19[%c0_284, %c80_285], %661 {strides = array<i32>} : memref<8x128xf32, #tpu.memory_space<vmem>>, vector<8x8xf32>,
    %cst_286 = arith.constant dense<0.000000e+00> : vector<8x128xf32>
    %663 = tpu.matmul %661, %56, %cst_286 {dimension_numbers = #tpu.dot_dimension_numbers<[1], [0], [0], [1], [0, 0, 1, 1], [], []>} : vector<8x8xf32>, vector<8x128xf32>, vector<8x128xf32> -> vector<8x128xf32>
    %cst_287 = arith.constant dense<0.000000e+00> : vector<8x128xf32>
    %664 = tpu.matmul %631, %57, %cst_287 {dimension_numbers = #tpu.dot_dimension_numbers<[1], [0], [0], [1], [0, 0, 1, 1], [], []>} : vector<8x32xf32>, vector<32x128xf32>, vector<8x128xf32> -> vector<8x128xf32>
    %665 = arith.addf %663, %664 : vector<8x128xf32>
    %c80_288 = arith.constant 80 : index
    %c0_289 = arith.constant 0 : index
    %666 = vector.load %arg26[%c80_288, %c0_289] : memref<128x128xf32, #tpu.memory_space<vmem>>, vector<8x128xf32>
    %667 = arith.addf %665, %666 : vector<8x128xf32>
    %668 = arith.negf %667 : vector<8x128xf32>
    %669 = math.exp %668 : vector<8x128xf32>
    %cst_290 = arith.constant 1.000000e+00 : f32
    %670 = vector.broadcast %cst_290 : f32 to vector<8x128xf32>
    %671 = arith.addf %670, %669 : vector<8x128xf32>
    %672 = arith.divf %670, %671 : vector<8x128xf32>
    %673 = vector.extract_strided_slice %672 {offsets = [0, 0], sizes = [8, 32], strides = [1, 1]} : vector<8x128xf32> to vector<8x32xf32>
    %674 = vector.extract_strided_slice %672 {offsets = [0, 32], sizes = [8, 32], strides = [1, 1]} : vector<8x128xf32> to vector<8x32xf32>
    %675 = vector.extract_strided_slice %672 {offsets = [0, 96], sizes = [8, 32], strides = [1, 1]} : vector<8x128xf32> to vector<8x32xf32>
    %676 = vector.extract_strided_slice %667 {offsets = [0, 64], sizes = [8, 32], strides = [1, 1]} : vector<8x128xf32> to vector<8x32xf32>
    %677 = math.tanh %676 : vector<8x32xf32>
    %678 = arith.mulf %674, %624 : vector<8x32xf32>
    %679 = arith.mulf %673, %677 : vector<8x32xf32>
    %680 = arith.addf %678, %679 : vector<8x32xf32>
    %681 = math.tanh %680 : vector<8x32xf32>
    %682 = arith.mulf %675, %681 : vector<8x32xf32>
    %c88 = arith.constant 88 : index
    %c0_291 = arith.constant 0 : index
    %683 = vector.load %arg1[%c88, %c0_291] : memref<128x8xf32, #tpu.memory_space<vmem>>, vector<8x8xf32>
    %c88_292 = arith.constant 88 : index
    %c0_293 = arith.constant 0 : index
    %684 = vector.load %arg2[%c88_292, %c0_293] : memref<128x8xf32, #tpu.memory_space<vmem>>, vector<8x8xf32>
    %c88_294 = arith.constant 88 : index
    %c0_295 = arith.constant 0 : index
    %685 = vector.load %arg27[%c88_294, %c0_295] : memref<128x8xf32, #tpu.memory_space<vmem>>, vector<8x8xf32>
    %c88_296 = arith.constant 88 : index
    %c0_297 = arith.constant 0 : index
    %686 = vector.load %arg24[%c88_296, %c0_297] : memref<128x32xf32, #tpu.memory_space<vmem>>, vector<8x32xf32>
    %687 = arith.mulf %682, %686 : vector<8x32xf32>
    %cst_298 = arith.constant dense<0.000000e+00> : vector<8x8xf32>
    %688 = tpu.matmul %687, %54, %cst_298 {dimension_numbers = #tpu.dot_dimension_numbers<[1], [0], [0], [1], [0, 0, 1, 1], [], []>} : vector<8x32xf32>, vector<32x8xf32>, vector<8x8xf32> -> vector<8x8xf32>
    %689 = arith.addf %688, %60 : vector<8x8xf32>
    %690 = arith.mulf %684, %683 : vector<8x8xf32>
    %cst_299 = arith.constant 1.000000e+00 : f32
    %691 = vector.broadcast %cst_299 : f32 to vector<8x8xf32>
    %692 = arith.subf %691, %684 : vector<8x8xf32>
    %693 = arith.mulf %692, %689 : vector<8x8xf32>
    %694 = arith.addf %690, %693 : vector<8x8xf32>
    %cst_300 = arith.constant dense<0.000000e+00> : vector<8x8xf32>
    %695 = tpu.matmul %694, %55, %cst_300 {dimension_numbers = #tpu.dot_dimension_numbers<[1], [0], [0], [1], [0, 0, 1, 1], [], []>} : vector<8x8xf32>, vector<8x8xf32>, vector<8x8xf32> -> vector<8x8xf32>
    %696 = arith.addf %695, %63 : vector<8x8xf32>
    %c88_301 = arith.constant 88 : index
    %c0_302 = arith.constant 0 : index
    %697 = vector.load %arg25[%c88_301, %c0_302] : memref<128x8xf32, #tpu.memory_space<vmem>>, vector<8x8xf32>
    %698 = arith.mulf %697, %696 : vector<8x8xf32>
    %cst_303 = arith.constant 1.000000e+00 : f32
    %699 = vector.broadcast %cst_303 : f32 to vector<8x8xf32>
    %700 = arith.subf %699, %697 : vector<8x8xf32>
    %701 = arith.mulf %700, %689 : vector<8x8xf32>
    %702 = arith.addf %698, %701 : vector<8x8xf32>
    %703 = arith.subf %683, %689 : vector<8x8xf32>
    %704 = math.absf %703 : vector<8x8xf32>
    %705 = arith.subf %683, %696 : vector<8x8xf32>
    %706 = math.absf %705 : vector<8x8xf32>
    %707 = arith.addf %704, %706 : vector<8x8xf32>
    %708 = arith.subf %683, %702 : vector<8x8xf32>
    %709 = math.absf %708 : vector<8x8xf32>
    %710 = arith.addf %707, %709 : vector<8x8xf32>
    %711 = arith.mulf %710, %685 : vector<8x8xf32>
    %712 = arith.addf %656, %711 : vector<8x8xf32>
    %713 = arith.mulf %684, %683 : vector<8x8xf32>
    %cst_304 = arith.constant 1.000000e+00 : f32
    %714 = vector.broadcast %cst_304 : f32 to vector<8x8xf32>
    %715 = arith.subf %714, %684 : vector<8x8xf32>
    %716 = arith.mulf %715, %702 : vector<8x8xf32>
    %717 = arith.addf %713, %716 : vector<8x8xf32>
    %c0_305 = arith.constant 0 : index
    %c88_306 = arith.constant 88 : index
    %718 = vector.load %arg19[%c0_305, %c88_306] : memref<8x128xf32, #tpu.memory_space<vmem>>, vector<8x8xf32>
    tpu.vector_store %arg19[%c0_305, %c88_306], %717 {strides = array<i32>} : memref<8x128xf32, #tpu.memory_space<vmem>>, vector<8x8xf32>,
    %cst_307 = arith.constant dense<0.000000e+00> : vector<8x128xf32>
    %719 = tpu.matmul %717, %56, %cst_307 {dimension_numbers = #tpu.dot_dimension_numbers<[1], [0], [0], [1], [0, 0, 1, 1], [], []>} : vector<8x8xf32>, vector<8x128xf32>, vector<8x128xf32> -> vector<8x128xf32>
    %cst_308 = arith.constant dense<0.000000e+00> : vector<8x128xf32>
    %720 = tpu.matmul %687, %57, %cst_308 {dimension_numbers = #tpu.dot_dimension_numbers<[1], [0], [0], [1], [0, 0, 1, 1], [], []>} : vector<8x32xf32>, vector<32x128xf32>, vector<8x128xf32> -> vector<8x128xf32>
    %721 = arith.addf %719, %720 : vector<8x128xf32>
    %c88_309 = arith.constant 88 : index
    %c0_310 = arith.constant 0 : index
    %722 = vector.load %arg26[%c88_309, %c0_310] : memref<128x128xf32, #tpu.memory_space<vmem>>, vector<8x128xf32>
    %723 = arith.addf %721, %722 : vector<8x128xf32>
    %724 = arith.negf %723 : vector<8x128xf32>
    %725 = math.exp %724 : vector<8x128xf32>
    %cst_311 = arith.constant 1.000000e+00 : f32
    %726 = vector.broadcast %cst_311 : f32 to vector<8x128xf32>
    %727 = arith.addf %726, %725 : vector<8x128xf32>
    %728 = arith.divf %726, %727 : vector<8x128xf32>
    %729 = vector.extract_strided_slice %728 {offsets = [0, 0], sizes = [8, 32], strides = [1, 1]} : vector<8x128xf32> to vector<8x32xf32>
    %730 = vector.extract_strided_slice %728 {offsets = [0, 32], sizes = [8, 32], strides = [1, 1]} : vector<8x128xf32> to vector<8x32xf32>
    %731 = vector.extract_strided_slice %728 {offsets = [0, 96], sizes = [8, 32], strides = [1, 1]} : vector<8x128xf32> to vector<8x32xf32>
    %732 = vector.extract_strided_slice %723 {offsets = [0, 64], sizes = [8, 32], strides = [1, 1]} : vector<8x128xf32> to vector<8x32xf32>
    %733 = math.tanh %732 : vector<8x32xf32>
    %734 = arith.mulf %730, %680 : vector<8x32xf32>
    %735 = arith.mulf %729, %733 : vector<8x32xf32>
    %736 = arith.addf %734, %735 : vector<8x32xf32>
    %737 = math.tanh %736 : vector<8x32xf32>
    %738 = arith.mulf %731, %737 : vector<8x32xf32>
    %c96 = arith.constant 96 : index
    %c0_312 = arith.constant 0 : index
    %739 = vector.load %arg1[%c96, %c0_312] : memref<128x8xf32, #tpu.memory_space<vmem>>, vector<8x8xf32>
    %c96_313 = arith.constant 96 : index
    %c0_314 = arith.constant 0 : index
    %740 = vector.load %arg2[%c96_313, %c0_314] : memref<128x8xf32, #tpu.memory_space<vmem>>, vector<8x8xf32>
    %c96_315 = arith.constant 96 : index
    %c0_316 = arith.constant 0 : index
    %741 = vector.load %arg27[%c96_315, %c0_316] : memref<128x8xf32, #tpu.memory_space<vmem>>, vector<8x8xf32>
    %c96_317 = arith.constant 96 : index
    %c0_318 = arith.constant 0 : index
    %742 = vector.load %arg24[%c96_317, %c0_318] : memref<128x32xf32, #tpu.memory_space<vmem>>, vector<8x32xf32>
    %743 = arith.mulf %738, %742 : vector<8x32xf32>
    %cst_319 = arith.constant dense<0.000000e+00> : vector<8x8xf32>
    %744 = tpu.matmul %743, %54, %cst_319 {dimension_numbers = #tpu.dot_dimension_numbers<[1], [0], [0], [1], [0, 0, 1, 1], [], []>} : vector<8x32xf32>, vector<32x8xf32>, vector<8x8xf32> -> vector<8x8xf32>
    %745 = arith.addf %744, %60 : vector<8x8xf32>
    %746 = arith.mulf %740, %739 : vector<8x8xf32>
    %cst_320 = arith.constant 1.000000e+00 : f32
    %747 = vector.broadcast %cst_320 : f32 to vector<8x8xf32>
    %748 = arith.subf %747, %740 : vector<8x8xf32>
    %749 = arith.mulf %748, %745 : vector<8x8xf32>
    %750 = arith.addf %746, %749 : vector<8x8xf32>
    %cst_321 = arith.constant dense<0.000000e+00> : vector<8x8xf32>
    %751 = tpu.matmul %750, %55, %cst_321 {dimension_numbers = #tpu.dot_dimension_numbers<[1], [0], [0], [1], [0, 0, 1, 1], [], []>} : vector<8x8xf32>, vector<8x8xf32>, vector<8x8xf32> -> vector<8x8xf32>
    %752 = arith.addf %751, %63 : vector<8x8xf32>
    %c96_322 = arith.constant 96 : index
    %c0_323 = arith.constant 0 : index
    %753 = vector.load %arg25[%c96_322, %c0_323] : memref<128x8xf32, #tpu.memory_space<vmem>>, vector<8x8xf32>
    %754 = arith.mulf %753, %752 : vector<8x8xf32>
    %cst_324 = arith.constant 1.000000e+00 : f32
    %755 = vector.broadcast %cst_324 : f32 to vector<8x8xf32>
    %756 = arith.subf %755, %753 : vector<8x8xf32>
    %757 = arith.mulf %756, %745 : vector<8x8xf32>
    %758 = arith.addf %754, %757 : vector<8x8xf32>
    %759 = arith.subf %739, %745 : vector<8x8xf32>
    %760 = math.absf %759 : vector<8x8xf32>
    %761 = arith.subf %739, %752 : vector<8x8xf32>
    %762 = math.absf %761 : vector<8x8xf32>
    %763 = arith.addf %760, %762 : vector<8x8xf32>
    %764 = arith.subf %739, %758 : vector<8x8xf32>
    %765 = math.absf %764 : vector<8x8xf32>
    %766 = arith.addf %763, %765 : vector<8x8xf32>
    %767 = arith.mulf %766, %741 : vector<8x8xf32>
    %768 = arith.addf %712, %767 : vector<8x8xf32>
    %769 = arith.mulf %740, %739 : vector<8x8xf32>
    %cst_325 = arith.constant 1.000000e+00 : f32
    %770 = vector.broadcast %cst_325 : f32 to vector<8x8xf32>
    %771 = arith.subf %770, %740 : vector<8x8xf32>
    %772 = arith.mulf %771, %758 : vector<8x8xf32>
    %773 = arith.addf %769, %772 : vector<8x8xf32>
    %c0_326 = arith.constant 0 : index
    %c96_327 = arith.constant 96 : index
    %774 = vector.load %arg19[%c0_326, %c96_327] : memref<8x128xf32, #tpu.memory_space<vmem>>, vector<8x8xf32>
    tpu.vector_store %arg19[%c0_326, %c96_327], %773 {strides = array<i32>} : memref<8x128xf32, #tpu.memory_space<vmem>>, vector<8x8xf32>,
    %cst_328 = arith.constant dense<0.000000e+00> : vector<8x128xf32>
    %775 = tpu.matmul %773, %56, %cst_328 {dimension_numbers = #tpu.dot_dimension_numbers<[1], [0], [0], [1], [0, 0, 1, 1], [], []>} : vector<8x8xf32>, vector<8x128xf32>, vector<8x128xf32> -> vector<8x128xf32>
    %cst_329 = arith.constant dense<0.000000e+00> : vector<8x128xf32>
    %776 = tpu.matmul %743, %57, %cst_329 {dimension_numbers = #tpu.dot_dimension_numbers<[1], [0], [0], [1], [0, 0, 1, 1], [], []>} : vector<8x32xf32>, vector<32x128xf32>, vector<8x128xf32> -> vector<8x128xf32>
    %777 = arith.addf %775, %776 : vector<8x128xf32>
    %c96_330 = arith.constant 96 : index
    %c0_331 = arith.constant 0 : index
    %778 = vector.load %arg26[%c96_330, %c0_331] : memref<128x128xf32, #tpu.memory_space<vmem>>, vector<8x128xf32>
    %779 = arith.addf %777, %778 : vector<8x128xf32>
    %780 = arith.negf %779 : vector<8x128xf32>
    %781 = math.exp %780 : vector<8x128xf32>
    %cst_332 = arith.constant 1.000000e+00 : f32
    %782 = vector.broadcast %cst_332 : f32 to vector<8x128xf32>
    %783 = arith.addf %782, %781 : vector<8x128xf32>
    %784 = arith.divf %782, %783 : vector<8x128xf32>
    %785 = vector.extract_strided_slice %784 {offsets = [0, 0], sizes = [8, 32], strides = [1, 1]} : vector<8x128xf32> to vector<8x32xf32>
    %786 = vector.extract_strided_slice %784 {offsets = [0, 32], sizes = [8, 32], strides = [1, 1]} : vector<8x128xf32> to vector<8x32xf32>
    %787 = vector.extract_strided_slice %784 {offsets = [0, 96], sizes = [8, 32], strides = [1, 1]} : vector<8x128xf32> to vector<8x32xf32>
    %788 = vector.extract_strided_slice %779 {offsets = [0, 64], sizes = [8, 32], strides = [1, 1]} : vector<8x128xf32> to vector<8x32xf32>
    %789 = math.tanh %788 : vector<8x32xf32>
    %790 = arith.mulf %786, %736 : vector<8x32xf32>
    %791 = arith.mulf %785, %789 : vector<8x32xf32>
    %792 = arith.addf %790, %791 : vector<8x32xf32>
    %793 = math.tanh %792 : vector<8x32xf32>
    %794 = arith.mulf %787, %793 : vector<8x32xf32>
    %c104 = arith.constant 104 : index
    %c0_333 = arith.constant 0 : index
    %795 = vector.load %arg1[%c104, %c0_333] : memref<128x8xf32, #tpu.memory_space<vmem>>, vector<8x8xf32>
    %c104_334 = arith.constant 104 : index
    %c0_335 = arith.constant 0 : index
    %796 = vector.load %arg2[%c104_334, %c0_335] : memref<128x8xf32, #tpu.memory_space<vmem>>, vector<8x8xf32>
    %c104_336 = arith.constant 104 : index
    %c0_337 = arith.constant 0 : index
    %797 = vector.load %arg27[%c104_336, %c0_337] : memref<128x8xf32, #tpu.memory_space<vmem>>, vector<8x8xf32>
    %c104_338 = arith.constant 104 : index
    %c0_339 = arith.constant 0 : index
    %798 = vector.load %arg24[%c104_338, %c0_339] : memref<128x32xf32, #tpu.memory_space<vmem>>, vector<8x32xf32>
    %799 = arith.mulf %794, %798 : vector<8x32xf32>
    %cst_340 = arith.constant dense<0.000000e+00> : vector<8x8xf32>
    %800 = tpu.matmul %799, %54, %cst_340 {dimension_numbers = #tpu.dot_dimension_numbers<[1], [0], [0], [1], [0, 0, 1, 1], [], []>} : vector<8x32xf32>, vector<32x8xf32>, vector<8x8xf32> -> vector<8x8xf32>
    %801 = arith.addf %800, %60 : vector<8x8xf32>
    %802 = arith.mulf %796, %795 : vector<8x8xf32>
    %cst_341 = arith.constant 1.000000e+00 : f32
    %803 = vector.broadcast %cst_341 : f32 to vector<8x8xf32>
    %804 = arith.subf %803, %796 : vector<8x8xf32>
    %805 = arith.mulf %804, %801 : vector<8x8xf32>
    %806 = arith.addf %802, %805 : vector<8x8xf32>
    %cst_342 = arith.constant dense<0.000000e+00> : vector<8x8xf32>
    %807 = tpu.matmul %806, %55, %cst_342 {dimension_numbers = #tpu.dot_dimension_numbers<[1], [0], [0], [1], [0, 0, 1, 1], [], []>} : vector<8x8xf32>, vector<8x8xf32>, vector<8x8xf32> -> vector<8x8xf32>
    %808 = arith.addf %807, %63 : vector<8x8xf32>
    %c104_343 = arith.constant 104 : index
    %c0_344 = arith.constant 0 : index
    %809 = vector.load %arg25[%c104_343, %c0_344] : memref<128x8xf32, #tpu.memory_space<vmem>>, vector<8x8xf32>
    %810 = arith.mulf %809, %808 : vector<8x8xf32>
    %cst_345 = arith.constant 1.000000e+00 : f32
    %811 = vector.broadcast %cst_345 : f32 to vector<8x8xf32>
    %812 = arith.subf %811, %809 : vector<8x8xf32>
    %813 = arith.mulf %812, %801 : vector<8x8xf32>
    %814 = arith.addf %810, %813 : vector<8x8xf32>
    %815 = arith.subf %795, %801 : vector<8x8xf32>
    %816 = math.absf %815 : vector<8x8xf32>
    %817 = arith.subf %795, %808 : vector<8x8xf32>
    %818 = math.absf %817 : vector<8x8xf32>
    %819 = arith.addf %816, %818 : vector<8x8xf32>
    %820 = arith.subf %795, %814 : vector<8x8xf32>
    %821 = math.absf %820 : vector<8x8xf32>
    %822 = arith.addf %819, %821 : vector<8x8xf32>
    %823 = arith.mulf %822, %797 : vector<8x8xf32>
    %824 = arith.addf %768, %823 : vector<8x8xf32>
    %825 = arith.mulf %796, %795 : vector<8x8xf32>
    %cst_346 = arith.constant 1.000000e+00 : f32
    %826 = vector.broadcast %cst_346 : f32 to vector<8x8xf32>
    %827 = arith.subf %826, %796 : vector<8x8xf32>
    %828 = arith.mulf %827, %814 : vector<8x8xf32>
    %829 = arith.addf %825, %828 : vector<8x8xf32>
    %c0_347 = arith.constant 0 : index
    %c104_348 = arith.constant 104 : index
    %830 = vector.load %arg19[%c0_347, %c104_348] : memref<8x128xf32, #tpu.memory_space<vmem>>, vector<8x8xf32>
    tpu.vector_store %arg19[%c0_347, %c104_348], %829 {strides = array<i32>} : memref<8x128xf32, #tpu.memory_space<vmem>>, vector<8x8xf32>,
    %cst_349 = arith.constant dense<0.000000e+00> : vector<8x128xf32>
    %831 = tpu.matmul %829, %56, %cst_349 {dimension_numbers = #tpu.dot_dimension_numbers<[1], [0], [0], [1], [0, 0, 1, 1], [], []>} : vector<8x8xf32>, vector<8x128xf32>, vector<8x128xf32> -> vector<8x128xf32>
    %cst_350 = arith.constant dense<0.000000e+00> : vector<8x128xf32>
    %832 = tpu.matmul %799, %57, %cst_350 {dimension_numbers = #tpu.dot_dimension_numbers<[1], [0], [0], [1], [0, 0, 1, 1], [], []>} : vector<8x32xf32>, vector<32x128xf32>, vector<8x128xf32> -> vector<8x128xf32>
    %833 = arith.addf %831, %832 : vector<8x128xf32>
    %c104_351 = arith.constant 104 : index
    %c0_352 = arith.constant 0 : index
    %834 = vector.load %arg26[%c104_351, %c0_352] : memref<128x128xf32, #tpu.memory_space<vmem>>, vector<8x128xf32>
    %835 = arith.addf %833, %834 : vector<8x128xf32>
    %836 = arith.negf %835 : vector<8x128xf32>
    %837 = math.exp %836 : vector<8x128xf32>
    %cst_353 = arith.constant 1.000000e+00 : f32
    %838 = vector.broadcast %cst_353 : f32 to vector<8x128xf32>
    %839 = arith.addf %838, %837 : vector<8x128xf32>
    %840 = arith.divf %838, %839 : vector<8x128xf32>
    %841 = vector.extract_strided_slice %840 {offsets = [0, 0], sizes = [8, 32], strides = [1, 1]} : vector<8x128xf32> to vector<8x32xf32>
    %842 = vector.extract_strided_slice %840 {offsets = [0, 32], sizes = [8, 32], strides = [1, 1]} : vector<8x128xf32> to vector<8x32xf32>
    %843 = vector.extract_strided_slice %840 {offsets = [0, 96], sizes = [8, 32], strides = [1, 1]} : vector<8x128xf32> to vector<8x32xf32>
    %844 = vector.extract_strided_slice %835 {offsets = [0, 64], sizes = [8, 32], strides = [1, 1]} : vector<8x128xf32> to vector<8x32xf32>
    %845 = math.tanh %844 : vector<8x32xf32>
    %846 = arith.mulf %842, %792 : vector<8x32xf32>
    %847 = arith.mulf %841, %845 : vector<8x32xf32>
    %848 = arith.addf %846, %847 : vector<8x32xf32>
    %849 = math.tanh %848 : vector<8x32xf32>
    %850 = arith.mulf %843, %849 : vector<8x32xf32>
    %c112 = arith.constant 112 : index
    %c0_354 = arith.constant 0 : index
    %851 = vector.load %arg1[%c112, %c0_354] : memref<128x8xf32, #tpu.memory_space<vmem>>, vector<8x8xf32>
    %c112_355 = arith.constant 112 : index
    %c0_356 = arith.constant 0 : index
    %852 = vector.load %arg2[%c112_355, %c0_356] : memref<128x8xf32, #tpu.memory_space<vmem>>, vector<8x8xf32>
    %c112_357 = arith.constant 112 : index
    %c0_358 = arith.constant 0 : index
    %853 = vector.load %arg27[%c112_357, %c0_358] : memref<128x8xf32, #tpu.memory_space<vmem>>, vector<8x8xf32>
    %c112_359 = arith.constant 112 : index
    %c0_360 = arith.constant 0 : index
    %854 = vector.load %arg24[%c112_359, %c0_360] : memref<128x32xf32, #tpu.memory_space<vmem>>, vector<8x32xf32>
    %855 = arith.mulf %850, %854 : vector<8x32xf32>
    %cst_361 = arith.constant dense<0.000000e+00> : vector<8x8xf32>
    %856 = tpu.matmul %855, %54, %cst_361 {dimension_numbers = #tpu.dot_dimension_numbers<[1], [0], [0], [1], [0, 0, 1, 1], [], []>} : vector<8x32xf32>, vector<32x8xf32>, vector<8x8xf32> -> vector<8x8xf32>
    %857 = arith.addf %856, %60 : vector<8x8xf32>
    %858 = arith.mulf %852, %851 : vector<8x8xf32>
    %cst_362 = arith.constant 1.000000e+00 : f32
    %859 = vector.broadcast %cst_362 : f32 to vector<8x8xf32>
    %860 = arith.subf %859, %852 : vector<8x8xf32>
    %861 = arith.mulf %860, %857 : vector<8x8xf32>
    %862 = arith.addf %858, %861 : vector<8x8xf32>
    %cst_363 = arith.constant dense<0.000000e+00> : vector<8x8xf32>
    %863 = tpu.matmul %862, %55, %cst_363 {dimension_numbers = #tpu.dot_dimension_numbers<[1], [0], [0], [1], [0, 0, 1, 1], [], []>} : vector<8x8xf32>, vector<8x8xf32>, vector<8x8xf32> -> vector<8x8xf32>
    %864 = arith.addf %863, %63 : vector<8x8xf32>
    %c112_364 = arith.constant 112 : index
    %c0_365 = arith.constant 0 : index
    %865 = vector.load %arg25[%c112_364, %c0_365] : memref<128x8xf32, #tpu.memory_space<vmem>>, vector<8x8xf32>
    %866 = arith.mulf %865, %864 : vector<8x8xf32>
    %cst_366 = arith.constant 1.000000e+00 : f32
    %867 = vector.broadcast %cst_366 : f32 to vector<8x8xf32>
    %868 = arith.subf %867, %865 : vector<8x8xf32>
    %869 = arith.mulf %868, %857 : vector<8x8xf32>
    %870 = arith.addf %866, %869 : vector<8x8xf32>
    %871 = arith.subf %851, %857 : vector<8x8xf32>
    %872 = math.absf %871 : vector<8x8xf32>
    %873 = arith.subf %851, %864 : vector<8x8xf32>
    %874 = math.absf %873 : vector<8x8xf32>
    %875 = arith.addf %872, %874 : vector<8x8xf32>
    %876 = arith.subf %851, %870 : vector<8x8xf32>
    %877 = math.absf %876 : vector<8x8xf32>
    %878 = arith.addf %875, %877 : vector<8x8xf32>
    %879 = arith.mulf %878, %853 : vector<8x8xf32>
    %880 = arith.addf %824, %879 : vector<8x8xf32>
    %881 = arith.mulf %852, %851 : vector<8x8xf32>
    %cst_367 = arith.constant 1.000000e+00 : f32
    %882 = vector.broadcast %cst_367 : f32 to vector<8x8xf32>
    %883 = arith.subf %882, %852 : vector<8x8xf32>
    %884 = arith.mulf %883, %870 : vector<8x8xf32>
    %885 = arith.addf %881, %884 : vector<8x8xf32>
    %c0_368 = arith.constant 0 : index
    %c112_369 = arith.constant 112 : index
    %886 = vector.load %arg19[%c0_368, %c112_369] : memref<8x128xf32, #tpu.memory_space<vmem>>, vector<8x8xf32>
    tpu.vector_store %arg19[%c0_368, %c112_369], %885 {strides = array<i32>} : memref<8x128xf32, #tpu.memory_space<vmem>>, vector<8x8xf32>,
    %cst_370 = arith.constant dense<0.000000e+00> : vector<8x128xf32>
    %887 = tpu.matmul %885, %56, %cst_370 {dimension_numbers = #tpu.dot_dimension_numbers<[1], [0], [0], [1], [0, 0, 1, 1], [], []>} : vector<8x8xf32>, vector<8x128xf32>, vector<8x128xf32> -> vector<8x128xf32>
    %cst_371 = arith.constant dense<0.000000e+00> : vector<8x128xf32>
    %888 = tpu.matmul %855, %57, %cst_371 {dimension_numbers = #tpu.dot_dimension_numbers<[1], [0], [0], [1], [0, 0, 1, 1], [], []>} : vector<8x32xf32>, vector<32x128xf32>, vector<8x128xf32> -> vector<8x128xf32>
    %889 = arith.addf %887, %888 : vector<8x128xf32>
    %c112_372 = arith.constant 112 : index
    %c0_373 = arith.constant 0 : index
    %890 = vector.load %arg26[%c112_372, %c0_373] : memref<128x128xf32, #tpu.memory_space<vmem>>, vector<8x128xf32>
    %891 = arith.addf %889, %890 : vector<8x128xf32>
    %892 = arith.negf %891 : vector<8x128xf32>
    %893 = math.exp %892 : vector<8x128xf32>
    %cst_374 = arith.constant 1.000000e+00 : f32
    %894 = vector.broadcast %cst_374 : f32 to vector<8x128xf32>
    %895 = arith.addf %894, %893 : vector<8x128xf32>
    %896 = arith.divf %894, %895 : vector<8x128xf32>
    %897 = vector.extract_strided_slice %896 {offsets = [0, 0], sizes = [8, 32], strides = [1, 1]} : vector<8x128xf32> to vector<8x32xf32>
    %898 = vector.extract_strided_slice %896 {offsets = [0, 32], sizes = [8, 32], strides = [1, 1]} : vector<8x128xf32> to vector<8x32xf32>
    %899 = vector.extract_strided_slice %896 {offsets = [0, 96], sizes = [8, 32], strides = [1, 1]} : vector<8x128xf32> to vector<8x32xf32>
    %900 = vector.extract_strided_slice %891 {offsets = [0, 64], sizes = [8, 32], strides = [1, 1]} : vector<8x128xf32> to vector<8x32xf32>
    %901 = math.tanh %900 : vector<8x32xf32>
    %902 = arith.mulf %898, %848 : vector<8x32xf32>
    %903 = arith.mulf %897, %901 : vector<8x32xf32>
    %904 = arith.addf %902, %903 : vector<8x32xf32>
    %905 = math.tanh %904 : vector<8x32xf32>
    %906 = arith.mulf %899, %905 : vector<8x32xf32>
    %c120 = arith.constant 120 : index
    %c0_375 = arith.constant 0 : index
    %907 = vector.load %arg1[%c120, %c0_375] : memref<128x8xf32, #tpu.memory_space<vmem>>, vector<8x8xf32>
    %c120_376 = arith.constant 120 : index
    %c0_377 = arith.constant 0 : index
    %908 = vector.load %arg2[%c120_376, %c0_377] : memref<128x8xf32, #tpu.memory_space<vmem>>, vector<8x8xf32>
    %c120_378 = arith.constant 120 : index
    %c0_379 = arith.constant 0 : index
    %909 = vector.load %arg27[%c120_378, %c0_379] : memref<128x8xf32, #tpu.memory_space<vmem>>, vector<8x8xf32>
    %c120_380 = arith.constant 120 : index
    %c0_381 = arith.constant 0 : index
    %910 = vector.load %arg24[%c120_380, %c0_381] : memref<128x32xf32, #tpu.memory_space<vmem>>, vector<8x32xf32>
    %911 = arith.mulf %906, %910 : vector<8x32xf32>
    %cst_382 = arith.constant dense<0.000000e+00> : vector<8x8xf32>
    %912 = tpu.matmul %911, %54, %cst_382 {dimension_numbers = #tpu.dot_dimension_numbers<[1], [0], [0], [1], [0, 0, 1, 1], [], []>} : vector<8x32xf32>, vector<32x8xf32>, vector<8x8xf32> -> vector<8x8xf32>
    %913 = arith.addf %912, %60 : vector<8x8xf32>
    %914 = arith.mulf %908, %907 : vector<8x8xf32>
    %cst_383 = arith.constant 1.000000e+00 : f32
    %915 = vector.broadcast %cst_383 : f32 to vector<8x8xf32>
    %916 = arith.subf %915, %908 : vector<8x8xf32>
    %917 = arith.mulf %916, %913 : vector<8x8xf32>
    %918 = arith.addf %914, %917 : vector<8x8xf32>
    %cst_384 = arith.constant dense<0.000000e+00> : vector<8x8xf32>
    %919 = tpu.matmul %918, %55, %cst_384 {dimension_numbers = #tpu.dot_dimension_numbers<[1], [0], [0], [1], [0, 0, 1, 1], [], []>} : vector<8x8xf32>, vector<8x8xf32>, vector<8x8xf32> -> vector<8x8xf32>
    %920 = arith.addf %919, %63 : vector<8x8xf32>
    %c120_385 = arith.constant 120 : index
    %c0_386 = arith.constant 0 : index
    %921 = vector.load %arg25[%c120_385, %c0_386] : memref<128x8xf32, #tpu.memory_space<vmem>>, vector<8x8xf32>
    %922 = arith.mulf %921, %920 : vector<8x8xf32>
    %cst_387 = arith.constant 1.000000e+00 : f32
    %923 = vector.broadcast %cst_387 : f32 to vector<8x8xf32>
    %924 = arith.subf %923, %921 : vector<8x8xf32>
    %925 = arith.mulf %924, %913 : vector<8x8xf32>
    %926 = arith.addf %922, %925 : vector<8x8xf32>
    %927 = arith.subf %907, %913 : vector<8x8xf32>
    %928 = math.absf %927 : vector<8x8xf32>
    %929 = arith.subf %907, %920 : vector<8x8xf32>
    %930 = math.absf %929 : vector<8x8xf32>
    %931 = arith.addf %928, %930 : vector<8x8xf32>
    %932 = arith.subf %907, %926 : vector<8x8xf32>
    %933 = math.absf %932 : vector<8x8xf32>
    %934 = arith.addf %931, %933 : vector<8x8xf32>
    %935 = arith.mulf %934, %909 : vector<8x8xf32>
    %936 = arith.addf %880, %935 : vector<8x8xf32>
    %937 = arith.mulf %908, %907 : vector<8x8xf32>
    %cst_388 = arith.constant 1.000000e+00 : f32
    %938 = vector.broadcast %cst_388 : f32 to vector<8x8xf32>
    %939 = arith.subf %938, %908 : vector<8x8xf32>
    %940 = arith.mulf %939, %926 : vector<8x8xf32>
    %941 = arith.addf %937, %940 : vector<8x8xf32>
    %c0_389 = arith.constant 0 : index
    %c120_390 = arith.constant 120 : index
    %942 = vector.load %arg19[%c0_389, %c120_390] : memref<8x128xf32, #tpu.memory_space<vmem>>, vector<8x8xf32>
    tpu.vector_store %arg19[%c0_389, %c120_390], %941 {strides = array<i32>} : memref<8x128xf32, #tpu.memory_space<vmem>>, vector<8x8xf32>,
    %cst_391 = arith.constant dense<0.000000e+00> : vector<8x128xf32>
    %943 = tpu.matmul %941, %56, %cst_391 {dimension_numbers = #tpu.dot_dimension_numbers<[1], [0], [0], [1], [0, 0, 1, 1], [], []>} : vector<8x8xf32>, vector<8x128xf32>, vector<8x128xf32> -> vector<8x128xf32>
    %cst_392 = arith.constant dense<0.000000e+00> : vector<8x128xf32>
    %944 = tpu.matmul %911, %57, %cst_392 {dimension_numbers = #tpu.dot_dimension_numbers<[1], [0], [0], [1], [0, 0, 1, 1], [], []>} : vector<8x32xf32>, vector<32x128xf32>, vector<8x128xf32> -> vector<8x128xf32>
    %945 = arith.addf %943, %944 : vector<8x128xf32>
    %c120_393 = arith.constant 120 : index
    %c0_394 = arith.constant 0 : index
    %946 = vector.load %arg26[%c120_393, %c0_394] : memref<128x128xf32, #tpu.memory_space<vmem>>, vector<8x128xf32>
    %947 = arith.addf %945, %946 : vector<8x128xf32>
    %948 = arith.negf %947 : vector<8x128xf32>
    %949 = math.exp %948 : vector<8x128xf32>
    %cst_395 = arith.constant 1.000000e+00 : f32
    %950 = vector.broadcast %cst_395 : f32 to vector<8x128xf32>
    %951 = arith.addf %950, %949 : vector<8x128xf32>
    %952 = arith.divf %950, %951 : vector<8x128xf32>
    %953 = vector.extract_strided_slice %952 {offsets = [0, 0], sizes = [8, 32], strides = [1, 1]} : vector<8x128xf32> to vector<8x32xf32>
    %954 = vector.extract_strided_slice %952 {offsets = [0, 32], sizes = [8, 32], strides = [1, 1]} : vector<8x128xf32> to vector<8x32xf32>
    %955 = vector.extract_strided_slice %952 {offsets = [0, 96], sizes = [8, 32], strides = [1, 1]} : vector<8x128xf32> to vector<8x32xf32>
    %956 = vector.extract_strided_slice %947 {offsets = [0, 64], sizes = [8, 32], strides = [1, 1]} : vector<8x128xf32> to vector<8x32xf32>
    %957 = math.tanh %956 : vector<8x32xf32>
    %958 = arith.mulf %954, %904 : vector<8x32xf32>
    %959 = arith.mulf %953, %957 : vector<8x32xf32>
    %960 = arith.addf %958, %959 : vector<8x32xf32>
    %961 = math.tanh %960 : vector<8x32xf32>
    %962 = arith.mulf %955, %961 : vector<8x32xf32>
    %c0_396 = arith.constant 0 : index
    %c0_397 = arith.constant 0 : index
    %963 = vector.load %arg21[%c0_396, %c0_397] : memref<8x32xf32, #tpu.memory_space<vmem>>, vector<8x32xf32>
    tpu.vector_store %arg21[%c0_396, %c0_397], %962 {strides = array<i32>} : memref<8x32xf32, #tpu.memory_space<vmem>>, vector<8x32xf32>,
    %c0_398 = arith.constant 0 : index
    %c0_399 = arith.constant 0 : index
    %964 = vector.load %arg22[%c0_398, %c0_399] : memref<8x32xf32, #tpu.memory_space<vmem>>, vector<8x32xf32>
    tpu.vector_store %arg22[%c0_398, %c0_399], %960 {strides = array<i32>} : memref<8x32xf32, #tpu.memory_space<vmem>>, vector<8x32xf32>,
    %c0_400 = arith.constant 0 : index
    %c0_401 = arith.constant 0 : index
    %965 = vector.load %arg23[%c0_400, %c0_401] : memref<1x1xf32, #tpu.memory_space<vmem>>, vector<1x1xf32>
    %966 = vector.shape_cast %936 : vector<8x8xf32> to vector<1x8x8xf32>
    %cst_402 = arith.constant dense<0.000000e+00> : vector<1xf32>
    %967 = vector.multi_reduction <add>, %966, %cst_402 [1, 2] : vector<1x8x8xf32> to vector<1xf32>
    %968 = vector.shape_cast %967 : vector<1xf32> to vector<1x1x1xf32>
    %969 = vector.extract %968[0, 0, 0] : f32 from vector<1x1x1xf32>
    %970 = vector.broadcast %969 : f32 to vector<1x1xf32>
    %971 = arith.addf %965, %970 : vector<1x1xf32>
    %c0_403 = arith.constant 0 : index
    %c0_404 = arith.constant 0 : index
    %972 = vector.load %arg23[%c0_403, %c0_404] : memref<1x1xf32, #tpu.memory_space<vmem>>, vector<1x1xf32>
    tpu.vector_store %arg23[%c0_403, %c0_404], %971 {strides = array<i32>} : memref<1x1xf32, #tpu.memory_space<vmem>>, vector<1x1xf32>,
    %c0_405 = arith.constant 0 : index
    %c0_406 = arith.constant 0 : index
    %973 = vector.load %arg20[%c0_405, %c0_406] : memref<1x1xf32, #tpu.memory_space<vmem>>, vector<1x1xf32>
    tpu.vector_store %arg20[%c0_405, %c0_406], %971 {strides = array<i32>} : memref<1x1xf32, #tpu.memory_space<vmem>>, vector<1x1xf32>,
    return
  }
  func.func @transform_0(%arg0: i32) -> (i32, i32) {
    %c0_i32 = arith.constant 0 : i32
    %c0_i32_0 = arith.constant 0 : i32
    return %arg0, %c0_i32 : i32, i32
  }
  func.func @transform_1(%arg0: i32) -> (i32, i32) {
    %c0_i32 = arith.constant 0 : i32
    %c0_i32_0 = arith.constant 0 : i32
    return %arg0, %c0_i32 : i32, i32
  }
  func.func @transform_2(%arg0: i32) -> (i32, i32) {
    %c0_i32 = arith.constant 0 : i32
    %c0_i32_0 = arith.constant 0 : i32
    return %arg0, %c0_i32 : i32, i32
  }
  func.func @transform_3(%arg0: i32) -> (i32, i32) {
    %c0_i32 = arith.constant 0 : i32
    %c0_i32_0 = arith.constant 0 : i32
    %c0_i32_1 = arith.constant 0 : i32
    return %c0_i32, %c0_i32_0 : i32, i32
  }
  func.func @transform_4(%arg0: i32) -> (i32, i32) {
    %c0_i32 = arith.constant 0 : i32
    %c0_i32_0 = arith.constant 0 : i32
    %c0_i32_1 = arith.constant 0 : i32
    return %c0_i32, %c0_i32_0 : i32, i32
  }
  func.func @transform_5(%arg0: i32) -> (i32, i32) {
    %c0_i32 = arith.constant 0 : i32
    %c0_i32_0 = arith.constant 0 : i32
    %c0_i32_1 = arith.constant 0 : i32
    return %c0_i32, %c0_i32_0 : i32, i32
  }
  func.func @transform_6(%arg0: i32) -> (i32, i32) {
    %c0_i32 = arith.constant 0 : i32
    %c0_i32_0 = arith.constant 0 : i32
    %c0_i32_1 = arith.constant 0 : i32
    return %c0_i32, %c0_i32_0 : i32, i32
  }
  func.func @transform_7(%arg0: i32) -> (i32, i32) {
    %c0_i32 = arith.constant 0 : i32
    %c0_i32_0 = arith.constant 0 : i32
    %c0_i32_1 = arith.constant 0 : i32
    return %c0_i32, %c0_i32_0 : i32, i32
  }
  func.func @transform_8(%arg0: i32) -> (i32, i32) {
    %c0_i32 = arith.constant 0 : i32
    %c0_i32_0 = arith.constant 0 : i32
    %c0_i32_1 = arith.constant 0 : i32
    return %c0_i32, %c0_i32_0 : i32, i32
  }
  func.func @transform_9(%arg0: i32) -> (i32, i32) {
    %c0_i32 = arith.constant 0 : i32
    %c0_i32_0 = arith.constant 0 : i32
    %c0_i32_1 = arith.constant 0 : i32
    return %c0_i32, %c0_i32_0 : i32, i32
  }
  func.func @transform_10(%arg0: i32) -> (i32, i32) {
    %c0_i32 = arith.constant 0 : i32
    %c0_i32_0 = arith.constant 0 : i32
    %c0_i32_1 = arith.constant 0 : i32
    return %c0_i32, %c0_i32_0 : i32, i32
  }
  func.func @transform_11(%arg0: i32) -> (i32, i32) {
    %c0_i32 = arith.constant 0 : i32
    %c0_i32_0 = arith.constant 0 : i32
    %c0_i32_1 = arith.constant 0 : i32
    return %c0_i32, %c0_i32_0 : i32, i32
  }
  func.func @transform_12(%arg0: i32) -> (i32, i32) {
    %c0_i32 = arith.constant 0 : i32
    %c0_i32_0 = arith.constant 0 : i32
    %c0_i32_1 = arith.constant 0 : i32
    return %c0_i32, %c0_i32_0 : i32, i32
  }
  func.func @transform_13(%arg0: i32) -> (i32, i32) {
    %c0_i32 = arith.constant 0 : i32
    %c0_i32_0 = arith.constant 0 : i32
    %c0_i32_1 = arith.constant 0 : i32
    return %c0_i32, %c0_i32_0 : i32, i32
  }
  func.func @transform_14(%arg0: i32) -> (i32, i32) {
    %c0_i32 = arith.constant 0 : i32
    %c0_i32_0 = arith.constant 0 : i32
    %c0_i32_1 = arith.constant 0 : i32
    return %c0_i32, %c0_i32_0 : i32, i32
  }
  func.func @transform_15(%arg0: i32) -> (i32, i32) {
    %c0_i32 = arith.constant 0 : i32
    %c0_i32_0 = arith.constant 0 : i32
    %c0_i32_1 = arith.constant 0 : i32
    return %c0_i32, %c0_i32_0 : i32, i32
  }
  func.func @transform_16(%arg0: i32) -> (i32, i32) {
    %c0_i32 = arith.constant 0 : i32
    %c0_i32_0 = arith.constant 0 : i32
    %c0_i32_1 = arith.constant 0 : i32
    return %c0_i32, %c0_i32_0 : i32, i32
  }
  func.func @transform_17(%arg0: i32) -> (i32, i32) {
    %c0_i32 = arith.constant 0 : i32
    %c0_i32_0 = arith.constant 0 : i32
    %c0_i32_1 = arith.constant 0 : i32
    return %c0_i32, %c0_i32_0 : i32, i32
  }
  func.func @transform_18(%arg0: i32) -> (i32, i32) {
    %c0_i32 = arith.constant 0 : i32
    %c0_i32_0 = arith.constant 0 : i32
    return %c0_i32, %arg0 : i32, i32
  }
  func.func @transform_19(%arg0: i32) -> (i32, i32) {
    %c0_i32 = arith.constant 0 : i32
    %c0_i32_0 = arith.constant 0 : i32
    %c0_i32_1 = arith.constant 0 : i32
    return %c0_i32, %c0_i32_0 : i32, i32
  }
}

</mosaic_0001>

<llo_original>
// kernel: tpu_custom_call.1
$region0: #{tpu_custom_call.1}
  #allocation0 [shape = 'u32[]', space=smem, size = 0x4, offset = 0x4, fixed_abs, tag = 'smem constant byte address 0x4 - core index']
  #allocation1 [shape = 'u32[144,128]{1,0:T(1,128)}', space=vmem, size = 0x12000, scoped, tag = 'internal scratch']
  #allocation2 [shape = 'f32[8,32]{1,0:T(8,128)}', space=vmem, size = 0x1000, scoped, tag = 'scratch operand']
  #allocation3 [shape = 'f32[8,32]{1,0:T(8,128)}', space=vmem, size = 0x1000, scoped, tag = 'scratch operand']
  #allocation4 [shape = 'f32[1,1]{1,0:T(1,128)}', space=vmem, size = 0x200, scoped, tag = 'scratch operand']
  #allocation5 [shape = 'f32[128,32]{1,0:T(8,128)}', space=vmem, size = 0x10000, scoped, tag = 'scratch operand']
  #allocation6 [shape = 'f32[128,8]{1,0:T(8,128)}', space=vmem, size = 0x10000, scoped, tag = 'scratch operand']
  #allocation7 [shape = 'f32[128,128]{1,0:T(8,128)}', space=vmem, size = 0x10000, scoped, tag = 'scratch operand']
  #allocation8 [shape = 'f32[128,8]{1,0:T(8,128)}', space=vmem, size = 0x10000, scoped, tag = 'scratch operand']
  %s0 = inlined_call_operand.vmem [shape: f32[256,8], index: 0, kind: input, shape index: {}]
  %s1 = inlined_call_operand.vmem [shape: f32[256,8], index: 1, kind: input, shape index: {}]
  %s2 = inlined_call_operand.vmem [shape: f32[256,8], index: 2, kind: input, shape index: {}]
  %s3 = inlined_call_operand.vmem [shape: f32[8,32], index: 3, kind: input, shape index: {}]
  %s4 = inlined_call_operand.vmem [shape: f32[1,32], index: 4, kind: input, shape index: {}]
  %s5 = inlined_call_operand.vmem [shape: f32[8,8], index: 5, kind: input, shape index: {}]
  %s6 = inlined_call_operand.vmem [shape: f32[1,8], index: 6, kind: input, shape index: {}]
  %s7 = inlined_call_operand.vmem [shape: f32[32,8], index: 7, kind: input, shape index: {}]
  %s8 = inlined_call_operand.vmem [shape: f32[1,8], index: 8, kind: input, shape index: {}]
  %s9 = inlined_call_operand.vmem [shape: f32[8,8], index: 9, kind: input, shape index: {}]
  %s10 = inlined_call_operand.vmem [shape: f32[1,8], index: 10, kind: input, shape index: {}]
  %s11 = inlined_call_operand.vmem [shape: f32[8,8], index: 11, kind: input, shape index: {}]
  %s12 = inlined_call_operand.vmem [shape: f32[8,8], index: 12, kind: input, shape index: {}]
  %s13 = inlined_call_operand.vmem [shape: f32[1,8], index: 13, kind: input, shape index: {}]
  %s14 = inlined_call_operand.vmem [shape: f32[8,128], index: 14, kind: input, shape index: {}]
  %s15 = inlined_call_operand.vmem [shape: f32[8,128], index: 15, kind: input, shape index: {}]
  %s16 = inlined_call_operand.vmem [shape: f32[32,128], index: 16, kind: input, shape index: {}]
  %s17 = inlined_call_operand.vmem [shape: f32[1,128], index: 17, kind: input, shape index: {}]
  %s18 = inlined_call_operand.hbm [shape: f32[8,256], index: 18, kind: output, shape index: {0}]
  %s19 = inlined_call_operand.hbm [shape: f32[1,1], index: 19, kind: output, shape index: {1}]
  %20 = xla_tuple %s18, %s19
  %s21 = sld [smem:[#allocation0]]
  $region117: #{tpu_custom_call.1} parent=0
    _
  %s23 = ssub.s32 1, %s21
  %s24 = scalar_select 0, %s23, %s21
  $region1: #{tpu_custom_call.1} parent=0
    #allocation9 [shape = 'u8[8192]{0}', space=vmem, size = 0x2000, scoped, tag = 'output window, operand 0']
    #allocation10 [shape = 's32[2]{0}', space=sflag, size = 0x8, scoped, tag = 'scoped memory for tpu_custom_call.1']
    #allocation11 [shape = 'u8[512]{0}', space=vmem, size = 0x400, scoped, tag = 'output window, operand 1, single buffered']
    #allocation12 [shape = 's32[1]{0}', space=sflag, size = 0x4, scoped, tag = 'scoped memory for tpu_custom_call.1']
    %25 = vsyncpa [#allocation10], 0
    %s26 = scalar_lea.sflag [#allocation10], 1
    %27 = vsyncpa %s26, 0
    %28 = vsyncpa [#allocation12], 0
    loop: start=0, step=1, limit=4
    $region2: #{tpu_custom_call.1} parent=1 // loop_pre_header
      _
    $region3: #{tpu_custom_call.1} parent=1 // loop_header
      %s30 = sphi 0, %s34
      %p31 = scmp.ge.s32.totalorder %s30, 4
      %s40 = sphi 0, %s42
      %s43 = sphi 0, %s40
      %s44 = sphi 0, %s43
      %s60 = sphi 0, %s44
      %s66 = sphi 0, %s68
      %s69 = sphi 0, %s66
      %s70 = sphi 0, %s69
      %s86 = sphi 0, %s70
      %s92 = sphi 0, %s94
      %s95 = sphi 0, %s92
      %s96 = sphi 0, %s95
      %s112 = sphi 0, %s96
      %s116 = sphi 0, %s116
      %s118 = sphi 0, %s116
      %s119 = sphi 0, %s118
      %s133 = sphi 0, %s119
      %s137 = sphi 0, %s137
      %s139 = sphi 0, %s137
      %s140 = sphi 0, %s139
      %s154 = sphi 0, %s140
      %s158 = sphi 0, %s158
      %s160 = sphi 0, %s158
      %s161 = sphi 0, %s160
      %s175 = sphi 0, %s161
      %s179 = sphi 0, %s179
      %s181 = sphi 0, %s179
      %s182 = sphi 0, %s181
      %s196 = sphi 0, %s182
      %s200 = sphi 0, %s200
      %s202 = sphi 0, %s200
      %s203 = sphi 0, %s202
      %s217 = sphi 0, %s203
      %s221 = sphi 0, %s221
      %s223 = sphi 0, %s221
      %s224 = sphi 0, %s223
      %s238 = sphi 0, %s224
      %s242 = sphi 0, %s242
      %s244 = sphi 0, %s242
      %s245 = sphi 0, %s244
      %s259 = sphi 0, %s245
      %s263 = sphi 0, %s263
      %s265 = sphi 0, %s263
      %s266 = sphi 0, %s265
      %s280 = sphi 0, %s266
      %s284 = sphi 0, %s284
      %s286 = sphi 0, %s284
      %s287 = sphi 0, %s286
      %s301 = sphi 0, %s287
      %s305 = sphi 0, %s305
      %s307 = sphi 0, %s305
      %s308 = sphi 0, %s307
      %s322 = sphi 0, %s308
      %s326 = sphi 0, %s326
      %s328 = sphi 0, %s326
      %s329 = sphi 0, %s328
      %s343 = sphi 0, %s329
      %s347 = sphi 0, %s347
      %s349 = sphi 0, %s347
      %s350 = sphi 0, %s349
      %s364 = sphi 0, %s350
      %s368 = sphi 0, %s368
      %s370 = sphi 0, %s368
      %s371 = sphi 0, %s370
      %s385 = sphi 0, %s371
      %s389 = sphi 0, %s389
      %s391 = sphi 0, %s389
      %s392 = sphi 0, %s391
      %s406 = sphi 0, %s392
      %s410 = sphi 0, %s410
      %s412 = sphi 0, %s410
      %s413 = sphi 0, %s412
      %s427 = sphi 0, %s413
      %s433 = sphi 0, %s435
      %s436 = sphi 0, %s433
      %s437 = sphi 0, %s436
      %s453 = sphi 0, %s437
      %s457 = sphi 0, %s457
      %s459 = sphi 0, %s457
      %s460 = sphi 0, %s459
      %s474 = sphi 0, %s460
    $region4: #{tpu_custom_call.1} parent=1 // loop_header_branch
      %33 = sbr.rel (%p31) target = $region8
    $region5: #{tpu_custom_call.1} parent=1 // loop_body
      %s35 = ssub.s32 %s30, 1
      %s36 = ssub.s32 %s30, 2
      %s37 = sadd.s32 %s30, 1
      %s38 = ssub.s32 %s30, %s37
      %p39 = scmp.eq.s32.totalorder %s38, 0
      %s41 = sadd.s32 %s40, 1
      %s42 = scalar_select %p39, %s40, %s41
      %p45 = pneg %p39
      %p46 = scmp.eq.s32.totalorder %s30, 1
      %p47 = por %p45, %p46
      %p48 = scmp.ne.s32.totalorder %s40, %s43
      %p49 = scmp.eq.s32.totalorder %s30, 0
      %p50 = por %p48, %p49
      %p51 = scmp.ne.s32.totalorder %s40, %s43
      %p52 = scmp.eq.s32.totalorder %s35, 1
      %p53 = por %p51, %p52
      %p54 = scmp.ne.s32.totalorder %s43, %s44
      %p55 = scmp.eq.s32.totalorder %s35, 0
      %p56 = por %p54, %p55
      %p57 = scmp.ne.s32.totalorder %s43, %s44
      %p58 = scmp.eq.s32.totalorder %s36, 1
      %p59 = por %p57, %p58
      %p61 = scmp.ne.s32.totalorder %s44, %s60
      %p62 = scmp.eq.s32.totalorder %s36, 0
      %p63 = por %p61, %p62
      %s64 = ssub.s32 %s30, %s37
      %p65 = scmp.eq.s32.totalorder %s64, 0
      %s67 = sadd.s32 %s66, 1
      %s68 = scalar_select %p65, %s66, %s67
      %p71 = pneg %p65
      %p72 = scmp.eq.s32.totalorder %s30, 1
      %p73 = por %p71, %p72
      %p74 = scmp.ne.s32.totalorder %s66, %s69
      %p75 = scmp.eq.s32.totalorder %s30, 0
      %p76 = por %p74, %p75
      %p77 = scmp.ne.s32.totalorder %s66, %s69
      %p78 = scmp.eq.s32.totalorder %s35, 1
      %p79 = por %p77, %p78
      %p80 = scmp.ne.s32.totalorder %s69, %s70
      %p81 = scmp.eq.s32.totalorder %s35, 0
      %p82 = por %p80, %p81
      %p83 = scmp.ne.s32.totalorder %s69, %s70
      %p84 = scmp.eq.s32.totalorder %s36, 1
      %p85 = por %p83, %p84
      %p87 = scmp.ne.s32.totalorder %s70, %s86
      %p88 = scmp.eq.s32.totalorder %s36, 0
      %p89 = por %p87, %p88
      %s90 = ssub.s32 %s30, %s37
      %p91 = scmp.eq.s32.totalorder %s90, 0
      %s93 = sadd.s32 %s92, 1
      %s94 = scalar_select %p91, %s92, %s93
      %p97 = pneg %p91
      %p98 = scmp.eq.s32.totalorder %s30, 1
      %p99 = por %p97, %p98
      %p100 = scmp.ne.s32.totalorder %s92, %s95
      %p101 = scmp.eq.s32.totalorder %s30, 0
      %p102 = por %p100, %p101
      %p103 = scmp.ne.s32.totalorder %s92, %s95
      %p104 = scmp.eq.s32.totalorder %s35, 1
      %p105 = por %p103, %p104
      %p106 = scmp.ne.s32.totalorder %s95, %s96
      %p107 = scmp.eq.s32.totalorder %s35, 0
      %p108 = por %p106, %p107
      %p109 = scmp.ne.s32.totalorder %s95, %s96
      %p110 = scmp.eq.s32.totalorder %s36, 1
      %p111 = por %p109, %p110
      %p113 = scmp.ne.s32.totalorder %s96, %s112
      %p114 = scmp.eq.s32.totalorder %s36, 0
      %p115 = por %p113, %p114
      %s117 = sadd.s32 %s116, 1
      %p120 = scmp.eq.s32.totalorder %s30, 1
      %p121 = scmp.ne.s32.totalorder %s116, %s118
      %p122 = scmp.eq.s32.totalorder %s30, 0
      %p123 = por %p121, %p122
      %p124 = scmp.ne.s32.totalorder %s116, %s118
      %p125 = scmp.eq.s32.totalorder %s35, 1
      %p126 = por %p124, %p125
      %p127 = scmp.ne.s32.totalorder %s118, %s119
      %p128 = scmp.eq.s32.totalorder %s35, 0
      %p129 = por %p127, %p128
      %p130 = scmp.ne.s32.totalorder %s118, %s119
      %p131 = scmp.eq.s32.totalorder %s36, 1
      %p132 = por %p130, %p131
      %p134 = scmp.ne.s32.totalorder %s119, %s133
      %p135 = scmp.eq.s32.totalorder %s36, 0
      %p136 = por %p134, %p135
      %s138 = sadd.s32 %s137, 1
      %p141 = scmp.eq.s32.totalorder %s30, 1
      %p142 = scmp.ne.s32.totalorder %s137, %s139
      %p143 = scmp.eq.s32.totalorder %s30, 0
      %p144 = por %p142, %p143
      %p145 = scmp.ne.s32.totalorder %s137, %s139
      %p146 = scmp.eq.s32.totalorder %s35, 1
      %p147 = por %p145, %p146
      %p148 = scmp.ne.s32.totalorder %s139, %s140
      %p149 = scmp.eq.s32.totalorder %s35, 0
      %p150 = por %p148, %p149
      %p151 = scmp.ne.s32.totalorder %s139, %s140
      %p152 = scmp.eq.s32.totalorder %s36, 1
      %p153 = por %p151, %p152
      %p155 = scmp.ne.s32.totalorder %s140, %s154
      %p156 = scmp.eq.s32.totalorder %s36, 0
      %p157 = por %p155, %p156
      %s159 = sadd.s32 %s158, 1
      %p162 = scmp.eq.s32.totalorder %s30, 1
      %p163 = scmp.ne.s32.totalorder %s158, %s160
      %p164 = scmp.eq.s32.totalorder %s30, 0
      %p165 = por %p163, %p164
      %p166 = scmp.ne.s32.totalorder %s158, %s160
      %p167 = scmp.eq.s32.totalorder %s35, 1
      %p168 = por %p166, %p167
      %p169 = scmp.ne.s32.totalorder %s160, %s161
      %p170 = scmp.eq.s32.totalorder %s35, 0
      %p171 = por %p169, %p170
      %p172 = scmp.ne.s32.totalorder %s160, %s161
      %p173 = scmp.eq.s32.totalorder %s36, 1
      %p174 = por %p172, %p173
      %p176 = scmp.ne.s32.totalorder %s161, %s175
      %p177 = scmp.eq.s32.totalorder %s36, 0
      %p178 = por %p176, %p177
      %s180 = sadd.s32 %s179, 1
      %p183 = scmp.eq.s32.totalorder %s30, 1
      %p184 = scmp.ne.s32.totalorder %s179, %s181
      %p185 = scmp.eq.s32.totalorder %s30, 0
      %p186 = por %p184, %p185
      %p187 = scmp.ne.s32.totalorder %s179, %s181
      %p188 = scmp.eq.s32.totalorder %s35, 1
      %p189 = por %p187, %p188
      %p190 = scmp.ne.s32.totalorder %s181, %s182
      %p191 = scmp.eq.s32.totalorder %s35, 0
      %p192 = por %p190, %p191
      %p193 = scmp.ne.s32.totalorder %s181, %s182
      %p194 = scmp.eq.s32.totalorder %s36, 1
      %p195 = por %p193, %p194
      %p197 = scmp.ne.s32.totalorder %s182, %s196
      %p198 = scmp.eq.s32.totalorder %s36, 0
      %p199 = por %p197, %p198
      %s201 = sadd.s32 %s200, 1
      %p204 = scmp.eq.s32.totalorder %s30, 1
      %p205 = scmp.ne.s32.totalorder %s200, %s202
      %p206 = scmp.eq.s32.totalorder %s30, 0
      %p207 = por %p205, %p206
      %p208 = scmp.ne.s32.totalorder %s200, %s202
      %p209 = scmp.eq.s32.totalorder %s35, 1
      %p210 = por %p208, %p209
      %p211 = scmp.ne.s32.totalorder %s202, %s203
      %p212 = scmp.eq.s32.totalorder %s35, 0
      %p213 = por %p211, %p212
      %p214 = scmp.ne.s32.totalorder %s202, %s203
      %p215 = scmp.eq.s32.totalorder %s36, 1
      %p216 = por %p214, %p215
      %p218 = scmp.ne.s32.totalorder %s203, %s217
      %p219 = scmp.eq.s32.totalorder %s36, 0
      %p220 = por %p218, %p219
      %s222 = sadd.s32 %s221, 1
      %p225 = scmp.eq.s32.totalorder %s30, 1
      %p226 = scmp.ne.s32.totalorder %s221, %s223
      %p227 = scmp.eq.s32.totalorder %s30, 0
      %p228 = por %p226, %p227
      %p229 = scmp.ne.s32.totalorder %s221, %s223
      %p230 = scmp.eq.s32.totalorder %s35, 1
      %p231 = por %p229, %p230
      %p232 = scmp.ne.s32.totalorder %s223, %s224
      %p233 = scmp.eq.s32.totalorder %s35, 0
      %p234 = por %p232, %p233
      %p235 = scmp.ne.s32.totalorder %s223, %s224
      %p236 = scmp.eq.s32.totalorder %s36, 1
      %p237 = por %p235, %p236
      %p239 = scmp.ne.s32.totalorder %s224, %s238
      %p240 = scmp.eq.s32.totalorder %s36, 0
      %p241 = por %p239, %p240
      %s243 = sadd.s32 %s242, 1
      %p246 = scmp.eq.s32.totalorder %s30, 1
      %p247 = scmp.ne.s32.totalorder %s242, %s244
      %p248 = scmp.eq.s32.totalorder %s30, 0
      %p249 = por %p247, %p248
      %p250 = scmp.ne.s32.totalorder %s242, %s244
      %p251 = scmp.eq.s32.totalorder %s35, 1
      %p252 = por %p250, %p251
      %p253 = scmp.ne.s32.totalorder %s244, %s245
      %p254 = scmp.eq.s32.totalorder %s35, 0
      %p255 = por %p253, %p254
      %p256 = scmp.ne.s32.totalorder %s244, %s245
      %p257 = scmp.eq.s32.totalorder %s36, 1
      %p258 = por %p256, %p257
      %p260 = scmp.ne.s32.totalorder %s245, %s259
      %p261 = scmp.eq.s32.totalorder %s36, 0
      %p262 = por %p260, %p261
      %s264 = sadd.s32 %s263, 1
      %p267 = scmp.eq.s32.totalorder %s30, 1
      %p268 = scmp.ne.s32.totalorder %s263, %s265
      %p269 = scmp.eq.s32.totalorder %s30, 0
      %p270 = por %p268, %p269
      %p271 = scmp.ne.s32.totalorder %s263, %s265
      %p272 = scmp.eq.s32.totalorder %s35, 1
      %p273 = por %p271, %p272
      %p274 = scmp.ne.s32.totalorder %s265, %s266
      %p275 = scmp.eq.s32.totalorder %s35, 0
      %p276 = por %p274, %p275
      %p277 = scmp.ne.s32.totalorder %s265, %s266
      %p278 = scmp.eq.s32.totalorder %s36, 1
      %p279 = por %p277, %p278
      %p281 = scmp.ne.s32.totalorder %s266, %s280
      %p282 = scmp.eq.s32.totalorder %s36, 0
      %p283 = por %p281, %p282
      %s285 = sadd.s32 %s284, 1
      %p288 = scmp.eq.s32.totalorder %s30, 1
      %p289 = scmp.ne.s32.totalorder %s284, %s286
      %p290 = scmp.eq.s32.totalorder %s30, 0
      %p291 = por %p289, %p290
      %p292 = scmp.ne.s32.totalorder %s284, %s286
      %p293 = scmp.eq.s32.totalorder %s35, 1
      %p294 = por %p292, %p293
      %p295 = scmp.ne.s32.totalorder %s286, %s287
      %p296 = scmp.eq.s32.totalorder %s35, 0
      %p297 = por %p295, %p296
      %p298 = scmp.ne.s32.totalorder %s286, %s287
      %p299 = scmp.eq.s32.totalorder %s36, 1
      %p300 = por %p298, %p299
      %p302 = scmp.ne.s32.totalorder %s287, %s301
      %p303 = scmp.eq.s32.totalorder %s36, 0
      %p304 = por %p302, %p303
      %s306 = sadd.s32 %s305, 1
      %p309 = scmp.eq.s32.totalorder %s30, 1
      %p310 = scmp.ne.s32.totalorder %s305, %s307
      %p311 = scmp.eq.s32.totalorder %s30, 0
      %p312 = por %p310, %p311
      %p313 = scmp.ne.s32.totalorder %s305, %s307
      %p314 = scmp.eq.s32.totalorder %s35, 1
      %p315 = por %p313, %p314
      %p316 = scmp.ne.s32.totalorder %s307, %s308
      %p317 = scmp.eq.s32.totalorder %s35, 0
      %p318 = por %p316, %p317
      %p319 = scmp.ne.s32.totalorder %s307, %s308
      %p320 = scmp.eq.s32.totalorder %s36, 1
      %p321 = por %p319, %p320
      %p323 = scmp.ne.s32.totalorder %s308, %s322
      %p324 = scmp.eq.s32.totalorder %s36, 0
      %p325 = por %p323, %p324
      %s327 = sadd.s32 %s326, 1
      %p330 = scmp.eq.s32.totalorder %s30, 1
      %p331 = scmp.ne.s32.totalorder %s326, %s328
      %p332 = scmp.eq.s32.totalorder %s30, 0
      %p333 = por %p331, %p332
      %p334 = scmp.ne.s32.totalorder %s326, %s328
      %p335 = scmp.eq.s32.totalorder %s35, 1
      %p336 = por %p334, %p335
      %p337 = scmp.ne.s32.totalorder %s328, %s329
      %p338 = scmp.eq.s32.totalorder %s35, 0
      %p339 = por %p337, %p338
      %p340 = scmp.ne.s32.totalorder %s328, %s329
      %p341 = scmp.eq.s32.totalorder %s36, 1
      %p342 = por %p340, %p341
      %p344 = scmp.ne.s32.totalorder %s329, %s343
      %p345 = scmp.eq.s32.totalorder %s36, 0
      %p346 = por %p344, %p345
      %s348 = sadd.s32 %s347, 1
      %p351 = scmp.eq.s32.totalorder %s30, 1
      %p352 = scmp.ne.s32.totalorder %s347, %s349
      %p353 = scmp.eq.s32.totalorder %s30, 0
      %p354 = por %p352, %p353
      %p355 = scmp.ne.s32.totalorder %s347, %s349
      %p356 = scmp.eq.s32.totalorder %s35, 1
      %p357 = por %p355, %p356
      %p358 = scmp.ne.s32.totalorder %s349, %s350
      %p359 = scmp.eq.s32.totalorder %s35, 0
      %p360 = por %p358, %p359
      %p361 = scmp.ne.s32.totalorder %s349, %s350
      %p362 = scmp.eq.s32.totalorder %s36, 1
      %p363 = por %p361, %p362
      %p365 = scmp.ne.s32.totalorder %s350, %s364
      %p366 = scmp.eq.s32.totalorder %s36, 0
      %p367 = por %p365, %p366
      %s369 = sadd.s32 %s368, 1
      %p372 = scmp.eq.s32.totalorder %s30, 1
      %p373 = scmp.ne.s32.totalorder %s368, %s370
      %p374 = scmp.eq.s32.totalorder %s30, 0
      %p375 = por %p373, %p374
      %p376 = scmp.ne.s32.totalorder %s368, %s370
      %p377 = scmp.eq.s32.totalorder %s35, 1
      %p378 = por %p376, %p377
      %p379 = scmp.ne.s32.totalorder %s370, %s371
      %p380 = scmp.eq.s32.totalorder %s35, 0
      %p381 = por %p379, %p380
      %p382 = scmp.ne.s32.totalorder %s370, %s371
      %p383 = scmp.eq.s32.totalorder %s36, 1
      %p384 = por %p382, %p383
      %p386 = scmp.ne.s32.totalorder %s371, %s385
      %p387 = scmp.eq.s32.totalorder %s36, 0
      %p388 = por %p386, %p387
      %s390 = sadd.s32 %s389, 1
      %p393 = scmp.eq.s32.totalorder %s30, 1
      %p394 = scmp.ne.s32.totalorder %s389, %s391
      %p395 = scmp.eq.s32.totalorder %s30, 0
      %p396 = por %p394, %p395
      %p397 = scmp.ne.s32.totalorder %s389, %s391
      %p398 = scmp.eq.s32.totalorder %s35, 1
      %p399 = por %p397, %p398
      %p400 = scmp.ne.s32.totalorder %s391, %s392
      %p401 = scmp.eq.s32.totalorder %s35, 0
      %p402 = por %p400, %p401
      %p403 = scmp.ne.s32.totalorder %s391, %s392
      %p404 = scmp.eq.s32.totalorder %s36, 1
      %p405 = por %p403, %p404
      %p407 = scmp.ne.s32.totalorder %s392, %s406
      %p408 = scmp.eq.s32.totalorder %s36, 0
      %p409 = por %p407, %p408
      %s411 = sadd.s32 %s410, 1
      %p414 = scmp.eq.s32.totalorder %s30, 1
      %p415 = scmp.ne.s32.totalorder %s410, %s412
      %p416 = scmp.eq.s32.totalorder %s30, 0
      %p417 = por %p415, %p416
      %p418 = scmp.ne.s32.totalorder %s410, %s412
      %p419 = scmp.eq.s32.totalorder %s35, 1
      %p420 = por %p418, %p419
      %p421 = scmp.ne.s32.totalorder %s412, %s413
      %p422 = scmp.eq.s32.totalorder %s35, 0
      %p423 = por %p421, %p422
      %p424 = scmp.ne.s32.totalorder %s412, %s413
      %p425 = scmp.eq.s32.totalorder %s36, 1
      %p426 = por %p424, %p425
      %p428 = scmp.ne.s32.totalorder %s413, %s427
      %p429 = scmp.eq.s32.totalorder %s36, 0
      %p430 = por %p428, %p429
      %s431 = ssub.s32 %s30, %s37
      %p432 = scmp.eq.s32.totalorder %s431, 0
      %s434 = sadd.s32 %s433, 1
      %s435 = scalar_select %p432, %s433, %s434
      %p438 = pneg %p432
      %p439 = scmp.eq.s32.totalorder %s30, 1
      %p440 = por %p438, %p439
      %p441 = scmp.ne.s32.totalorder %s433, %s436
      %p442 = scmp.eq.s32.totalorder %s30, 0
      %p443 = por %p441, %p442
      %p444 = scmp.ne.s32.totalorder %s433, %s436
      %p445 = scmp.eq.s32.totalorder %s35, 1
      %p446 = por %p444, %p445
      %p447 = scmp.ne.s32.totalorder %s436, %s437
      %p448 = scmp.eq.s32.totalorder %s35, 0
      %p449 = por %p447, %p448
      %p450 = scmp.ne.s32.totalorder %s436, %s437
      %p451 = scmp.eq.s32.totalorder %s36, 1
      %p452 = por %p450, %p451
      %p454 = scmp.ne.s32.totalorder %s437, %s453
      %p455 = scmp.eq.s32.totalorder %s36, 0
      %p456 = por %p454, %p455
      %s458 = sadd.s32 %s457, 1
      %p461 = scmp.eq.s32.totalorder %s30, 1
      %p462 = scmp.ne.s32.totalorder %s457, %s459
      %p463 = scmp.eq.s32.totalorder %s30, 0
      %p464 = por %p462, %p463
      %p465 = scmp.ne.s32.totalorder %s457, %s459
      %p466 = scmp.eq.s32.totalorder %s35, 1
      %p467 = por %p465, %p466
      %p468 = scmp.ne.s32.totalorder %s459, %s460
      %p469 = scmp.eq.s32.totalorder %s35, 0
      %p470 = por %p468, %p469
      %p471 = scmp.ne.s32.totalorder %s459, %s460
      %p472 = scmp.eq.s32.totalorder %s36, 1
      %p473 = por %p471, %p472
      %p475 = scmp.ne.s32.totalorder %s460, %s474
      %p476 = scmp.eq.s32.totalorder %s36, 0
      %p477 = por %p475, %p476
      %p478 = scmp.le.s32.totalorder 1, %s30
      %p479 = scmp.lt.s32.totalorder %s30, 3
      %p480 = pnand %p478, %p479
      %p481 = pneg %p480
      // Predicated region
      $region9: #{tpu_custom_call.1} parent=5 // pred_check
        _
      $region10: #{tpu_custom_call.1} parent=5 // pred_check_branch
        %483 = sbr.rel (%p480) target = $region12
      $region11: #{tpu_custom_call.1} parent=5 // pred_region
        %s484 = ssub.s32 %s30, 1
        // Predicated region
        $region13: #{tpu_custom_call.1} parent=11 // pred_check
          %p485 = pneg %p129
        $region14: #{tpu_custom_call.1} parent=11 // pred_check_branch
          %487 = sbr.rel (%p485) target = $region16
        $region15: #{tpu_custom_call.1} parent=11 // pred_region
          _
        $region16: #{tpu_custom_call.1} parent=11 // pred_fallthru
          _
        // Predicated region
        $region17: #{tpu_custom_call.1} parent=11 // pred_check
          %p488 = pneg %p150
        $region18: #{tpu_custom_call.1} parent=11 // pred_check_branch
          %490 = sbr.rel (%p488) target = $region20
        $region19: #{tpu_custom_call.1} parent=11 // pred_region
          _
        $region20: #{tpu_custom_call.1} parent=11 // pred_fallthru
          _
        // Predicated region
        $region21: #{tpu_custom_call.1} parent=11 // pred_check
          %p491 = pneg %p171
        $region22: #{tpu_custom_call.1} parent=11 // pred_check_branch
          %493 = sbr.rel (%p491) target = $region24
        $region23: #{tpu_custom_call.1} parent=11 // pred_region
          _
        $region24: #{tpu_custom_call.1} parent=11 // pred_fallthru
          _
        // Predicated region
        $region25: #{tpu_custom_call.1} parent=11 // pred_check
          %p494 = pneg %p192
        $region26: #{tpu_custom_call.1} parent=11 // pred_check_branch
          %496 = sbr.rel (%p494) target = $region28
        $region27: #{tpu_custom_call.1} parent=11 // pred_region
          _
        $region28: #{tpu_custom_call.1} parent=11 // pred_fallthru
          _
        // Predicated region
        $region29: #{tpu_custom_call.1} parent=11 // pred_check
          %p497 = pneg %p213
        $region30: #{tpu_custom_call.1} parent=11 // pred_check_branch
          %499 = sbr.rel (%p497) target = $region32
        $region31: #{tpu_custom_call.1} parent=11 // pred_region
          _
        $region32: #{tpu_custom_call.1} parent=11 // pred_fallthru
          _
        // Predicated region
        $region33: #{tpu_custom_call.1} parent=11 // pred_check
          %p500 = pneg %p234
        $region34: #{tpu_custom_call.1} parent=11 // pred_check_branch
          %502 = sbr.rel (%p500) target = $region36
        $region35: #{tpu_custom_call.1} parent=11 // pred_region
          _
        $region36: #{tpu_custom_call.1} parent=11 // pred_fallthru
          _
        // Predicated region
        $region37: #{tpu_custom_call.1} parent=11 // pred_check
          %p503 = pneg %p255
        $region38: #{tpu_custom_call.1} parent=11 // pred_check_branch
          %505 = sbr.rel (%p503) target = $region40
        $region39: #{tpu_custom_call.1} parent=11 // pred_region
          _
        $region40: #{tpu_custom_call.1} parent=11 // pred_fallthru
          _
        // Predicated region
        $region41: #{tpu_custom_call.1} parent=11 // pred_check
          %p506 = pneg %p276
        $region42: #{tpu_custom_call.1} parent=11 // pred_check_branch
          %508 = sbr.rel (%p506) target = $region44
        $region43: #{tpu_custom_call.1} parent=11 // pred_region
          _
        $region44: #{tpu_custom_call.1} parent=11 // pred_fallthru
          _
        // Predicated region
        $region45: #{tpu_custom_call.1} parent=11 // pred_check
          %p509 = pneg %p297
        $region46: #{tpu_custom_call.1} parent=11 // pred_check_branch
          %511 = sbr.rel (%p509) target = $region48
        $region47: #{tpu_custom_call.1} parent=11 // pred_region
          _
        $region48: #{tpu_custom_call.1} parent=11 // pred_fallthru
          _
        // Predicated region
        $region49: #{tpu_custom_call.1} parent=11 // pred_check
          %p512 = pneg %p318
        $region50: #{tpu_custom_call.1} parent=11 // pred_check_branch
          %514 = sbr.rel (%p512) target = $region52
        $region51: #{tpu_custom_call.1} parent=11 // pred_region
          _
        $region52: #{tpu_custom_call.1} parent=11 // pred_fallthru
          _
        // Predicated region
        $region53: #{tpu_custom_call.1} parent=11 // pred_check
          %p515 = pneg %p339
        $region54: #{tpu_custom_call.1} parent=11 // pred_check_branch
          %517 = sbr.rel (%p515) target = $region56
        $region55: #{tpu_custom_call.1} parent=11 // pred_region
          _
        $region56: #{tpu_custom_call.1} parent=11 // pred_fallthru
          _
        // Predicated region
        $region57: #{tpu_custom_call.1} parent=11 // pred_check
          %p518 = pneg %p360
        $region58: #{tpu_custom_call.1} parent=11 // pred_check_branch
          %520 = sbr.rel (%p518) target = $region60
        $region59: #{tpu_custom_call.1} parent=11 // pred_region
          _
        $region60: #{tpu_custom_call.1} parent=11 // pred_fallthru
          _
        // Predicated region
        $region61: #{tpu_custom_call.1} parent=11 // pred_check
          %p521 = pneg %p381
        $region62: #{tpu_custom_call.1} parent=11 // pred_check_branch
          %523 = sbr.rel (%p521) target = $region64
        $region63: #{tpu_custom_call.1} parent=11 // pred_region
          _
        $region64: #{tpu_custom_call.1} parent=11 // pred_fallthru
          _
        // Predicated region
        $region65: #{tpu_custom_call.1} parent=11 // pred_check
          %p524 = pneg %p402
        $region66: #{tpu_custom_call.1} parent=11 // pred_check_branch
          %526 = sbr.rel (%p524) target = $region68
        $region67: #{tpu_custom_call.1} parent=11 // pred_region
          _
        $region68: #{tpu_custom_call.1} parent=11 // pred_fallthru
          _
        // Predicated region
        $region69: #{tpu_custom_call.1} parent=11 // pred_check
          %p527 = pneg %p423
        $region70: #{tpu_custom_call.1} parent=11 // pred_check_branch
          %529 = sbr.rel (%p527) target = $region72
        $region71: #{tpu_custom_call.1} parent=11 // pred_region
          _
        $region72: #{tpu_custom_call.1} parent=11 // pred_fallthru
          _
      $region12: #{tpu_custom_call.1} parent=5 // pred_fallthru
        _
      %p530 = scmp.lt.s32.totalorder %s30, 2
      // Predicated region
      $region73: #{tpu_custom_call.1} parent=5 // pred_check
        %p531 = pneg %p530
      $region74: #{tpu_custom_call.1} parent=5 // pred_check_branch
        %533 = sbr.rel (%p531) target = $region76
      $region75: #{tpu_custom_call.1} parent=5 // pred_region
        // Predicated region
        $region77: #{tpu_custom_call.1} parent=75 // pred_check
          %p534 = pneg %p50
        $region78: #{tpu_custom_call.1} parent=75 // pred_check_branch
          %536 = sbr.rel (%p534) target = $region80
        $region79: #{tpu_custom_call.1} parent=75 // pred_region
          %s537 = smul.u32 16, %s30
          %p538 = scmp.lt.s32.totalorder %s537, 31
          %s539 = scalar_select %p538, %s537, 31
          %s540 = smul.addr %s539, 8
          %s541 = scalar_lea.vmem %s0, %s540
          %s542 = smul.u32 16, %s30
        $region80: #{tpu_custom_call.1} parent=75 // pred_fallthru
          _
        // Predicated region
        $region81: #{tpu_custom_call.1} parent=75 // pred_check
          %p543 = pneg %p76
        $region82: #{tpu_custom_call.1} parent=75 // pred_check_branch
          %545 = sbr.rel (%p543) target = $region84
        $region83: #{tpu_custom_call.1} parent=75 // pred_region
          %s546 = smul.u32 16, %s30
          %p547 = scmp.lt.s32.totalorder %s546, 31
          %s548 = scalar_select %p547, %s546, 31
          %s549 = smul.addr %s548, 8
          %s550 = scalar_lea.vmem %s1, %s549
          %s551 = smul.u32 16, %s30
        $region84: #{tpu_custom_call.1} parent=75 // pred_fallthru
          _
        // Predicated region
        $region85: #{tpu_custom_call.1} parent=75 // pred_check
          %p552 = pneg %p102
        $region86: #{tpu_custom_call.1} parent=75 // pred_check_branch
          %554 = sbr.rel (%p552) target = $region88
        $region87: #{tpu_custom_call.1} parent=75 // pred_region
          %s555 = smul.u32 16, %s30
          %p556 = scmp.lt.s32.totalorder %s555, 31
          %s557 = scalar_select %p556, %s555, 31
          %s558 = smul.addr %s557, 8
          %s559 = scalar_lea.vmem %s2, %s558
          %s560 = smul.u32 16, %s30
        $region88: #{tpu_custom_call.1} parent=75 // pred_fallthru
          _
      $region76: #{tpu_custom_call.1} parent=5 // pred_fallthru
        _
      %p561 = scmp.le.s32.totalorder 1, %s30
      %p562 = scmp.lt.s32.totalorder %s30, 3
      %p563 = pnand %p561, %p562
      %p564 = pneg %p563
      // Predicated region
      $region89: #{tpu_custom_call.1} parent=5 // pred_check
        _
      $region90: #{tpu_custom_call.1} parent=5 // pred_check_branch
        %566 = sbr.rel (%p563) target = $region92
      $region91: #{tpu_custom_call.1} parent=5 // pred_region
        %s567 = ssub.s32 %s30, 1
        %s568 = smul.u32 16, %s35
        %p569 = scmp.lt.s32.totalorder %s568, 31
        %s570 = scalar_select %p569, %s568, 31
        %s571 = smul.addr %s570, 8
        %s572 = scalar_lea.vmem %s0, %s571
        %p573 = pneg %p56
        %p574 = pneg %p53
        %s575 = smul.u32 16, %s35
        %p576 = scmp.lt.s32.totalorder %s575, 31
        %s577 = scalar_select %p576, %s575, 31
        %s578 = smul.addr %s577, 8
        %s579 = scalar_lea.vmem %s1, %s578
        %p580 = pneg %p82
        %p581 = pneg %p79
        %s582 = smul.u32 16, %s35
        %p583 = scmp.lt.s32.totalorder %s582, 31
        %s584 = scalar_select %p583, %s582, 31
        %s585 = smul.addr %s584, 8
        %s586 = scalar_lea.vmem %s2, %s585
        %p587 = pneg %p108
        %p588 = pneg %p105
        %p589 = pneg %p129
        %p590 = pneg %p126
        %p591 = pneg %p150
        %p592 = pneg %p147
        %p593 = pneg %p171
        %p594 = pneg %p168
        %p595 = pneg %p192
        %p596 = pneg %p189
        %p597 = pneg %p213
        %p598 = pneg %p210
        %p599 = pneg %p234
        %p600 = pneg %p231
        %p601 = pneg %p255
        %p602 = pneg %p252
        %p603 = pneg %p276
        %p604 = pneg %p273
        %p605 = pneg %p297
        %p606 = pneg %p294
        %p607 = pneg %p318
        %p608 = pneg %p315
        %p609 = pneg %p339
        %p610 = pneg %p336
        %p611 = pneg %p360
        %p612 = pneg %p357
        %p613 = pneg %p381
        %p614 = pneg %p378
        %p615 = pneg %p402
        %p616 = pneg %p399
        %p617 = pneg %p423
        %p618 = pneg %p420
        %p619 = pneg %p449
        %p620 = pneg %p446
        %s621 = sand.u32 %s436, 1
        %s622 = scalar_lea.sflag [#allocation10], %s621
        %s623 = sand.u32 %s436, 1
        %s624 = smul.addr %s623, 8
        %s625 = scalar_lea.vmem [#allocation9], %s624
        %p626 = pneg %p470
        %p627 = pneg %p467
        %s628 = smul.u32 16, %s35
        %p629 = scmp.lt.s32.totalorder %s628, 31
        %s630 = scalar_select %p629, %s628, 31
        %s631 = smul.addr %s630, 8
        %s632 = scalar_lea.vmem %s0, %s631
        %s633 = smul.u32 16, %s35
        %s634 = smul.u32 16, %s35
        %p635 = scmp.lt.s32.totalorder %s634, 31
        %s636 = scalar_select %p635, %s634, 31
        %s637 = smul.addr %s636, 8
        %s638 = scalar_lea.vmem %s1, %s637
        %s639 = smul.u32 16, %s35
        %s640 = smul.u32 16, %s35
        %p641 = scmp.lt.s32.totalorder %s640, 31
        %s642 = scalar_select %p641, %s640, 31
        %s643 = smul.addr %s642, 8
        %s644 = scalar_lea.vmem %s2, %s643
        %s645 = smul.u32 16, %s35
        %p646 = scmp.eq.s32.totalorder %s35, 0
        // Predicated region
        $region93: #{tpu_custom_call.1} parent=91 // pred_check
          %p647 = pneg %p646
        $region94: #{tpu_custom_call.1} parent=91 // pred_check_branch
          %649 = sbr.rel (%p647) target = $region96
        $region95: #{tpu_custom_call.1} parent=91 // pred_region
          %vm650 = vcmask 261120
          %651 = vst.msk [vmem:[#allocation2] sm:$0xff] %vm650, 0.0
          %652 = vst.msk [vmem:[#allocation3] sm:$0xff] %vm650, 0.0
          %vm653 = vcmask 0
          %654 = vst.msk [vmem:[#allocation4] sm:$0x1] %vm653, 0.0
        $region96: #{tpu_custom_call.1} parent=91 // pred_fallthru
          _
        %v655 = vld [vmem:[%s644] sm:$0xff]
        %v656 = vld [vmem:[%s644 + $0x8] sm:$0xff]
        %v657 = vld [vmem:[%s644 + $0x10] sm:$0xff]
        %v658 = vld [vmem:[%s644 + $0x18] sm:$0xff]
        %v659 = vld [vmem:[%s644 + $0x20] sm:$0xff]
        %v660 = vld [vmem:[%s644 + $0x28] sm:$0xff]
        %v661 = vld [vmem:[%s644 + $0x30] sm:$0xff]
        %v662 = vld [vmem:[%s644 + $0x38] sm:$0xff]
        %v663 = vld [vmem:[%s644 + $0x40] sm:$0xff]
        %v664 = vld [vmem:[%s644 + $0x48] sm:$0xff]
        %v665 = vld [vmem:[%s644 + $0x50] sm:$0xff]
        %v666 = vld [vmem:[%s644 + $0x58] sm:$0xff]
        %v667 = vld [vmem:[%s644 + $0x60] sm:$0xff]
        %v668 = vld [vmem:[%s644 + $0x68] sm:$0xff]
        %v669 = vld [vmem:[%s644 + $0x70] sm:$0xff]
        %v670 = vld [vmem:[%s644 + $0x78] sm:$0xff]
        %v671 = vld [vmem:[%s638] sm:$0xff]
        %v672 = vld [vmem:[%s638 + $0x8] sm:$0xff]
        %v673 = vld [vmem:[%s638 + $0x10] sm:$0xff]
        %v674 = vld [vmem:[%s638 + $0x18] sm:$0xff]
        %v675 = vld [vmem:[%s638 + $0x20] sm:$0xff]
        %v676 = vld [vmem:[%s638 + $0x28] sm:$0xff]
        %v677 = vld [vmem:[%s638 + $0x30] sm:$0xff]
        %v678 = vld [vmem:[%s638 + $0x38] sm:$0xff]
        %v679 = vld [vmem:[%s638 + $0x40] sm:$0xff]
        %v680 = vld [vmem:[%s638 + $0x48] sm:$0xff]
        %v681 = vld [vmem:[%s638 + $0x50] sm:$0xff]
        %v682 = vld [vmem:[%s638 + $0x58] sm:$0xff]
        %v683 = vld [vmem:[%s638 + $0x60] sm:$0xff]
        %v684 = vld [vmem:[%s638 + $0x68] sm:$0xff]
        %v685 = vld [vmem:[%s638 + $0x70] sm:$0xff]
        %v686 = vld [vmem:[%s638 + $0x78] sm:$0xff]
        %v687 = vld [vmem:[%s3] sm:$0xff]
        %v688 = vld [vmem:[%s4] sm:$0x1]
        %v690 = vlaneseq
        %v691 = vshrl.u32 %v690, 7
        %v692 = vsub.s32 0, %v691
        %v693 = vrot.slane %v688, %v692
        %vm695 = vcmask 64512
        %v697 = vsel %vm695, %v655, 0
        %v700 = vsel %vm695, %v656, 0
        %v703 = vsel %vm695, %v657, 0
        %v706 = vsel %vm695, %v658, 0
        %v709 = vsel %vm695, %v659, 0
        %v712 = vsel %vm695, %v660, 0
        %v715 = vsel %vm695, %v661, 0
        %v718 = vsel %vm695, %v662, 0
        %v721 = vsel %vm695, %v663, 0
        %v724 = vsel %vm695, %v664, 0
        %v727 = vsel %vm695, %v665, 0
        %v730 = vsel %vm695, %v666, 0
        %v733 = vsel %vm695, %v667, 0
        %v736 = vsel %vm695, %v668, 0
        %v739 = vsel %vm695, %v669, 0
        %v742 = vsel %vm695, %v670, 0
        %744 = vmatprep.subr.mxu0 0.0
        %745 = vmatpush1.msra.mxu0 %v687
        %746 = vmatprep.subr.mxu0 0.0
        %747 = vmatpush1.msra.mxu0 0.0
        %748 = vmatprep.subr.mxu0 0.0
        %749 = vmatpush1.msra.mxu0 0.0
        %750 = vmatprep.subr.mxu0 0.0
        %751 = vmatpush1.msra.mxu0 0.0
        %752 = vmatprep.subr.mxu0 0.0
        %753 = vmatpush1.msra.mxu0 0.0
        %754 = vmatprep.subr.mxu0 0.0
        %755 = vmatpush1.msra.mxu0 0.0
        %756 = vmatprep.subr.mxu0 0.0
        %757 = vmatpush1.msra.mxu0 0.0
        %758 = vmatprep.subr.mxu0 0.0
        %759 = vmatpush1.msra.mxu0 0.0
        %760 = vmatprep.subr.mxu0 0.0
        %761 = vmatpush1.msra.mxu0 0.0
        %762 = vmatprep.subr.mxu0 0.0
        %763 = vmatpush1.msra.mxu0 0.0
        %764 = vmatprep.subr.mxu0 0.0
        %765 = vmatpush1.msra.mxu0 0.0
        %766 = vmatprep.subr.mxu0 0.0
        %767 = vmatpush1.msra.mxu0 0.0
        %768 = vmatprep.subr.mxu0 0.0
        %769 = vmatpush1.msra.mxu0 0.0
        %770 = vmatprep.subr.mxu0 0.0
        %771 = vmatpush1.msra.mxu0 0.0
        %772 = vmatprep.subr.mxu0 0.0
        %773 = vmatpush1.msra.mxu0 0.0
        %774 = vmatprep.subr.mxu0 0.0
        %775 = vmatpush1.msra.mxu0 0.0
        %776 = vmatprep.subr.mxu0 0.0
        %777 = vmatpush1.msra.mxu0 0.0
        %778 = vmatprep.subr.mxu0 0.0
        %779 = vmatpush1.msra.mxu0 0.0
        %780 = vmatprep.subr.mxu0 0.0
        %781 = vmatpush1.msra.mxu0 0.0
        %782 = vmatprep.subr.mxu0 0.0
        %783 = vmatpush1.msra.mxu0 0.0
        %784 = vmatprep.subr.mxu0 0.0
        %785 = vmatpush1.msra.mxu0 0.0
        %786 = vmatprep.subr.mxu0 0.0
        %787 = vmatpush1.msra.mxu0 0.0
        %788 = vmatprep.subr.mxu0 0.0
        %789 = vmatpush1.msra.mxu0 0.0
        %790 = vmatprep.subr.mxu0 0.0
        %791 = vmatpush1.msra.mxu0 0.0
        %792 = vmatprep.subr.mxu0 0.0
        %793 = vmatpush1.msra.mxu0 0.0
        %794 = vmatprep.subr.mxu0 0.0
        %795 = vmatpush1.msra.mxu0 0.0
        %796 = vmatprep.subr.mxu0 0.0
        %797 = vmatpush1.msra.mxu0 0.0
        %798 = vmatprep.subr.mxu0 0.0
        %799 = vmatpush1.msra.mxu0 0.0
        %800 = vmatprep.subr.mxu0 0.0
        %801 = vmatpush1.msra.mxu0 0.0
        %802 = vmatprep.subr.mxu0 0.0
        %803 = vmatpush1.msra.mxu0 0.0
        %804 = vmatprep.subr.mxu0 0.0
        %805 = vmatpush1.msra.mxu0 0.0
        %806 = vmatprep.subr.mxu0 0.0
        %807 = vmatpush1.msra.mxu0 0.0
        %808 = vmatprep.mubr.f32.mxu0 0.0
        %809 = vmatmul.mubr.f32.gmra.mrb[0].mxu0 %v697
        %v810 = vpop.f32.mrb[0].mxu0
        %v811 = vadd.f32 %v693, %v810
        %v812 = vpop.f32.mrb[0].mxu0
        %813 = vmatprep.mubr.f32.mxu0 0.0
        %814 = vmatmul.mubr.f32.gmra.mrb[0].mxu0 %v700
        %v815 = vpop.f32.mrb[0].mxu0
        %v816 = vadd.f32 %v693, %v815
        %v817 = vpop.f32.mrb[0].mxu0
        %818 = vmatprep.mubr.f32.mxu0 0.0
        %819 = vmatmul.mubr.f32.gmra.mrb[0].mxu0 %v703
        %v820 = vpop.f32.mrb[0].mxu0
        %v821 = vadd.f32 %v693, %v820
        %v822 = vpop.f32.mrb[0].mxu0
        %823 = vmatprep.mubr.f32.mxu0 0.0
        %824 = vmatmul.mubr.f32.gmra.mrb[0].mxu0 %v706
        %v825 = vpop.f32.mrb[0].mxu0
        %v826 = vadd.f32 %v693, %v825
        %v827 = vpop.f32.mrb[0].mxu0
        %828 = vmatprep.mubr.f32.mxu0 0.0
        %829 = vmatmul.mubr.f32.gmra.mrb[0].mxu0 %v709
        %v830 = vpop.f32.mrb[0].mxu0
        %v831 = vadd.f32 %v693, %v830
        %v832 = vpop.f32.mrb[0].mxu0
        %833 = vmatprep.mubr.f32.mxu0 0.0
        %834 = vmatmul.mubr.f32.gmra.mrb[0].mxu0 %v712
        %v835 = vpop.f32.mrb[0].mxu0
        %v836 = vadd.f32 %v693, %v835
        %v837 = vpop.f32.mrb[0].mxu0
        %838 = vmatprep.mubr.f32.mxu0 0.0
        %839 = vmatmul.mubr.f32.gmra.mrb[0].mxu0 %v715
        %v840 = vpop.f32.mrb[0].mxu0
        %v841 = vadd.f32 %v693, %v840
        %v842 = vpop.f32.mrb[0].mxu0
        %843 = vmatprep.mubr.f32.mxu0 0.0
        %844 = vmatmul.mubr.f32.gmra.mrb[0].mxu0 %v718
        %v845 = vpop.f32.mrb[0].mxu0
        %v846 = vadd.f32 %v693, %v845
        %v847 = vpop.f32.mrb[0].mxu0
        %848 = vmatprep.mubr.f32.mxu0 0.0
        %849 = vmatmul.mubr.f32.gmra.mrb[0].mxu0 %v721
        %v850 = vpop.f32.mrb[0].mxu0
        %v851 = vadd.f32 %v693, %v850
        %v852 = vpop.f32.mrb[0].mxu0
        %853 = vmatprep.mubr.f32.mxu0 0.0
        %854 = vmatmul.mubr.f32.gmra.mrb[0].mxu0 %v724
        %v855 = vpop.f32.mrb[0].mxu0
        %v856 = vadd.f32 %v693, %v855
        %v857 = vpop.f32.mrb[0].mxu0
        %858 = vmatprep.mubr.f32.mxu0 0.0
        %859 = vmatmul.mubr.f32.gmra.mrb[0].mxu0 %v727
        %v860 = vpop.f32.mrb[0].mxu0
        %v861 = vadd.f32 %v693, %v860
        %v862 = vpop.f32.mrb[0].mxu0
        %863 = vmatprep.mubr.f32.mxu0 0.0
        %864 = vmatmul.mubr.f32.gmra.mrb[0].mxu0 %v730
        %v865 = vpop.f32.mrb[0].mxu0
        %v866 = vadd.f32 %v693, %v865
        %v867 = vpop.f32.mrb[0].mxu0
        %868 = vmatprep.mubr.f32.mxu0 0.0
        %869 = vmatmul.mubr.f32.gmra.mrb[0].mxu0 %v733
        %v870 = vpop.f32.mrb[0].mxu0
        %v871 = vadd.f32 %v693, %v870
        %v872 = vpop.f32.mrb[0].mxu0
        %873 = vmatprep.mubr.f32.mxu0 0.0
        %874 = vmatmul.mubr.f32.gmra.mrb[0].mxu0 %v736
        %v875 = vpop.f32.mrb[0].mxu0
        %v876 = vadd.f32 %v693, %v875
        %v877 = vpop.f32.mrb[0].mxu0
        %878 = vmatprep.mubr.f32.mxu0 0.0
        %879 = vmatmul.mubr.f32.gmra.mrb[0].mxu0 %v739
        %v880 = vpop.f32.mrb[0].mxu0
        %v881 = vadd.f32 %v693, %v880
        %v882 = vpop.f32.mrb[0].mxu0
        %883 = vmatprep.mubr.f32.mxu0 0.0
        %884 = vmatmul.mubr.f32.gmra.mrb[0].mxu0 %v742
        %v885 = vpop.f32.mrb[0].mxu0
        %v886 = vadd.f32 %v693, %v885
        %v887 = vpop.f32.mrb[0].mxu0
        %888 = vdwg.mxu0
        %v889 = vmax.f32 %v811, 0.0
        %v890 = vmax.f32 %v816, 0.0
        %v891 = vmax.f32 %v821, 0.0
        %v892 = vmax.f32 %v826, 0.0
        %v893 = vmax.f32 %v831, 0.0
        %v894 = vmax.f32 %v836, 0.0
        %v895 = vmax.f32 %v841, 0.0
        %v896 = vmax.f32 %v846, 0.0
        %v897 = vmax.f32 %v851, 0.0
        %v898 = vmax.f32 %v856, 0.0
        %v899 = vmax.f32 %v861, 0.0
        %v900 = vmax.f32 %v866, 0.0
        %v901 = vmax.f32 %v871, 0.0
        %v902 = vmax.f32 %v876, 0.0
        %v903 = vmax.f32 %v881, 0.0
        %v904 = vmax.f32 %v886, 0.0
        %v905 = vsub.f32 0.0, %v889
        %v906 = vsub.f32 0.0, %v890
        %v907 = vsub.f32 0.0, %v891
        %v908 = vsub.f32 0.0, %v892
        %v909 = vsub.f32 0.0, %v893
        %v910 = vsub.f32 0.0, %v894
        %v911 = vsub.f32 0.0, %v895
        %v912 = vsub.f32 0.0, %v896
        %v913 = vsub.f32 0.0, %v897
        %v914 = vsub.f32 0.0, %v898
        %v915 = vsub.f32 0.0, %v899
        %v916 = vsub.f32 0.0, %v900
        %v917 = vsub.f32 0.0, %v901
        %v918 = vsub.f32 0.0, %v902
        %v919 = vsub.f32 0.0, %v903
        %v920 = vsub.f32 0.0, %v904
        %v921 = vmul.f32 %v905, 1.442695
        %v922 = vpow.pop %v921
        %v923 = vmul.f32 %v906, 1.442695
        %v924 = vpow.pop %v923
        %v925 = vmul.f32 %v907, 1.442695
        %v926 = vpow.pop %v925
        %v927 = vmul.f32 %v908, 1.442695
        %v928 = vpow.pop %v927
        %v929 = vmul.f32 %v909, 1.442695
        %v930 = vpow.pop %v929
        %v931 = vmul.f32 %v910, 1.442695
        %v932 = vpow.pop %v931
        %v933 = vmul.f32 %v911, 1.442695
        %v934 = vpow.pop %v933
        %v935 = vmul.f32 %v912, 1.442695
        %v936 = vpow.pop %v935
        %v937 = vmul.f32 %v913, 1.442695
        %v938 = vpow.pop %v937
        %v939 = vmul.f32 %v914, 1.442695
        %v940 = vpow.pop %v939
        %v941 = vmul.f32 %v915, 1.442695
        %v942 = vpow.pop %v941
        %v943 = vmul.f32 %v916, 1.442695
        %v944 = vpow.pop %v943
        %v945 = vmul.f32 %v917, 1.442695
        %v946 = vpow.pop %v945
        %v947 = vmul.f32 %v918, 1.442695
        %v948 = vpow.pop %v947
        %v949 = vmul.f32 %v919, 1.442695
        %v950 = vpow.pop %v949
        %v951 = vmul.f32 %v920, 1.442695
        %v952 = vpow.pop %v951
        %vm953 = vcmask 261120
        %954 = vst.msk [vmem:[#allocation5] sm:$0xff] %vm953, %v922
        %955 = vst.msk [vmem:[#allocation5 + $0x8] sm:$0xff] %vm953, %v924
        %956 = vst.msk [vmem:[#allocation5 + $0x10] sm:$0xff] %vm953, %v926
        %957 = vst.msk [vmem:[#allocation5 + $0x18] sm:$0xff] %vm953, %v928
        %958 = vst.msk [vmem:[#allocation5 + $0x20] sm:$0xff] %vm953, %v930
        %959 = vst.msk [vmem:[#allocation5 + $0x28] sm:$0xff] %vm953, %v932
        %960 = vst.msk [vmem:[#allocation5 + $0x30] sm:$0xff] %vm953, %v934
        %961 = vst.msk [vmem:[#allocation5 + $0x38] sm:$0xff] %vm953, %v936
        %962 = vst.msk [vmem:[#allocation5 + $0x40] sm:$0xff] %vm953, %v938
        %963 = vst.msk [vmem:[#allocation5 + $0x48] sm:$0xff] %vm953, %v940
        %964 = vst.msk [vmem:[#allocation5 + $0x50] sm:$0xff] %vm953, %v942
        %965 = vst.msk [vmem:[#allocation5 + $0x58] sm:$0xff] %vm953, %v944
        %966 = vst.msk [vmem:[#allocation5 + $0x60] sm:$0xff] %vm953, %v946
        %967 = vst.msk [vmem:[#allocation5 + $0x68] sm:$0xff] %vm953, %v948
        %968 = vst.msk [vmem:[#allocation5 + $0x70] sm:$0xff] %vm953, %v950
        %969 = vst.msk [vmem:[#allocation5 + $0x78] sm:$0xff] %vm953, %v952
        %v970 = vld [vmem:[%s5] sm:$0xff]
        %v971 = vld [vmem:[%s6] sm:$0x1]
        %v973 = vlaneseq
        %v974 = vshrl.u32 %v973, 7
        %v975 = vsub.s32 0, %v974
        %v976 = vrot.slane %v971, %v975
        %978 = vmatprep.subr.mxu0 0.0
        %979 = vmatpush1.msra.mxu0 %v970
        %980 = vmatprep.subr.mxu0 0.0
        %981 = vmatpush1.msra.mxu0 0.0
        %982 = vmatprep.subr.mxu0 0.0
        %983 = vmatpush1.msra.mxu0 0.0
        %984 = vmatprep.subr.mxu0 0.0
        %985 = vmatpush1.msra.mxu0 0.0
        %986 = vmatprep.subr.mxu0 0.0
        %987 = vmatpush1.msra.mxu0 0.0
        %988 = vmatprep.subr.mxu0 0.0
        %989 = vmatpush1.msra.mxu0 0.0
        %990 = vmatprep.subr.mxu0 0.0
        %991 = vmatpush1.msra.mxu0 0.0
        %992 = vmatprep.subr.mxu0 0.0
        %993 = vmatpush1.msra.mxu0 0.0
        %994 = vmatprep.subr.mxu0 0.0
        %995 = vmatpush1.msra.mxu0 0.0
        %996 = vmatprep.subr.mxu0 0.0
        %997 = vmatpush1.msra.mxu0 0.0
        %998 = vmatprep.subr.mxu0 0.0
        %999 = vmatpush1.msra.mxu0 0.0
        %1000 = vmatprep.subr.mxu0 0.0
        %1001 = vmatpush1.msra.mxu0 0.0
        %1002 = vmatprep.subr.mxu0 0.0
        %1003 = vmatpush1.msra.mxu0 0.0
        %1004 = vmatprep.subr.mxu0 0.0
        %1005 = vmatpush1.msra.mxu0 0.0
        %1006 = vmatprep.subr.mxu0 0.0
        %1007 = vmatpush1.msra.mxu0 0.0
        %1008 = vmatprep.subr.mxu0 0.0
        %1009 = vmatpush1.msra.mxu0 0.0
        %1010 = vmatprep.subr.mxu0 0.0
        %1011 = vmatpush1.msra.mxu0 0.0
        %1012 = vmatprep.subr.mxu0 0.0
        %1013 = vmatpush1.msra.mxu0 0.0
        %1014 = vmatprep.subr.mxu0 0.0
        %1015 = vmatpush1.msra.mxu0 0.0
        %1016 = vmatprep.subr.mxu0 0.0
        %1017 = vmatpush1.msra.mxu0 0.0
        %1018 = vmatprep.subr.mxu0 0.0
        %1019 = vmatpush1.msra.mxu0 0.0
        %1020 = vmatprep.subr.mxu0 0.0
        %1021 = vmatpush1.msra.mxu0 0.0
        %1022 = vmatprep.subr.mxu0 0.0
        %1023 = vmatpush1.msra.mxu0 0.0
        %1024 = vmatprep.subr.mxu0 0.0
        %1025 = vmatpush1.msra.mxu0 0.0
        %1026 = vmatprep.subr.mxu0 0.0
        %1027 = vmatpush1.msra.mxu0 0.0
        %1028 = vmatprep.subr.mxu0 0.0
        %1029 = vmatpush1.msra.mxu0 0.0
        %1030 = vmatprep.subr.mxu0 0.0
        %1031 = vmatpush1.msra.mxu0 0.0
        %1032 = vmatprep.subr.mxu0 0.0
        %1033 = vmatpush1.msra.mxu0 0.0
        %1034 = vmatprep.subr.mxu0 0.0
        %1035 = vmatpush1.msra.mxu0 0.0
        %1036 = vmatprep.subr.mxu0 0.0
        %1037 = vmatpush1.msra.mxu0 0.0
        %1038 = vmatprep.subr.mxu0 0.0
        %1039 = vmatpush1.msra.mxu0 0.0
        %1040 = vmatprep.subr.mxu0 0.0
        %1041 = vmatpush1.msra.mxu0 0.0
        %1042 = vmatprep.mubr.f32.mxu0 0.0
        %1043 = vmatmul.mubr.f32.gmra.mrb[0].mxu0 %v697
        %v1044 = vpop.f32.mrb[0].mxu0
        %v1045 = vadd.f32 %v976, %v1044
        %v1046 = vpop.f32.mrb[0].mxu0
        %1047 = vmatprep.mubr.f32.mxu0 0.0
        %1048 = vmatmul.mubr.f32.gmra.mrb[0].mxu0 %v700
        %v1049 = vpop.f32.mrb[0].mxu0
        %v1050 = vadd.f32 %v976, %v1049
        %v1051 = vpop.f32.mrb[0].mxu0
        %1052 = vmatprep.mubr.f32.mxu0 0.0
        %1053 = vmatmul.mubr.f32.gmra.mrb[0].mxu0 %v703
        %v1054 = vpop.f32.mrb[0].mxu0
        %v1055 = vadd.f32 %v976, %v1054
        %v1056 = vpop.f32.mrb[0].mxu0
        %1057 = vmatprep.mubr.f32.mxu0 0.0
        %1058 = vmatmul.mubr.f32.gmra.mrb[0].mxu0 %v706
        %v1059 = vpop.f32.mrb[0].mxu0
        %v1060 = vadd.f32 %v976, %v1059
        %v1061 = vpop.f32.mrb[0].mxu0
        %1062 = vmatprep.mubr.f32.mxu0 0.0
        %1063 = vmatmul.mubr.f32.gmra.mrb[0].mxu0 %v709
        %v1064 = vpop.f32.mrb[0].mxu0
        %v1065 = vadd.f32 %v976, %v1064
        %v1066 = vpop.f32.mrb[0].mxu0
        %1067 = vmatprep.mubr.f32.mxu0 0.0
        %1068 = vmatmul.mubr.f32.gmra.mrb[0].mxu0 %v712
        %v1069 = vpop.f32.mrb[0].mxu0
        %v1070 = vadd.f32 %v976, %v1069
        %v1071 = vpop.f32.mrb[0].mxu0
        %1072 = vmatprep.mubr.f32.mxu0 0.0
        %1073 = vmatmul.mubr.f32.gmra.mrb[0].mxu0 %v715
        %v1074 = vpop.f32.mrb[0].mxu0
        %v1075 = vadd.f32 %v976, %v1074
        %v1076 = vpop.f32.mrb[0].mxu0
        %1077 = vmatprep.mubr.f32.mxu0 0.0
        %1078 = vmatmul.mubr.f32.gmra.mrb[0].mxu0 %v718
        %v1079 = vpop.f32.mrb[0].mxu0
        %v1080 = vadd.f32 %v976, %v1079
        %v1081 = vpop.f32.mrb[0].mxu0
        %1082 = vmatprep.mubr.f32.mxu0 0.0
        %1083 = vmatmul.mubr.f32.gmra.mrb[0].mxu0 %v721
        %v1084 = vpop.f32.mrb[0].mxu0
        %v1085 = vadd.f32 %v976, %v1084
        %v1086 = vpop.f32.mrb[0].mxu0
        %1087 = vmatprep.mubr.f32.mxu0 0.0
        %1088 = vmatmul.mubr.f32.gmra.mrb[0].mxu0 %v724
        %v1089 = vpop.f32.mrb[0].mxu0
        %v1090 = vadd.f32 %v976, %v1089
        %v1091 = vpop.f32.mrb[0].mxu0
        %1092 = vmatprep.mubr.f32.mxu0 0.0
        %1093 = vmatmul.mubr.f32.gmra.mrb[0].mxu0 %v727
        %v1094 = vpop.f32.mrb[0].mxu0
        %v1095 = vadd.f32 %v976, %v1094
        %v1096 = vpop.f32.mrb[0].mxu0
        %1097 = vmatprep.mubr.f32.mxu0 0.0
        %1098 = vmatmul.mubr.f32.gmra.mrb[0].mxu0 %v730
        %v1099 = vpop.f32.mrb[0].mxu0
        %v1100 = vadd.f32 %v976, %v1099
        %v1101 = vpop.f32.mrb[0].mxu0
        %1102 = vmatprep.mubr.f32.mxu0 0.0
        %1103 = vmatmul.mubr.f32.gmra.mrb[0].mxu0 %v733
        %v1104 = vpop.f32.mrb[0].mxu0
        %v1105 = vadd.f32 %v976, %v1104
        %v1106 = vpop.f32.mrb[0].mxu0
        %1107 = vmatprep.mubr.f32.mxu0 0.0
        %1108 = vmatmul.mubr.f32.gmra.mrb[0].mxu0 %v736
        %v1109 = vpop.f32.mrb[0].mxu0
        %v1110 = vadd.f32 %v976, %v1109
        %v1111 = vpop.f32.mrb[0].mxu0
        %1112 = vmatprep.mubr.f32.mxu0 0.0
        %1113 = vmatmul.mubr.f32.gmra.mrb[0].mxu0 %v739
        %v1114 = vpop.f32.mrb[0].mxu0
        %v1115 = vadd.f32 %v976, %v1114
        %v1116 = vpop.f32.mrb[0].mxu0
        %1117 = vmatprep.mubr.f32.mxu0 0.0
        %1118 = vmatmul.mubr.f32.gmra.mrb[0].mxu0 %v742
        %v1119 = vpop.f32.mrb[0].mxu0
        %v1120 = vadd.f32 %v976, %v1119
        %v1121 = vpop.f32.mrb[0].mxu0
        %1122 = vdwg.mxu0
        %v1123 = vmax.f32 %v1045, 0.0
        %v1124 = vmax.f32 %v1050, 0.0
        %v1125 = vmax.f32 %v1055, 0.0
        %v1126 = vmax.f32 %v1060, 0.0
        %v1127 = vmax.f32 %v1065, 0.0
        %v1128 = vmax.f32 %v1070, 0.0
        %v1129 = vmax.f32 %v1075, 0.0
        %v1130 = vmax.f32 %v1080, 0.0
        %v1131 = vmax.f32 %v1085, 0.0
        %v1132 = vmax.f32 %v1090, 0.0
        %v1133 = vmax.f32 %v1095, 0.0
        %v1134 = vmax.f32 %v1100, 0.0
        %v1135 = vmax.f32 %v1105, 0.0
        %v1136 = vmax.f32 %v1110, 0.0
        %v1137 = vmax.f32 %v1115, 0.0
        %v1138 = vmax.f32 %v1120, 0.0
        %v1139 = vsub.f32 0.0, %v1123
        %v1140 = vsub.f32 0.0, %v1124
        %v1141 = vsub.f32 0.0, %v1125
        %v1142 = vsub.f32 0.0, %v1126
        %v1143 = vsub.f32 0.0, %v1127
        %v1144 = vsub.f32 0.0, %v1128
        %v1145 = vsub.f32 0.0, %v1129
        %v1146 = vsub.f32 0.0, %v1130
        %v1147 = vsub.f32 0.0, %v1131
        %v1148 = vsub.f32 0.0, %v1132
        %v1149 = vsub.f32 0.0, %v1133
        %v1150 = vsub.f32 0.0, %v1134
        %v1151 = vsub.f32 0.0, %v1135
        %v1152 = vsub.f32 0.0, %v1136
        %v1153 = vsub.f32 0.0, %v1137
        %v1154 = vsub.f32 0.0, %v1138
        %v1155 = vmul.f32 %v1139, 1.442695
        %v1156 = vpow.pop %v1155
        %v1157 = vmul.f32 %v1140, 1.442695
        %v1158 = vpow.pop %v1157
        %v1159 = vmul.f32 %v1141, 1.442695
        %v1160 = vpow.pop %v1159
        %v1161 = vmul.f32 %v1142, 1.442695
        %v1162 = vpow.pop %v1161
        %v1163 = vmul.f32 %v1143, 1.442695
        %v1164 = vpow.pop %v1163
        %v1165 = vmul.f32 %v1144, 1.442695
        %v1166 = vpow.pop %v1165
        %v1167 = vmul.f32 %v1145, 1.442695
        %v1168 = vpow.pop %v1167
        %v1169 = vmul.f32 %v1146, 1.442695
        %v1170 = vpow.pop %v1169
        %v1171 = vmul.f32 %v1147, 1.442695
        %v1172 = vpow.pop %v1171
        %v1173 = vmul.f32 %v1148, 1.442695
        %v1174 = vpow.pop %v1173
        %v1175 = vmul.f32 %v1149, 1.442695
        %v1176 = vpow.pop %v1175
        %v1177 = vmul.f32 %v1150, 1.442695
        %v1178 = vpow.pop %v1177
        %v1179 = vmul.f32 %v1151, 1.442695
        %v1180 = vpow.pop %v1179
        %v1181 = vmul.f32 %v1152, 1.442695
        %v1182 = vpow.pop %v1181
        %v1183 = vmul.f32 %v1153, 1.442695
        %v1184 = vpow.pop %v1183
        %v1185 = vmul.f32 %v1154, 1.442695
        %v1186 = vpow.pop %v1185
        %v1187 = vld [vmem:[%s11] sm:$0xff]
        %v1188 = vld [vmem:[%s12] sm:$0xff]
        %v1190 = vsel %vm695, %v671, 0
        %v1193 = vsel %vm695, %v672, 0
        %v1196 = vsel %vm695, %v673, 0
        %v1199 = vsel %vm695, %v674, 0
        %v1202 = vsel %vm695, %v675, 0
        %v1205 = vsel %vm695, %v676, 0
        %v1208 = vsel %vm695, %v677, 0
        %v1211 = vsel %vm695, %v678, 0
        %v1214 = vsel %vm695, %v679, 0
        %v1217 = vsel %vm695, %v680, 0
        %v1220 = vsel %vm695, %v681, 0
        %v1223 = vsel %vm695, %v682, 0
        %v1226 = vsel %vm695, %v683, 0
        %v1229 = vsel %vm695, %v684, 0
        %v1232 = vsel %vm695, %v685, 0
        %v1235 = vsel %vm695, %v686, 0
        %1237 = vmatprep.subr.mxu0 0.0
        %1238 = vmatpush1.msra.mxu0 %v1188
        %1239 = vmatprep.subr.mxu0 0.0
        %1240 = vmatpush1.msra.mxu0 0.0
        %1241 = vmatprep.subr.mxu0 0.0
        %1242 = vmatpush1.msra.mxu0 0.0
        %1243 = vmatprep.subr.mxu0 0.0
        %1244 = vmatpush1.msra.mxu0 0.0
        %1245 = vmatprep.subr.mxu0 0.0
        %1246 = vmatpush1.msra.mxu0 0.0
        %1247 = vmatprep.subr.mxu0 0.0
        %1248 = vmatpush1.msra.mxu0 0.0
        %1249 = vmatprep.subr.mxu0 0.0
        %1250 = vmatpush1.msra.mxu0 0.0
        %1251 = vmatprep.subr.mxu0 0.0
        %1252 = vmatpush1.msra.mxu0 0.0
        %1253 = vmatprep.subr.mxu0 0.0
        %1254 = vmatpush1.msra.mxu0 0.0
        %1255 = vmatprep.subr.mxu0 0.0
        %1256 = vmatpush1.msra.mxu0 0.0
        %1257 = vmatprep.subr.mxu0 0.0
        %1258 = vmatpush1.msra.mxu0 0.0
        %1259 = vmatprep.subr.mxu0 0.0
        %1260 = vmatpush1.msra.mxu0 0.0
        %1261 = vmatprep.subr.mxu0 0.0
        %1262 = vmatpush1.msra.mxu0 0.0
        %1263 = vmatprep.subr.mxu0 0.0
        %1264 = vmatpush1.msra.mxu0 0.0
        %1265 = vmatprep.subr.mxu0 0.0
        %1266 = vmatpush1.msra.mxu0 0.0
        %1267 = vmatprep.subr.mxu0 0.0
        %1268 = vmatpush1.msra.mxu0 0.0
        %1269 = vmatprep.subr.mxu0 0.0
        %1270 = vmatpush1.msra.mxu0 0.0
        %1271 = vmatprep.subr.mxu0 0.0
        %1272 = vmatpush1.msra.mxu0 0.0
        %1273 = vmatprep.subr.mxu0 0.0
        %1274 = vmatpush1.msra.mxu0 0.0
        %1275 = vmatprep.subr.mxu0 0.0
        %1276 = vmatpush1.msra.mxu0 0.0
        %1277 = vmatprep.subr.mxu0 0.0
        %1278 = vmatpush1.msra.mxu0 0.0
        %1279 = vmatprep.subr.mxu0 0.0
        %1280 = vmatpush1.msra.mxu0 0.0
        %1281 = vmatprep.subr.mxu0 0.0
        %1282 = vmatpush1.msra.mxu0 0.0
        %1283 = vmatprep.subr.mxu0 0.0
        %1284 = vmatpush1.msra.mxu0 0.0
        %1285 = vmatprep.subr.mxu0 0.0
        %1286 = vmatpush1.msra.mxu0 0.0
        %1287 = vmatprep.subr.mxu0 0.0
        %1288 = vmatpush1.msra.mxu0 0.0
        %1289 = vmatprep.subr.mxu0 0.0
        %1290 = vmatpush1.msra.mxu0 0.0
        %1291 = vmatprep.subr.mxu0 0.0
        %1292 = vmatpush1.msra.mxu0 0.0
        %1293 = vmatprep.subr.mxu0 0.0
        %1294 = vmatpush1.msra.mxu0 0.0
        %1295 = vmatprep.subr.mxu0 0.0
        %1296 = vmatpush1.msra.mxu0 0.0
        %1297 = vmatprep.subr.mxu0 0.0
        %1298 = vmatpush1.msra.mxu0 0.0
        %1299 = vmatprep.subr.mxu0 0.0
        %1300 = vmatpush1.msra.mxu0 0.0
        %1301 = vmatprep.mubr.f32.mxu0 0.0
        %1302 = vmatmul.mubr.f32.gmra.mrb[0].mxu0 %v1190
        %v1303 = vpop.f32.mrb[0].mxu0
        %v1304 = vadd.f32 0.0, %v1303
        %v1305 = vpop.f32.mrb[0].mxu0
        %1306 = vmatprep.mubr.f32.mxu0 0.0
        %1307 = vmatmul.mubr.f32.gmra.mrb[0].mxu0 %v1193
        %v1308 = vpop.f32.mrb[0].mxu0
        %v1309 = vadd.f32 0.0, %v1308
        %v1310 = vpop.f32.mrb[0].mxu0
        %1311 = vmatprep.mubr.f32.mxu0 0.0
        %1312 = vmatmul.mubr.f32.gmra.mrb[0].mxu0 %v1196
        %v1313 = vpop.f32.mrb[0].mxu0
        %v1314 = vadd.f32 0.0, %v1313
        %v1315 = vpop.f32.mrb[0].mxu0
        %1316 = vmatprep.mubr.f32.mxu0 0.0
        %1317 = vmatmul.mubr.f32.gmra.mrb[0].mxu0 %v1199
        %v1318 = vpop.f32.mrb[0].mxu0
        %v1319 = vadd.f32 0.0, %v1318
        %v1320 = vpop.f32.mrb[0].mxu0
        %1321 = vmatprep.mubr.f32.mxu0 0.0
        %1322 = vmatmul.mubr.f32.gmra.mrb[0].mxu0 %v1202
        %v1323 = vpop.f32.mrb[0].mxu0
        %v1324 = vadd.f32 0.0, %v1323
        %v1325 = vpop.f32.mrb[0].mxu0
        %1326 = vmatprep.mubr.f32.mxu0 0.0
        %1327 = vmatmul.mubr.f32.gmra.mrb[0].mxu0 %v1205
        %v1328 = vpop.f32.mrb[0].mxu0
        %v1329 = vadd.f32 0.0, %v1328
        %v1330 = vpop.f32.mrb[0].mxu0
        %1331 = vmatprep.mubr.f32.mxu0 0.0
        %1332 = vmatmul.mubr.f32.gmra.mrb[0].mxu0 %v1208
        %v1333 = vpop.f32.mrb[0].mxu0
        %v1334 = vadd.f32 0.0, %v1333
        %v1335 = vpop.f32.mrb[0].mxu0
        %1336 = vmatprep.mubr.f32.mxu0 0.0
        %1337 = vmatmul.mubr.f32.gmra.mrb[0].mxu0 %v1211
        %v1338 = vpop.f32.mrb[0].mxu0
        %v1339 = vadd.f32 0.0, %v1338
        %v1340 = vpop.f32.mrb[0].mxu0
        %1341 = vmatprep.mubr.f32.mxu0 0.0
        %1342 = vmatmul.mubr.f32.gmra.mrb[0].mxu0 %v1214
        %v1343 = vpop.f32.mrb[0].mxu0
        %v1344 = vadd.f32 0.0, %v1343
        %v1345 = vpop.f32.mrb[0].mxu0
        %1346 = vmatprep.mubr.f32.mxu0 0.0
        %1347 = vmatmul.mubr.f32.gmra.mrb[0].mxu0 %v1217
        %v1348 = vpop.f32.mrb[0].mxu0
        %v1349 = vadd.f32 0.0, %v1348
        %v1350 = vpop.f32.mrb[0].mxu0
        %1351 = vmatprep.mubr.f32.mxu0 0.0
        %1352 = vmatmul.mubr.f32.gmra.mrb[0].mxu0 %v1220
        %v1353 = vpop.f32.mrb[0].mxu0
        %v1354 = vadd.f32 0.0, %v1353
        %v1355 = vpop.f32.mrb[0].mxu0
        %1356 = vmatprep.mubr.f32.mxu0 0.0
        %1357 = vmatmul.mubr.f32.gmra.mrb[0].mxu0 %v1223
        %v1358 = vpop.f32.mrb[0].mxu0
        %v1359 = vadd.f32 0.0, %v1358
        %v1360 = vpop.f32.mrb[0].mxu0
        %1361 = vmatprep.mubr.f32.mxu0 0.0
        %1362 = vmatmul.mubr.f32.gmra.mrb[0].mxu0 %v1226
        %v1363 = vpop.f32.mrb[0].mxu0
        %v1364 = vadd.f32 0.0, %v1363
        %v1365 = vpop.f32.mrb[0].mxu0
        %1366 = vmatprep.mubr.f32.mxu0 0.0
        %1367 = vmatmul.mubr.f32.gmra.mrb[0].mxu0 %v1229
        %v1368 = vpop.f32.mrb[0].mxu0
        %v1369 = vadd.f32 0.0, %v1368
        %v1370 = vpop.f32.mrb[0].mxu0
        %1371 = vmatprep.mubr.f32.mxu0 0.0
        %1372 = vmatmul.mubr.f32.gmra.mrb[0].mxu0 %v1232
        %v1373 = vpop.f32.mrb[0].mxu0
        %v1374 = vadd.f32 0.0, %v1373
        %v1375 = vpop.f32.mrb[0].mxu0
        %1376 = vmatprep.mubr.f32.mxu0 0.0
        %1377 = vmatmul.mubr.f32.gmra.mrb[0].mxu0 %v1235
        %v1378 = vpop.f32.mrb[0].mxu0
        %v1379 = vadd.f32 0.0, %v1378
        %v1380 = vpop.f32.mrb[0].mxu0
        %1381 = vdwg.mxu0
        %v1383 = vsel %vm695, %v1156, 0
        %v1386 = vsel %vm695, %v1158, 0
        %v1389 = vsel %vm695, %v1160, 0
        %v1392 = vsel %vm695, %v1162, 0
        %v1395 = vsel %vm695, %v1164, 0
        %v1398 = vsel %vm695, %v1166, 0
        %v1401 = vsel %vm695, %v1168, 0
        %v1404 = vsel %vm695, %v1170, 0
        %v1407 = vsel %vm695, %v1172, 0
        %v1410 = vsel %vm695, %v1174, 0
        %v1413 = vsel %vm695, %v1176, 0
        %v1416 = vsel %vm695, %v1178, 0
        %v1419 = vsel %vm695, %v1180, 0
        %v1422 = vsel %vm695, %v1182, 0
        %v1425 = vsel %vm695, %v1184, 0
        %v1428 = vsel %vm695, %v1186, 0
        %1430 = vmatprep.subr.mxu0 0.0
        %1431 = vmatpush1.msra.mxu0 %v1187
        %1432 = vmatprep.subr.mxu0 0.0
        %1433 = vmatpush1.msra.mxu0 0.0
        %1434 = vmatprep.subr.mxu0 0.0
        %1435 = vmatpush1.msra.mxu0 0.0
        %1436 = vmatprep.subr.mxu0 0.0
        %1437 = vmatpush1.msra.mxu0 0.0
        %1438 = vmatprep.subr.mxu0 0.0
        %1439 = vmatpush1.msra.mxu0 0.0
        %1440 = vmatprep.subr.mxu0 0.0
        %1441 = vmatpush1.msra.mxu0 0.0
        %1442 = vmatprep.subr.mxu0 0.0
        %1443 = vmatpush1.msra.mxu0 0.0
        %1444 = vmatprep.subr.mxu0 0.0
        %1445 = vmatpush1.msra.mxu0 0.0
        %1446 = vmatprep.subr.mxu0 0.0
        %1447 = vmatpush1.msra.mxu0 0.0
        %1448 = vmatprep.subr.mxu0 0.0
        %1449 = vmatpush1.msra.mxu0 0.0
        %1450 = vmatprep.subr.mxu0 0.0
        %1451 = vmatpush1.msra.mxu0 0.0
        %1452 = vmatprep.subr.mxu0 0.0
        %1453 = vmatpush1.msra.mxu0 0.0
        %1454 = vmatprep.subr.mxu0 0.0
        %1455 = vmatpush1.msra.mxu0 0.0
        %1456 = vmatprep.subr.mxu0 0.0
        %1457 = vmatpush1.msra.mxu0 0.0
        %1458 = vmatprep.subr.mxu0 0.0
        %1459 = vmatpush1.msra.mxu0 0.0
        %1460 = vmatprep.subr.mxu0 0.0
        %1461 = vmatpush1.msra.mxu0 0.0
        %1462 = vmatprep.subr.mxu0 0.0
        %1463 = vmatpush1.msra.mxu0 0.0
        %1464 = vmatprep.subr.mxu0 0.0
        %1465 = vmatpush1.msra.mxu0 0.0
        %1466 = vmatprep.subr.mxu0 0.0
        %1467 = vmatpush1.msra.mxu0 0.0
        %1468 = vmatprep.subr.mxu0 0.0
        %1469 = vmatpush1.msra.mxu0 0.0
        %1470 = vmatprep.subr.mxu0 0.0
        %1471 = vmatpush1.msra.mxu0 0.0
        %1472 = vmatprep.subr.mxu0 0.0
        %1473 = vmatpush1.msra.mxu0 0.0
        %1474 = vmatprep.subr.mxu0 0.0
        %1475 = vmatpush1.msra.mxu0 0.0
        %1476 = vmatprep.subr.mxu0 0.0
        %1477 = vmatpush1.msra.mxu0 0.0
        %1478 = vmatprep.subr.mxu0 0.0
        %1479 = vmatpush1.msra.mxu0 0.0
        %1480 = vmatprep.subr.mxu0 0.0
        %1481 = vmatpush1.msra.mxu0 0.0
        %1482 = vmatprep.subr.mxu0 0.0
        %1483 = vmatpush1.msra.mxu0 0.0
        %1484 = vmatprep.subr.mxu0 0.0
        %1485 = vmatpush1.msra.mxu0 0.0
        %1486 = vmatprep.subr.mxu0 0.0
        %1487 = vmatpush1.msra.mxu0 0.0
        %1488 = vmatprep.subr.mxu0 0.0
        %1489 = vmatpush1.msra.mxu0 0.0
        %1490 = vmatprep.subr.mxu0 0.0
        %1491 = vmatpush1.msra.mxu0 0.0
        %1492 = vmatprep.subr.mxu0 0.0
        %1493 = vmatpush1.msra.mxu0 0.0
        %1494 = vmatprep.mubr.f32.mxu0 0.0
        %1495 = vmatmul.mubr.f32.gmra.mrb[0].mxu0 %v1383
        %v1496 = vpop.f32.mrb[0].mxu0
        %v1497 = vadd.f32 %v1304, %v1496
        %v1498 = vpop.f32.mrb[0].mxu0
        %1499 = vmatprep.mubr.f32.mxu0 0.0
        %1500 = vmatmul.mubr.f32.gmra.mrb[0].mxu0 %v1386
        %v1501 = vpop.f32.mrb[0].mxu0
        %v1502 = vadd.f32 %v1309, %v1501
        %v1503 = vpop.f32.mrb[0].mxu0
        %1504 = vmatprep.mubr.f32.mxu0 0.0
        %1505 = vmatmul.mubr.f32.gmra.mrb[0].mxu0 %v1389
        %v1506 = vpop.f32.mrb[0].mxu0
        %v1507 = vadd.f32 %v1314, %v1506
        %v1508 = vpop.f32.mrb[0].mxu0
        %1509 = vmatprep.mubr.f32.mxu0 0.0
        %1510 = vmatmul.mubr.f32.gmra.mrb[0].mxu0 %v1392
        %v1511 = vpop.f32.mrb[0].mxu0
        %v1512 = vadd.f32 %v1319, %v1511
        %v1513 = vpop.f32.mrb[0].mxu0
        %1514 = vmatprep.mubr.f32.mxu0 0.0
        %1515 = vmatmul.mubr.f32.gmra.mrb[0].mxu0 %v1395
        %v1516 = vpop.f32.mrb[0].mxu0
        %v1517 = vadd.f32 %v1324, %v1516
        %v1518 = vpop.f32.mrb[0].mxu0
        %1519 = vmatprep.mubr.f32.mxu0 0.0
        %1520 = vmatmul.mubr.f32.gmra.mrb[0].mxu0 %v1398
        %v1521 = vpop.f32.mrb[0].mxu0
        %v1522 = vadd.f32 %v1329, %v1521
        %v1523 = vpop.f32.mrb[0].mxu0
        %1524 = vmatprep.mubr.f32.mxu0 0.0
        %1525 = vmatmul.mubr.f32.gmra.mrb[0].mxu0 %v1401
        %v1526 = vpop.f32.mrb[0].mxu0
        %v1527 = vadd.f32 %v1334, %v1526
        %v1528 = vpop.f32.mrb[0].mxu0
        %1529 = vmatprep.mubr.f32.mxu0 0.0
        %1530 = vmatmul.mubr.f32.gmra.mrb[0].mxu0 %v1404
        %v1531 = vpop.f32.mrb[0].mxu0
        %v1532 = vadd.f32 %v1339, %v1531
        %v1533 = vpop.f32.mrb[0].mxu0
        %1534 = vmatprep.mubr.f32.mxu0 0.0
        %1535 = vmatmul.mubr.f32.gmra.mrb[0].mxu0 %v1407
        %v1536 = vpop.f32.mrb[0].mxu0
        %v1537 = vadd.f32 %v1344, %v1536
        %v1538 = vpop.f32.mrb[0].mxu0
        %1539 = vmatprep.mubr.f32.mxu0 0.0
        %1540 = vmatmul.mubr.f32.gmra.mrb[0].mxu0 %v1410
        %v1541 = vpop.f32.mrb[0].mxu0
        %v1542 = vadd.f32 %v1349, %v1541
        %v1543 = vpop.f32.mrb[0].mxu0
        %1544 = vmatprep.mubr.f32.mxu0 0.0
        %1545 = vmatmul.mubr.f32.gmra.mrb[0].mxu0 %v1413
        %v1546 = vpop.f32.mrb[0].mxu0
        %v1547 = vadd.f32 %v1354, %v1546
        %v1548 = vpop.f32.mrb[0].mxu0
        %1549 = vmatprep.mubr.f32.mxu0 0.0
        %1550 = vmatmul.mubr.f32.gmra.mrb[0].mxu0 %v1416
        %v1551 = vpop.f32.mrb[0].mxu0
        %v1552 = vadd.f32 %v1359, %v1551
        %v1553 = vpop.f32.mrb[0].mxu0
        %1554 = vmatprep.mubr.f32.mxu0 0.0
        %1555 = vmatmul.mubr.f32.gmra.mrb[0].mxu0 %v1419
        %v1556 = vpop.f32.mrb[0].mxu0
        %v1557 = vadd.f32 %v1364, %v1556
        %v1558 = vpop.f32.mrb[0].mxu0
        %1559 = vmatprep.mubr.f32.mxu0 0.0
        %1560 = vmatmul.mubr.f32.gmra.mrb[0].mxu0 %v1422
        %v1561 = vpop.f32.mrb[0].mxu0
        %v1562 = vadd.f32 %v1369, %v1561
        %v1563 = vpop.f32.mrb[0].mxu0
        %1564 = vmatprep.mubr.f32.mxu0 0.0
        %1565 = vmatmul.mubr.f32.gmra.mrb[0].mxu0 %v1425
        %v1566 = vpop.f32.mrb[0].mxu0
        %v1567 = vadd.f32 %v1374, %v1566
        %v1568 = vpop.f32.mrb[0].mxu0
        %1569 = vmatprep.mubr.f32.mxu0 0.0
        %1570 = vmatmul.mubr.f32.gmra.mrb[0].mxu0 %v1428
        %v1571 = vpop.f32.mrb[0].mxu0
        %v1572 = vadd.f32 %v1379, %v1571
        %v1573 = vpop.f32.mrb[0].mxu0
        %1574 = vdwg.mxu0
        %v1575 = vld [vmem:[%s13] sm:$0x1]
        %v1577 = vlaneseq
        %v1578 = vshrl.u32 %v1577, 7
        %v1579 = vsub.s32 0, %v1578
        %v1580 = vrot.slane %v1575, %v1579
        %v1582 = vadd.f32 %v1497, %v1580
        %v1583 = vadd.f32 %v1502, %v1580
        %v1584 = vadd.f32 %v1507, %v1580
        %v1585 = vadd.f32 %v1512, %v1580
        %v1586 = vadd.f32 %v1517, %v1580
        %v1587 = vadd.f32 %v1522, %v1580
        %v1588 = vadd.f32 %v1527, %v1580
        %v1589 = vadd.f32 %v1532, %v1580
        %v1590 = vadd.f32 %v1537, %v1580
        %v1591 = vadd.f32 %v1542, %v1580
        %v1592 = vadd.f32 %v1547, %v1580
        %v1593 = vadd.f32 %v1552, %v1580
        %v1594 = vadd.f32 %v1557, %v1580
        %v1595 = vadd.f32 %v1562, %v1580
        %v1596 = vadd.f32 %v1567, %v1580
        %v1597 = vadd.f32 %v1572, %v1580
        %1598 = vst.msk [vmem:[#allocation6] sm:$0xff] %vm695, %v1582
        %1599 = vst.msk [vmem:[#allocation6 + $0x8] sm:$0xff] %vm695, %v1583
        %1600 = vst.msk [vmem:[#allocation6 + $0x10] sm:$0xff] %vm695, %v1584
        %1601 = vst.msk [vmem:[#allocation6 + $0x18] sm:$0xff] %vm695, %v1585
        %1602 = vst.msk [vmem:[#allocation6 + $0x20] sm:$0xff] %vm695, %v1586
        %1603 = vst.msk [vmem:[#allocation6 + $0x28] sm:$0xff] %vm695, %v1587
        %1604 = vst.msk [vmem:[#allocation6 + $0x30] sm:$0xff] %vm695, %v1588
        %1605 = vst.msk [vmem:[#allocation6 + $0x38] sm:$0xff] %vm695, %v1589
        %1606 = vst.msk [vmem:[#allocation6 + $0x40] sm:$0xff] %vm695, %v1590
        %1607 = vst.msk [vmem:[#allocation6 + $0x48] sm:$0xff] %vm695, %v1591
        %1608 = vst.msk [vmem:[#allocation6 + $0x50] sm:$0xff] %vm695, %v1592
        %1609 = vst.msk [vmem:[#allocation6 + $0x58] sm:$0xff] %vm695, %v1593
        %1610 = vst.msk [vmem:[#allocation6 + $0x60] sm:$0xff] %vm695, %v1594
        %1611 = vst.msk [vmem:[#allocation6 + $0x68] sm:$0xff] %vm695, %v1595
        %1612 = vst.msk [vmem:[#allocation6 + $0x70] sm:$0xff] %vm695, %v1596
        %1613 = vst.msk [vmem:[#allocation6 + $0x78] sm:$0xff] %vm695, %v1597
        %v1614 = vld [vmem:[%s15] sm:$0xff]
        %v1615 = vld [vmem:[%s17] sm:$0x1]
        %v1617 = vlaneseq
        %v1618 = vshrl.u32 %v1617, 7
        %v1619 = vsub.s32 0, %v1618
        %v1620 = vrot.slane %v1615, %v1619
        %1622 = vmatprep.subr.mxu0 0.0
        %1623 = vmatpush1.msra.mxu0 %v1614
        %1624 = vmatprep.subr.mxu0 0.0
        %1625 = vmatpush1.msra.mxu0 0.0
        %1626 = vmatprep.subr.mxu0 0.0
        %1627 = vmatpush1.msra.mxu0 0.0
        %1628 = vmatprep.subr.mxu0 0.0
        %1629 = vmatpush1.msra.mxu0 0.0
        %1630 = vmatprep.subr.mxu0 0.0
        %1631 = vmatpush1.msra.mxu0 0.0
        %1632 = vmatprep.subr.mxu0 0.0
        %1633 = vmatpush1.msra.mxu0 0.0
        %1634 = vmatprep.subr.mxu0 0.0
        %1635 = vmatpush1.msra.mxu0 0.0
        %1636 = vmatprep.subr.mxu0 0.0
        %1637 = vmatpush1.msra.mxu0 0.0
        %1638 = vmatprep.subr.mxu0 0.0
        %1639 = vmatpush1.msra.mxu0 0.0
        %1640 = vmatprep.subr.mxu0 0.0
        %1641 = vmatpush1.msra.mxu0 0.0
        %1642 = vmatprep.subr.mxu0 0.0
        %1643 = vmatpush1.msra.mxu0 0.0
        %1644 = vmatprep.subr.mxu0 0.0
        %1645 = vmatpush1.msra.mxu0 0.0
        %1646 = vmatprep.subr.mxu0 0.0
        %1647 = vmatpush1.msra.mxu0 0.0
        %1648 = vmatprep.subr.mxu0 0.0
        %1649 = vmatpush1.msra.mxu0 0.0
        %1650 = vmatprep.subr.mxu0 0.0
        %1651 = vmatpush1.msra.mxu0 0.0
        %1652 = vmatprep.subr.mxu0 0.0
        %1653 = vmatpush1.msra.mxu0 0.0
        %1654 = vmatprep.subr.mxu0 0.0
        %1655 = vmatpush1.msra.mxu0 0.0
        %1656 = vmatprep.subr.mxu0 0.0
        %1657 = vmatpush1.msra.mxu0 0.0
        %1658 = vmatprep.subr.mxu0 0.0
        %1659 = vmatpush1.msra.mxu0 0.0
        %1660 = vmatprep.subr.mxu0 0.0
        %1661 = vmatpush1.msra.mxu0 0.0
        %1662 = vmatprep.subr.mxu0 0.0
        %1663 = vmatpush1.msra.mxu0 0.0
        %1664 = vmatprep.subr.mxu0 0.0
        %1665 = vmatpush1.msra.mxu0 0.0
        %1666 = vmatprep.subr.mxu0 0.0
        %1667 = vmatpush1.msra.mxu0 0.0
        %1668 = vmatprep.subr.mxu0 0.0
        %1669 = vmatpush1.msra.mxu0 0.0
        %1670 = vmatprep.subr.mxu0 0.0
        %1671 = vmatpush1.msra.mxu0 0.0
        %1672 = vmatprep.subr.mxu0 0.0
        %1673 = vmatpush1.msra.mxu0 0.0
        %1674 = vmatprep.subr.mxu0 0.0
        %1675 = vmatpush1.msra.mxu0 0.0
        %1676 = vmatprep.subr.mxu0 0.0
        %1677 = vmatpush1.msra.mxu0 0.0
        %1678 = vmatprep.subr.mxu0 0.0
        %1679 = vmatpush1.msra.mxu0 0.0
        %1680 = vmatprep.subr.mxu0 0.0
        %1681 = vmatpush1.msra.mxu0 0.0
        %1682 = vmatprep.subr.mxu0 0.0
        %1683 = vmatpush1.msra.mxu0 0.0
        %1684 = vmatprep.subr.mxu0 0.0
        %1685 = vmatpush1.msra.mxu0 0.0
        %1686 = vmatprep.mubr.f32.mxu0 0.0
        %1687 = vmatmul.mubr.f32.gmra.mrb[0].mxu0 %v1190
        %v1688 = vpop.f32.mrb[0].mxu0
        %v1689 = vadd.f32 %v1620, %v1688
        %v1690 = vpop.f32.mrb[0].mxu0
        %1691 = vmatprep.mubr.f32.mxu0 0.0
        %1692 = vmatmul.mubr.f32.gmra.mrb[0].mxu0 %v1193
        %v1693 = vpop.f32.mrb[0].mxu0
        %v1694 = vadd.f32 %v1620, %v1693
        %v1695 = vpop.f32.mrb[0].mxu0
        %1696 = vmatprep.mubr.f32.mxu0 0.0
        %1697 = vmatmul.mubr.f32.gmra.mrb[0].mxu0 %v1196
        %v1698 = vpop.f32.mrb[0].mxu0
        %v1699 = vadd.f32 %v1620, %v1698
        %v1700 = vpop.f32.mrb[0].mxu0
        %1701 = vmatprep.mubr.f32.mxu0 0.0
        %1702 = vmatmul.mubr.f32.gmra.mrb[0].mxu0 %v1199
        %v1703 = vpop.f32.mrb[0].mxu0
        %v1704 = vadd.f32 %v1620, %v1703
        %v1705 = vpop.f32.mrb[0].mxu0
        %1706 = vmatprep.mubr.f32.mxu0 0.0
        %1707 = vmatmul.mubr.f32.gmra.mrb[0].mxu0 %v1202
        %v1708 = vpop.f32.mrb[0].mxu0
        %v1709 = vadd.f32 %v1620, %v1708
        %v1710 = vpop.f32.mrb[0].mxu0
        %1711 = vmatprep.mubr.f32.mxu0 0.0
        %1712 = vmatmul.mubr.f32.gmra.mrb[0].mxu0 %v1205
        %v1713 = vpop.f32.mrb[0].mxu0
        %v1714 = vadd.f32 %v1620, %v1713
        %v1715 = vpop.f32.mrb[0].mxu0
        %1716 = vmatprep.mubr.f32.mxu0 0.0
        %1717 = vmatmul.mubr.f32.gmra.mrb[0].mxu0 %v1208
        %v1718 = vpop.f32.mrb[0].mxu0
        %v1719 = vadd.f32 %v1620, %v1718
        %v1720 = vpop.f32.mrb[0].mxu0
        %1721 = vmatprep.mubr.f32.mxu0 0.0
        %1722 = vmatmul.mubr.f32.gmra.mrb[0].mxu0 %v1211
        %v1723 = vpop.f32.mrb[0].mxu0
        %v1724 = vadd.f32 %v1620, %v1723
        %v1725 = vpop.f32.mrb[0].mxu0
        %1726 = vmatprep.mubr.f32.mxu0 0.0
        %1727 = vmatmul.mubr.f32.gmra.mrb[0].mxu0 %v1214
        %v1728 = vpop.f32.mrb[0].mxu0
        %v1729 = vadd.f32 %v1620, %v1728
        %v1730 = vpop.f32.mrb[0].mxu0
        %1731 = vmatprep.mubr.f32.mxu0 0.0
        %1732 = vmatmul.mubr.f32.gmra.mrb[0].mxu0 %v1217
        %v1733 = vpop.f32.mrb[0].mxu0
        %v1734 = vadd.f32 %v1620, %v1733
        %v1735 = vpop.f32.mrb[0].mxu0
        %1736 = vmatprep.mubr.f32.mxu0 0.0
        %1737 = vmatmul.mubr.f32.gmra.mrb[0].mxu0 %v1220
        %v1738 = vpop.f32.mrb[0].mxu0
        %v1739 = vadd.f32 %v1620, %v1738
        %v1740 = vpop.f32.mrb[0].mxu0
        %1741 = vmatprep.mubr.f32.mxu0 0.0
        %1742 = vmatmul.mubr.f32.gmra.mrb[0].mxu0 %v1223
        %v1743 = vpop.f32.mrb[0].mxu0
        %v1744 = vadd.f32 %v1620, %v1743
        %v1745 = vpop.f32.mrb[0].mxu0
        %1746 = vmatprep.mubr.f32.mxu0 0.0
        %1747 = vmatmul.mubr.f32.gmra.mrb[0].mxu0 %v1226
        %v1748 = vpop.f32.mrb[0].mxu0
        %v1749 = vadd.f32 %v1620, %v1748
        %v1750 = vpop.f32.mrb[0].mxu0
        %1751 = vmatprep.mubr.f32.mxu0 0.0
        %1752 = vmatmul.mubr.f32.gmra.mrb[0].mxu0 %v1229
        %v1753 = vpop.f32.mrb[0].mxu0
        %v1754 = vadd.f32 %v1620, %v1753
        %v1755 = vpop.f32.mrb[0].mxu0
        %1756 = vmatprep.mubr.f32.mxu0 0.0
        %1757 = vmatmul.mubr.f32.gmra.mrb[0].mxu0 %v1232
        %v1758 = vpop.f32.mrb[0].mxu0
        %v1759 = vadd.f32 %v1620, %v1758
        %v1760 = vpop.f32.mrb[0].mxu0
        %1761 = vmatprep.mubr.f32.mxu0 0.0
        %1762 = vmatmul.mubr.f32.gmra.mrb[0].mxu0 %v1235
        %v1763 = vpop.f32.mrb[0].mxu0
        %v1764 = vadd.f32 %v1620, %v1763
        %v1765 = vpop.f32.mrb[0].mxu0
        %1766 = vdwg.mxu0
        %1767 = vst [vmem:[#allocation7] sm:$0xff] %v1689
        %1768 = vst [vmem:[#allocation7 + $0x8] sm:$0xff] %v1694
        %1769 = vst [vmem:[#allocation7 + $0x10] sm:$0xff] %v1699
        %1770 = vst [vmem:[#allocation7 + $0x18] sm:$0xff] %v1704
        %1771 = vst [vmem:[#allocation7 + $0x20] sm:$0xff] %v1709
        %1772 = vst [vmem:[#allocation7 + $0x28] sm:$0xff] %v1714
        %1773 = vst [vmem:[#allocation7 + $0x30] sm:$0xff] %v1719
        %1774 = vst [vmem:[#allocation7 + $0x38] sm:$0xff] %v1724
        %1775 = vst [vmem:[#allocation7 + $0x40] sm:$0xff] %v1729
        %1776 = vst [vmem:[#allocation7 + $0x48] sm:$0xff] %v1734
        %1777 = vst [vmem:[#allocation7 + $0x50] sm:$0xff] %v1739
        %1778 = vst [vmem:[#allocation7 + $0x58] sm:$0xff] %v1744
        %1779 = vst [vmem:[#allocation7 + $0x60] sm:$0xff] %v1749
        %1780 = vst [vmem:[#allocation7 + $0x68] sm:$0xff] %v1754
        %1781 = vst [vmem:[#allocation7 + $0x70] sm:$0xff] %v1759
        %1782 = vst [vmem:[#allocation7 + $0x78] sm:$0xff] %v1764
        %v1783 = vsel %vm695, %v671, 0.0
        %1784 = vadd.xlane.f32.xlu0 %v1783
        %v1785 = vpop.xlane.xlu0 %1784
        %v1786 = vsel %vm695, %v672, 0.0
        %1787 = vadd.xlane.f32.xlu0 %v1786
        %v1788 = vpop.xlane.xlu0 %1787
        %v1789 = vsel %vm695, %v673, 0.0
        %1790 = vadd.xlane.f32.xlu0 %v1789
        %v1791 = vpop.xlane.xlu0 %1790
        %v1792 = vsel %vm695, %v674, 0.0
        %1793 = vadd.xlane.f32.xlu0 %v1792
        %v1794 = vpop.xlane.xlu0 %1793
        %v1795 = vsel %vm695, %v675, 0.0
        %1796 = vadd.xlane.f32.xlu0 %v1795
        %v1797 = vpop.xlane.xlu0 %1796
        %v1798 = vsel %vm695, %v676, 0.0
        %1799 = vadd.xlane.f32.xlu0 %v1798
        %v1800 = vpop.xlane.xlu0 %1799
        %v1801 = vsel %vm695, %v677, 0.0
        %1802 = vadd.xlane.f32.xlu0 %v1801
        %v1803 = vpop.xlane.xlu0 %1802
        %v1804 = vsel %vm695, %v678, 0.0
        %1805 = vadd.xlane.f32.xlu0 %v1804
        %v1806 = vpop.xlane.xlu0 %1805
        %v1807 = vsel %vm695, %v679, 0.0
        %1808 = vadd.xlane.f32.xlu0 %v1807
        %v1809 = vpop.xlane.xlu0 %1808
        %v1810 = vsel %vm695, %v680, 0.0
        %1811 = vadd.xlane.f32.xlu0 %v1810
        %v1812 = vpop.xlane.xlu0 %1811
        %v1813 = vsel %vm695, %v681, 0.0
        %1814 = vadd.xlane.f32.xlu0 %v1813
        %v1815 = vpop.xlane.xlu0 %1814
        %v1816 = vsel %vm695, %v682, 0.0
        %1817 = vadd.xlane.f32.xlu0 %v1816
        %v1818 = vpop.xlane.xlu0 %1817
        %v1819 = vsel %vm695, %v683, 0.0
        %1820 = vadd.xlane.f32.xlu0 %v1819
        %v1821 = vpop.xlane.xlu0 %1820
        %v1822 = vsel %vm695, %v684, 0.0
        %1823 = vadd.xlane.f32.xlu0 %v1822
        %v1824 = vpop.xlane.xlu0 %1823
        %v1825 = vsel %vm695, %v685, 0.0
        %1826 = vadd.xlane.f32.xlu0 %v1825
        %v1827 = vpop.xlane.xlu0 %1826
        %v1828 = vsel %vm695, %v686, 0.0
        %1829 = vadd.xlane.f32.xlu0 %v1828
        %v1830 = vpop.xlane.xlu0 %1829
        %v1831 = vrot.slane %v1785, 4
        %v1832 = vadd.f32 %v1785, %v1831
        %v1833 = vrot.slane %v1832, 2
        %v1834 = vadd.f32 %v1832, %v1833
        %v1835 = vrot.slane %v1834, 1
        %v1836 = vadd.f32 %v1834, %v1835
        %v1837 = vrot.slane %v1788, 4
        %v1838 = vadd.f32 %v1788, %v1837
        %v1839 = vrot.slane %v1838, 2
        %v1840 = vadd.f32 %v1838, %v1839
        %v1841 = vrot.slane %v1840, 1
        %v1842 = vadd.f32 %v1840, %v1841
        %v1843 = vrot.slane %v1791, 4
        %v1844 = vadd.f32 %v1791, %v1843
        %v1845 = vrot.slane %v1844, 2
        %v1846 = vadd.f32 %v1844, %v1845
        %v1847 = vrot.slane %v1846, 1
        %v1848 = vadd.f32 %v1846, %v1847
        %v1849 = vrot.slane %v1794, 4
        %v1850 = vadd.f32 %v1794, %v1849
        %v1851 = vrot.slane %v1850, 2
        %v1852 = vadd.f32 %v1850, %v1851
        %v1853 = vrot.slane %v1852, 1
        %v1854 = vadd.f32 %v1852, %v1853
        %v1855 = vrot.slane %v1797, 4
        %v1856 = vadd.f32 %v1797, %v1855
        %v1857 = vrot.slane %v1856, 2
        %v1858 = vadd.f32 %v1856, %v1857
        %v1859 = vrot.slane %v1858, 1
        %v1860 = vadd.f32 %v1858, %v1859
        %v1861 = vrot.slane %v1800, 4
        %v1862 = vadd.f32 %v1800, %v1861
        %v1863 = vrot.slane %v1862, 2
        %v1864 = vadd.f32 %v1862, %v1863
        %v1865 = vrot.slane %v1864, 1
        %v1866 = vadd.f32 %v1864, %v1865
        %v1867 = vrot.slane %v1803, 4
        %v1868 = vadd.f32 %v1803, %v1867
        %v1869 = vrot.slane %v1868, 2
        %v1870 = vadd.f32 %v1868, %v1869
        %v1871 = vrot.slane %v1870, 1
        %v1872 = vadd.f32 %v1870, %v1871
        %v1873 = vrot.slane %v1806, 4
        %v1874 = vadd.f32 %v1806, %v1873
        %v1875 = vrot.slane %v1874, 2
        %v1876 = vadd.f32 %v1874, %v1875
        %v1877 = vrot.slane %v1876, 1
        %v1878 = vadd.f32 %v1876, %v1877
        %v1879 = vrot.slane %v1809, 4
        %v1880 = vadd.f32 %v1809, %v1879
        %v1881 = vrot.slane %v1880, 2
        %v1882 = vadd.f32 %v1880, %v1881
        %v1883 = vrot.slane %v1882, 1
        %v1884 = vadd.f32 %v1882, %v1883
        %v1885 = vrot.slane %v1812, 4
        %v1886 = vadd.f32 %v1812, %v1885
        %v1887 = vrot.slane %v1886, 2
        %v1888 = vadd.f32 %v1886, %v1887
        %v1889 = vrot.slane %v1888, 1
        %v1890 = vadd.f32 %v1888, %v1889
        %v1891 = vrot.slane %v1815, 4
        %v1892 = vadd.f32 %v1815, %v1891
        %v1893 = vrot.slane %v1892, 2
        %v1894 = vadd.f32 %v1892, %v1893
        %v1895 = vrot.slane %v1894, 1
        %v1896 = vadd.f32 %v1894, %v1895
        %v1897 = vrot.slane %v1818, 4
        %v1898 = vadd.f32 %v1818, %v1897
        %v1899 = vrot.slane %v1898, 2
        %v1900 = vadd.f32 %v1898, %v1899
        %v1901 = vrot.slane %v1900, 1
        %v1902 = vadd.f32 %v1900, %v1901
        %v1903 = vrot.slane %v1821, 4
        %v1904 = vadd.f32 %v1821, %v1903
        %v1905 = vrot.slane %v1904, 2
        %v1906 = vadd.f32 %v1904, %v1905
        %v1907 = vrot.slane %v1906, 1
        %v1908 = vadd.f32 %v1906, %v1907
        %v1909 = vrot.slane %v1824, 4
        %v1910 = vadd.f32 %v1824, %v1909
        %v1911 = vrot.slane %v1910, 2
        %v1912 = vadd.f32 %v1910, %v1911
        %v1913 = vrot.slane %v1912, 1
        %v1914 = vadd.f32 %v1912, %v1913
        %v1915 = vrot.slane %v1827, 4
        %v1916 = vadd.f32 %v1827, %v1915
        %v1917 = vrot.slane %v1916, 2
        %v1918 = vadd.f32 %v1916, %v1917
        %v1919 = vrot.slane %v1918, 1
        %v1920 = vadd.f32 %v1918, %v1919
        %v1921 = vrot.slane %v1830, 4
        %v1922 = vadd.f32 %v1830, %v1921
        %v1923 = vrot.slane %v1922, 2
        %v1924 = vadd.f32 %v1922, %v1923
        %v1925 = vrot.slane %v1924, 1
        %v1926 = vadd.f32 %v1924, %v1925
        %v1927 = vadd.f32 %v1836, 1e-05
        %v1928 = vadd.f32 %v1842, 1e-05
        %v1929 = vadd.f32 %v1848, 1e-05
        %v1930 = vadd.f32 %v1854, 1e-05
        %v1931 = vadd.f32 %v1860, 1e-05
        %v1932 = vadd.f32 %v1866, 1e-05
        %v1933 = vadd.f32 %v1872, 1e-05
        %v1934 = vadd.f32 %v1878, 1e-05
        %v1935 = vadd.f32 %v1884, 1e-05
        %v1936 = vadd.f32 %v1890, 1e-05
        %v1937 = vadd.f32 %v1896, 1e-05
        %v1938 = vadd.f32 %v1902, 1e-05
        %v1939 = vadd.f32 %v1908, 1e-05
        %v1940 = vadd.f32 %v1914, 1e-05
        %v1941 = vadd.f32 %v1920, 1e-05
        %v1942 = vadd.f32 %v1926, 1e-05
        %v1943 = vrcp.pop %v1927
        %v1944 = vmul.f32 1.0, %v1943
        %v1945 = vrcp.pop %v1928
        %v1946 = vmul.f32 1.0, %v1945
        %v1947 = vrcp.pop %v1929
        %v1948 = vmul.f32 1.0, %v1947
        %v1949 = vrcp.pop %v1930
        %v1950 = vmul.f32 1.0, %v1949
        %v1951 = vrcp.pop %v1931
        %v1952 = vmul.f32 1.0, %v1951
        %v1953 = vrcp.pop %v1932
        %v1954 = vmul.f32 1.0, %v1953
        %v1955 = vrcp.pop %v1933
        %v1956 = vmul.f32 1.0, %v1955
        %v1957 = vrcp.pop %v1934
        %v1958 = vmul.f32 1.0, %v1957
        %v1959 = vrcp.pop %v1935
        %v1960 = vmul.f32 1.0, %v1959
        %v1961 = vrcp.pop %v1936
        %v1962 = vmul.f32 1.0, %v1961
        %v1963 = vrcp.pop %v1937
        %v1964 = vmul.f32 1.0, %v1963
        %v1965 = vrcp.pop %v1938
        %v1966 = vmul.f32 1.0, %v1965
        %v1967 = vrcp.pop %v1939
        %v1968 = vmul.f32 1.0, %v1967
        %v1969 = vrcp.pop %v1940
        %v1970 = vmul.f32 1.0, %v1969
        %v1971 = vrcp.pop %v1941
        %v1972 = vmul.f32 1.0, %v1971
        %v1973 = vrcp.pop %v1942
        %v1974 = vmul.f32 1.0, %v1973
        %v1975 = vmul.f32 %v671, %v1944
        %v1976 = vmul.f32 %v672, %v1946
        %v1977 = vmul.f32 %v673, %v1948
        %v1978 = vmul.f32 %v674, %v1950
        %v1979 = vmul.f32 %v675, %v1952
        %v1980 = vmul.f32 %v676, %v1954
        %v1981 = vmul.f32 %v677, %v1956
        %v1982 = vmul.f32 %v678, %v1958
        %v1983 = vmul.f32 %v679, %v1960
        %v1984 = vmul.f32 %v680, %v1962
        %v1985 = vmul.f32 %v681, %v1964
        %v1986 = vmul.f32 %v682, %v1966
        %v1987 = vmul.f32 %v683, %v1968
        %v1988 = vmul.f32 %v684, %v1970
        %v1989 = vmul.f32 %v685, %v1972
        %v1990 = vmul.f32 %v686, %v1974
        %1991 = vst.msk [vmem:[#allocation8] sm:$0xff] %vm695, %v1975
        %1992 = vst.msk [vmem:[#allocation8 + $0x8] sm:$0xff] %vm695, %v1976
        %1993 = vst.msk [vmem:[#allocation8 + $0x10] sm:$0xff] %vm695, %v1977
        %1994 = vst.msk [vmem:[#allocation8 + $0x18] sm:$0xff] %vm695, %v1978
        %1995 = vst.msk [vmem:[#allocation8 + $0x20] sm:$0xff] %vm695, %v1979
        %1996 = vst.msk [vmem:[#allocation8 + $0x28] sm:$0xff] %vm695, %v1980
        %1997 = vst.msk [vmem:[#allocation8 + $0x30] sm:$0xff] %vm695, %v1981
        %1998 = vst.msk [vmem:[#allocation8 + $0x38] sm:$0xff] %vm695, %v1982
        %1999 = vst.msk [vmem:[#allocation8 + $0x40] sm:$0xff] %vm695, %v1983
        %2000 = vst.msk [vmem:[#allocation8 + $0x48] sm:$0xff] %vm695, %v1984
        %2001 = vst.msk [vmem:[#allocation8 + $0x50] sm:$0xff] %vm695, %v1985
        %2002 = vst.msk [vmem:[#allocation8 + $0x58] sm:$0xff] %vm695, %v1986
        %2003 = vst.msk [vmem:[#allocation8 + $0x60] sm:$0xff] %vm695, %v1987
        %2004 = vst.msk [vmem:[#allocation8 + $0x68] sm:$0xff] %vm695, %v1988
        %2005 = vst.msk [vmem:[#allocation8 + $0x70] sm:$0xff] %vm695, %v1989
        %2006 = vst.msk [vmem:[#allocation8 + $0x78] sm:$0xff] %vm695, %v1990
        %v2007 = vld [vmem:[%s7] sm:$0xff]
        %v2008 = vld [vmem:[%s7 + $0x8] sm:$0xff]
        %v2009 = vld [vmem:[%s7 + $0x10] sm:$0xff]
        %v2010 = vld [vmem:[%s7 + $0x18] sm:$0xff]
        %v2011 = vld [vmem:[%s9] sm:$0xff]
        %v2012 = vld [vmem:[%s14] sm:$0xff]
        %v2013 = vld [vmem:[%s16] sm:$0xff]
        %v2014 = vld [vmem:[%s16 + $0x8] sm:$0xff]
        %v2015 = vld [vmem:[%s16 + $0x10] sm:$0xff]
        %v2016 = vld [vmem:[%s16 + $0x18] sm:$0xff]
        %v2017 = vld [vmem:[%s8] sm:$0x1]
        %v2019 = vlaneseq
        %v2020 = vshrl.u32 %v2019, 7
        %v2021 = vsub.s32 0, %v2020
        %v2022 = vrot.slane %v2017, %v2021
        %v2024 = vld [vmem:[%s10] sm:$0x1]
        %v2026 = vlaneseq
        %v2027 = vshrl.u32 %v2026, 7
        %v2028 = vsub.s32 0, %v2027
        %v2029 = vrot.slane %v2024, %v2028
        %v2031 = vld [vmem:[#allocation2] sm:$0xff]
        %v2032 = vld [vmem:[#allocation3] sm:$0xff]
        %v2033 = vld [vmem:[%s632] sm:$0xff]
        %v2034 = vld [vmem:[%s638] sm:$0xff]
        %v2035 = vld [vmem:[#allocation8] sm:$0xff]
        %v2036 = vld [vmem:[#allocation5] sm:$0xff]
        %v2037 = vmul.f32 %v2031, %v2036
        %v2039 = vsel %vm953, %v2037, 0
        %2041 = vmatprep.subr.mxu0 0.0
        %2042 = vmatpush1.msra.mxu0 %v2007
        %2043 = vmatprep.subr.mxu0 0.0
        %2044 = vmatpush1.msra.mxu0 %v2008
        %2045 = vmatprep.subr.mxu0 0.0
        %2046 = vmatpush1.msra.mxu0 %v2009
        %2047 = vmatprep.subr.mxu0 0.0
        %2048 = vmatpush1.msra.mxu0 %v2010
        %2049 = vmatprep.subr.mxu0 0.0
        %2050 = vmatpush1.msra.mxu0 0.0
        %2051 = vmatprep.subr.mxu0 0.0
        %2052 = vmatpush1.msra.mxu0 0.0
        %2053 = vmatprep.subr.mxu0 0.0
        %2054 = vmatpush1.msra.mxu0 0.0
        %2055 = vmatprep.subr.mxu0 0.0
        %2056 = vmatpush1.msra.mxu0 0.0
        %2057 = vmatprep.subr.mxu0 0.0
        %2058 = vmatpush1.msra.mxu0 0.0
        %2059 = vmatprep.subr.mxu0 0.0
        %2060 = vmatpush1.msra.mxu0 0.0
        %2061 = vmatprep.subr.mxu0 0.0
        %2062 = vmatpush1.msra.mxu0 0.0
        %2063 = vmatprep.subr.mxu0 0.0
        %2064 = vmatpush1.msra.mxu0 0.0
        %2065 = vmatprep.subr.mxu0 0.0
        %2066 = vmatpush1.msra.mxu0 0.0
        %2067 = vmatprep.subr.mxu0 0.0
        %2068 = vmatpush1.msra.mxu0 0.0
        %2069 = vmatprep.subr.mxu0 0.0
        %2070 = vmatpush1.msra.mxu0 0.0
        %2071 = vmatprep.subr.mxu0 0.0
        %2072 = vmatpush1.msra.mxu0 0.0
        %2073 = vmatprep.subr.mxu0 0.0
        %2074 = vmatpush1.msra.mxu0 0.0
        %2075 = vmatprep.subr.mxu0 0.0
        %2076 = vmatpush1.msra.mxu0 0.0
        %2077 = vmatprep.subr.mxu0 0.0
        %2078 = vmatpush1.msra.mxu0 0.0
        %2079 = vmatprep.subr.mxu0 0.0
        %2080 = vmatpush1.msra.mxu0 0.0
        %2081 = vmatprep.subr.mxu0 0.0
        %2082 = vmatpush1.msra.mxu0 0.0
        %2083 = vmatprep.subr.mxu0 0.0
        %2084 = vmatpush1.msra.mxu0 0.0
        %2085 = vmatprep.subr.mxu0 0.0
        %2086 = vmatpush1.msra.mxu0 0.0
        %2087 = vmatprep.subr.mxu0 0.0
        %2088 = vmatpush1.msra.mxu0 0.0
        %2089 = vmatprep.subr.mxu0 0.0
        %2090 = vmatpush1.msra.mxu0 0.0
        %2091 = vmatprep.subr.mxu0 0.0
        %2092 = vmatpush1.msra.mxu0 0.0
        %2093 = vmatprep.subr.mxu0 0.0
        %2094 = vmatpush1.msra.mxu0 0.0
        %2095 = vmatprep.subr.mxu0 0.0
        %2096 = vmatpush1.msra.mxu0 0.0
        %2097 = vmatprep.subr.mxu0 0.0
        %2098 = vmatpush1.msra.mxu0 0.0
        %2099 = vmatprep.subr.mxu0 0.0
        %2100 = vmatpush1.msra.mxu0 0.0
        %2101 = vmatprep.subr.mxu0 0.0
        %2102 = vmatpush1.msra.mxu0 0.0
        %2103 = vmatprep.subr.mxu0 0.0
        %2104 = vmatpush1.msra.mxu0 0.0
        %2105 = vmatprep.mubr.f32.mxu0 0.0
        %2106 = vmatmul.mubr.f32.gmra.mrb[0].mxu0 %v2039
        %v2107 = vpop.f32.mrb[0].mxu0
        %v2108 = vadd.f32 %v2022, %v2107
        %v2109 = vpop.f32.mrb[0].mxu0
        %2110 = vdwg.mxu0
        %v2111 = vmul.f32 %v2034, %v2033
        %v2112 = vsub.f32 1.0, %v2034
        %v2113 = vmul.f32 %v2112, %v2108
        %v2114 = vadd.f32 %v2111, %v2113
        %v2116 = vsel %vm695, %v2114, 0
        %2118 = vmatprep.subr.mxu0 0.0
        %2119 = vmatpush1.msra.mxu0 %v2011
        %2120 = vmatprep.subr.mxu0 0.0
        %2121 = vmatpush1.msra.mxu0 0.0
        %2122 = vmatprep.subr.mxu0 0.0
        %2123 = vmatpush1.msra.mxu0 0.0
        %2124 = vmatprep.subr.mxu0 0.0
        %2125 = vmatpush1.msra.mxu0 0.0
        %2126 = vmatprep.subr.mxu0 0.0
        %2127 = vmatpush1.msra.mxu0 0.0
        %2128 = vmatprep.subr.mxu0 0.0
        %2129 = vmatpush1.msra.mxu0 0.0
        %2130 = vmatprep.subr.mxu0 0.0
        %2131 = vmatpush1.msra.mxu0 0.0
        %2132 = vmatprep.subr.mxu0 0.0
        %2133 = vmatpush1.msra.mxu0 0.0
        %2134 = vmatprep.subr.mxu0 0.0
        %2135 = vmatpush1.msra.mxu0 0.0
        %2136 = vmatprep.subr.mxu0 0.0
        %2137 = vmatpush1.msra.mxu0 0.0
        %2138 = vmatprep.subr.mxu0 0.0
        %2139 = vmatpush1.msra.mxu0 0.0
        %2140 = vmatprep.subr.mxu0 0.0
        %2141 = vmatpush1.msra.mxu0 0.0
        %2142 = vmatprep.subr.mxu0 0.0
        %2143 = vmatpush1.msra.mxu0 0.0
        %2144 = vmatprep.subr.mxu0 0.0
        %2145 = vmatpush1.msra.mxu0 0.0
        %2146 = vmatprep.subr.mxu0 0.0
        %2147 = vmatpush1.msra.mxu0 0.0
        %2148 = vmatprep.subr.mxu0 0.0
        %2149 = vmatpush1.msra.mxu0 0.0
        %2150 = vmatprep.subr.mxu0 0.0
        %2151 = vmatpush1.msra.mxu0 0.0
        %2152 = vmatprep.subr.mxu0 0.0
        %2153 = vmatpush1.msra.mxu0 0.0
        %2154 = vmatprep.subr.mxu0 0.0
        %2155 = vmatpush1.msra.mxu0 0.0
        %2156 = vmatprep.subr.mxu0 0.0
        %2157 = vmatpush1.msra.mxu0 0.0
        %2158 = vmatprep.subr.mxu0 0.0
        %2159 = vmatpush1.msra.mxu0 0.0
        %2160 = vmatprep.subr.mxu0 0.0
        %2161 = vmatpush1.msra.mxu0 0.0
        %2162 = vmatprep.subr.mxu0 0.0
        %2163 = vmatpush1.msra.mxu0 0.0
        %2164 = vmatprep.subr.mxu0 0.0
        %2165 = vmatpush1.msra.mxu0 0.0
        %2166 = vmatprep.subr.mxu0 0.0
        %2167 = vmatpush1.msra.mxu0 0.0
        %2168 = vmatprep.subr.mxu0 0.0
        %2169 = vmatpush1.msra.mxu0 0.0
        %2170 = vmatprep.subr.mxu0 0.0
        %2171 = vmatpush1.msra.mxu0 0.0
        %2172 = vmatprep.subr.mxu0 0.0
        %2173 = vmatpush1.msra.mxu0 0.0
        %2174 = vmatprep.subr.mxu0 0.0
        %2175 = vmatpush1.msra.mxu0 0.0
        %2176 = vmatprep.subr.mxu0 0.0
        %2177 = vmatpush1.msra.mxu0 0.0
        %2178 = vmatprep.subr.mxu0 0.0
        %2179 = vmatpush1.msra.mxu0 0.0
        %2180 = vmatprep.subr.mxu0 0.0
        %2181 = vmatpush1.msra.mxu0 0.0
        %2182 = vmatprep.mubr.f32.mxu0 0.0
        %2183 = vmatmul.mubr.f32.gmra.mrb[0].mxu0 %v2116
        %v2184 = vpop.f32.mrb[0].mxu0
        %v2185 = vadd.f32 %v2029, %v2184
        %v2186 = vpop.f32.mrb[0].mxu0
        %2187 = vdwg.mxu0
        %v2188 = vld [vmem:[#allocation6] sm:$0xff]
        %v2189 = vmul.f32 %v2188, %v2185
        %v2190 = vsub.f32 1.0, %v2188
        %v2191 = vmul.f32 %v2190, %v2108
        %v2192 = vadd.f32 %v2189, %v2191
        %v2193 = vsub.f32 %v2033, %v2108
        %v2194 = vand.u32 2147483647, %v2193
        %v2195 = vsub.f32 %v2033, %v2185
        %v2196 = vand.u32 2147483647, %v2195
        %v2197 = vadd.f32 %v2194, %v2196
        %v2198 = vsub.f32 %v2033, %v2192
        %v2199 = vand.u32 2147483647, %v2198
        %v2200 = vadd.f32 %v2197, %v2199
        %v2201 = vmul.f32 %v2200, %v2035
        %v2202 = vadd.f32 %v2201, 0.0
        %v2203 = vmul.f32 %v2112, %v2192
        %v2204 = vadd.f32 %v2111, %v2203
        %2205 = vst.msk [vmem:[%s625] sm:$0xff] %vm695, %v2204
        %2206 = vmatprep.subr.mxu0 0.0
        %2207 = vmatpush1.msra.mxu0 %v2013
        %2208 = vmatprep.subr.mxu0 0.0
        %2209 = vmatpush1.msra.mxu0 %v2014
        %2210 = vmatprep.subr.mxu0 0.0
        %2211 = vmatpush1.msra.mxu0 %v2015
        %2212 = vmatprep.subr.mxu0 0.0
        %2213 = vmatpush1.msra.mxu0 %v2016
        %2214 = vmatprep.subr.mxu0 0.0
        %2215 = vmatpush1.msra.mxu0 0.0
        %2216 = vmatprep.subr.mxu0 0.0
        %2217 = vmatpush1.msra.mxu0 0.0
        %2218 = vmatprep.subr.mxu0 0.0
        %2219 = vmatpush1.msra.mxu0 0.0
        %2220 = vmatprep.subr.mxu0 0.0
        %2221 = vmatpush1.msra.mxu0 0.0
        %2222 = vmatprep.subr.mxu0 0.0
        %2223 = vmatpush1.msra.mxu0 0.0
        %2224 = vmatprep.subr.mxu0 0.0
        %2225 = vmatpush1.msra.mxu0 0.0
        %2226 = vmatprep.subr.mxu0 0.0
        %2227 = vmatpush1.msra.mxu0 0.0
        %2228 = vmatprep.subr.mxu0 0.0
        %2229 = vmatpush1.msra.mxu0 0.0
        %2230 = vmatprep.subr.mxu0 0.0
        %2231 = vmatpush1.msra.mxu0 0.0
        %2232 = vmatprep.subr.mxu0 0.0
        %2233 = vmatpush1.msra.mxu0 0.0
        %2234 = vmatprep.subr.mxu0 0.0
        %2235 = vmatpush1.msra.mxu0 0.0
        %2236 = vmatprep.subr.mxu0 0.0
        %2237 = vmatpush1.msra.mxu0 0.0
        %2238 = vmatprep.subr.mxu0 0.0
        %2239 = vmatpush1.msra.mxu0 0.0
        %2240 = vmatprep.subr.mxu0 0.0
        %2241 = vmatpush1.msra.mxu0 0.0
        %2242 = vmatprep.subr.mxu0 0.0
        %2243 = vmatpush1.msra.mxu0 0.0
        %2244 = vmatprep.subr.mxu0 0.0
        %2245 = vmatpush1.msra.mxu0 0.0
        %2246 = vmatprep.subr.mxu0 0.0
        %2247 = vmatpush1.msra.mxu0 0.0
        %2248 = vmatprep.subr.mxu0 0.0
        %2249 = vmatpush1.msra.mxu0 0.0
        %2250 = vmatprep.subr.mxu0 0.0
        %2251 = vmatpush1.msra.mxu0 0.0
        %2252 = vmatprep.subr.mxu0 0.0
        %2253 = vmatpush1.msra.mxu0 0.0
        %2254 = vmatprep.subr.mxu0 0.0
        %2255 = vmatpush1.msra.mxu0 0.0
        %2256 = vmatprep.subr.mxu0 0.0
        %2257 = vmatpush1.msra.mxu0 0.0
        %2258 = vmatprep.subr.mxu0 0.0
        %2259 = vmatpush1.msra.mxu0 0.0
        %2260 = vmatprep.subr.mxu0 0.0
        %2261 = vmatpush1.msra.mxu0 0.0
        %2262 = vmatprep.subr.mxu0 0.0
        %2263 = vmatpush1.msra.mxu0 0.0
        %2264 = vmatprep.subr.mxu0 0.0
        %2265 = vmatpush1.msra.mxu0 0.0
        %2266 = vmatprep.subr.mxu0 0.0
        %2267 = vmatpush1.msra.mxu0 0.0
        %2268 = vmatprep.subr.mxu0 0.0
        %2269 = vmatpush1.msra.mxu0 0.0
        %2270 = vmatprep.mubr.f32.mxu0 0.0
        %2271 = vmatmul.mubr.f32.gmra.mrb[0].mxu0 %v2039
        %v2272 = vpop.f32.mrb[0].mxu0
        %v2273 = vadd.f32 0.0, %v2272
        %v2274 = vpop.f32.mrb[0].mxu0
        %2275 = vdwg.mxu0
        %v2277 = vsel %vm695, %v2204, 0
        %2279 = vmatprep.subr.mxu0 0.0
        %2280 = vmatpush1.msra.mxu0 %v2012
        %2281 = vmatprep.subr.mxu0 0.0
        %2282 = vmatpush1.msra.mxu0 0.0
        %2283 = vmatprep.subr.mxu0 0.0
        %2284 = vmatpush1.msra.mxu0 0.0
        %2285 = vmatprep.subr.mxu0 0.0
        %2286 = vmatpush1.msra.mxu0 0.0
        %2287 = vmatprep.subr.mxu0 0.0
        %2288 = vmatpush1.msra.mxu0 0.0
        %2289 = vmatprep.subr.mxu0 0.0
        %2290 = vmatpush1.msra.mxu0 0.0
        %2291 = vmatprep.subr.mxu0 0.0
        %2292 = vmatpush1.msra.mxu0 0.0
        %2293 = vmatprep.subr.mxu0 0.0
        %2294 = vmatpush1.msra.mxu0 0.0
        %2295 = vmatprep.subr.mxu0 0.0
        %2296 = vmatpush1.msra.mxu0 0.0
        %2297 = vmatprep.subr.mxu0 0.0
        %2298 = vmatpush1.msra.mxu0 0.0
        %2299 = vmatprep.subr.mxu0 0.0
        %2300 = vmatpush1.msra.mxu0 0.0
        %2301 = vmatprep.subr.mxu0 0.0
        %2302 = vmatpush1.msra.mxu0 0.0
        %2303 = vmatprep.subr.mxu0 0.0
        %2304 = vmatpush1.msra.mxu0 0.0
        %2305 = vmatprep.subr.mxu0 0.0
        %2306 = vmatpush1.msra.mxu0 0.0
        %2307 = vmatprep.subr.mxu0 0.0
        %2308 = vmatpush1.msra.mxu0 0.0
        %2309 = vmatprep.subr.mxu0 0.0
        %2310 = vmatpush1.msra.mxu0 0.0
        %2311 = vmatprep.subr.mxu0 0.0
        %2312 = vmatpush1.msra.mxu0 0.0
        %2313 = vmatprep.subr.mxu0 0.0
        %2314 = vmatpush1.msra.mxu0 0.0
        %2315 = vmatprep.subr.mxu0 0.0
        %2316 = vmatpush1.msra.mxu0 0.0
        %2317 = vmatprep.subr.mxu0 0.0
        %2318 = vmatpush1.msra.mxu0 0.0
        %2319 = vmatprep.subr.mxu0 0.0
        %2320 = vmatpush1.msra.mxu0 0.0
        %2321 = vmatprep.subr.mxu0 0.0
        %2322 = vmatpush1.msra.mxu0 0.0
        %2323 = vmatprep.subr.mxu0 0.0
        %2324 = vmatpush1.msra.mxu0 0.0
        %2325 = vmatprep.subr.mxu0 0.0
        %2326 = vmatpush1.msra.mxu0 0.0
        %2327 = vmatprep.subr.mxu0 0.0
        %2328 = vmatpush1.msra.mxu0 0.0
        %2329 = vmatprep.subr.mxu0 0.0
        %2330 = vmatpush1.msra.mxu0 0.0
        %2331 = vmatprep.subr.mxu0 0.0
        %2332 = vmatpush1.msra.mxu0 0.0
        %2333 = vmatprep.subr.mxu0 0.0
        %2334 = vmatpush1.msra.mxu0 0.0
        %2335 = vmatprep.subr.mxu0 0.0
        %2336 = vmatpush1.msra.mxu0 0.0
        %2337 = vmatprep.subr.mxu0 0.0
        %2338 = vmatpush1.msra.mxu0 0.0
        %2339 = vmatprep.subr.mxu0 0.0
        %2340 = vmatpush1.msra.mxu0 0.0
        %2341 = vmatprep.subr.mxu0 0.0
        %2342 = vmatpush1.msra.mxu0 0.0
        %2343 = vmatprep.mubr.f32.mxu0 0.0
        %2344 = vmatmul.mubr.f32.gmra.mrb[0].mxu0 %v2277
        %v2345 = vpop.f32.mrb[0].mxu0
        %v2346 = vadd.f32 %v2273, %v2345
        %v2347 = vpop.f32.mrb[0].mxu0
        %2348 = vdwg.mxu0
        %v2349 = vld [vmem:[#allocation7] sm:$0xff]
        %v2350 = vadd.f32 %v2346, %v2349
        %v2351 = vxor.u32 %v2350, 2147483648
        %v2352 = vmul.f32 %v2351, 1.442695
        %v2353 = vpow.pop %v2352
        %v2354 = vadd.f32 %v2353, 1.0
        %v2355 = vrcp.pop %v2354
        %v2356 = vmul.f32 1.0, %v2355
        %v2357 = vtanh.pop %v2350
        %2359 = vrot.lane.b32.xlu0 %v2032, 32
        %v2360 = vpop.permute.xlu0 %2359
        %v2362 = vmul.f32 %v2356, %v2360
        %2364 = vrot.lane.b32.xlu0 %v2357, 64
        %v2365 = vpop.permute.xlu0 %2364
        %v2367 = vmul.f32 %v2356, %v2365
        %2369 = vrot.lane.b32.xlu0 %v2367, 32
        %v2370 = vpop.permute.xlu0 %2369
        %v2372 = vadd.f32 %v2362, %v2370
        %v2373 = vtanh.pop %v2372
        %2375 = vrot.lane.b32.xlu0 %v2373, 64
        %v2376 = vpop.permute.xlu0 %2375
        %v2378 = vmul.f32 %v2356, %v2376
        %v2379 = vld [vmem:[%s632 + $0x8] sm:$0xff]
        %v2380 = vld [vmem:[%s638 + $0x8] sm:$0xff]
        %v2381 = vld [vmem:[#allocation8 + $0x8] sm:$0xff]
        %v2382 = vld [vmem:[#allocation5 + $0x8] sm:$0xff]
        %2384 = vrot.lane.b32.xlu0 %v2382, 96
        %v2385 = vpop.permute.xlu0 %2384
        %v2387 = vmul.f32 %v2378, %v2385
        %2389 = vrot.lane.b32.xlu0 %v2387, 32
        %v2390 = vpop.permute.xlu0 %2389
        %v2391 = vsel %vm953, %v2390, 0
        %2393 = vmatprep.subr.mxu0 0.0
        %2394 = vmatpush1.msra.mxu0 %v2007
        %2395 = vmatprep.subr.mxu0 0.0
        %2396 = vmatpush1.msra.mxu0 %v2008
        %2397 = vmatprep.subr.mxu0 0.0
        %2398 = vmatpush1.msra.mxu0 %v2009
        %2399 = vmatprep.subr.mxu0 0.0
        %2400 = vmatpush1.msra.mxu0 %v2010
        %2401 = vmatprep.subr.mxu0 0.0
        %2402 = vmatpush1.msra.mxu0 0.0
        %2403 = vmatprep.subr.mxu0 0.0
        %2404 = vmatpush1.msra.mxu0 0.0
        %2405 = vmatprep.subr.mxu0 0.0
        %2406 = vmatpush1.msra.mxu0 0.0
        %2407 = vmatprep.subr.mxu0 0.0
        %2408 = vmatpush1.msra.mxu0 0.0
        %2409 = vmatprep.subr.mxu0 0.0
        %2410 = vmatpush1.msra.mxu0 0.0
        %2411 = vmatprep.subr.mxu0 0.0
        %2412 = vmatpush1.msra.mxu0 0.0
        %2413 = vmatprep.subr.mxu0 0.0
        %2414 = vmatpush1.msra.mxu0 0.0
        %2415 = vmatprep.subr.mxu0 0.0
        %2416 = vmatpush1.msra.mxu0 0.0
        %2417 = vmatprep.subr.mxu0 0.0
        %2418 = vmatpush1.msra.mxu0 0.0
        %2419 = vmatprep.subr.mxu0 0.0
        %2420 = vmatpush1.msra.mxu0 0.0
        %2421 = vmatprep.subr.mxu0 0.0
        %2422 = vmatpush1.msra.mxu0 0.0
        %2423 = vmatprep.subr.mxu0 0.0
        %2424 = vmatpush1.msra.mxu0 0.0
        %2425 = vmatprep.subr.mxu0 0.0
        %2426 = vmatpush1.msra.mxu0 0.0
        %2427 = vmatprep.subr.mxu0 0.0
        %2428 = vmatpush1.msra.mxu0 0.0
        %2429 = vmatprep.subr.mxu0 0.0
        %2430 = vmatpush1.msra.mxu0 0.0
        %2431 = vmatprep.subr.mxu0 0.0
        %2432 = vmatpush1.msra.mxu0 0.0
        %2433 = vmatprep.subr.mxu0 0.0
        %2434 = vmatpush1.msra.mxu0 0.0
        %2435 = vmatprep.subr.mxu0 0.0
        %2436 = vmatpush1.msra.mxu0 0.0
        %2437 = vmatprep.subr.mxu0 0.0
        %2438 = vmatpush1.msra.mxu0 0.0
        %2439 = vmatprep.subr.mxu0 0.0
        %2440 = vmatpush1.msra.mxu0 0.0
        %2441 = vmatprep.subr.mxu0 0.0
        %2442 = vmatpush1.msra.mxu0 0.0
        %2443 = vmatprep.subr.mxu0 0.0
        %2444 = vmatpush1.msra.mxu0 0.0
        %2445 = vmatprep.subr.mxu0 0.0
        %2446 = vmatpush1.msra.mxu0 0.0
        %2447 = vmatprep.subr.mxu0 0.0
        %2448 = vmatpush1.msra.mxu0 0.0
        %2449 = vmatprep.subr.mxu0 0.0
        %2450 = vmatpush1.msra.mxu0 0.0
        %2451 = vmatprep.subr.mxu0 0.0
        %2452 = vmatpush1.msra.mxu0 0.0
        %2453 = vmatprep.subr.mxu0 0.0
        %2454 = vmatpush1.msra.mxu0 0.0
        %2455 = vmatprep.subr.mxu0 0.0
        %2456 = vmatpush1.msra.mxu0 0.0
        %2457 = vmatprep.mubr.f32.mxu0 0.0
        %2458 = vmatmul.mubr.f32.gmra.mrb[0].mxu0 %v2391
        %v2459 = vpop.f32.mrb[0].mxu0
        %v2460 = vadd.f32 %v2022, %v2459
        %v2461 = vpop.f32.mrb[0].mxu0
        %2462 = vdwg.mxu0
        %v2463 = vmul.f32 %v2380, %v2379
        %v2464 = vsub.f32 1.0, %v2380
        %v2465 = vmul.f32 %v2464, %v2460
        %v2466 = vadd.f32 %v2463, %v2465
        %v2468 = vsel %vm695, %v2466, 0
        %2470 = vmatprep.subr.mxu0 0.0
        %2471 = vmatpush1.msra.mxu0 %v2011
        %2472 = vmatprep.subr.mxu0 0.0
        %2473 = vmatpush1.msra.mxu0 0.0
        %2474 = vmatprep.subr.mxu0 0.0
        %2475 = vmatpush1.msra.mxu0 0.0
        %2476 = vmatprep.subr.mxu0 0.0
        %2477 = vmatpush1.msra.mxu0 0.0
        %2478 = vmatprep.subr.mxu0 0.0
        %2479 = vmatpush1.msra.mxu0 0.0
        %2480 = vmatprep.subr.mxu0 0.0
        %2481 = vmatpush1.msra.mxu0 0.0
        %2482 = vmatprep.subr.mxu0 0.0
        %2483 = vmatpush1.msra.mxu0 0.0
        %2484 = vmatprep.subr.mxu0 0.0
        %2485 = vmatpush1.msra.mxu0 0.0
        %2486 = vmatprep.subr.mxu0 0.0
        %2487 = vmatpush1.msra.mxu0 0.0
        %2488 = vmatprep.subr.mxu0 0.0
        %2489 = vmatpush1.msra.mxu0 0.0
        %2490 = vmatprep.subr.mxu0 0.0
        %2491 = vmatpush1.msra.mxu0 0.0
        %2492 = vmatprep.subr.mxu0 0.0
        %2493 = vmatpush1.msra.mxu0 0.0
        %2494 = vmatprep.subr.mxu0 0.0
        %2495 = vmatpush1.msra.mxu0 0.0
        %2496 = vmatprep.subr.mxu0 0.0
        %2497 = vmatpush1.msra.mxu0 0.0
        %2498 = vmatprep.subr.mxu0 0.0
        %2499 = vmatpush1.msra.mxu0 0.0
        %2500 = vmatprep.subr.mxu0 0.0
        %2501 = vmatpush1.msra.mxu0 0.0
        %2502 = vmatprep.subr.mxu0 0.0
        %2503 = vmatpush1.msra.mxu0 0.0
        %2504 = vmatprep.subr.mxu0 0.0
        %2505 = vmatpush1.msra.mxu0 0.0
        %2506 = vmatprep.subr.mxu0 0.0
        %2507 = vmatpush1.msra.mxu0 0.0
        %2508 = vmatprep.subr.mxu0 0.0
        %2509 = vmatpush1.msra.mxu0 0.0
        %2510 = vmatprep.subr.mxu0 0.0
        %2511 = vmatpush1.msra.mxu0 0.0
        %2512 = vmatprep.subr.mxu0 0.0
        %2513 = vmatpush1.msra.mxu0 0.0
        %2514 = vmatprep.subr.mxu0 0.0
        %2515 = vmatpush1.msra.mxu0 0.0
        %2516 = vmatprep.subr.mxu0 0.0
        %2517 = vmatpush1.msra.mxu0 0.0
        %2518 = vmatprep.subr.mxu0 0.0
        %2519 = vmatpush1.msra.mxu0 0.0
        %2520 = vmatprep.subr.mxu0 0.0
        %2521 = vmatpush1.msra.mxu0 0.0
        %2522 = vmatprep.subr.mxu0 0.0
        %2523 = vmatpush1.msra.mxu0 0.0
        %2524 = vmatprep.subr.mxu0 0.0
        %2525 = vmatpush1.msra.mxu0 0.0
        %2526 = vmatprep.subr.mxu0 0.0
        %2527 = vmatpush1.msra.mxu0 0.0
        %2528 = vmatprep.subr.mxu0 0.0
        %2529 = vmatpush1.msra.mxu0 0.0
        %2530 = vmatprep.subr.mxu0 0.0
        %2531 = vmatpush1.msra.mxu0 0.0
        %2532 = vmatprep.subr.mxu0 0.0
        %2533 = vmatpush1.msra.mxu0 0.0
        %2534 = vmatprep.mubr.f32.mxu0 0.0
        %2535 = vmatmul.mubr.f32.gmra.mrb[0].mxu0 %v2468
        %v2536 = vpop.f32.mrb[0].mxu0
        %v2537 = vadd.f32 %v2029, %v2536
        %v2538 = vpop.f32.mrb[0].mxu0
        %2539 = vdwg.mxu0
        %v2540 = vld [vmem:[#allocation6 + $0x8] sm:$0xff]
        %v2541 = vmul.f32 %v2540, %v2537
        %v2542 = vsub.f32 1.0, %v2540
        %v2543 = vmul.f32 %v2542, %v2460
        %v2544 = vadd.f32 %v2541, %v2543
        %v2545 = vsub.f32 %v2379, %v2460
        %v2546 = vand.u32 2147483647, %v2545
        %v2547 = vsub.f32 %v2379, %v2537
        %v2548 = vand.u32 2147483647, %v2547
        %v2549 = vadd.f32 %v2546, %v2548
        %v2550 = vsub.f32 %v2379, %v2544
        %v2551 = vand.u32 2147483647, %v2550
        %v2552 = vadd.f32 %v2549, %v2551
        %v2553 = vmul.f32 %v2552, %v2381
        %v2554 = vadd.f32 %v2202, %v2553
        %v2555 = vmul.f32 %v2464, %v2544
        %v2556 = vadd.f32 %v2463, %v2555
        %2558 = vrot.lane.b32.xlu0 %v2556, 8
        %v2559 = vpop.permute.xlu0 %2558
        %vm2561 = vcmask 130112
        %2562 = vst.msk [vmem:[%s625] sm:$0xff] %vm2561, %v2559
        %2563 = vmatprep.subr.mxu0 0.0
        %2564 = vmatpush1.msra.mxu0 %v2013
        %2565 = vmatprep.subr.mxu0 0.0
        %2566 = vmatpush1.msra.mxu0 %v2014
        %2567 = vmatprep.subr.mxu0 0.0
        %2568 = vmatpush1.msra.mxu0 %v2015
        %2569 = vmatprep.subr.mxu0 0.0
        %2570 = vmatpush1.msra.mxu0 %v2016
        %2571 = vmatprep.subr.mxu0 0.0
        %2572 = vmatpush1.msra.mxu0 0.0
        %2573 = vmatprep.subr.mxu0 0.0
        %2574 = vmatpush1.msra.mxu0 0.0
        %2575 = vmatprep.subr.mxu0 0.0
        %2576 = vmatpush1.msra.mxu0 0.0
        %2577 = vmatprep.subr.mxu0 0.0
        %2578 = vmatpush1.msra.mxu0 0.0
        %2579 = vmatprep.subr.mxu0 0.0
        %2580 = vmatpush1.msra.mxu0 0.0
        %2581 = vmatprep.subr.mxu0 0.0
        %2582 = vmatpush1.msra.mxu0 0.0
        %2583 = vmatprep.subr.mxu0 0.0
        %2584 = vmatpush1.msra.mxu0 0.0
        %2585 = vmatprep.subr.mxu0 0.0
        %2586 = vmatpush1.msra.mxu0 0.0
        %2587 = vmatprep.subr.mxu0 0.0
        %2588 = vmatpush1.msra.mxu0 0.0
        %2589 = vmatprep.subr.mxu0 0.0
        %2590 = vmatpush1.msra.mxu0 0.0
        %2591 = vmatprep.subr.mxu0 0.0
        %2592 = vmatpush1.msra.mxu0 0.0
        %2593 = vmatprep.subr.mxu0 0.0
        %2594 = vmatpush1.msra.mxu0 0.0
        %2595 = vmatprep.subr.mxu0 0.0
        %2596 = vmatpush1.msra.mxu0 0.0
        %2597 = vmatprep.subr.mxu0 0.0
        %2598 = vmatpush1.msra.mxu0 0.0
        %2599 = vmatprep.subr.mxu0 0.0
        %2600 = vmatpush1.msra.mxu0 0.0
        %2601 = vmatprep.subr.mxu0 0.0
        %2602 = vmatpush1.msra.mxu0 0.0
        %2603 = vmatprep.subr.mxu0 0.0
        %2604 = vmatpush1.msra.mxu0 0.0
        %2605 = vmatprep.subr.mxu0 0.0
        %2606 = vmatpush1.msra.mxu0 0.0
        %2607 = vmatprep.subr.mxu0 0.0
        %2608 = vmatpush1.msra.mxu0 0.0
        %2609 = vmatprep.subr.mxu0 0.0
        %2610 = vmatpush1.msra.mxu0 0.0
        %2611 = vmatprep.subr.mxu0 0.0
        %2612 = vmatpush1.msra.mxu0 0.0
        %2613 = vmatprep.subr.mxu0 0.0
        %2614 = vmatpush1.msra.mxu0 0.0
        %2615 = vmatprep.subr.mxu0 0.0
        %2616 = vmatpush1.msra.mxu0 0.0
        %2617 = vmatprep.subr.mxu0 0.0
        %2618 = vmatpush1.msra.mxu0 0.0
        %2619 = vmatprep.subr.mxu0 0.0
        %2620 = vmatpush1.msra.mxu0 0.0
        %2621 = vmatprep.subr.mxu0 0.0
        %2622 = vmatpush1.msra.mxu0 0.0
        %2623 = vmatprep.subr.mxu0 0.0
        %2624 = vmatpush1.msra.mxu0 0.0
        %2625 = vmatprep.subr.mxu0 0.0
        %2626 = vmatpush1.msra.mxu0 0.0
        %2627 = vmatprep.mubr.f32.mxu0 0.0
        %2628 = vmatmul.mubr.f32.gmra.mrb[0].mxu0 %v2391
        %v2629 = vpop.f32.mrb[0].mxu0
        %v2630 = vadd.f32 0.0, %v2629
        %v2631 = vpop.f32.mrb[0].mxu0
        %2632 = vdwg.mxu0
        %v2633 = vsel %vm695, %v2556, 0
        %2635 = vmatprep.subr.mxu0 0.0
        %2636 = vmatpush1.msra.mxu0 %v2012
        %2637 = vmatprep.subr.mxu0 0.0
        %2638 = vmatpush1.msra.mxu0 0.0
        %2639 = vmatprep.subr.mxu0 0.0
        %2640 = vmatpush1.msra.mxu0 0.0
        %2641 = vmatprep.subr.mxu0 0.0
        %2642 = vmatpush1.msra.mxu0 0.0
        %2643 = vmatprep.subr.mxu0 0.0
        %2644 = vmatpush1.msra.mxu0 0.0
        %2645 = vmatprep.subr.mxu0 0.0
        %2646 = vmatpush1.msra.mxu0 0.0
        %2647 = vmatprep.subr.mxu0 0.0
        %2648 = vmatpush1.msra.mxu0 0.0
        %2649 = vmatprep.subr.mxu0 0.0
        %2650 = vmatpush1.msra.mxu0 0.0
        %2651 = vmatprep.subr.mxu0 0.0
        %2652 = vmatpush1.msra.mxu0 0.0
        %2653 = vmatprep.subr.mxu0 0.0
        %2654 = vmatpush1.msra.mxu0 0.0
        %2655 = vmatprep.subr.mxu0 0.0
        %2656 = vmatpush1.msra.mxu0 0.0
        %2657 = vmatprep.subr.mxu0 0.0
        %2658 = vmatpush1.msra.mxu0 0.0
        %2659 = vmatprep.subr.mxu0 0.0
        %2660 = vmatpush1.msra.mxu0 0.0
        %2661 = vmatprep.subr.mxu0 0.0
        %2662 = vmatpush1.msra.mxu0 0.0
        %2663 = vmatprep.subr.mxu0 0.0
        %2664 = vmatpush1.msra.mxu0 0.0
        %2665 = vmatprep.subr.mxu0 0.0
        %2666 = vmatpush1.msra.mxu0 0.0
        %2667 = vmatprep.subr.mxu0 0.0
        %2668 = vmatpush1.msra.mxu0 0.0
        %2669 = vmatprep.subr.mxu0 0.0
        %2670 = vmatpush1.msra.mxu0 0.0
        %2671 = vmatprep.subr.mxu0 0.0
        %2672 = vmatpush1.msra.mxu0 0.0
        %2673 = vmatprep.subr.mxu0 0.0
        %2674 = vmatpush1.msra.mxu0 0.0
        %2675 = vmatprep.subr.mxu0 0.0
        %2676 = vmatpush1.msra.mxu0 0.0
        %2677 = vmatprep.subr.mxu0 0.0
        %2678 = vmatpush1.msra.mxu0 0.0
        %2679 = vmatprep.subr.mxu0 0.0
        %2680 = vmatpush1.msra.mxu0 0.0
        %2681 = vmatprep.subr.mxu0 0.0
        %2682 = vmatpush1.msra.mxu0 0.0
        %2683 = vmatprep.subr.mxu0 0.0
        %2684 = vmatpush1.msra.mxu0 0.0
        %2685 = vmatprep.subr.mxu0 0.0
        %2686 = vmatpush1.msra.mxu0 0.0
        %2687 = vmatprep.subr.mxu0 0.0
        %2688 = vmatpush1.msra.mxu0 0.0
        %2689 = vmatprep.subr.mxu0 0.0
        %2690 = vmatpush1.msra.mxu0 0.0
        %2691 = vmatprep.subr.mxu0 0.0
        %2692 = vmatpush1.msra.mxu0 0.0
        %2693 = vmatprep.subr.mxu0 0.0
        %2694 = vmatpush1.msra.mxu0 0.0
        %2695 = vmatprep.subr.mxu0 0.0
        %2696 = vmatpush1.msra.mxu0 0.0
        %2697 = vmatprep.subr.mxu0 0.0
        %2698 = vmatpush1.msra.mxu0 0.0
        %2699 = vmatprep.mubr.f32.mxu0 0.0
        %2700 = vmatmul.mubr.f32.gmra.mrb[0].mxu0 %v2633
        %v2701 = vpop.f32.mrb[0].mxu0
        %v2702 = vadd.f32 %v2630, %v2701
        %v2703 = vpop.f32.mrb[0].mxu0
        %2704 = vdwg.mxu0
        %v2705 = vld [vmem:[#allocation7 + $0x8] sm:$0xff]
        %v2706 = vadd.f32 %v2702, %v2705
        %v2707 = vxor.u32 %v2706, 2147483648
        %v2708 = vmul.f32 %v2707, 1.442695
        %v2709 = vpow.pop %v2708
        %v2710 = vadd.f32 %v2709, 1.0
        %v2711 = vrcp.pop %v2710
        %v2712 = vmul.f32 1.0, %v2711
        %v2713 = vtanh.pop %v2706
        %v2714 = vmul.f32 %v2712, %v2372
        %2716 = vrot.lane.b32.xlu0 %v2713, 64
        %v2717 = vpop.permute.xlu0 %2716
        %v2719 = vmul.f32 %v2712, %v2717
        %2721 = vrot.lane.b32.xlu0 %v2719, 32
        %v2722 = vpop.permute.xlu0 %2721
        %v2724 = vadd.f32 %v2714, %v2722
        %v2725 = vtanh.pop %v2724
        %2727 = vrot.lane.b32.xlu0 %v2725, 64
        %v2728 = vpop.permute.xlu0 %2727
        %v2730 = vmul.f32 %v2712, %v2728
        %v2731 = vld [vmem:[%s632 + $0x10] sm:$0xff]
        %v2732 = vld [vmem:[%s638 + $0x10] sm:$0xff]
        %v2733 = vld [vmem:[#allocation8 + $0x10] sm:$0xff]
        %v2734 = vld [vmem:[#allocation5 + $0x10] sm:$0xff]
        %2736 = vrot.lane.b32.xlu0 %v2734, 96
        %v2737 = vpop.permute.xlu0 %2736
        %v2739 = vmul.f32 %v2730, %v2737
        %2741 = vrot.lane.b32.xlu0 %v2739, 32
        %v2742 = vpop.permute.xlu0 %2741
        %v2743 = vsel %vm953, %v2742, 0
        %2745 = vmatprep.subr.mxu0 0.0
        %2746 = vmatpush1.msra.mxu0 %v2007
        %2747 = vmatprep.subr.mxu0 0.0
        %2748 = vmatpush1.msra.mxu0 %v2008
        %2749 = vmatprep.subr.mxu0 0.0
        %2750 = vmatpush1.msra.mxu0 %v2009
        %2751 = vmatprep.subr.mxu0 0.0
        %2752 = vmatpush1.msra.mxu0 %v2010
        %2753 = vmatprep.subr.mxu0 0.0
        %2754 = vmatpush1.msra.mxu0 0.0
        %2755 = vmatprep.subr.mxu0 0.0
        %2756 = vmatpush1.msra.mxu0 0.0
        %2757 = vmatprep.subr.mxu0 0.0
        %2758 = vmatpush1.msra.mxu0 0.0
        %2759 = vmatprep.subr.mxu0 0.0
        %2760 = vmatpush1.msra.mxu0 0.0
        %2761 = vmatprep.subr.mxu0 0.0
        %2762 = vmatpush1.msra.mxu0 0.0
        %2763 = vmatprep.subr.mxu0 0.0
        %2764 = vmatpush1.msra.mxu0 0.0
        %2765 = vmatprep.subr.mxu0 0.0
        %2766 = vmatpush1.msra.mxu0 0.0
        %2767 = vmatprep.subr.mxu0 0.0
        %2768 = vmatpush1.msra.mxu0 0.0
        %2769 = vmatprep.subr.mxu0 0.0
        %2770 = vmatpush1.msra.mxu0 0.0
        %2771 = vmatprep.subr.mxu0 0.0
        %2772 = vmatpush1.msra.mxu0 0.0
        %2773 = vmatprep.subr.mxu0 0.0
        %2774 = vmatpush1.msra.mxu0 0.0
        %2775 = vmatprep.subr.mxu0 0.0
        %2776 = vmatpush1.msra.mxu0 0.0
        %2777 = vmatprep.subr.mxu0 0.0
        %2778 = vmatpush1.msra.mxu0 0.0
        %2779 = vmatprep.subr.mxu0 0.0
        %2780 = vmatpush1.msra.mxu0 0.0
        %2781 = vmatprep.subr.mxu0 0.0
        %2782 = vmatpush1.msra.mxu0 0.0
        %2783 = vmatprep.subr.mxu0 0.0
        %2784 = vmatpush1.msra.mxu0 0.0
        %2785 = vmatprep.subr.mxu0 0.0
        %2786 = vmatpush1.msra.mxu0 0.0
        %2787 = vmatprep.subr.mxu0 0.0
        %2788 = vmatpush1.msra.mxu0 0.0
        %2789 = vmatprep.subr.mxu0 0.0
        %2790 = vmatpush1.msra.mxu0 0.0
        %2791 = vmatprep.subr.mxu0 0.0
        %2792 = vmatpush1.msra.mxu0 0.0
        %2793 = vmatprep.subr.mxu0 0.0
        %2794 = vmatpush1.msra.mxu0 0.0
        %2795 = vmatprep.subr.mxu0 0.0
        %2796 = vmatpush1.msra.mxu0 0.0
        %2797 = vmatprep.subr.mxu0 0.0
        %2798 = vmatpush1.msra.mxu0 0.0
        %2799 = vmatprep.subr.mxu0 0.0
        %2800 = vmatpush1.msra.mxu0 0.0
        %2801 = vmatprep.subr.mxu0 0.0
        %2802 = vmatpush1.msra.mxu0 0.0
        %2803 = vmatprep.subr.mxu0 0.0
        %2804 = vmatpush1.msra.mxu0 0.0
        %2805 = vmatprep.subr.mxu0 0.0
        %2806 = vmatpush1.msra.mxu0 0.0
        %2807 = vmatprep.subr.mxu0 0.0
        %2808 = vmatpush1.msra.mxu0 0.0
        %2809 = vmatprep.mubr.f32.mxu0 0.0
        %2810 = vmatmul.mubr.f32.gmra.mrb[0].mxu0 %v2743
        %v2811 = vpop.f32.mrb[0].mxu0
        %v2812 = vadd.f32 %v2022, %v2811
        %v2813 = vpop.f32.mrb[0].mxu0
        %2814 = vdwg.mxu0
        %v2815 = vmul.f32 %v2732, %v2731
        %v2816 = vsub.f32 1.0, %v2732
        %v2817 = vmul.f32 %v2816, %v2812
        %v2818 = vadd.f32 %v2815, %v2817
        %v2820 = vsel %vm695, %v2818, 0
        %2822 = vmatprep.subr.mxu0 0.0
        %2823 = vmatpush1.msra.mxu0 %v2011
        %2824 = vmatprep.subr.mxu0 0.0
        %2825 = vmatpush1.msra.mxu0 0.0
        %2826 = vmatprep.subr.mxu0 0.0
        %2827 = vmatpush1.msra.mxu0 0.0
        %2828 = vmatprep.subr.mxu0 0.0
        %2829 = vmatpush1.msra.mxu0 0.0
        %2830 = vmatprep.subr.mxu0 0.0
        %2831 = vmatpush1.msra.mxu0 0.0
        %2832 = vmatprep.subr.mxu0 0.0
        %2833 = vmatpush1.msra.mxu0 0.0
        %2834 = vmatprep.subr.mxu0 0.0
        %2835 = vmatpush1.msra.mxu0 0.0
        %2836 = vmatprep.subr.mxu0 0.0
        %2837 = vmatpush1.msra.mxu0 0.0
        %2838 = vmatprep.subr.mxu0 0.0
        %2839 = vmatpush1.msra.mxu0 0.0
        %2840 = vmatprep.subr.mxu0 0.0
        %2841 = vmatpush1.msra.mxu0 0.0
        %2842 = vmatprep.subr.mxu0 0.0
        %2843 = vmatpush1.msra.mxu0 0.0
        %2844 = vmatprep.subr.mxu0 0.0
        %2845 = vmatpush1.msra.mxu0 0.0
        %2846 = vmatprep.subr.mxu0 0.0
        %2847 = vmatpush1.msra.mxu0 0.0
        %2848 = vmatprep.subr.mxu0 0.0
        %2849 = vmatpush1.msra.mxu0 0.0
        %2850 = vmatprep.subr.mxu0 0.0
        %2851 = vmatpush1.msra.mxu0 0.0
        %2852 = vmatprep.subr.mxu0 0.0
        %2853 = vmatpush1.msra.mxu0 0.0
        %2854 = vmatprep.subr.mxu0 0.0
        %2855 = vmatpush1.msra.mxu0 0.0
        %2856 = vmatprep.subr.mxu0 0.0
        %2857 = vmatpush1.msra.mxu0 0.0
        %2858 = vmatprep.subr.mxu0 0.0
        %2859 = vmatpush1.msra.mxu0 0.0
        %2860 = vmatprep.subr.mxu0 0.0
        %2861 = vmatpush1.msra.mxu0 0.0
        %2862 = vmatprep.subr.mxu0 0.0
        %2863 = vmatpush1.msra.mxu0 0.0
        %2864 = vmatprep.subr.mxu0 0.0
        %2865 = vmatpush1.msra.mxu0 0.0
        %2866 = vmatprep.subr.mxu0 0.0
        %2867 = vmatpush1.msra.mxu0 0.0
        %2868 = vmatprep.subr.mxu0 0.0
        %2869 = vmatpush1.msra.mxu0 0.0
        %2870 = vmatprep.subr.mxu0 0.0
        %2871 = vmatpush1.msra.mxu0 0.0
        %2872 = vmatprep.subr.mxu0 0.0
        %2873 = vmatpush1.msra.mxu0 0.0
        %2874 = vmatprep.subr.mxu0 0.0
        %2875 = vmatpush1.msra.mxu0 0.0
        %2876 = vmatprep.subr.mxu0 0.0
        %2877 = vmatpush1.msra.mxu0 0.0
        %2878 = vmatprep.subr.mxu0 0.0
        %2879 = vmatpush1.msra.mxu0 0.0
        %2880 = vmatprep.subr.mxu0 0.0
        %2881 = vmatpush1.msra.mxu0 0.0
        %2882 = vmatprep.subr.mxu0 0.0
        %2883 = vmatpush1.msra.mxu0 0.0
        %2884 = vmatprep.subr.mxu0 0.0
        %2885 = vmatpush1.msra.mxu0 0.0
        %2886 = vmatprep.mubr.f32.mxu0 0.0
        %2887 = vmatmul.mubr.f32.gmra.mrb[0].mxu0 %v2820
        %v2888 = vpop.f32.mrb[0].mxu0
        %v2889 = vadd.f32 %v2029, %v2888
        %v2890 = vpop.f32.mrb[0].mxu0
        %2891 = vdwg.mxu0
        %v2892 = vld [vmem:[#allocation6 + $0x10] sm:$0xff]
        %v2893 = vmul.f32 %v2892, %v2889
        %v2894 = vsub.f32 1.0, %v2892
        %v2895 = vmul.f32 %v2894, %v2812
        %v2896 = vadd.f32 %v2893, %v2895
        %v2897 = vsub.f32 %v2731, %v2812
        %v2898 = vand.u32 2147483647, %v2897
        %v2899 = vsub.f32 %v2731, %v2889
        %v2900 = vand.u32 2147483647, %v2899
        %v2901 = vadd.f32 %v2898, %v2900
        %v2902 = vsub.f32 %v2731, %v2896
        %v2903 = vand.u32 2147483647, %v2902
        %v2904 = vadd.f32 %v2901, %v2903
        %v2905 = vmul.f32 %v2904, %v2733
        %v2906 = vadd.f32 %v2554, %v2905
        %v2907 = vmul.f32 %v2816, %v2896
        %v2908 = vadd.f32 %v2815, %v2907
        %2910 = vrot.lane.b32.xlu0 %v2908, 16
        %v2911 = vpop.permute.xlu0 %2910
        %vm2913 = vcmask 195712
        %2914 = vst.msk [vmem:[%s625] sm:$0xff] %vm2913, %v2911
        %2915 = vmatprep.subr.mxu0 0.0
        %2916 = vmatpush1.msra.mxu0 %v2013
        %2917 = vmatprep.subr.mxu0 0.0
        %2918 = vmatpush1.msra.mxu0 %v2014
        %2919 = vmatprep.subr.mxu0 0.0
        %2920 = vmatpush1.msra.mxu0 %v2015
        %2921 = vmatprep.subr.mxu0 0.0
        %2922 = vmatpush1.msra.mxu0 %v2016
        %2923 = vmatprep.subr.mxu0 0.0
        %2924 = vmatpush1.msra.mxu0 0.0
        %2925 = vmatprep.subr.mxu0 0.0
        %2926 = vmatpush1.msra.mxu0 0.0
        %2927 = vmatprep.subr.mxu0 0.0
        %2928 = vmatpush1.msra.mxu0 0.0
        %2929 = vmatprep.subr.mxu0 0.0
        %2930 = vmatpush1.msra.mxu0 0.0
        %2931 = vmatprep.subr.mxu0 0.0
        %2932 = vmatpush1.msra.mxu0 0.0
        %2933 = vmatprep.subr.mxu0 0.0
        %2934 = vmatpush1.msra.mxu0 0.0
        %2935 = vmatprep.subr.mxu0 0.0
        %2936 = vmatpush1.msra.mxu0 0.0
        %2937 = vmatprep.subr.mxu0 0.0
        %2938 = vmatpush1.msra.mxu0 0.0
        %2939 = vmatprep.subr.mxu0 0.0
        %2940 = vmatpush1.msra.mxu0 0.0
        %2941 = vmatprep.subr.mxu0 0.0
        %2942 = vmatpush1.msra.mxu0 0.0
        %2943 = vmatprep.subr.mxu0 0.0
        %2944 = vmatpush1.msra.mxu0 0.0
        %2945 = vmatprep.subr.mxu0 0.0
        %2946 = vmatpush1.msra.mxu0 0.0
        %2947 = vmatprep.subr.mxu0 0.0
        %2948 = vmatpush1.msra.mxu0 0.0
        %2949 = vmatprep.subr.mxu0 0.0
        %2950 = vmatpush1.msra.mxu0 0.0
        %2951 = vmatprep.subr.mxu0 0.0
        %2952 = vmatpush1.msra.mxu0 0.0
        %2953 = vmatprep.subr.mxu0 0.0
        %2954 = vmatpush1.msra.mxu0 0.0
        %2955 = vmatprep.subr.mxu0 0.0
        %2956 = vmatpush1.msra.mxu0 0.0
        %2957 = vmatprep.subr.mxu0 0.0
        %2958 = vmatpush1.msra.mxu0 0.0
        %2959 = vmatprep.subr.mxu0 0.0
        %2960 = vmatpush1.msra.mxu0 0.0
        %2961 = vmatprep.subr.mxu0 0.0
        %2962 = vmatpush1.msra.mxu0 0.0
        %2963 = vmatprep.subr.mxu0 0.0
        %2964 = vmatpush1.msra.mxu0 0.0
        %2965 = vmatprep.subr.mxu0 0.0
        %2966 = vmatpush1.msra.mxu0 0.0
        %2967 = vmatprep.subr.mxu0 0.0
        %2968 = vmatpush1.msra.mxu0 0.0
        %2969 = vmatprep.subr.mxu0 0.0
        %2970 = vmatpush1.msra.mxu0 0.0
        %2971 = vmatprep.subr.mxu0 0.0
        %2972 = vmatpush1.msra.mxu0 0.0
        %2973 = vmatprep.subr.mxu0 0.0
        %2974 = vmatpush1.msra.mxu0 0.0
        %2975 = vmatprep.subr.mxu0 0.0
        %2976 = vmatpush1.msra.mxu0 0.0
        %2977 = vmatprep.subr.mxu0 0.0
        %2978 = vmatpush1.msra.mxu0 0.0
        %2979 = vmatprep.mubr.f32.mxu0 0.0
        %2980 = vmatmul.mubr.f32.gmra.mrb[0].mxu0 %v2743
        %v2981 = vpop.f32.mrb[0].mxu0
        %v2982 = vadd.f32 0.0, %v2981
        %v2983 = vpop.f32.mrb[0].mxu0
        %2984 = vdwg.mxu0
        %v2985 = vsel %vm695, %v2908, 0
        %2987 = vmatprep.subr.mxu0 0.0
        %2988 = vmatpush1.msra.mxu0 %v2012
        %2989 = vmatprep.subr.mxu0 0.0
        %2990 = vmatpush1.msra.mxu0 0.0
        %2991 = vmatprep.subr.mxu0 0.0
        %2992 = vmatpush1.msra.mxu0 0.0
        %2993 = vmatprep.subr.mxu0 0.0
        %2994 = vmatpush1.msra.mxu0 0.0
        %2995 = vmatprep.subr.mxu0 0.0
        %2996 = vmatpush1.msra.mxu0 0.0
        %2997 = vmatprep.subr.mxu0 0.0
        %2998 = vmatpush1.msra.mxu0 0.0
        %2999 = vmatprep.subr.mxu0 0.0
        %3000 = vmatpush1.msra.mxu0 0.0
        %3001 = vmatprep.subr.mxu0 0.0
        %3002 = vmatpush1.msra.mxu0 0.0
        %3003 = vmatprep.subr.mxu0 0.0
        %3004 = vmatpush1.msra.mxu0 0.0
        %3005 = vmatprep.subr.mxu0 0.0
        %3006 = vmatpush1.msra.mxu0 0.0
        %3007 = vmatprep.subr.mxu0 0.0
        %3008 = vmatpush1.msra.mxu0 0.0
        %3009 = vmatprep.subr.mxu0 0.0
        %3010 = vmatpush1.msra.mxu0 0.0
        %3011 = vmatprep.subr.mxu0 0.0
        %3012 = vmatpush1.msra.mxu0 0.0
        %3013 = vmatprep.subr.mxu0 0.0
        %3014 = vmatpush1.msra.mxu0 0.0
        %3015 = vmatprep.subr.mxu0 0.0
        %3016 = vmatpush1.msra.mxu0 0.0
        %3017 = vmatprep.subr.mxu0 0.0
        %3018 = vmatpush1.msra.mxu0 0.0
        %3019 = vmatprep.subr.mxu0 0.0
        %3020 = vmatpush1.msra.mxu0 0.0
        %3021 = vmatprep.subr.mxu0 0.0
        %3022 = vmatpush1.msra.mxu0 0.0
        %3023 = vmatprep.subr.mxu0 0.0
        %3024 = vmatpush1.msra.mxu0 0.0
        %3025 = vmatprep.subr.mxu0 0.0
        %3026 = vmatpush1.msra.mxu0 0.0
        %3027 = vmatprep.subr.mxu0 0.0
        %3028 = vmatpush1.msra.mxu0 0.0
        %3029 = vmatprep.subr.mxu0 0.0
        %3030 = vmatpush1.msra.mxu0 0.0
        %3031 = vmatprep.subr.mxu0 0.0
        %3032 = vmatpush1.msra.mxu0 0.0
        %3033 = vmatprep.subr.mxu0 0.0
        %3034 = vmatpush1.msra.mxu0 0.0
        %3035 = vmatprep.subr.mxu0 0.0
        %3036 = vmatpush1.msra.mxu0 0.0
        %3037 = vmatprep.subr.mxu0 0.0
        %3038 = vmatpush1.msra.mxu0 0.0
        %3039 = vmatprep.subr.mxu0 0.0
        %3040 = vmatpush1.msra.mxu0 0.0
        %3041 = vmatprep.subr.mxu0 0.0
        %3042 = vmatpush1.msra.mxu0 0.0
        %3043 = vmatprep.subr.mxu0 0.0
        %3044 = vmatpush1.msra.mxu0 0.0
        %3045 = vmatprep.subr.mxu0 0.0
        %3046 = vmatpush1.msra.mxu0 0.0
        %3047 = vmatprep.subr.mxu0 0.0
        %3048 = vmatpush1.msra.mxu0 0.0
        %3049 = vmatprep.subr.mxu0 0.0
        %3050 = vmatpush1.msra.mxu0 0.0
        %3051 = vmatprep.mubr.f32.mxu0 0.0
        %3052 = vmatmul.mubr.f32.gmra.mrb[0].mxu0 %v2985
        %v3053 = vpop.f32.mrb[0].mxu0
        %v3054 = vadd.f32 %v2982, %v3053
        %v3055 = vpop.f32.mrb[0].mxu0
        %3056 = vdwg.mxu0
        %v3057 = vld [vmem:[#allocation7 + $0x10] sm:$0xff]
        %v3058 = vadd.f32 %v3054, %v3057
        %v3059 = vxor.u32 %v3058, 2147483648
        %v3060 = vmul.f32 %v3059, 1.442695
        %v3061 = vpow.pop %v3060
        %v3062 = vadd.f32 %v3061, 1.0
        %v3063 = vrcp.pop %v3062
        %v3064 = vmul.f32 1.0, %v3063
        %v3065 = vtanh.pop %v3058
        %v3066 = vmul.f32 %v3064, %v2724
        %3068 = vrot.lane.b32.xlu0 %v3065, 64
        %v3069 = vpop.permute.xlu0 %3068
        %v3071 = vmul.f32 %v3064, %v3069
        %3073 = vrot.lane.b32.xlu0 %v3071, 32
        %v3074 = vpop.permute.xlu0 %3073
        %v3076 = vadd.f32 %v3066, %v3074
        %v3077 = vtanh.pop %v3076
        %3079 = vrot.lane.b32.xlu0 %v3077, 64
        %v3080 = vpop.permute.xlu0 %3079
        %v3082 = vmul.f32 %v3064, %v3080
        %v3083 = vld [vmem:[%s632 + $0x18] sm:$0xff]
        %v3084 = vld [vmem:[%s638 + $0x18] sm:$0xff]
        %v3085 = vld [vmem:[#allocation8 + $0x18] sm:$0xff]
        %v3086 = vld [vmem:[#allocation5 + $0x18] sm:$0xff]
        %3088 = vrot.lane.b32.xlu0 %v3086, 96
        %v3089 = vpop.permute.xlu0 %3088
        %v3091 = vmul.f32 %v3082, %v3089
        %3093 = vrot.lane.b32.xlu0 %v3091, 32
        %v3094 = vpop.permute.xlu0 %3093
        %v3095 = vsel %vm953, %v3094, 0
        %3097 = vmatprep.subr.mxu0 0.0
        %3098 = vmatpush1.msra.mxu0 %v2007
        %3099 = vmatprep.subr.mxu0 0.0
        %3100 = vmatpush1.msra.mxu0 %v2008
        %3101 = vmatprep.subr.mxu0 0.0
        %3102 = vmatpush1.msra.mxu0 %v2009
        %3103 = vmatprep.subr.mxu0 0.0
        %3104 = vmatpush1.msra.mxu0 %v2010
        %3105 = vmatprep.subr.mxu0 0.0
        %3106 = vmatpush1.msra.mxu0 0.0
        %3107 = vmatprep.subr.mxu0 0.0
        %3108 = vmatpush1.msra.mxu0 0.0
        %3109 = vmatprep.subr.mxu0 0.0
        %3110 = vmatpush1.msra.mxu0 0.0
        %3111 = vmatprep.subr.mxu0 0.0
        %3112 = vmatpush1.msra.mxu0 0.0
        %3113 = vmatprep.subr.mxu0 0.0
        %3114 = vmatpush1.msra.mxu0 0.0
        %3115 = vmatprep.subr.mxu0 0.0
        %3116 = vmatpush1.msra.mxu0 0.0
        %3117 = vmatprep.subr.mxu0 0.0
        %3118 = vmatpush1.msra.mxu0 0.0
        %3119 = vmatprep.subr.mxu0 0.0
        %3120 = vmatpush1.msra.mxu0 0.0
        %3121 = vmatprep.subr.mxu0 0.0
        %3122 = vmatpush1.msra.mxu0 0.0
        %3123 = vmatprep.subr.mxu0 0.0
        %3124 = vmatpush1.msra.mxu0 0.0
        %3125 = vmatprep.subr.mxu0 0.0
        %3126 = vmatpush1.msra.mxu0 0.0
        %3127 = vmatprep.subr.mxu0 0.0
        %3128 = vmatpush1.msra.mxu0 0.0
        %3129 = vmatprep.subr.mxu0 0.0
        %3130 = vmatpush1.msra.mxu0 0.0
        %3131 = vmatprep.subr.mxu0 0.0
        %3132 = vmatpush1.msra.mxu0 0.0
        %3133 = vmatprep.subr.mxu0 0.0
        %3134 = vmatpush1.msra.mxu0 0.0
        %3135 = vmatprep.subr.mxu0 0.0
        %3136 = vmatpush1.msra.mxu0 0.0
        %3137 = vmatprep.subr.mxu0 0.0
        %3138 = vmatpush1.msra.mxu0 0.0
        %3139 = vmatprep.subr.mxu0 0.0
        %3140 = vmatpush1.msra.mxu0 0.0
        %3141 = vmatprep.subr.mxu0 0.0
        %3142 = vmatpush1.msra.mxu0 0.0
        %3143 = vmatprep.subr.mxu0 0.0
        %3144 = vmatpush1.msra.mxu0 0.0
        %3145 = vmatprep.subr.mxu0 0.0
        %3146 = vmatpush1.msra.mxu0 0.0
        %3147 = vmatprep.subr.mxu0 0.0
        %3148 = vmatpush1.msra.mxu0 0.0
        %3149 = vmatprep.subr.mxu0 0.0
        %3150 = vmatpush1.msra.mxu0 0.0
        %3151 = vmatprep.subr.mxu0 0.0
        %3152 = vmatpush1.msra.mxu0 0.0
        %3153 = vmatprep.subr.mxu0 0.0
        %3154 = vmatpush1.msra.mxu0 0.0
        %3155 = vmatprep.subr.mxu0 0.0
        %3156 = vmatpush1.msra.mxu0 0.0
        %3157 = vmatprep.subr.mxu0 0.0
        %3158 = vmatpush1.msra.mxu0 0.0
        %3159 = vmatprep.subr.mxu0 0.0
        %3160 = vmatpush1.msra.mxu0 0.0
        %3161 = vmatprep.mubr.f32.mxu0 0.0
        %3162 = vmatmul.mubr.f32.gmra.mrb[0].mxu0 %v3095
        %v3163 = vpop.f32.mrb[0].mxu0
        %v3164 = vadd.f32 %v2022, %v3163
        %v3165 = vpop.f32.mrb[0].mxu0
        %3166 = vdwg.mxu0
        %v3167 = vmul.f32 %v3084, %v3083
        %v3168 = vsub.f32 1.0, %v3084
        %v3169 = vmul.f32 %v3168, %v3164
        %v3170 = vadd.f32 %v3167, %v3169
        %v3172 = vsel %vm695, %v3170, 0
        %3174 = vmatprep.subr.mxu0 0.0
        %3175 = vmatpush1.msra.mxu0 %v2011
        %3176 = vmatprep.subr.mxu0 0.0
        %3177 = vmatpush1.msra.mxu0 0.0
        %3178 = vmatprep.subr.mxu0 0.0
        %3179 = vmatpush1.msra.mxu0 0.0
        %3180 = vmatprep.subr.mxu0 0.0
        %3181 = vmatpush1.msra.mxu0 0.0
        %3182 = vmatprep.subr.mxu0 0.0
        %3183 = vmatpush1.msra.mxu0 0.0
        %3184 = vmatprep.subr.mxu0 0.0
        %3185 = vmatpush1.msra.mxu0 0.0
        %3186 = vmatprep.subr.mxu0 0.0
        %3187 = vmatpush1.msra.mxu0 0.0
        %3188 = vmatprep.subr.mxu0 0.0
        %3189 = vmatpush1.msra.mxu0 0.0
        %3190 = vmatprep.subr.mxu0 0.0
        %3191 = vmatpush1.msra.mxu0 0.0
        %3192 = vmatprep.subr.mxu0 0.0
        %3193 = vmatpush1.msra.mxu0 0.0
        %3194 = vmatprep.subr.mxu0 0.0
        %3195 = vmatpush1.msra.mxu0 0.0
        %3196 = vmatprep.subr.mxu0 0.0
        %3197 = vmatpush1.msra.mxu0 0.0
        %3198 = vmatprep.subr.mxu0 0.0
        %3199 = vmatpush1.msra.mxu0 0.0
        %3200 = vmatprep.subr.mxu0 0.0
        %3201 = vmatpush1.msra.mxu0 0.0
        %3202 = vmatprep.subr.mxu0 0.0
        %3203 = vmatpush1.msra.mxu0 0.0
        %3204 = vmatprep.subr.mxu0 0.0
        %3205 = vmatpush1.msra.mxu0 0.0
        %3206 = vmatprep.subr.mxu0 0.0
        %3207 = vmatpush1.msra.mxu0 0.0
        %3208 = vmatprep.subr.mxu0 0.0
        %3209 = vmatpush1.msra.mxu0 0.0
        %3210 = vmatprep.subr.mxu0 0.0
        %3211 = vmatpush1.msra.mxu0 0.0
        %3212 = vmatprep.subr.mxu0 0.0
        %3213 = vmatpush1.msra.mxu0 0.0
        %3214 = vmatprep.subr.mxu0 0.0
        %3215 = vmatpush1.msra.mxu0 0.0
        %3216 = vmatprep.subr.mxu0 0.0
        %3217 = vmatpush1.msra.mxu0 0.0
        %3218 = vmatprep.subr.mxu0 0.0
        %3219 = vmatpush1.msra.mxu0 0.0
        %3220 = vmatprep.subr.mxu0 0.0
        %3221 = vmatpush1.msra.mxu0 0.0
        %3222 = vmatprep.subr.mxu0 0.0
        %3223 = vmatpush1.msra.mxu0 0.0
        %3224 = vmatprep.subr.mxu0 0.0
        %3225 = vmatpush1.msra.mxu0 0.0
        %3226 = vmatprep.subr.mxu0 0.0
        %3227 = vmatpush1.msra.mxu0 0.0
        %3228 = vmatprep.subr.mxu0 0.0
        %3229 = vmatpush1.msra.mxu0 0.0
        %3230 = vmatprep.subr.mxu0 0.0
        %3231 = vmatpush1.msra.mxu0 0.0
        %3232 = vmatprep.subr.mxu0 0.0
        %3233 = vmatpush1.msra.mxu0 0.0
        %3234 = vmatprep.subr.mxu0 0.0
        %3235 = vmatpush1.msra.mxu0 0.0
        %3236 = vmatprep.subr.mxu0 0.0
        %3237 = vmatpush1.msra.mxu0 0.0
        %3238 = vmatprep.mubr.f32.mxu0 0.0
        %3239 = vmatmul.mubr.f32.gmra.mrb[0].mxu0 %v3172
        %v3240 = vpop.f32.mrb[0].mxu0
        %v3241 = vadd.f32 %v2029, %v3240
        %v3242 = vpop.f32.mrb[0].mxu0
        %3243 = vdwg.mxu0
        %v3244 = vld [vmem:[#allocation6 + $0x18] sm:$0xff]
        %v3245 = vmul.f32 %v3244, %v3241
        %v3246 = vsub.f32 1.0, %v3244
        %v3247 = vmul.f32 %v3246, %v3164
        %v3248 = vadd.f32 %v3245, %v3247
        %v3249 = vsub.f32 %v3083, %v3164
        %v3250 = vand.u32 2147483647, %v3249
        %v3251 = vsub.f32 %v3083, %v3241
        %v3252 = vand.u32 2147483647, %v3251
        %v3253 = vadd.f32 %v3250, %v3252
        %v3254 = vsub.f32 %v3083, %v3248
        %v3255 = vand.u32 2147483647, %v3254
        %v3256 = vadd.f32 %v3253, %v3255
        %v3257 = vmul.f32 %v3256, %v3085
        %v3258 = vadd.f32 %v2906, %v3257
        %v3259 = vmul.f32 %v3168, %v3248
        %v3260 = vadd.f32 %v3167, %v3259
        %3262 = vrot.lane.b32.xlu0 %v3260, 24
        %v3263 = vpop.permute.xlu0 %3262
        %vm3265 = vcmask 261312
        %3266 = vst.msk [vmem:[%s625] sm:$0xff] %vm3265, %v3263
        %3267 = vmatprep.subr.mxu0 0.0
        %3268 = vmatpush1.msra.mxu0 %v2013
        %3269 = vmatprep.subr.mxu0 0.0
        %3270 = vmatpush1.msra.mxu0 %v2014
        %3271 = vmatprep.subr.mxu0 0.0
        %3272 = vmatpush1.msra.mxu0 %v2015
        %3273 = vmatprep.subr.mxu0 0.0
        %3274 = vmatpush1.msra.mxu0 %v2016
        %3275 = vmatprep.subr.mxu0 0.0
        %3276 = vmatpush1.msra.mxu0 0.0
        %3277 = vmatprep.subr.mxu0 0.0
        %3278 = vmatpush1.msra.mxu0 0.0
        %3279 = vmatprep.subr.mxu0 0.0
        %3280 = vmatpush1.msra.mxu0 0.0
        %3281 = vmatprep.subr.mxu0 0.0
        %3282 = vmatpush1.msra.mxu0 0.0
        %3283 = vmatprep.subr.mxu0 0.0
        %3284 = vmatpush1.msra.mxu0 0.0
        %3285 = vmatprep.subr.mxu0 0.0
        %3286 = vmatpush1.msra.mxu0 0.0
        %3287 = vmatprep.subr.mxu0 0.0
        %3288 = vmatpush1.msra.mxu0 0.0
        %3289 = vmatprep.subr.mxu0 0.0
        %3290 = vmatpush1.msra.mxu0 0.0
        %3291 = vmatprep.subr.mxu0 0.0
        %3292 = vmatpush1.msra.mxu0 0.0
        %3293 = vmatprep.subr.mxu0 0.0
        %3294 = vmatpush1.msra.mxu0 0.0
        %3295 = vmatprep.subr.mxu0 0.0
        %3296 = vmatpush1.msra.mxu0 0.0
        %3297 = vmatprep.subr.mxu0 0.0
        %3298 = vmatpush1.msra.mxu0 0.0
        %3299 = vmatprep.subr.mxu0 0.0
        %3300 = vmatpush1.msra.mxu0 0.0
        %3301 = vmatprep.subr.mxu0 0.0
        %3302 = vmatpush1.msra.mxu0 0.0
        %3303 = vmatprep.subr.mxu0 0.0
        %3304 = vmatpush1.msra.mxu0 0.0
        %3305 = vmatprep.subr.mxu0 0.0
        %3306 = vmatpush1.msra.mxu0 0.0
        %3307 = vmatprep.subr.mxu0 0.0
        %3308 = vmatpush1.msra.mxu0 0.0
        %3309 = vmatprep.subr.mxu0 0.0
        %3310 = vmatpush1.msra.mxu0 0.0
        %3311 = vmatprep.subr.mxu0 0.0
        %3312 = vmatpush1.msra.mxu0 0.0
        %3313 = vmatprep.subr.mxu0 0.0
        %3314 = vmatpush1.msra.mxu0 0.0
        %3315 = vmatprep.subr.mxu0 0.0
        %3316 = vmatpush1.msra.mxu0 0.0
        %3317 = vmatprep.subr.mxu0 0.0
        %3318 = vmatpush1.msra.mxu0 0.0
        %3319 = vmatprep.subr.mxu0 0.0
        %3320 = vmatpush1.msra.mxu0 0.0
        %3321 = vmatprep.subr.mxu0 0.0
        %3322 = vmatpush1.msra.mxu0 0.0
        %3323 = vmatprep.subr.mxu0 0.0
        %3324 = vmatpush1.msra.mxu0 0.0
        %3325 = vmatprep.subr.mxu0 0.0
        %3326 = vmatpush1.msra.mxu0 0.0
        %3327 = vmatprep.subr.mxu0 0.0
        %3328 = vmatpush1.msra.mxu0 0.0
        %3329 = vmatprep.subr.mxu0 0.0
        %3330 = vmatpush1.msra.mxu0 0.0
        %3331 = vmatprep.mubr.f32.mxu0 0.0
        %3332 = vmatmul.mubr.f32.gmra.mrb[0].mxu0 %v3095
        %v3333 = vpop.f32.mrb[0].mxu0
        %v3334 = vadd.f32 0.0, %v3333
        %v3335 = vpop.f32.mrb[0].mxu0
        %3336 = vdwg.mxu0
        %v3337 = vsel %vm695, %v3260, 0
        %3339 = vmatprep.subr.mxu0 0.0
        %3340 = vmatpush1.msra.mxu0 %v2012
        %3341 = vmatprep.subr.mxu0 0.0
        %3342 = vmatpush1.msra.mxu0 0.0
        %3343 = vmatprep.subr.mxu0 0.0
        %3344 = vmatpush1.msra.mxu0 0.0
        %3345 = vmatprep.subr.mxu0 0.0
        %3346 = vmatpush1.msra.mxu0 0.0
        %3347 = vmatprep.subr.mxu0 0.0
        %3348 = vmatpush1.msra.mxu0 0.0
        %3349 = vmatprep.subr.mxu0 0.0
        %3350 = vmatpush1.msra.mxu0 0.0
        %3351 = vmatprep.subr.mxu0 0.0
        %3352 = vmatpush1.msra.mxu0 0.0
        %3353 = vmatprep.subr.mxu0 0.0
        %3354 = vmatpush1.msra.mxu0 0.0
        %3355 = vmatprep.subr.mxu0 0.0
        %3356 = vmatpush1.msra.mxu0 0.0
        %3357 = vmatprep.subr.mxu0 0.0
        %3358 = vmatpush1.msra.mxu0 0.0
        %3359 = vmatprep.subr.mxu0 0.0
        %3360 = vmatpush1.msra.mxu0 0.0
        %3361 = vmatprep.subr.mxu0 0.0
        %3362 = vmatpush1.msra.mxu0 0.0
        %3363 = vmatprep.subr.mxu0 0.0
        %3364 = vmatpush1.msra.mxu0 0.0
        %3365 = vmatprep.subr.mxu0 0.0
        %3366 = vmatpush1.msra.mxu0 0.0
        %3367 = vmatprep.subr.mxu0 0.0
        %3368 = vmatpush1.msra.mxu0 0.0
        %3369 = vmatprep.subr.mxu0 0.0
        %3370 = vmatpush1.msra.mxu0 0.0
        %3371 = vmatprep.subr.mxu0 0.0
        %3372 = vmatpush1.msra.mxu0 0.0
        %3373 = vmatprep.subr.mxu0 0.0
        %3374 = vmatpush1.msra.mxu0 0.0
        %3375 = vmatprep.subr.mxu0 0.0
        %3376 = vmatpush1.msra.mxu0 0.0
        %3377 = vmatprep.subr.mxu0 0.0
        %3378 = vmatpush1.msra.mxu0 0.0
        %3379 = vmatprep.subr.mxu0 0.0
        %3380 = vmatpush1.msra.mxu0 0.0
        %3381 = vmatprep.subr.mxu0 0.0
        %3382 = vmatpush1.msra.mxu0 0.0
        %3383 = vmatprep.subr.mxu0 0.0
        %3384 = vmatpush1.msra.mxu0 0.0
        %3385 = vmatprep.subr.mxu0 0.0
        %3386 = vmatpush1.msra.mxu0 0.0
        %3387 = vmatprep.subr.mxu0 0.0
        %3388 = vmatpush1.msra.mxu0 0.0
        %3389 = vmatprep.subr.mxu0 0.0
        %3390 = vmatpush1.msra.mxu0 0.0
        %3391 = vmatprep.subr.mxu0 0.0
        %3392 = vmatpush1.msra.mxu0 0.0
        %3393 = vmatprep.subr.mxu0 0.0
        %3394 = vmatpush1.msra.mxu0 0.0
        %3395 = vmatprep.subr.mxu0 0.0
        %3396 = vmatpush1.msra.mxu0 0.0
        %3397 = vmatprep.subr.mxu0 0.0
        %3398 = vmatpush1.msra.mxu0 0.0
        %3399 = vmatprep.subr.mxu0 0.0
        %3400 = vmatpush1.msra.mxu0 0.0
        %3401 = vmatprep.subr.mxu0 0.0
        %3402 = vmatpush1.msra.mxu0 0.0
        %3403 = vmatprep.mubr.f32.mxu0 0.0
        %3404 = vmatmul.mubr.f32.gmra.mrb[0].mxu0 %v3337
        %v3405 = vpop.f32.mrb[0].mxu0
        %v3406 = vadd.f32 %v3334, %v3405
        %v3407 = vpop.f32.mrb[0].mxu0
        %3408 = vdwg.mxu0
        %v3409 = vld [vmem:[#allocation7 + $0x18] sm:$0xff]
        %v3410 = vadd.f32 %v3406, %v3409
        %v3411 = vxor.u32 %v3410, 2147483648
        %v3412 = vmul.f32 %v3411, 1.442695
        %v3413 = vpow.pop %v3412
        %v3414 = vadd.f32 %v3413, 1.0
        %v3415 = vrcp.pop %v3414
        %v3416 = vmul.f32 1.0, %v3415
        %v3417 = vtanh.pop %v3410
        %v3418 = vmul.f32 %v3416, %v3076
        %3420 = vrot.lane.b32.xlu0 %v3417, 64
        %v3421 = vpop.permute.xlu0 %3420
        %v3423 = vmul.f32 %v3416, %v3421
        %3425 = vrot.lane.b32.xlu0 %v3423, 32
        %v3426 = vpop.permute.xlu0 %3425
        %v3428 = vadd.f32 %v3418, %v3426
        %v3429 = vtanh.pop %v3428
        %3431 = vrot.lane.b32.xlu0 %v3429, 64
        %v3432 = vpop.permute.xlu0 %3431
        %v3434 = vmul.f32 %v3416, %v3432
        %v3435 = vld [vmem:[%s632 + $0x20] sm:$0xff]
        %v3436 = vld [vmem:[%s638 + $0x20] sm:$0xff]
        %v3437 = vld [vmem:[#allocation8 + $0x20] sm:$0xff]
        %v3438 = vld [vmem:[#allocation5 + $0x20] sm:$0xff]
        %3440 = vrot.lane.b32.xlu0 %v3438, 96
        %v3441 = vpop.permute.xlu0 %3440
        %v3443 = vmul.f32 %v3434, %v3441
        %3445 = vrot.lane.b32.xlu0 %v3443, 32
        %v3446 = vpop.permute.xlu0 %3445
        %v3447 = vsel %vm953, %v3446, 0
        %3449 = vmatprep.subr.mxu0 0.0
        %3450 = vmatpush1.msra.mxu0 %v2007
        %3451 = vmatprep.subr.mxu0 0.0
        %3452 = vmatpush1.msra.mxu0 %v2008
        %3453 = vmatprep.subr.mxu0 0.0
        %3454 = vmatpush1.msra.mxu0 %v2009
        %3455 = vmatprep.subr.mxu0 0.0
        %3456 = vmatpush1.msra.mxu0 %v2010
        %3457 = vmatprep.subr.mxu0 0.0
        %3458 = vmatpush1.msra.mxu0 0.0
        %3459 = vmatprep.subr.mxu0 0.0
        %3460 = vmatpush1.msra.mxu0 0.0
        %3461 = vmatprep.subr.mxu0 0.0
        %3462 = vmatpush1.msra.mxu0 0.0
        %3463 = vmatprep.subr.mxu0 0.0
        %3464 = vmatpush1.msra.mxu0 0.0
        %3465 = vmatprep.subr.mxu0 0.0
        %3466 = vmatpush1.msra.mxu0 0.0
        %3467 = vmatprep.subr.mxu0 0.0
        %3468 = vmatpush1.msra.mxu0 0.0
        %3469 = vmatprep.subr.mxu0 0.0
        %3470 = vmatpush1.msra.mxu0 0.0
        %3471 = vmatprep.subr.mxu0 0.0
        %3472 = vmatpush1.msra.mxu0 0.0
        %3473 = vmatprep.subr.mxu0 0.0
        %3474 = vmatpush1.msra.mxu0 0.0
        %3475 = vmatprep.subr.mxu0 0.0
        %3476 = vmatpush1.msra.mxu0 0.0
        %3477 = vmatprep.subr.mxu0 0.0
        %3478 = vmatpush1.msra.mxu0 0.0
        %3479 = vmatprep.subr.mxu0 0.0
        %3480 = vmatpush1.msra.mxu0 0.0
        %3481 = vmatprep.subr.mxu0 0.0
        %3482 = vmatpush1.msra.mxu0 0.0
        %3483 = vmatprep.subr.mxu0 0.0
        %3484 = vmatpush1.msra.mxu0 0.0
        %3485 = vmatprep.subr.mxu0 0.0
        %3486 = vmatpush1.msra.mxu0 0.0
        %3487 = vmatprep.subr.mxu0 0.0
        %3488 = vmatpush1.msra.mxu0 0.0
        %3489 = vmatprep.subr.mxu0 0.0
        %3490 = vmatpush1.msra.mxu0 0.0
        %3491 = vmatprep.subr.mxu0 0.0
        %3492 = vmatpush1.msra.mxu0 0.0
        %3493 = vmatprep.subr.mxu0 0.0
        %3494 = vmatpush1.msra.mxu0 0.0
        %3495 = vmatprep.subr.mxu0 0.0
        %3496 = vmatpush1.msra.mxu0 0.0
        %3497 = vmatprep.subr.mxu0 0.0
        %3498 = vmatpush1.msra.mxu0 0.0
        %3499 = vmatprep.subr.mxu0 0.0
        %3500 = vmatpush1.msra.mxu0 0.0
        %3501 = vmatprep.subr.mxu0 0.0
        %3502 = vmatpush1.msra.mxu0 0.0
        %3503 = vmatprep.subr.mxu0 0.0
        %3504 = vmatpush1.msra.mxu0 0.0
        %3505 = vmatprep.subr.mxu0 0.0
        %3506 = vmatpush1.msra.mxu0 0.0
        %3507 = vmatprep.subr.mxu0 0.0
        %3508 = vmatpush1.msra.mxu0 0.0
        %3509 = vmatprep.subr.mxu0 0.0
        %3510 = vmatpush1.msra.mxu0 0.0
        %3511 = vmatprep.subr.mxu0 0.0
        %3512 = vmatpush1.msra.mxu0 0.0
        %3513 = vmatprep.mubr.f32.mxu0 0.0
        %3514 = vmatmul.mubr.f32.gmra.mrb[0].mxu0 %v3447
        %v3515 = vpop.f32.mrb[0].mxu0
        %v3516 = vadd.f32 %v2022, %v3515
        %v3517 = vpop.f32.mrb[0].mxu0
        %3518 = vdwg.mxu0
        %v3519 = vmul.f32 %v3436, %v3435
        %v3520 = vsub.f32 1.0, %v3436
        %v3521 = vmul.f32 %v3520, %v3516
        %v3522 = vadd.f32 %v3519, %v3521
        %v3524 = vsel %vm695, %v3522, 0
        %3526 = vmatprep.subr.mxu0 0.0
        %3527 = vmatpush1.msra.mxu0 %v2011
        %3528 = vmatprep.subr.mxu0 0.0
        %3529 = vmatpush1.msra.mxu0 0.0
        %3530 = vmatprep.subr.mxu0 0.0
        %3531 = vmatpush1.msra.mxu0 0.0
        %3532 = vmatprep.subr.mxu0 0.0
        %3533 = vmatpush1.msra.mxu0 0.0
        %3534 = vmatprep.subr.mxu0 0.0
        %3535 = vmatpush1.msra.mxu0 0.0
        %3536 = vmatprep.subr.mxu0 0.0
        %3537 = vmatpush1.msra.mxu0 0.0
        %3538 = vmatprep.subr.mxu0 0.0
        %3539 = vmatpush1.msra.mxu0 0.0
        %3540 = vmatprep.subr.mxu0 0.0
        %3541 = vmatpush1.msra.mxu0 0.0
        %3542 = vmatprep.subr.mxu0 0.0
        %3543 = vmatpush1.msra.mxu0 0.0
        %3544 = vmatprep.subr.mxu0 0.0
        %3545 = vmatpush1.msra.mxu0 0.0
        %3546 = vmatprep.subr.mxu0 0.0
        %3547 = vmatpush1.msra.mxu0 0.0
        %3548 = vmatprep.subr.mxu0 0.0
        %3549 = vmatpush1.msra.mxu0 0.0
        %3550 = vmatprep.subr.mxu0 0.0
        %3551 = vmatpush1.msra.mxu0 0.0
        %3552 = vmatprep.subr.mxu0 0.0
        %3553 = vmatpush1.msra.mxu0 0.0
        %3554 = vmatprep.subr.mxu0 0.0
        %3555 = vmatpush1.msra.mxu0 0.0
        %3556 = vmatprep.subr.mxu0 0.0
        %3557 = vmatpush1.msra.mxu0 0.0
        %3558 = vmatprep.subr.mxu0 0.0
        %3559 = vmatpush1.msra.mxu0 0.0
        %3560 = vmatprep.subr.mxu0 0.0
        %3561 = vmatpush1.msra.mxu0 0.0
        %3562 = vmatprep.subr.mxu0 0.0
        %3563 = vmatpush1.msra.mxu0 0.0
        %3564 = vmatprep.subr.mxu0 0.0
        %3565 = vmatpush1.msra.mxu0 0.0
        %3566 = vmatprep.subr.mxu0 0.0
        %3567 = vmatpush1.msra.mxu0 0.0
        %3568 = vmatprep.subr.mxu0 0.0
        %3569 = vmatpush1.msra.mxu0 0.0
        %3570 = vmatprep.subr.mxu0 0.0
        %3571 = vmatpush1.msra.mxu0 0.0
        %3572 = vmatprep.subr.mxu0 0.0
        %3573 = vmatpush1.msra.mxu0 0.0
        %3574 = vmatprep.subr.mxu0 0.0
        %3575 = vmatpush1.msra.mxu0 0.0
        %3576 = vmatprep.subr.mxu0 0.0
        %3577 = vmatpush1.msra.mxu0 0.0
        %3578 = vmatprep.subr.mxu0 0.0
        %3579 = vmatpush1.msra.mxu0 0.0
        %3580 = vmatprep.subr.mxu0 0.0
        %3581 = vmatpush1.msra.mxu0 0.0
        %3582 = vmatprep.subr.mxu0 0.0
        %3583 = vmatpush1.msra.mxu0 0.0
        %3584 = vmatprep.subr.mxu0 0.0
        %3585 = vmatpush1.msra.mxu0 0.0
        %3586 = vmatprep.subr.mxu0 0.0
        %3587 = vmatpush1.msra.mxu0 0.0
        %3588 = vmatprep.subr.mxu0 0.0
        %3589 = vmatpush1.msra.mxu0 0.0
        %3590 = vmatprep.mubr.f32.mxu0 0.0
        %3591 = vmatmul.mubr.f32.gmra.mrb[0].mxu0 %v3524
        %v3592 = vpop.f32.mrb[0].mxu0
        %v3593 = vadd.f32 %v2029, %v3592
        %v3594 = vpop.f32.mrb[0].mxu0
        %3595 = vdwg.mxu0
        %v3596 = vld [vmem:[#allocation6 + $0x20] sm:$0xff]
        %v3597 = vmul.f32 %v3596, %v3593
        %v3598 = vsub.f32 1.0, %v3596
        %v3599 = vmul.f32 %v3598, %v3516
        %v3600 = vadd.f32 %v3597, %v3599
        %v3601 = vsub.f32 %v3435, %v3516
        %v3602 = vand.u32 2147483647, %v3601
        %v3603 = vsub.f32 %v3435, %v3593
        %v3604 = vand.u32 2147483647, %v3603
        %v3605 = vadd.f32 %v3602, %v3604
        %v3606 = vsub.f32 %v3435, %v3600
        %v3607 = vand.u32 2147483647, %v3606
        %v3608 = vadd.f32 %v3605, %v3607
        %v3609 = vmul.f32 %v3608, %v3437
        %v3610 = vadd.f32 %v3258, %v3609
        %v3611 = vmul.f32 %v3520, %v3600
        %v3612 = vadd.f32 %v3519, %v3611
        %3614 = vrot.lane.b32.xlu0 %v3612, 32
        %v3615 = vpop.permute.xlu0 %3614
        %vm3617 = vcmask 326912
        %3618 = vst.msk [vmem:[%s625] sm:$0xff] %vm3617, %v3615
        %3619 = vmatprep.subr.mxu0 0.0
        %3620 = vmatpush1.msra.mxu0 %v2013
        %3621 = vmatprep.subr.mxu0 0.0
        %3622 = vmatpush1.msra.mxu0 %v2014
        %3623 = vmatprep.subr.mxu0 0.0
        %3624 = vmatpush1.msra.mxu0 %v2015
        %3625 = vmatprep.subr.mxu0 0.0
        %3626 = vmatpush1.msra.mxu0 %v2016
        %3627 = vmatprep.subr.mxu0 0.0
        %3628 = vmatpush1.msra.mxu0 0.0
        %3629 = vmatprep.subr.mxu0 0.0
        %3630 = vmatpush1.msra.mxu0 0.0
        %3631 = vmatprep.subr.mxu0 0.0
        %3632 = vmatpush1.msra.mxu0 0.0
        %3633 = vmatprep.subr.mxu0 0.0
        %3634 = vmatpush1.msra.mxu0 0.0
        %3635 = vmatprep.subr.mxu0 0.0
        %3636 = vmatpush1.msra.mxu0 0.0
        %3637 = vmatprep.subr.mxu0 0.0
        %3638 = vmatpush1.msra.mxu0 0.0
        %3639 = vmatprep.subr.mxu0 0.0
        %3640 = vmatpush1.msra.mxu0 0.0
        %3641 = vmatprep.subr.mxu0 0.0
        %3642 = vmatpush1.msra.mxu0 0.0
        %3643 = vmatprep.subr.mxu0 0.0
        %3644 = vmatpush1.msra.mxu0 0.0
        %3645 = vmatprep.subr.mxu0 0.0
        %3646 = vmatpush1.msra.mxu0 0.0
        %3647 = vmatprep.subr.mxu0 0.0
        %3648 = vmatpush1.msra.mxu0 0.0
        %3649 = vmatprep.subr.mxu0 0.0
        %3650 = vmatpush1.msra.mxu0 0.0
        %3651 = vmatprep.subr.mxu0 0.0
        %3652 = vmatpush1.msra.mxu0 0.0
        %3653 = vmatprep.subr.mxu0 0.0
        %3654 = vmatpush1.msra.mxu0 0.0
        %3655 = vmatprep.subr.mxu0 0.0
        %3656 = vmatpush1.msra.mxu0 0.0
        %3657 = vmatprep.subr.mxu0 0.0
        %3658 = vmatpush1.msra.mxu0 0.0
        %3659 = vmatprep.subr.mxu0 0.0
        %3660 = vmatpush1.msra.mxu0 0.0
        %3661 = vmatprep.subr.mxu0 0.0
        %3662 = vmatpush1.msra.mxu0 0.0
        %3663 = vmatprep.subr.mxu0 0.0
        %3664 = vmatpush1.msra.mxu0 0.0
        %3665 = vmatprep.subr.mxu0 0.0
        %3666 = vmatpush1.msra.mxu0 0.0
        %3667 = vmatprep.subr.mxu0 0.0
        %3668 = vmatpush1.msra.mxu0 0.0
        %3669 = vmatprep.subr.mxu0 0.0
        %3670 = vmatpush1.msra.mxu0 0.0
        %3671 = vmatprep.subr.mxu0 0.0
        %3672 = vmatpush1.msra.mxu0 0.0
        %3673 = vmatprep.subr.mxu0 0.0
        %3674 = vmatpush1.msra.mxu0 0.0
        %3675 = vmatprep.subr.mxu0 0.0
        %3676 = vmatpush1.msra.mxu0 0.0
        %3677 = vmatprep.subr.mxu0 0.0
        %3678 = vmatpush1.msra.mxu0 0.0
        %3679 = vmatprep.subr.mxu0 0.0
        %3680 = vmatpush1.msra.mxu0 0.0
        %3681 = vmatprep.subr.mxu0 0.0
        %3682 = vmatpush1.msra.mxu0 0.0
        %3683 = vmatprep.mubr.f32.mxu0 0.0
        %3684 = vmatmul.mubr.f32.gmra.mrb[0].mxu0 %v3447
        %v3685 = vpop.f32.mrb[0].mxu0
        %v3686 = vadd.f32 0.0, %v3685
        %v3687 = vpop.f32.mrb[0].mxu0
        %3688 = vdwg.mxu0
        %v3689 = vsel %vm695, %v3612, 0
        %3691 = vmatprep.subr.mxu0 0.0
        %3692 = vmatpush1.msra.mxu0 %v2012
        %3693 = vmatprep.subr.mxu0 0.0
        %3694 = vmatpush1.msra.mxu0 0.0
        %3695 = vmatprep.subr.mxu0 0.0
        %3696 = vmatpush1.msra.mxu0 0.0
        %3697 = vmatprep.subr.mxu0 0.0
        %3698 = vmatpush1.msra.mxu0 0.0
        %3699 = vmatprep.subr.mxu0 0.0
        %3700 = vmatpush1.msra.mxu0 0.0
        %3701 = vmatprep.subr.mxu0 0.0
        %3702 = vmatpush1.msra.mxu0 0.0
        %3703 = vmatprep.subr.mxu0 0.0
        %3704 = vmatpush1.msra.mxu0 0.0
        %3705 = vmatprep.subr.mxu0 0.0
        %3706 = vmatpush1.msra.mxu0 0.0
        %3707 = vmatprep.subr.mxu0 0.0
        %3708 = vmatpush1.msra.mxu0 0.0
        %3709 = vmatprep.subr.mxu0 0.0
        %3710 = vmatpush1.msra.mxu0 0.0
        %3711 = vmatprep.subr.mxu0 0.0
        %3712 = vmatpush1.msra.mxu0 0.0
        %3713 = vmatprep.subr.mxu0 0.0
        %3714 = vmatpush1.msra.mxu0 0.0
        %3715 = vmatprep.subr.mxu0 0.0
        %3716 = vmatpush1.msra.mxu0 0.0
        %3717 = vmatprep.subr.mxu0 0.0
        %3718 = vmatpush1.msra.mxu0 0.0
        %3719 = vmatprep.subr.mxu0 0.0
        %3720 = vmatpush1.msra.mxu0 0.0
        %3721 = vmatprep.subr.mxu0 0.0
        %3722 = vmatpush1.msra.mxu0 0.0
        %3723 = vmatprep.subr.mxu0 0.0
        %3724 = vmatpush1.msra.mxu0 0.0
        %3725 = vmatprep.subr.mxu0 0.0
        %3726 = vmatpush1.msra.mxu0 0.0
        %3727 = vmatprep.subr.mxu0 0.0
        %3728 = vmatpush1.msra.mxu0 0.0
        %3729 = vmatprep.subr.mxu0 0.0
        %3730 = vmatpush1.msra.mxu0 0.0
        %3731 = vmatprep.subr.mxu0 0.0
        %3732 = vmatpush1.msra.mxu0 0.0
        %3733 = vmatprep.subr.mxu0 0.0
        %3734 = vmatpush1.msra.mxu0 0.0
        %3735 = vmatprep.subr.mxu0 0.0
        %3736 = vmatpush1.msra.mxu0 0.0
        %3737 = vmatprep.subr.mxu0 0.0
        %3738 = vmatpush1.msra.mxu0 0.0
        %3739 = vmatprep.subr.mxu0 0.0
        %3740 = vmatpush1.msra.mxu0 0.0
        %3741 = vmatprep.subr.mxu0 0.0
        %3742 = vmatpush1.msra.mxu0 0.0
        %3743 = vmatprep.subr.mxu0 0.0
        %3744 = vmatpush1.msra.mxu0 0.0
        %3745 = vmatprep.subr.mxu0 0.0
        %3746 = vmatpush1.msra.mxu0 0.0
        %3747 = vmatprep.subr.mxu0 0.0
        %3748 = vmatpush1.msra.mxu0 0.0
        %3749 = vmatprep.subr.mxu0 0.0
        %3750 = vmatpush1.msra.mxu0 0.0
        %3751 = vmatprep.subr.mxu0 0.0
        %3752 = vmatpush1.msra.mxu0 0.0
        %3753 = vmatprep.subr.mxu0 0.0
        %3754 = vmatpush1.msra.mxu0 0.0
        %3755 = vmatprep.mubr.f32.mxu0 0.0
        %3756 = vmatmul.mubr.f32.gmra.mrb[0].mxu0 %v3689
        %v3757 = vpop.f32.mrb[0].mxu0
        %v3758 = vadd.f32 %v3686, %v3757
        %v3759 = vpop.f32.mrb[0].mxu0
        %3760 = vdwg.mxu0
        %v3761 = vld [vmem:[#allocation7 + $0x20] sm:$0xff]
        %v3762 = vadd.f32 %v3758, %v3761
        %v3763 = vxor.u32 %v3762, 2147483648
        %v3764 = vmul.f32 %v3763, 1.442695
        %v3765 = vpow.pop %v3764
        %v3766 = vadd.f32 %v3765, 1.0
        %v3767 = vrcp.pop %v3766
        %v3768 = vmul.f32 1.0, %v3767
        %v3769 = vtanh.pop %v3762
        %v3770 = vmul.f32 %v3768, %v3428
        %3772 = vrot.lane.b32.xlu0 %v3769, 64
        %v3773 = vpop.permute.xlu0 %3772
        %v3775 = vmul.f32 %v3768, %v3773
        %3777 = vrot.lane.b32.xlu0 %v3775, 32
        %v3778 = vpop.permute.xlu0 %3777
        %v3780 = vadd.f32 %v3770, %v3778
        %v3781 = vtanh.pop %v3780
        %3783 = vrot.lane.b32.xlu0 %v3781, 64
        %v3784 = vpop.permute.xlu0 %3783
        %v3786 = vmul.f32 %v3768, %v3784
        %v3787 = vld [vmem:[%s632 + $0x28] sm:$0xff]
        %v3788 = vld [vmem:[%s638 + $0x28] sm:$0xff]
        %v3789 = vld [vmem:[#allocation8 + $0x28] sm:$0xff]
        %v3790 = vld [vmem:[#allocation5 + $0x28] sm:$0xff]
        %3792 = vrot.lane.b32.xlu0 %v3790, 96
        %v3793 = vpop.permute.xlu0 %3792
        %v3795 = vmul.f32 %v3786, %v3793
        %3797 = vrot.lane.b32.xlu0 %v3795, 32
        %v3798 = vpop.permute.xlu0 %3797
        %v3799 = vsel %vm953, %v3798, 0
        %3801 = vmatprep.subr.mxu0 0.0
        %3802 = vmatpush1.msra.mxu0 %v2007
        %3803 = vmatprep.subr.mxu0 0.0
        %3804 = vmatpush1.msra.mxu0 %v2008
        %3805 = vmatprep.subr.mxu0 0.0
        %3806 = vmatpush1.msra.mxu0 %v2009
        %3807 = vmatprep.subr.mxu0 0.0
        %3808 = vmatpush1.msra.mxu0 %v2010
        %3809 = vmatprep.subr.mxu0 0.0
        %3810 = vmatpush1.msra.mxu0 0.0
        %3811 = vmatprep.subr.mxu0 0.0
        %3812 = vmatpush1.msra.mxu0 0.0
        %3813 = vmatprep.subr.mxu0 0.0
        %3814 = vmatpush1.msra.mxu0 0.0
        %3815 = vmatprep.subr.mxu0 0.0
        %3816 = vmatpush1.msra.mxu0 0.0
        %3817 = vmatprep.subr.mxu0 0.0
        %3818 = vmatpush1.msra.mxu0 0.0
        %3819 = vmatprep.subr.mxu0 0.0
        %3820 = vmatpush1.msra.mxu0 0.0
        %3821 = vmatprep.subr.mxu0 0.0
        %3822 = vmatpush1.msra.mxu0 0.0
        %3823 = vmatprep.subr.mxu0 0.0
        %3824 = vmatpush1.msra.mxu0 0.0
        %3825 = vmatprep.subr.mxu0 0.0
        %3826 = vmatpush1.msra.mxu0 0.0
        %3827 = vmatprep.subr.mxu0 0.0
        %3828 = vmatpush1.msra.mxu0 0.0
        %3829 = vmatprep.subr.mxu0 0.0
        %3830 = vmatpush1.msra.mxu0 0.0
        %3831 = vmatprep.subr.mxu0 0.0
        %3832 = vmatpush1.msra.mxu0 0.0
        %3833 = vmatprep.subr.mxu0 0.0
        %3834 = vmatpush1.msra.mxu0 0.0
        %3835 = vmatprep.subr.mxu0 0.0
        %3836 = vmatpush1.msra.mxu0 0.0
        %3837 = vmatprep.subr.mxu0 0.0
        %3838 = vmatpush1.msra.mxu0 0.0
        %3839 = vmatprep.subr.mxu0 0.0
        %3840 = vmatpush1.msra.mxu0 0.0
        %3841 = vmatprep.subr.mxu0 0.0
        %3842 = vmatpush1.msra.mxu0 0.0
        %3843 = vmatprep.subr.mxu0 0.0
        %3844 = vmatpush1.msra.mxu0 0.0
        %3845 = vmatprep.subr.mxu0 0.0
        %3846 = vmatpush1.msra.mxu0 0.0
        %3847 = vmatprep.subr.mxu0 0.0
        %3848 = vmatpush1.msra.mxu0 0.0
        %3849 = vmatprep.subr.mxu0 0.0
        %3850 = vmatpush1.msra.mxu0 0.0
        %3851 = vmatprep.subr.mxu0 0.0
        %3852 = vmatpush1.msra.mxu0 0.0
        %3853 = vmatprep.subr.mxu0 0.0
        %3854 = vmatpush1.msra.mxu0 0.0
        %3855 = vmatprep.subr.mxu0 0.0
        %3856 = vmatpush1.msra.mxu0 0.0
        %3857 = vmatprep.subr.mxu0 0.0
        %3858 = vmatpush1.msra.mxu0 0.0
        %3859 = vmatprep.subr.mxu0 0.0
        %3860 = vmatpush1.msra.mxu0 0.0
        %3861 = vmatprep.subr.mxu0 0.0
        %3862 = vmatpush1.msra.mxu0 0.0
        %3863 = vmatprep.subr.mxu0 0.0
        %3864 = vmatpush1.msra.mxu0 0.0
        %3865 = vmatprep.mubr.f32.mxu0 0.0
        %3866 = vmatmul.mubr.f32.gmra.mrb[0].mxu0 %v3799
        %v3867 = vpop.f32.mrb[0].mxu0
        %v3868 = vadd.f32 %v2022, %v3867
        %v3869 = vpop.f32.mrb[0].mxu0
        %3870 = vdwg.mxu0
        %v3871 = vmul.f32 %v3788, %v3787
        %v3872 = vsub.f32 1.0, %v3788
        %v3873 = vmul.f32 %v3872, %v3868
        %v3874 = vadd.f32 %v3871, %v3873
        %v3876 = vsel %vm695, %v3874, 0
        %3878 = vmatprep.subr.mxu0 0.0
        %3879 = vmatpush1.msra.mxu0 %v2011
        %3880 = vmatprep.subr.mxu0 0.0
        %3881 = vmatpush1.msra.mxu0 0.0
        %3882 = vmatprep.subr.mxu0 0.0
        %3883 = vmatpush1.msra.mxu0 0.0
        %3884 = vmatprep.subr.mxu0 0.0
        %3885 = vmatpush1.msra.mxu0 0.0
        %3886 = vmatprep.subr.mxu0 0.0
        %3887 = vmatpush1.msra.mxu0 0.0
        %3888 = vmatprep.subr.mxu0 0.0
        %3889 = vmatpush1.msra.mxu0 0.0
        %3890 = vmatprep.subr.mxu0 0.0
        %3891 = vmatpush1.msra.mxu0 0.0
        %3892 = vmatprep.subr.mxu0 0.0
        %3893 = vmatpush1.msra.mxu0 0.0
        %3894 = vmatprep.subr.mxu0 0.0
        %3895 = vmatpush1.msra.mxu0 0.0
        %3896 = vmatprep.subr.mxu0 0.0
        %3897 = vmatpush1.msra.mxu0 0.0
        %3898 = vmatprep.subr.mxu0 0.0
        %3899 = vmatpush1.msra.mxu0 0.0
        %3900 = vmatprep.subr.mxu0 0.0
        %3901 = vmatpush1.msra.mxu0 0.0
        %3902 = vmatprep.subr.mxu0 0.0
        %3903 = vmatpush1.msra.mxu0 0.0
        %3904 = vmatprep.subr.mxu0 0.0
        %3905 = vmatpush1.msra.mxu0 0.0
        %3906 = vmatprep.subr.mxu0 0.0
        %3907 = vmatpush1.msra.mxu0 0.0
        %3908 = vmatprep.subr.mxu0 0.0
        %3909 = vmatpush1.msra.mxu0 0.0
        %3910 = vmatprep.subr.mxu0 0.0
        %3911 = vmatpush1.msra.mxu0 0.0
        %3912 = vmatprep.subr.mxu0 0.0
        %3913 = vmatpush1.msra.mxu0 0.0
        %3914 = vmatprep.subr.mxu0 0.0
        %3915 = vmatpush1.msra.mxu0 0.0
        %3916 = vmatprep.subr.mxu0 0.0
        %3917 = vmatpush1.msra.mxu0 0.0
        %3918 = vmatprep.subr.mxu0 0.0
        %3919 = vmatpush1.msra.mxu0 0.0
        %3920 = vmatprep.subr.mxu0 0.0
        %3921 = vmatpush1.msra.mxu0 0.0
        %3922 = vmatprep.subr.mxu0 0.0
        %3923 = vmatpush1.msra.mxu0 0.0
        %3924 = vmatprep.subr.mxu0 0.0
        %3925 = vmatpush1.msra.mxu0 0.0
        %3926 = vmatprep.subr.mxu0 0.0
        %3927 = vmatpush1.msra.mxu0 0.0
        %3928 = vmatprep.subr.mxu0 0.0
        %3929 = vmatpush1.msra.mxu0 0.0
        %3930 = vmatprep.subr.mxu0 0.0
        %3931 = vmatpush1.msra.mxu0 0.0
        %3932 = vmatprep.subr.mxu0 0.0
        %3933 = vmatpush1.msra.mxu0 0.0
        %3934 = vmatprep.subr.mxu0 0.0
        %3935 = vmatpush1.msra.mxu0 0.0
        %3936 = vmatprep.subr.mxu0 0.0
        %3937 = vmatpush1.msra.mxu0 0.0
        %3938 = vmatprep.subr.mxu0 0.0
        %3939 = vmatpush1.msra.mxu0 0.0
        %3940 = vmatprep.subr.mxu0 0.0
        %3941 = vmatpush1.msra.mxu0 0.0
        %3942 = vmatprep.mubr.f32.mxu0 0.0
        %3943 = vmatmul.mubr.f32.gmra.mrb[0].mxu0 %v3876
        %v3944 = vpop.f32.mrb[0].mxu0
        %v3945 = vadd.f32 %v2029, %v3944
        %v3946 = vpop.f32.mrb[0].mxu0
        %3947 = vdwg.mxu0
        %v3948 = vld [vmem:[#allocation6 + $0x28] sm:$0xff]
        %v3949 = vmul.f32 %v3948, %v3945
        %v3950 = vsub.f32 1.0, %v3948
        %v3951 = vmul.f32 %v3950, %v3868
        %v3952 = vadd.f32 %v3949, %v3951
        %v3953 = vsub.f32 %v3787, %v3868
        %v3954 = vand.u32 2147483647, %v3953
        %v3955 = vsub.f32 %v3787, %v3945
        %v3956 = vand.u32 2147483647, %v3955
        %v3957 = vadd.f32 %v3954, %v3956
        %v3958 = vsub.f32 %v3787, %v3952
        %v3959 = vand.u32 2147483647, %v3958
        %v3960 = vadd.f32 %v3957, %v3959
        %v3961 = vmul.f32 %v3960, %v3789
        %v3962 = vadd.f32 %v3610, %v3961
        %v3963 = vmul.f32 %v3872, %v3952
        %v3964 = vadd.f32 %v3871, %v3963
        %3966 = vrot.lane.b32.xlu0 %v3964, 40
        %v3967 = vpop.permute.xlu0 %3966
        %vm3969 = vcmask 392512
        %3970 = vst.msk [vmem:[%s625] sm:$0xff] %vm3969, %v3967
        %3971 = vmatprep.subr.mxu0 0.0
        %3972 = vmatpush1.msra.mxu0 %v2013
        %3973 = vmatprep.subr.mxu0 0.0
        %3974 = vmatpush1.msra.mxu0 %v2014
        %3975 = vmatprep.subr.mxu0 0.0
        %3976 = vmatpush1.msra.mxu0 %v2015
        %3977 = vmatprep.subr.mxu0 0.0
        %3978 = vmatpush1.msra.mxu0 %v2016
        %3979 = vmatprep.subr.mxu0 0.0
        %3980 = vmatpush1.msra.mxu0 0.0
        %3981 = vmatprep.subr.mxu0 0.0
        %3982 = vmatpush1.msra.mxu0 0.0
        %3983 = vmatprep.subr.mxu0 0.0
        %3984 = vmatpush1.msra.mxu0 0.0
        %3985 = vmatprep.subr.mxu0 0.0
        %3986 = vmatpush1.msra.mxu0 0.0
        %3987 = vmatprep.subr.mxu0 0.0
        %3988 = vmatpush1.msra.mxu0 0.0
        %3989 = vmatprep.subr.mxu0 0.0
        %3990 = vmatpush1.msra.mxu0 0.0
        %3991 = vmatprep.subr.mxu0 0.0
        %3992 = vmatpush1.msra.mxu0 0.0
        %3993 = vmatprep.subr.mxu0 0.0
        %3994 = vmatpush1.msra.mxu0 0.0
        %3995 = vmatprep.subr.mxu0 0.0
        %3996 = vmatpush1.msra.mxu0 0.0
        %3997 = vmatprep.subr.mxu0 0.0
        %3998 = vmatpush1.msra.mxu0 0.0
        %3999 = vmatprep.subr.mxu0 0.0
        %4000 = vmatpush1.msra.mxu0 0.0
        %4001 = vmatprep.subr.mxu0 0.0
        %4002 = vmatpush1.msra.mxu0 0.0
        %4003 = vmatprep.subr.mxu0 0.0
        %4004 = vmatpush1.msra.mxu0 0.0
        %4005 = vmatprep.subr.mxu0 0.0
        %4006 = vmatpush1.msra.mxu0 0.0
        %4007 = vmatprep.subr.mxu0 0.0
        %4008 = vmatpush1.msra.mxu0 0.0
        %4009 = vmatprep.subr.mxu0 0.0
        %4010 = vmatpush1.msra.mxu0 0.0
        %4011 = vmatprep.subr.mxu0 0.0
        %4012 = vmatpush1.msra.mxu0 0.0
        %4013 = vmatprep.subr.mxu0 0.0
        %4014 = vmatpush1.msra.mxu0 0.0
        %4015 = vmatprep.subr.mxu0 0.0
        %4016 = vmatpush1.msra.mxu0 0.0
        %4017 = vmatprep.subr.mxu0 0.0
        %4018 = vmatpush1.msra.mxu0 0.0
        %4019 = vmatprep.subr.mxu0 0.0
        %4020 = vmatpush1.msra.mxu0 0.0
        %4021 = vmatprep.subr.mxu0 0.0
        %4022 = vmatpush1.msra.mxu0 0.0
        %4023 = vmatprep.subr.mxu0 0.0
        %4024 = vmatpush1.msra.mxu0 0.0
        %4025 = vmatprep.subr.mxu0 0.0
        %4026 = vmatpush1.msra.mxu0 0.0
        %4027 = vmatprep.subr.mxu0 0.0
        %4028 = vmatpush1.msra.mxu0 0.0
        %4029 = vmatprep.subr.mxu0 0.0
        %4030 = vmatpush1.msra.mxu0 0.0
        %4031 = vmatprep.subr.mxu0 0.0
        %4032 = vmatpush1.msra.mxu0 0.0
        %4033 = vmatprep.subr.mxu0 0.0
        %4034 = vmatpush1.msra.mxu0 0.0
        %4035 = vmatprep.mubr.f32.mxu0 0.0
        %4036 = vmatmul.mubr.f32.gmra.mrb[0].mxu0 %v3799
        %v4037 = vpop.f32.mrb[0].mxu0
        %v4038 = vadd.f32 0.0, %v4037
        %v4039 = vpop.f32.mrb[0].mxu0
        %4040 = vdwg.mxu0
        %v4041 = vsel %vm695, %v3964, 0
        %4043 = vmatprep.subr.mxu0 0.0
        %4044 = vmatpush1.msra.mxu0 %v2012
        %4045 = vmatprep.subr.mxu0 0.0
        %4046 = vmatpush1.msra.mxu0 0.0
        %4047 = vmatprep.subr.mxu0 0.0
        %4048 = vmatpush1.msra.mxu0 0.0
        %4049 = vmatprep.subr.mxu0 0.0
        %4050 = vmatpush1.msra.mxu0 0.0
        %4051 = vmatprep.subr.mxu0 0.0
        %4052 = vmatpush1.msra.mxu0 0.0
        %4053 = vmatprep.subr.mxu0 0.0
        %4054 = vmatpush1.msra.mxu0 0.0
        %4055 = vmatprep.subr.mxu0 0.0
        %4056 = vmatpush1.msra.mxu0 0.0
        %4057 = vmatprep.subr.mxu0 0.0
        %4058 = vmatpush1.msra.mxu0 0.0
        %4059 = vmatprep.subr.mxu0 0.0
        %4060 = vmatpush1.msra.mxu0 0.0
        %4061 = vmatprep.subr.mxu0 0.0
        %4062 = vmatpush1.msra.mxu0 0.0
        %4063 = vmatprep.subr.mxu0 0.0
        %4064 = vmatpush1.msra.mxu0 0.0
        %4065 = vmatprep.subr.mxu0 0.0
        %4066 = vmatpush1.msra.mxu0 0.0
        %4067 = vmatprep.subr.mxu0 0.0
        %4068 = vmatpush1.msra.mxu0 0.0
        %4069 = vmatprep.subr.mxu0 0.0
        %4070 = vmatpush1.msra.mxu0 0.0
        %4071 = vmatprep.subr.mxu0 0.0
        %4072 = vmatpush1.msra.mxu0 0.0
        %4073 = vmatprep.subr.mxu0 0.0
        %4074 = vmatpush1.msra.mxu0 0.0
        %4075 = vmatprep.subr.mxu0 0.0
        %4076 = vmatpush1.msra.mxu0 0.0
        %4077 = vmatprep.subr.mxu0 0.0
        %4078 = vmatpush1.msra.mxu0 0.0
        %4079 = vmatprep.subr.mxu0 0.0
        %4080 = vmatpush1.msra.mxu0 0.0
        %4081 = vmatprep.subr.mxu0 0.0
        %4082 = vmatpush1.msra.mxu0 0.0
        %4083 = vmatprep.subr.mxu0 0.0
        %4084 = vmatpush1.msra.mxu0 0.0
        %4085 = vmatprep.subr.mxu0 0.0
        %4086 = vmatpush1.msra.mxu0 0.0
        %4087 = vmatprep.subr.mxu0 0.0
        %4088 = vmatpush1.msra.mxu0 0.0
        %4089 = vmatprep.subr.mxu0 0.0
        %4090 = vmatpush1.msra.mxu0 0.0
        %4091 = vmatprep.subr.mxu0 0.0
        %4092 = vmatpush1.msra.mxu0 0.0
        %4093 = vmatprep.subr.mxu0 0.0
        %4094 = vmatpush1.msra.mxu0 0.0
        %4095 = vmatprep.subr.mxu0 0.0
        %4096 = vmatpush1.msra.mxu0 0.0
        %4097 = vmatprep.subr.mxu0 0.0
        %4098 = vmatpush1.msra.mxu0 0.0
        %4099 = vmatprep.subr.mxu0 0.0
        %4100 = vmatpush1.msra.mxu0 0.0
        %4101 = vmatprep.subr.mxu0 0.0
        %4102 = vmatpush1.msra.mxu0 0.0
        %4103 = vmatprep.subr.mxu0 0.0
        %4104 = vmatpush1.msra.mxu0 0.0
        %4105 = vmatprep.subr.mxu0 0.0
        %4106 = vmatpush1.msra.mxu0 0.0
        %4107 = vmatprep.mubr.f32.mxu0 0.0
        %4108 = vmatmul.mubr.f32.gmra.mrb[0].mxu0 %v4041
        %v4109 = vpop.f32.mrb[0].mxu0
        %v4110 = vadd.f32 %v4038, %v4109
        %v4111 = vpop.f32.mrb[0].mxu0
        %4112 = vdwg.mxu0
        %v4113 = vld [vmem:[#allocation7 + $0x28] sm:$0xff]
        %v4114 = vadd.f32 %v4110, %v4113
        %v4115 = vxor.u32 %v4114, 2147483648
        %v4116 = vmul.f32 %v4115, 1.442695
        %v4117 = vpow.pop %v4116
        %v4118 = vadd.f32 %v4117, 1.0
        %v4119 = vrcp.pop %v4118
        %v4120 = vmul.f32 1.0, %v4119
        %v4121 = vtanh.pop %v4114
        %v4122 = vmul.f32 %v4120, %v3780
        %4124 = vrot.lane.b32.xlu0 %v4121, 64
        %v4125 = vpop.permute.xlu0 %4124
        %v4127 = vmul.f32 %v4120, %v4125
        %4129 = vrot.lane.b32.xlu0 %v4127, 32
        %v4130 = vpop.permute.xlu0 %4129
        %v4132 = vadd.f32 %v4122, %v4130
        %v4133 = vtanh.pop %v4132
        %4135 = vrot.lane.b32.xlu0 %v4133, 64
        %v4136 = vpop.permute.xlu0 %4135
        %v4138 = vmul.f32 %v4120, %v4136
        %v4139 = vld [vmem:[%s632 + $0x30] sm:$0xff]
        %v4140 = vld [vmem:[%s638 + $0x30] sm:$0xff]
        %v4141 = vld [vmem:[#allocation8 + $0x30] sm:$0xff]
        %v4142 = vld [vmem:[#allocation5 + $0x30] sm:$0xff]
        %4144 = vrot.lane.b32.xlu0 %v4142, 96
        %v4145 = vpop.permute.xlu0 %4144
        %v4147 = vmul.f32 %v4138, %v4145
        %4149 = vrot.lane.b32.xlu0 %v4147, 32
        %v4150 = vpop.permute.xlu0 %4149
        %v4151 = vsel %vm953, %v4150, 0
        %4153 = vmatprep.subr.mxu0 0.0
        %4154 = vmatpush1.msra.mxu0 %v2007
        %4155 = vmatprep.subr.mxu0 0.0
        %4156 = vmatpush1.msra.mxu0 %v2008
        %4157 = vmatprep.subr.mxu0 0.0
        %4158 = vmatpush1.msra.mxu0 %v2009
        %4159 = vmatprep.subr.mxu0 0.0
        %4160 = vmatpush1.msra.mxu0 %v2010
        %4161 = vmatprep.subr.mxu0 0.0
        %4162 = vmatpush1.msra.mxu0 0.0
        %4163 = vmatprep.subr.mxu0 0.0
        %4164 = vmatpush1.msra.mxu0 0.0
        %4165 = vmatprep.subr.mxu0 0.0
        %4166 = vmatpush1.msra.mxu0 0.0
        %4167 = vmatprep.subr.mxu0 0.0
        %4168 = vmatpush1.msra.mxu0 0.0
        %4169 = vmatprep.subr.mxu0 0.0
        %4170 = vmatpush1.msra.mxu0 0.0
        %4171 = vmatprep.subr.mxu0 0.0
        %4172 = vmatpush1.msra.mxu0 0.0
        %4173 = vmatprep.subr.mxu0 0.0
        %4174 = vmatpush1.msra.mxu0 0.0
        %4175 = vmatprep.subr.mxu0 0.0
        %4176 = vmatpush1.msra.mxu0 0.0
        %4177 = vmatprep.subr.mxu0 0.0
        %4178 = vmatpush1.msra.mxu0 0.0
        %4179 = vmatprep.subr.mxu0 0.0
        %4180 = vmatpush1.msra.mxu0 0.0
        %4181 = vmatprep.subr.mxu0 0.0
        %4182 = vmatpush1.msra.mxu0 0.0
        %4183 = vmatprep.subr.mxu0 0.0
        %4184 = vmatpush1.msra.mxu0 0.0
        %4185 = vmatprep.subr.mxu0 0.0
        %4186 = vmatpush1.msra.mxu0 0.0
        %4187 = vmatprep.subr.mxu0 0.0
        %4188 = vmatpush1.msra.mxu0 0.0
        %4189 = vmatprep.subr.mxu0 0.0
        %4190 = vmatpush1.msra.mxu0 0.0
        %4191 = vmatprep.subr.mxu0 0.0
        %4192 = vmatpush1.msra.mxu0 0.0
        %4193 = vmatprep.subr.mxu0 0.0
        %4194 = vmatpush1.msra.mxu0 0.0
        %4195 = vmatprep.subr.mxu0 0.0
        %4196 = vmatpush1.msra.mxu0 0.0
        %4197 = vmatprep.subr.mxu0 0.0
        %4198 = vmatpush1.msra.mxu0 0.0
        %4199 = vmatprep.subr.mxu0 0.0
        %4200 = vmatpush1.msra.mxu0 0.0
        %4201 = vmatprep.subr.mxu0 0.0
        %4202 = vmatpush1.msra.mxu0 0.0
        %4203 = vmatprep.subr.mxu0 0.0
        %4204 = vmatpush1.msra.mxu0 0.0
        %4205 = vmatprep.subr.mxu0 0.0
        %4206 = vmatpush1.msra.mxu0 0.0
        %4207 = vmatprep.subr.mxu0 0.0
        %4208 = vmatpush1.msra.mxu0 0.0
        %4209 = vmatprep.subr.mxu0 0.0
        %4210 = vmatpush1.msra.mxu0 0.0
        %4211 = vmatprep.subr.mxu0 0.0
        %4212 = vmatpush1.msra.mxu0 0.0
        %4213 = vmatprep.subr.mxu0 0.0
        %4214 = vmatpush1.msra.mxu0 0.0
        %4215 = vmatprep.subr.mxu0 0.0
        %4216 = vmatpush1.msra.mxu0 0.0
        %4217 = vmatprep.mubr.f32.mxu0 0.0
        %4218 = vmatmul.mubr.f32.gmra.mrb[0].mxu0 %v4151
        %v4219 = vpop.f32.mrb[0].mxu0
        %v4220 = vadd.f32 %v2022, %v4219
        %v4221 = vpop.f32.mrb[0].mxu0
        %4222 = vdwg.mxu0
        %v4223 = vmul.f32 %v4140, %v4139
        %v4224 = vsub.f32 1.0, %v4140
        %v4225 = vmul.f32 %v4224, %v4220
        %v4226 = vadd.f32 %v4223, %v4225
        %v4228 = vsel %vm695, %v4226, 0
        %4230 = vmatprep.subr.mxu0 0.0
        %4231 = vmatpush1.msra.mxu0 %v2011
        %4232 = vmatprep.subr.mxu0 0.0
        %4233 = vmatpush1.msra.mxu0 0.0
        %4234 = vmatprep.subr.mxu0 0.0
        %4235 = vmatpush1.msra.mxu0 0.0
        %4236 = vmatprep.subr.mxu0 0.0
        %4237 = vmatpush1.msra.mxu0 0.0
        %4238 = vmatprep.subr.mxu0 0.0
        %4239 = vmatpush1.msra.mxu0 0.0
        %4240 = vmatprep.subr.mxu0 0.0
        %4241 = vmatpush1.msra.mxu0 0.0
        %4242 = vmatprep.subr.mxu0 0.0
        %4243 = vmatpush1.msra.mxu0 0.0
        %4244 = vmatprep.subr.mxu0 0.0
        %4245 = vmatpush1.msra.mxu0 0.0
        %4246 = vmatprep.subr.mxu0 0.0
        %4247 = vmatpush1.msra.mxu0 0.0
        %4248 = vmatprep.subr.mxu0 0.0
        %4249 = vmatpush1.msra.mxu0 0.0
        %4250 = vmatprep.subr.mxu0 0.0
        %4251 = vmatpush1.msra.mxu0 0.0
        %4252 = vmatprep.subr.mxu0 0.0
        %4253 = vmatpush1.msra.mxu0 0.0
        %4254 = vmatprep.subr.mxu0 0.0
        %4255 = vmatpush1.msra.mxu0 0.0
        %4256 = vmatprep.subr.mxu0 0.0
        %4257 = vmatpush1.msra.mxu0 0.0
        %4258 = vmatprep.subr.mxu0 0.0
        %4259 = vmatpush1.msra.mxu0 0.0
        %4260 = vmatprep.subr.mxu0 0.0
        %4261 = vmatpush1.msra.mxu0 0.0
        %4262 = vmatprep.subr.mxu0 0.0
        %4263 = vmatpush1.msra.mxu0 0.0
        %4264 = vmatprep.subr.mxu0 0.0
        %4265 = vmatpush1.msra.mxu0 0.0
        %4266 = vmatprep.subr.mxu0 0.0
        %4267 = vmatpush1.msra.mxu0 0.0
        %4268 = vmatprep.subr.mxu0 0.0
        %4269 = vmatpush1.msra.mxu0 0.0
        %4270 = vmatprep.subr.mxu0 0.0
        %4271 = vmatpush1.msra.mxu0 0.0
        %4272 = vmatprep.subr.mxu0 0.0
        %4273 = vmatpush1.msra.mxu0 0.0
        %4274 = vmatprep.subr.mxu0 0.0
        %4275 = vmatpush1.msra.mxu0 0.0
        %4276 = vmatprep.subr.mxu0 0.0
        %4277 = vmatpush1.msra.mxu0 0.0
        %4278 = vmatprep.subr.mxu0 0.0
        %4279 = vmatpush1.msra.mxu0 0.0
        %4280 = vmatprep.subr.mxu0 0.0
        %4281 = vmatpush1.msra.mxu0 0.0
        %4282 = vmatprep.subr.mxu0 0.0
        %4283 = vmatpush1.msra.mxu0 0.0
        %4284 = vmatprep.subr.mxu0 0.0
        %4285 = vmatpush1.msra.mxu0 0.0
        %4286 = vmatprep.subr.mxu0 0.0
        %4287 = vmatpush1.msra.mxu0 0.0
        %4288 = vmatprep.subr.mxu0 0.0
        %4289 = vmatpush1.msra.mxu0 0.0
        %4290 = vmatprep.subr.mxu0 0.0
        %4291 = vmatpush1.msra.mxu0 0.0
        %4292 = vmatprep.subr.mxu0 0.0
        %4293 = vmatpush1.msra.mxu0 0.0
        %4294 = vmatprep.mubr.f32.mxu0 0.0
        %4295 = vmatmul.mubr.f32.gmra.mrb[0].mxu0 %v4228
        %v4296 = vpop.f32.mrb[0].mxu0
        %v4297 = vadd.f32 %v2029, %v4296
        %v4298 = vpop.f32.mrb[0].mxu0
        %4299 = vdwg.mxu0
        %v4300 = vld [vmem:[#allocation6 + $0x30] sm:$0xff]
        %v4301 = vmul.f32 %v4300, %v4297
        %v4302 = vsub.f32 1.0, %v4300
        %v4303 = vmul.f32 %v4302, %v4220
        %v4304 = vadd.f32 %v4301, %v4303
        %v4305 = vsub.f32 %v4139, %v4220
        %v4306 = vand.u32 2147483647, %v4305
        %v4307 = vsub.f32 %v4139, %v4297
        %v4308 = vand.u32 2147483647, %v4307
        %v4309 = vadd.f32 %v4306, %v4308
        %v4310 = vsub.f32 %v4139, %v4304
        %v4311 = vand.u32 2147483647, %v4310
        %v4312 = vadd.f32 %v4309, %v4311
        %v4313 = vmul.f32 %v4312, %v4141
        %v4314 = vadd.f32 %v3962, %v4313
        %v4315 = vmul.f32 %v4224, %v4304
        %v4316 = vadd.f32 %v4223, %v4315
        %4318 = vrot.lane.b32.xlu0 %v4316, 48
        %v4319 = vpop.permute.xlu0 %4318
        %vm4321 = vcmask 458112
        %4322 = vst.msk [vmem:[%s625] sm:$0xff] %vm4321, %v4319
        %4323 = vmatprep.subr.mxu0 0.0
        %4324 = vmatpush1.msra.mxu0 %v2013
        %4325 = vmatprep.subr.mxu0 0.0
        %4326 = vmatpush1.msra.mxu0 %v2014
        %4327 = vmatprep.subr.mxu0 0.0
        %4328 = vmatpush1.msra.mxu0 %v2015
        %4329 = vmatprep.subr.mxu0 0.0
        %4330 = vmatpush1.msra.mxu0 %v2016
        %4331 = vmatprep.subr.mxu0 0.0
        %4332 = vmatpush1.msra.mxu0 0.0
        %4333 = vmatprep.subr.mxu0 0.0
        %4334 = vmatpush1.msra.mxu0 0.0
        %4335 = vmatprep.subr.mxu0 0.0
        %4336 = vmatpush1.msra.mxu0 0.0
        %4337 = vmatprep.subr.mxu0 0.0
        %4338 = vmatpush1.msra.mxu0 0.0
        %4339 = vmatprep.subr.mxu0 0.0
        %4340 = vmatpush1.msra.mxu0 0.0
        %4341 = vmatprep.subr.mxu0 0.0
        %4342 = vmatpush1.msra.mxu0 0.0
        %4343 = vmatprep.subr.mxu0 0.0
        %4344 = vmatpush1.msra.mxu0 0.0
        %4345 = vmatprep.subr.mxu0 0.0
        %4346 = vmatpush1.msra.mxu0 0.0
        %4347 = vmatprep.subr.mxu0 0.0
        %4348 = vmatpush1.msra.mxu0 0.0
        %4349 = vmatprep.subr.mxu0 0.0
        %4350 = vmatpush1.msra.mxu0 0.0
        %4351 = vmatprep.subr.mxu0 0.0
        %4352 = vmatpush1.msra.mxu0 0.0
        %4353 = vmatprep.subr.mxu0 0.0
        %4354 = vmatpush1.msra.mxu0 0.0
        %4355 = vmatprep.subr.mxu0 0.0
        %4356 = vmatpush1.msra.mxu0 0.0
        %4357 = vmatprep.subr.mxu0 0.0
        %4358 = vmatpush1.msra.mxu0 0.0
        %4359 = vmatprep.subr.mxu0 0.0
        %4360 = vmatpush1.msra.mxu0 0.0
        %4361 = vmatprep.subr.mxu0 0.0
        %4362 = vmatpush1.msra.mxu0 0.0
        %4363 = vmatprep.subr.mxu0 0.0
        %4364 = vmatpush1.msra.mxu0 0.0
        %4365 = vmatprep.subr.mxu0 0.0
        %4366 = vmatpush1.msra.mxu0 0.0
        %4367 = vmatprep.subr.mxu0 0.0
        %4368 = vmatpush1.msra.mxu0 0.0
        %4369 = vmatprep.subr.mxu0 0.0
        %4370 = vmatpush1.msra.mxu0 0.0
        %4371 = vmatprep.subr.mxu0 0.0
        %4372 = vmatpush1.msra.mxu0 0.0
        %4373 = vmatprep.subr.mxu0 0.0
        %4374 = vmatpush1.msra.mxu0 0.0
        %4375 = vmatprep.subr.mxu0 0.0
        %4376 = vmatpush1.msra.mxu0 0.0
        %4377 = vmatprep.subr.mxu0 0.0
        %4378 = vmatpush1.msra.mxu0 0.0
        %4379 = vmatprep.subr.mxu0 0.0
        %4380 = vmatpush1.msra.mxu0 0.0
        %4381 = vmatprep.subr.mxu0 0.0
        %4382 = vmatpush1.msra.mxu0 0.0
        %4383 = vmatprep.subr.mxu0 0.0
        %4384 = vmatpush1.msra.mxu0 0.0
        %4385 = vmatprep.subr.mxu0 0.0
        %4386 = vmatpush1.msra.mxu0 0.0
        %4387 = vmatprep.mubr.f32.mxu0 0.0
        %4388 = vmatmul.mubr.f32.gmra.mrb[0].mxu0 %v4151
        %v4389 = vpop.f32.mrb[0].mxu0
        %v4390 = vadd.f32 0.0, %v4389
        %v4391 = vpop.f32.mrb[0].mxu0
        %4392 = vdwg.mxu0
        %v4393 = vsel %vm695, %v4316, 0
        %4395 = vmatprep.subr.mxu0 0.0
        %4396 = vmatpush1.msra.mxu0 %v2012
        %4397 = vmatprep.subr.mxu0 0.0
        %4398 = vmatpush1.msra.mxu0 0.0
        %4399 = vmatprep.subr.mxu0 0.0
        %4400 = vmatpush1.msra.mxu0 0.0
        %4401 = vmatprep.subr.mxu0 0.0
        %4402 = vmatpush1.msra.mxu0 0.0
        %4403 = vmatprep.subr.mxu0 0.0
        %4404 = vmatpush1.msra.mxu0 0.0
        %4405 = vmatprep.subr.mxu0 0.0
        %4406 = vmatpush1.msra.mxu0 0.0
        %4407 = vmatprep.subr.mxu0 0.0
        %4408 = vmatpush1.msra.mxu0 0.0
        %4409 = vmatprep.subr.mxu0 0.0
        %4410 = vmatpush1.msra.mxu0 0.0
        %4411 = vmatprep.subr.mxu0 0.0
        %4412 = vmatpush1.msra.mxu0 0.0
        %4413 = vmatprep.subr.mxu0 0.0
        %4414 = vmatpush1.msra.mxu0 0.0
        %4415 = vmatprep.subr.mxu0 0.0
        %4416 = vmatpush1.msra.mxu0 0.0
        %4417 = vmatprep.subr.mxu0 0.0
        %4418 = vmatpush1.msra.mxu0 0.0
        %4419 = vmatprep.subr.mxu0 0.0
        %4420 = vmatpush1.msra.mxu0 0.0
        %4421 = vmatprep.subr.mxu0 0.0
        %4422 = vmatpush1.msra.mxu0 0.0
        %4423 = vmatprep.subr.mxu0 0.0
        %4424 = vmatpush1.msra.mxu0 0.0
        %4425 = vmatprep.subr.mxu0 0.0
        %4426 = vmatpush1.msra.mxu0 0.0
        %4427 = vmatprep.subr.mxu0 0.0
        %4428 = vmatpush1.msra.mxu0 0.0
        %4429 = vmatprep.subr.mxu0 0.0
        %4430 = vmatpush1.msra.mxu0 0.0
        %4431 = vmatprep.subr.mxu0 0.0
        %4432 = vmatpush1.msra.mxu0 0.0
        %4433 = vmatprep.subr.mxu0 0.0
        %4434 = vmatpush1.msra.mxu0 0.0
        %4435 = vmatprep.subr.mxu0 0.0
        %4436 = vmatpush1.msra.mxu0 0.0
        %4437 = vmatprep.subr.mxu0 0.0
        %4438 = vmatpush1.msra.mxu0 0.0
        %4439 = vmatprep.subr.mxu0 0.0
        %4440 = vmatpush1.msra.mxu0 0.0
        %4441 = vmatprep.subr.mxu0 0.0
        %4442 = vmatpush1.msra.mxu0 0.0
        %4443 = vmatprep.subr.mxu0 0.0
        %4444 = vmatpush1.msra.mxu0 0.0
        %4445 = vmatprep.subr.mxu0 0.0
        %4446 = vmatpush1.msra.mxu0 0.0
        %4447 = vmatprep.subr.mxu0 0.0
        %4448 = vmatpush1.msra.mxu0 0.0
        %4449 = vmatprep.subr.mxu0 0.0
        %4450 = vmatpush1.msra.mxu0 0.0
        %4451 = vmatprep.subr.mxu0 0.0
        %4452 = vmatpush1.msra.mxu0 0.0
        %4453 = vmatprep.subr.mxu0 0.0
        %4454 = vmatpush1.msra.mxu0 0.0
        %4455 = vmatprep.subr.mxu0 0.0
        %4456 = vmatpush1.msra.mxu0 0.0
        %4457 = vmatprep.subr.mxu0 0.0
        %4458 = vmatpush1.msra.mxu0 0.0
        %4459 = vmatprep.mubr.f32.mxu0 0.0
        %4460 = vmatmul.mubr.f32.gmra.mrb[0].mxu0 %v4393
        %v4461 = vpop.f32.mrb[0].mxu0
        %v4462 = vadd.f32 %v4390, %v4461
        %v4463 = vpop.f32.mrb[0].mxu0
        %4464 = vdwg.mxu0
        %v4465 = vld [vmem:[#allocation7 + $0x30] sm:$0xff]
        %v4466 = vadd.f32 %v4462, %v4465
        %v4467 = vxor.u32 %v4466, 2147483648
        %v4468 = vmul.f32 %v4467, 1.442695
        %v4469 = vpow.pop %v4468
        %v4470 = vadd.f32 %v4469, 1.0
        %v4471 = vrcp.pop %v4470
        %v4472 = vmul.f32 1.0, %v4471
        %v4473 = vtanh.pop %v4466
        %v4474 = vmul.f32 %v4472, %v4132
        %4476 = vrot.lane.b32.xlu0 %v4473, 64
        %v4477 = vpop.permute.xlu0 %4476
        %v4479 = vmul.f32 %v4472, %v4477
        %4481 = vrot.lane.b32.xlu0 %v4479, 32
        %v4482 = vpop.permute.xlu0 %4481
        %v4484 = vadd.f32 %v4474, %v4482
        %v4485 = vtanh.pop %v4484
        %4487 = vrot.lane.b32.xlu0 %v4485, 64
        %v4488 = vpop.permute.xlu0 %4487
        %v4490 = vmul.f32 %v4472, %v4488
        %v4491 = vld [vmem:[%s632 + $0x38] sm:$0xff]
        %v4492 = vld [vmem:[%s638 + $0x38] sm:$0xff]
        %v4493 = vld [vmem:[#allocation8 + $0x38] sm:$0xff]
        %v4494 = vld [vmem:[#allocation5 + $0x38] sm:$0xff]
        %4496 = vrot.lane.b32.xlu0 %v4494, 96
        %v4497 = vpop.permute.xlu0 %4496
        %v4499 = vmul.f32 %v4490, %v4497
        %4501 = vrot.lane.b32.xlu0 %v4499, 32
        %v4502 = vpop.permute.xlu0 %4501
        %v4503 = vsel %vm953, %v4502, 0
        %4505 = vmatprep.subr.mxu0 0.0
        %4506 = vmatpush1.msra.mxu0 %v2007
        %4507 = vmatprep.subr.mxu0 0.0
        %4508 = vmatpush1.msra.mxu0 %v2008
        %4509 = vmatprep.subr.mxu0 0.0
        %4510 = vmatpush1.msra.mxu0 %v2009
        %4511 = vmatprep.subr.mxu0 0.0
        %4512 = vmatpush1.msra.mxu0 %v2010
        %4513 = vmatprep.subr.mxu0 0.0
        %4514 = vmatpush1.msra.mxu0 0.0
        %4515 = vmatprep.subr.mxu0 0.0
        %4516 = vmatpush1.msra.mxu0 0.0
        %4517 = vmatprep.subr.mxu0 0.0
        %4518 = vmatpush1.msra.mxu0 0.0
        %4519 = vmatprep.subr.mxu0 0.0
        %4520 = vmatpush1.msra.mxu0 0.0
        %4521 = vmatprep.subr.mxu0 0.0
        %4522 = vmatpush1.msra.mxu0 0.0
        %4523 = vmatprep.subr.mxu0 0.0
        %4524 = vmatpush1.msra.mxu0 0.0
        %4525 = vmatprep.subr.mxu0 0.0
        %4526 = vmatpush1.msra.mxu0 0.0
        %4527 = vmatprep.subr.mxu0 0.0
        %4528 = vmatpush1.msra.mxu0 0.0
        %4529 = vmatprep.subr.mxu0 0.0
        %4530 = vmatpush1.msra.mxu0 0.0
        %4531 = vmatprep.subr.mxu0 0.0
        %4532 = vmatpush1.msra.mxu0 0.0
        %4533 = vmatprep.subr.mxu0 0.0
        %4534 = vmatpush1.msra.mxu0 0.0
        %4535 = vmatprep.subr.mxu0 0.0
        %4536 = vmatpush1.msra.mxu0 0.0
        %4537 = vmatprep.subr.mxu0 0.0
        %4538 = vmatpush1.msra.mxu0 0.0
        %4539 = vmatprep.subr.mxu0 0.0
        %4540 = vmatpush1.msra.mxu0 0.0
        %4541 = vmatprep.subr.mxu0 0.0
        %4542 = vmatpush1.msra.mxu0 0.0
        %4543 = vmatprep.subr.mxu0 0.0
        %4544 = vmatpush1.msra.mxu0 0.0
        %4545 = vmatprep.subr.mxu0 0.0
        %4546 = vmatpush1.msra.mxu0 0.0
        %4547 = vmatprep.subr.mxu0 0.0
        %4548 = vmatpush1.msra.mxu0 0.0
        %4549 = vmatprep.subr.mxu0 0.0
        %4550 = vmatpush1.msra.mxu0 0.0
        %4551 = vmatprep.subr.mxu0 0.0
        %4552 = vmatpush1.msra.mxu0 0.0
        %4553 = vmatprep.subr.mxu0 0.0
        %4554 = vmatpush1.msra.mxu0 0.0
        %4555 = vmatprep.subr.mxu0 0.0
        %4556 = vmatpush1.msra.mxu0 0.0
        %4557 = vmatprep.subr.mxu0 0.0
        %4558 = vmatpush1.msra.mxu0 0.0
        %4559 = vmatprep.subr.mxu0 0.0
        %4560 = vmatpush1.msra.mxu0 0.0
        %4561 = vmatprep.subr.mxu0 0.0
        %4562 = vmatpush1.msra.mxu0 0.0
        %4563 = vmatprep.subr.mxu0 0.0
        %4564 = vmatpush1.msra.mxu0 0.0
        %4565 = vmatprep.subr.mxu0 0.0
        %4566 = vmatpush1.msra.mxu0 0.0
        %4567 = vmatprep.subr.mxu0 0.0
        %4568 = vmatpush1.msra.mxu0 0.0
        %4569 = vmatprep.mubr.f32.mxu0 0.0
        %4570 = vmatmul.mubr.f32.gmra.mrb[0].mxu0 %v4503
        %v4571 = vpop.f32.mrb[0].mxu0
        %v4572 = vadd.f32 %v2022, %v4571
        %v4573 = vpop.f32.mrb[0].mxu0
        %4574 = vdwg.mxu0
        %v4575 = vmul.f32 %v4492, %v4491
        %v4576 = vsub.f32 1.0, %v4492
        %v4577 = vmul.f32 %v4576, %v4572
        %v4578 = vadd.f32 %v4575, %v4577
        %v4580 = vsel %vm695, %v4578, 0
        %4582 = vmatprep.subr.mxu0 0.0
        %4583 = vmatpush1.msra.mxu0 %v2011
        %4584 = vmatprep.subr.mxu0 0.0
        %4585 = vmatpush1.msra.mxu0 0.0
        %4586 = vmatprep.subr.mxu0 0.0
        %4587 = vmatpush1.msra.mxu0 0.0
        %4588 = vmatprep.subr.mxu0 0.0
        %4589 = vmatpush1.msra.mxu0 0.0
        %4590 = vmatprep.subr.mxu0 0.0
        %4591 = vmatpush1.msra.mxu0 0.0
        %4592 = vmatprep.subr.mxu0 0.0
        %4593 = vmatpush1.msra.mxu0 0.0
        %4594 = vmatprep.subr.mxu0 0.0
        %4595 = vmatpush1.msra.mxu0 0.0
        %4596 = vmatprep.subr.mxu0 0.0
        %4597 = vmatpush1.msra.mxu0 0.0
        %4598 = vmatprep.subr.mxu0 0.0
        %4599 = vmatpush1.msra.mxu0 0.0
        %4600 = vmatprep.subr.mxu0 0.0
        %4601 = vmatpush1.msra.mxu0 0.0
        %4602 = vmatprep.subr.mxu0 0.0
        %4603 = vmatpush1.msra.mxu0 0.0
        %4604 = vmatprep.subr.mxu0 0.0
        %4605 = vmatpush1.msra.mxu0 0.0
        %4606 = vmatprep.subr.mxu0 0.0
        %4607 = vmatpush1.msra.mxu0 0.0
        %4608 = vmatprep.subr.mxu0 0.0
        %4609 = vmatpush1.msra.mxu0 0.0
        %4610 = vmatprep.subr.mxu0 0.0
        %4611 = vmatpush1.msra.mxu0 0.0
        %4612 = vmatprep.subr.mxu0 0.0
        %4613 = vmatpush1.msra.mxu0 0.0
        %4614 = vmatprep.subr.mxu0 0.0
        %4615 = vmatpush1.msra.mxu0 0.0
        %4616 = vmatprep.subr.mxu0 0.0
        %4617 = vmatpush1.msra.mxu0 0.0
        %4618 = vmatprep.subr.mxu0 0.0
        %4619 = vmatpush1.msra.mxu0 0.0
        %4620 = vmatprep.subr.mxu0 0.0
        %4621 = vmatpush1.msra.mxu0 0.0
        %4622 = vmatprep.subr.mxu0 0.0
        %4623 = vmatpush1.msra.mxu0 0.0
        %4624 = vmatprep.subr.mxu0 0.0
        %4625 = vmatpush1.msra.mxu0 0.0
        %4626 = vmatprep.subr.mxu0 0.0
        %4627 = vmatpush1.msra.mxu0 0.0
        %4628 = vmatprep.subr.mxu0 0.0
        %4629 = vmatpush1.msra.mxu0 0.0
        %4630 = vmatprep.subr.mxu0 0.0
        %4631 = vmatpush1.msra.mxu0 0.0
        %4632 = vmatprep.subr.mxu0 0.0
        %4633 = vmatpush1.msra.mxu0 0.0
        %4634 = vmatprep.subr.mxu0 0.0
        %4635 = vmatpush1.msra.mxu0 0.0
        %4636 = vmatprep.subr.mxu0 0.0
        %4637 = vmatpush1.msra.mxu0 0.0
        %4638 = vmatprep.subr.mxu0 0.0
        %4639 = vmatpush1.msra.mxu0 0.0
        %4640 = vmatprep.subr.mxu0 0.0
        %4641 = vmatpush1.msra.mxu0 0.0
        %4642 = vmatprep.subr.mxu0 0.0
        %4643 = vmatpush1.msra.mxu0 0.0
        %4644 = vmatprep.subr.mxu0 0.0
        %4645 = vmatpush1.msra.mxu0 0.0
        %4646 = vmatprep.mubr.f32.mxu0 0.0
        %4647 = vmatmul.mubr.f32.gmra.mrb[0].mxu0 %v4580
        %v4648 = vpop.f32.mrb[0].mxu0
        %v4649 = vadd.f32 %v2029, %v4648
        %v4650 = vpop.f32.mrb[0].mxu0
        %4651 = vdwg.mxu0
        %v4652 = vld [vmem:[#allocation6 + $0x38] sm:$0xff]
        %v4653 = vmul.f32 %v4652, %v4649
        %v4654 = vsub.f32 1.0, %v4652
        %v4655 = vmul.f32 %v4654, %v4572
        %v4656 = vadd.f32 %v4653, %v4655
        %v4657 = vsub.f32 %v4491, %v4572
        %v4658 = vand.u32 2147483647, %v4657
        %v4659 = vsub.f32 %v4491, %v4649
        %v4660 = vand.u32 2147483647, %v4659
        %v4661 = vadd.f32 %v4658, %v4660
        %v4662 = vsub.f32 %v4491, %v4656
        %v4663 = vand.u32 2147483647, %v4662
        %v4664 = vadd.f32 %v4661, %v4663
        %v4665 = vmul.f32 %v4664, %v4493
        %v4666 = vadd.f32 %v4314, %v4665
        %v4667 = vmul.f32 %v4576, %v4656
        %v4668 = vadd.f32 %v4575, %v4667
        %4670 = vrot.lane.b32.xlu0 %v4668, 56
        %v4671 = vpop.permute.xlu0 %4670
        %vm4673 = vcmask 523712
        %4674 = vst.msk [vmem:[%s625] sm:$0xff] %vm4673, %v4671
        %4675 = vmatprep.subr.mxu0 0.0
        %4676 = vmatpush1.msra.mxu0 %v2013
        %4677 = vmatprep.subr.mxu0 0.0
        %4678 = vmatpush1.msra.mxu0 %v2014
        %4679 = vmatprep.subr.mxu0 0.0
        %4680 = vmatpush1.msra.mxu0 %v2015
        %4681 = vmatprep.subr.mxu0 0.0
        %4682 = vmatpush1.msra.mxu0 %v2016
        %4683 = vmatprep.subr.mxu0 0.0
        %4684 = vmatpush1.msra.mxu0 0.0
        %4685 = vmatprep.subr.mxu0 0.0
        %4686 = vmatpush1.msra.mxu0 0.0
        %4687 = vmatprep.subr.mxu0 0.0
        %4688 = vmatpush1.msra.mxu0 0.0
        %4689 = vmatprep.subr.mxu0 0.0
        %4690 = vmatpush1.msra.mxu0 0.0
        %4691 = vmatprep.subr.mxu0 0.0
        %4692 = vmatpush1.msra.mxu0 0.0
        %4693 = vmatprep.subr.mxu0 0.0
        %4694 = vmatpush1.msra.mxu0 0.0
        %4695 = vmatprep.subr.mxu0 0.0
        %4696 = vmatpush1.msra.mxu0 0.0
        %4697 = vmatprep.subr.mxu0 0.0
        %4698 = vmatpush1.msra.mxu0 0.0
        %4699 = vmatprep.subr.mxu0 0.0
        %4700 = vmatpush1.msra.mxu0 0.0
        %4701 = vmatprep.subr.mxu0 0.0
        %4702 = vmatpush1.msra.mxu0 0.0
        %4703 = vmatprep.subr.mxu0 0.0
        %4704 = vmatpush1.msra.mxu0 0.0
        %4705 = vmatprep.subr.mxu0 0.0
        %4706 = vmatpush1.msra.mxu0 0.0
        %4707 = vmatprep.subr.mxu0 0.0
        %4708 = vmatpush1.msra.mxu0 0.0
        %4709 = vmatprep.subr.mxu0 0.0
        %4710 = vmatpush1.msra.mxu0 0.0
        %4711 = vmatprep.subr.mxu0 0.0
        %4712 = vmatpush1.msra.mxu0 0.0
        %4713 = vmatprep.subr.mxu0 0.0
        %4714 = vmatpush1.msra.mxu0 0.0
        %4715 = vmatprep.subr.mxu0 0.0
        %4716 = vmatpush1.msra.mxu0 0.0
        %4717 = vmatprep.subr.mxu0 0.0
        %4718 = vmatpush1.msra.mxu0 0.0
        %4719 = vmatprep.subr.mxu0 0.0
        %4720 = vmatpush1.msra.mxu0 0.0
        %4721 = vmatprep.subr.mxu0 0.0
        %4722 = vmatpush1.msra.mxu0 0.0
        %4723 = vmatprep.subr.mxu0 0.0
        %4724 = vmatpush1.msra.mxu0 0.0
        %4725 = vmatprep.subr.mxu0 0.0
        %4726 = vmatpush1.msra.mxu0 0.0
        %4727 = vmatprep.subr.mxu0 0.0
        %4728 = vmatpush1.msra.mxu0 0.0
        %4729 = vmatprep.subr.mxu0 0.0
        %4730 = vmatpush1.msra.mxu0 0.0
        %4731 = vmatprep.subr.mxu0 0.0
        %4732 = vmatpush1.msra.mxu0 0.0
        %4733 = vmatprep.subr.mxu0 0.0
        %4734 = vmatpush1.msra.mxu0 0.0
        %4735 = vmatprep.subr.mxu0 0.0
        %4736 = vmatpush1.msra.mxu0 0.0
        %4737 = vmatprep.subr.mxu0 0.0
        %4738 = vmatpush1.msra.mxu0 0.0
        %4739 = vmatprep.mubr.f32.mxu0 0.0
        %4740 = vmatmul.mubr.f32.gmra.mrb[0].mxu0 %v4503
        %v4741 = vpop.f32.mrb[0].mxu0
        %v4742 = vadd.f32 0.0, %v4741
        %v4743 = vpop.f32.mrb[0].mxu0
        %4744 = vdwg.mxu0
        %v4745 = vsel %vm695, %v4668, 0
        %4747 = vmatprep.subr.mxu0 0.0
        %4748 = vmatpush1.msra.mxu0 %v2012
        %4749 = vmatprep.subr.mxu0 0.0
        %4750 = vmatpush1.msra.mxu0 0.0
        %4751 = vmatprep.subr.mxu0 0.0
        %4752 = vmatpush1.msra.mxu0 0.0
        %4753 = vmatprep.subr.mxu0 0.0
        %4754 = vmatpush1.msra.mxu0 0.0
        %4755 = vmatprep.subr.mxu0 0.0
        %4756 = vmatpush1.msra.mxu0 0.0
        %4757 = vmatprep.subr.mxu0 0.0
        %4758 = vmatpush1.msra.mxu0 0.0
        %4759 = vmatprep.subr.mxu0 0.0
        %4760 = vmatpush1.msra.mxu0 0.0
        %4761 = vmatprep.subr.mxu0 0.0
        %4762 = vmatpush1.msra.mxu0 0.0
        %4763 = vmatprep.subr.mxu0 0.0
        %4764 = vmatpush1.msra.mxu0 0.0
        %4765 = vmatprep.subr.mxu0 0.0
        %4766 = vmatpush1.msra.mxu0 0.0
        %4767 = vmatprep.subr.mxu0 0.0
        %4768 = vmatpush1.msra.mxu0 0.0
        %4769 = vmatprep.subr.mxu0 0.0
        %4770 = vmatpush1.msra.mxu0 0.0
        %4771 = vmatprep.subr.mxu0 0.0
        %4772 = vmatpush1.msra.mxu0 0.0
        %4773 = vmatprep.subr.mxu0 0.0
        %4774 = vmatpush1.msra.mxu0 0.0
        %4775 = vmatprep.subr.mxu0 0.0
        %4776 = vmatpush1.msra.mxu0 0.0
        %4777 = vmatprep.subr.mxu0 0.0
        %4778 = vmatpush1.msra.mxu0 0.0
        %4779 = vmatprep.subr.mxu0 0.0
        %4780 = vmatpush1.msra.mxu0 0.0
        %4781 = vmatprep.subr.mxu0 0.0
        %4782 = vmatpush1.msra.mxu0 0.0
        %4783 = vmatprep.subr.mxu0 0.0
        %4784 = vmatpush1.msra.mxu0 0.0
        %4785 = vmatprep.subr.mxu0 0.0
        %4786 = vmatpush1.msra.mxu0 0.0
        %4787 = vmatprep.subr.mxu0 0.0
        %4788 = vmatpush1.msra.mxu0 0.0
        %4789 = vmatprep.subr.mxu0 0.0
        %4790 = vmatpush1.msra.mxu0 0.0
        %4791 = vmatprep.subr.mxu0 0.0
        %4792 = vmatpush1.msra.mxu0 0.0
        %4793 = vmatprep.subr.mxu0 0.0
        %4794 = vmatpush1.msra.mxu0 0.0
        %4795 = vmatprep.subr.mxu0 0.0
        %4796 = vmatpush1.msra.mxu0 0.0
        %4797 = vmatprep.subr.mxu0 0.0
        %4798 = vmatpush1.msra.mxu0 0.0
        %4799 = vmatprep.subr.mxu0 0.0
        %4800 = vmatpush1.msra.mxu0 0.0
        %4801 = vmatprep.subr.mxu0 0.0
        %4802 = vmatpush1.msra.mxu0 0.0
        %4803 = vmatprep.subr.mxu0 0.0
        %4804 = vmatpush1.msra.mxu0 0.0
        %4805 = vmatprep.subr.mxu0 0.0
        %4806 = vmatpush1.msra.mxu0 0.0
        %4807 = vmatprep.subr.mxu0 0.0
        %4808 = vmatpush1.msra.mxu0 0.0
        %4809 = vmatprep.subr.mxu0 0.0
        %4810 = vmatpush1.msra.mxu0 0.0
        %4811 = vmatprep.mubr.f32.mxu0 0.0
        %4812 = vmatmul.mubr.f32.gmra.mrb[0].mxu0 %v4745
        %v4813 = vpop.f32.mrb[0].mxu0
        %v4814 = vadd.f32 %v4742, %v4813
        %v4815 = vpop.f32.mrb[0].mxu0
        %4816 = vdwg.mxu0
        %v4817 = vld [vmem:[#allocation7 + $0x38] sm:$0xff]
        %v4818 = vadd.f32 %v4814, %v4817
        %v4819 = vxor.u32 %v4818, 2147483648
        %v4820 = vmul.f32 %v4819, 1.442695
        %v4821 = vpow.pop %v4820
        %v4822 = vadd.f32 %v4821, 1.0
        %v4823 = vrcp.pop %v4822
        %v4824 = vmul.f32 1.0, %v4823
        %v4825 = vtanh.pop %v4818
        %v4826 = vmul.f32 %v4824, %v4484
        %4828 = vrot.lane.b32.xlu0 %v4825, 64
        %v4829 = vpop.permute.xlu0 %4828
        %v4831 = vmul.f32 %v4824, %v4829
        %4833 = vrot.lane.b32.xlu0 %v4831, 32
        %v4834 = vpop.permute.xlu0 %4833
        %v4836 = vadd.f32 %v4826, %v4834
        %v4837 = vtanh.pop %v4836
        %4839 = vrot.lane.b32.xlu0 %v4837, 64
        %v4840 = vpop.permute.xlu0 %4839
        %v4842 = vmul.f32 %v4824, %v4840
        %v4843 = vld [vmem:[%s632 + $0x40] sm:$0xff]
        %v4844 = vld [vmem:[%s638 + $0x40] sm:$0xff]
        %v4845 = vld [vmem:[#allocation8 + $0x40] sm:$0xff]
        %v4846 = vld [vmem:[#allocation5 + $0x40] sm:$0xff]
        %4848 = vrot.lane.b32.xlu0 %v4846, 96
        %v4849 = vpop.permute.xlu0 %4848
        %v4851 = vmul.f32 %v4842, %v4849
        %4853 = vrot.lane.b32.xlu0 %v4851, 32
        %v4854 = vpop.permute.xlu0 %4853
        %v4855 = vsel %vm953, %v4854, 0
        %4857 = vmatprep.subr.mxu0 0.0
        %4858 = vmatpush1.msra.mxu0 %v2007
        %4859 = vmatprep.subr.mxu0 0.0
        %4860 = vmatpush1.msra.mxu0 %v2008
        %4861 = vmatprep.subr.mxu0 0.0
        %4862 = vmatpush1.msra.mxu0 %v2009
        %4863 = vmatprep.subr.mxu0 0.0
        %4864 = vmatpush1.msra.mxu0 %v2010
        %4865 = vmatprep.subr.mxu0 0.0
        %4866 = vmatpush1.msra.mxu0 0.0
        %4867 = vmatprep.subr.mxu0 0.0
        %4868 = vmatpush1.msra.mxu0 0.0
        %4869 = vmatprep.subr.mxu0 0.0
        %4870 = vmatpush1.msra.mxu0 0.0
        %4871 = vmatprep.subr.mxu0 0.0
        %4872 = vmatpush1.msra.mxu0 0.0
        %4873 = vmatprep.subr.mxu0 0.0
        %4874 = vmatpush1.msra.mxu0 0.0
        %4875 = vmatprep.subr.mxu0 0.0
        %4876 = vmatpush1.msra.mxu0 0.0
        %4877 = vmatprep.subr.mxu0 0.0
        %4878 = vmatpush1.msra.mxu0 0.0
        %4879 = vmatprep.subr.mxu0 0.0
        %4880 = vmatpush1.msra.mxu0 0.0
        %4881 = vmatprep.subr.mxu0 0.0
        %4882 = vmatpush1.msra.mxu0 0.0
        %4883 = vmatprep.subr.mxu0 0.0
        %4884 = vmatpush1.msra.mxu0 0.0
        %4885 = vmatprep.subr.mxu0 0.0
        %4886 = vmatpush1.msra.mxu0 0.0
        %4887 = vmatprep.subr.mxu0 0.0
        %4888 = vmatpush1.msra.mxu0 0.0
        %4889 = vmatprep.subr.mxu0 0.0
        %4890 = vmatpush1.msra.mxu0 0.0
        %4891 = vmatprep.subr.mxu0 0.0
        %4892 = vmatpush1.msra.mxu0 0.0
        %4893 = vmatprep.subr.mxu0 0.0
        %4894 = vmatpush1.msra.mxu0 0.0
        %4895 = vmatprep.subr.mxu0 0.0
        %4896 = vmatpush1.msra.mxu0 0.0
        %4897 = vmatprep.subr.mxu0 0.0
        %4898 = vmatpush1.msra.mxu0 0.0
        %4899 = vmatprep.subr.mxu0 0.0
        %4900 = vmatpush1.msra.mxu0 0.0
        %4901 = vmatprep.subr.mxu0 0.0
        %4902 = vmatpush1.msra.mxu0 0.0
        %4903 = vmatprep.subr.mxu0 0.0
        %4904 = vmatpush1.msra.mxu0 0.0
        %4905 = vmatprep.subr.mxu0 0.0
        %4906 = vmatpush1.msra.mxu0 0.0
        %4907 = vmatprep.subr.mxu0 0.0
        %4908 = vmatpush1.msra.mxu0 0.0
        %4909 = vmatprep.subr.mxu0 0.0
        %4910 = vmatpush1.msra.mxu0 0.0
        %4911 = vmatprep.subr.mxu0 0.0
        %4912 = vmatpush1.msra.mxu0 0.0
        %4913 = vmatprep.subr.mxu0 0.0
        %4914 = vmatpush1.msra.mxu0 0.0
        %4915 = vmatprep.subr.mxu0 0.0
        %4916 = vmatpush1.msra.mxu0 0.0
        %4917 = vmatprep.subr.mxu0 0.0
        %4918 = vmatpush1.msra.mxu0 0.0
        %4919 = vmatprep.subr.mxu0 0.0
        %4920 = vmatpush1.msra.mxu0 0.0
        %4921 = vmatprep.mubr.f32.mxu0 0.0
        %4922 = vmatmul.mubr.f32.gmra.mrb[0].mxu0 %v4855
        %v4923 = vpop.f32.mrb[0].mxu0
        %v4924 = vadd.f32 %v2022, %v4923
        %v4925 = vpop.f32.mrb[0].mxu0
        %4926 = vdwg.mxu0
        %v4927 = vmul.f32 %v4844, %v4843
        %v4928 = vsub.f32 1.0, %v4844
        %v4929 = vmul.f32 %v4928, %v4924
        %v4930 = vadd.f32 %v4927, %v4929
        %v4932 = vsel %vm695, %v4930, 0
        %4934 = vmatprep.subr.mxu0 0.0
        %4935 = vmatpush1.msra.mxu0 %v2011
        %4936 = vmatprep.subr.mxu0 0.0
        %4937 = vmatpush1.msra.mxu0 0.0
        %4938 = vmatprep.subr.mxu0 0.0
        %4939 = vmatpush1.msra.mxu0 0.0
        %4940 = vmatprep.subr.mxu0 0.0
        %4941 = vmatpush1.msra.mxu0 0.0
        %4942 = vmatprep.subr.mxu0 0.0
        %4943 = vmatpush1.msra.mxu0 0.0
        %4944 = vmatprep.subr.mxu0 0.0
        %4945 = vmatpush1.msra.mxu0 0.0
        %4946 = vmatprep.subr.mxu0 0.0
        %4947 = vmatpush1.msra.mxu0 0.0
        %4948 = vmatprep.subr.mxu0 0.0
        %4949 = vmatpush1.msra.mxu0 0.0
        %4950 = vmatprep.subr.mxu0 0.0
        %4951 = vmatpush1.msra.mxu0 0.0
        %4952 = vmatprep.subr.mxu0 0.0
        %4953 = vmatpush1.msra.mxu0 0.0
        %4954 = vmatprep.subr.mxu0 0.0
        %4955 = vmatpush1.msra.mxu0 0.0
        %4956 = vmatprep.subr.mxu0 0.0
        %4957 = vmatpush1.msra.mxu0 0.0
        %4958 = vmatprep.subr.mxu0 0.0
        %4959 = vmatpush1.msra.mxu0 0.0
        %4960 = vmatprep.subr.mxu0 0.0
        %4961 = vmatpush1.msra.mxu0 0.0
        %4962 = vmatprep.subr.mxu0 0.0
        %4963 = vmatpush1.msra.mxu0 0.0
        %4964 = vmatprep.subr.mxu0 0.0
        %4965 = vmatpush1.msra.mxu0 0.0
        %4966 = vmatprep.subr.mxu0 0.0
        %4967 = vmatpush1.msra.mxu0 0.0
        %4968 = vmatprep.subr.mxu0 0.0
        %4969 = vmatpush1.msra.mxu0 0.0
        %4970 = vmatprep.subr.mxu0 0.0
        %4971 = vmatpush1.msra.mxu0 0.0
        %4972 = vmatprep.subr.mxu0 0.0
        %4973 = vmatpush1.msra.mxu0 0.0
        %4974 = vmatprep.subr.mxu0 0.0
        %4975 = vmatpush1.msra.mxu0 0.0
        %4976 = vmatprep.subr.mxu0 0.0
        %4977 = vmatpush1.msra.mxu0 0.0
        %4978 = vmatprep.subr.mxu0 0.0
        %4979 = vmatpush1.msra.mxu0 0.0
        %4980 = vmatprep.subr.mxu0 0.0
        %4981 = vmatpush1.msra.mxu0 0.0
        %4982 = vmatprep.subr.mxu0 0.0
        %4983 = vmatpush1.msra.mxu0 0.0
        %4984 = vmatprep.subr.mxu0 0.0
        %4985 = vmatpush1.msra.mxu0 0.0
        %4986 = vmatprep.subr.mxu0 0.0
        %4987 = vmatpush1.msra.mxu0 0.0
        %4988 = vmatprep.subr.mxu0 0.0
        %4989 = vmatpush1.msra.mxu0 0.0
        %4990 = vmatprep.subr.mxu0 0.0
        %4991 = vmatpush1.msra.mxu0 0.0
        %4992 = vmatprep.subr.mxu0 0.0
        %4993 = vmatpush1.msra.mxu0 0.0
        %4994 = vmatprep.subr.mxu0 0.0
        %4995 = vmatpush1.msra.mxu0 0.0
        %4996 = vmatprep.subr.mxu0 0.0
        %4997 = vmatpush1.msra.mxu0 0.0
        %4998 = vmatprep.mubr.f32.mxu0 0.0
        %4999 = vmatmul.mubr.f32.gmra.mrb[0].mxu0 %v4932
        %v5000 = vpop.f32.mrb[0].mxu0
        %v5001 = vadd.f32 %v2029, %v5000
        %v5002 = vpop.f32.mrb[0].mxu0
        %5003 = vdwg.mxu0
        %v5004 = vld [vmem:[#allocation6 + $0x40] sm:$0xff]
        %v5005 = vmul.f32 %v5004, %v5001
        %v5006 = vsub.f32 1.0, %v5004
        %v5007 = vmul.f32 %v5006, %v4924
        %v5008 = vadd.f32 %v5005, %v5007
        %v5009 = vsub.f32 %v4843, %v4924
        %v5010 = vand.u32 2147483647, %v5009
        %v5011 = vsub.f32 %v4843, %v5001
        %v5012 = vand.u32 2147483647, %v5011
        %v5013 = vadd.f32 %v5010, %v5012
        %v5014 = vsub.f32 %v4843, %v5008
        %v5015 = vand.u32 2147483647, %v5014
        %v5016 = vadd.f32 %v5013, %v5015
        %v5017 = vmul.f32 %v5016, %v4845
        %v5018 = vadd.f32 %v4666, %v5017
        %v5019 = vmul.f32 %v4928, %v5008
        %v5020 = vadd.f32 %v4927, %v5019
        %5022 = vrot.lane.b32.xlu0 %v5020, 64
        %v5023 = vpop.permute.xlu0 %5022
        %vm5025 = vcmask 589312
        %5026 = vst.msk [vmem:[%s625] sm:$0xff] %vm5025, %v5023
        %5027 = vmatprep.subr.mxu0 0.0
        %5028 = vmatpush1.msra.mxu0 %v2013
        %5029 = vmatprep.subr.mxu0 0.0
        %5030 = vmatpush1.msra.mxu0 %v2014
        %5031 = vmatprep.subr.mxu0 0.0
        %5032 = vmatpush1.msra.mxu0 %v2015
        %5033 = vmatprep.subr.mxu0 0.0
        %5034 = vmatpush1.msra.mxu0 %v2016
        %5035 = vmatprep.subr.mxu0 0.0
        %5036 = vmatpush1.msra.mxu0 0.0
        %5037 = vmatprep.subr.mxu0 0.0
        %5038 = vmatpush1.msra.mxu0 0.0
        %5039 = vmatprep.subr.mxu0 0.0
        %5040 = vmatpush1.msra.mxu0 0.0
        %5041 = vmatprep.subr.mxu0 0.0
        %5042 = vmatpush1.msra.mxu0 0.0
        %5043 = vmatprep.subr.mxu0 0.0
        %5044 = vmatpush1.msra.mxu0 0.0
        %5045 = vmatprep.subr.mxu0 0.0
        %5046 = vmatpush1.msra.mxu0 0.0
        %5047 = vmatprep.subr.mxu0 0.0
        %5048 = vmatpush1.msra.mxu0 0.0
        %5049 = vmatprep.subr.mxu0 0.0
        %5050 = vmatpush1.msra.mxu0 0.0
        %5051 = vmatprep.subr.mxu0 0.0
        %5052 = vmatpush1.msra.mxu0 0.0
        %5053 = vmatprep.subr.mxu0 0.0
        %5054 = vmatpush1.msra.mxu0 0.0
        %5055 = vmatprep.subr.mxu0 0.0
        %5056 = vmatpush1.msra.mxu0 0.0
        %5057 = vmatprep.subr.mxu0 0.0
        %5058 = vmatpush1.msra.mxu0 0.0
        %5059 = vmatprep.subr.mxu0 0.0
        %5060 = vmatpush1.msra.mxu0 0.0
        %5061 = vmatprep.subr.mxu0 0.0
        %5062 = vmatpush1.msra.mxu0 0.0
        %5063 = vmatprep.subr.mxu0 0.0
        %5064 = vmatpush1.msra.mxu0 0.0
        %5065 = vmatprep.subr.mxu0 0.0
        %5066 = vmatpush1.msra.mxu0 0.0
        %5067 = vmatprep.subr.mxu0 0.0
        %5068 = vmatpush1.msra.mxu0 0.0
        %5069 = vmatprep.subr.mxu0 0.0
        %5070 = vmatpush1.msra.mxu0 0.0
        %5071 = vmatprep.subr.mxu0 0.0
        %5072 = vmatpush1.msra.mxu0 0.0
        %5073 = vmatprep.subr.mxu0 0.0
        %5074 = vmatpush1.msra.mxu0 0.0
        %5075 = vmatprep.subr.mxu0 0.0
        %5076 = vmatpush1.msra.mxu0 0.0
        %5077 = vmatprep.subr.mxu0 0.0
        %5078 = vmatpush1.msra.mxu0 0.0
        %5079 = vmatprep.subr.mxu0 0.0
        %5080 = vmatpush1.msra.mxu0 0.0
        %5081 = vmatprep.subr.mxu0 0.0
        %5082 = vmatpush1.msra.mxu0 0.0
        %5083 = vmatprep.subr.mxu0 0.0
        %5084 = vmatpush1.msra.mxu0 0.0
        %5085 = vmatprep.subr.mxu0 0.0
        %5086 = vmatpush1.msra.mxu0 0.0
        %5087 = vmatprep.subr.mxu0 0.0
        %5088 = vmatpush1.msra.mxu0 0.0
        %5089 = vmatprep.subr.mxu0 0.0
        %5090 = vmatpush1.msra.mxu0 0.0
        %5091 = vmatprep.mubr.f32.mxu0 0.0
        %5092 = vmatmul.mubr.f32.gmra.mrb[0].mxu0 %v4855
        %v5093 = vpop.f32.mrb[0].mxu0
        %v5094 = vadd.f32 0.0, %v5093
        %v5095 = vpop.f32.mrb[0].mxu0
        %5096 = vdwg.mxu0
        %v5097 = vsel %vm695, %v5020, 0
        %5099 = vmatprep.subr.mxu0 0.0
        %5100 = vmatpush1.msra.mxu0 %v2012
        %5101 = vmatprep.subr.mxu0 0.0
        %5102 = vmatpush1.msra.mxu0 0.0
        %5103 = vmatprep.subr.mxu0 0.0
        %5104 = vmatpush1.msra.mxu0 0.0
        %5105 = vmatprep.subr.mxu0 0.0
        %5106 = vmatpush1.msra.mxu0 0.0
        %5107 = vmatprep.subr.mxu0 0.0
        %5108 = vmatpush1.msra.mxu0 0.0
        %5109 = vmatprep.subr.mxu0 0.0
        %5110 = vmatpush1.msra.mxu0 0.0
        %5111 = vmatprep.subr.mxu0 0.0
        %5112 = vmatpush1.msra.mxu0 0.0
        %5113 = vmatprep.subr.mxu0 0.0
        %5114 = vmatpush1.msra.mxu0 0.0
        %5115 = vmatprep.subr.mxu0 0.0
        %5116 = vmatpush1.msra.mxu0 0.0
        %5117 = vmatprep.subr.mxu0 0.0
        %5118 = vmatpush1.msra.mxu0 0.0
        %5119 = vmatprep.subr.mxu0 0.0
        %5120 = vmatpush1.msra.mxu0 0.0
        %5121 = vmatprep.subr.mxu0 0.0
        %5122 = vmatpush1.msra.mxu0 0.0
        %5123 = vmatprep.subr.mxu0 0.0
        %5124 = vmatpush1.msra.mxu0 0.0
        %5125 = vmatprep.subr.mxu0 0.0
        %5126 = vmatpush1.msra.mxu0 0.0
        %5127 = vmatprep.subr.mxu0 0.0
        %5128 = vmatpush1.msra.mxu0 0.0
        %5129 = vmatprep.subr.mxu0 0.0
        %5130 = vmatpush1.msra.mxu0 0.0
        %5131 = vmatprep.subr.mxu0 0.0
        %5132 = vmatpush1.msra.mxu0 0.0
        %5133 = vmatprep.subr.mxu0 0.0
        %5134 = vmatpush1.msra.mxu0 0.0
        %5135 = vmatprep.subr.mxu0 0.0
        %5136 = vmatpush1.msra.mxu0 0.0
        %5137 = vmatprep.subr.mxu0 0.0
        %5138 = vmatpush1.msra.mxu0 0.0
        %5139 = vmatprep.subr.mxu0 0.0
        %5140 = vmatpush1.msra.mxu0 0.0
        %5141 = vmatprep.subr.mxu0 0.0
        %5142 = vmatpush1.msra.mxu0 0.0
        %5143 = vmatprep.subr.mxu0 0.0
        %5144 = vmatpush1.msra.mxu0 0.0
        %5145 = vmatprep.subr.mxu0 0.0
        %5146 = vmatpush1.msra.mxu0 0.0
        %5147 = vmatprep.subr.mxu0 0.0
        %5148 = vmatpush1.msra.mxu0 0.0
        %5149 = vmatprep.subr.mxu0 0.0
        %5150 = vmatpush1.msra.mxu0 0.0
        %5151 = vmatprep.subr.mxu0 0.0
        %5152 = vmatpush1.msra.mxu0 0.0
        %5153 = vmatprep.subr.mxu0 0.0
        %5154 = vmatpush1.msra.mxu0 0.0
        %5155 = vmatprep.subr.mxu0 0.0
        %5156 = vmatpush1.msra.mxu0 0.0
        %5157 = vmatprep.subr.mxu0 0.0
        %5158 = vmatpush1.msra.mxu0 0.0
        %5159 = vmatprep.subr.mxu0 0.0
        %5160 = vmatpush1.msra.mxu0 0.0
        %5161 = vmatprep.subr.mxu0 0.0
        %5162 = vmatpush1.msra.mxu0 0.0
        %5163 = vmatprep.mubr.f32.mxu0 0.0
        %5164 = vmatmul.mubr.f32.gmra.mrb[0].mxu0 %v5097
        %v5165 = vpop.f32.mrb[0].mxu0
        %v5166 = vadd.f32 %v5094, %v5165
        %v5167 = vpop.f32.mrb[0].mxu0
        %5168 = vdwg.mxu0
        %v5169 = vld [vmem:[#allocation7 + $0x40] sm:$0xff]
        %v5170 = vadd.f32 %v5166, %v5169
        %v5171 = vxor.u32 %v5170, 2147483648
        %v5172 = vmul.f32 %v5171, 1.442695
        %v5173 = vpow.pop %v5172
        %v5174 = vadd.f32 %v5173, 1.0
        %v5175 = vrcp.pop %v5174
        %v5176 = vmul.f32 1.0, %v5175
        %v5177 = vtanh.pop %v5170
        %v5178 = vmul.f32 %v5176, %v4836
        %5180 = vrot.lane.b32.xlu0 %v5177, 64
        %v5181 = vpop.permute.xlu0 %5180
        %v5183 = vmul.f32 %v5176, %v5181
        %5185 = vrot.lane.b32.xlu0 %v5183, 32
        %v5186 = vpop.permute.xlu0 %5185
        %v5188 = vadd.f32 %v5178, %v5186
        %v5189 = vtanh.pop %v5188
        %5191 = vrot.lane.b32.xlu0 %v5189, 64
        %v5192 = vpop.permute.xlu0 %5191
        %v5194 = vmul.f32 %v5176, %v5192
        %v5195 = vld [vmem:[%s632 + $0x48] sm:$0xff]
        %v5196 = vld [vmem:[%s638 + $0x48] sm:$0xff]
        %v5197 = vld [vmem:[#allocation8 + $0x48] sm:$0xff]
        %v5198 = vld [vmem:[#allocation5 + $0x48] sm:$0xff]
        %5200 = vrot.lane.b32.xlu0 %v5198, 96
        %v5201 = vpop.permute.xlu0 %5200
        %v5203 = vmul.f32 %v5194, %v5201
        %5205 = vrot.lane.b32.xlu0 %v5203, 32
        %v5206 = vpop.permute.xlu0 %5205
        %v5207 = vsel %vm953, %v5206, 0
        %5209 = vmatprep.subr.mxu0 0.0
        %5210 = vmatpush1.msra.mxu0 %v2007
        %5211 = vmatprep.subr.mxu0 0.0
        %5212 = vmatpush1.msra.mxu0 %v2008
        %5213 = vmatprep.subr.mxu0 0.0
        %5214 = vmatpush1.msra.mxu0 %v2009
        %5215 = vmatprep.subr.mxu0 0.0
        %5216 = vmatpush1.msra.mxu0 %v2010
        %5217 = vmatprep.subr.mxu0 0.0
        %5218 = vmatpush1.msra.mxu0 0.0
        %5219 = vmatprep.subr.mxu0 0.0
        %5220 = vmatpush1.msra.mxu0 0.0
        %5221 = vmatprep.subr.mxu0 0.0
        %5222 = vmatpush1.msra.mxu0 0.0
        %5223 = vmatprep.subr.mxu0 0.0
        %5224 = vmatpush1.msra.mxu0 0.0
        %5225 = vmatprep.subr.mxu0 0.0
        %5226 = vmatpush1.msra.mxu0 0.0
        %5227 = vmatprep.subr.mxu0 0.0
        %5228 = vmatpush1.msra.mxu0 0.0
        %5229 = vmatprep.subr.mxu0 0.0
        %5230 = vmatpush1.msra.mxu0 0.0
        %5231 = vmatprep.subr.mxu0 0.0
        %5232 = vmatpush1.msra.mxu0 0.0
        %5233 = vmatprep.subr.mxu0 0.0
        %5234 = vmatpush1.msra.mxu0 0.0
        %5235 = vmatprep.subr.mxu0 0.0
        %5236 = vmatpush1.msra.mxu0 0.0
        %5237 = vmatprep.subr.mxu0 0.0
        %5238 = vmatpush1.msra.mxu0 0.0
        %5239 = vmatprep.subr.mxu0 0.0
        %5240 = vmatpush1.msra.mxu0 0.0
        %5241 = vmatprep.subr.mxu0 0.0
        %5242 = vmatpush1.msra.mxu0 0.0
        %5243 = vmatprep.subr.mxu0 0.0
        %5244 = vmatpush1.msra.mxu0 0.0
        %5245 = vmatprep.subr.mxu0 0.0
        %5246 = vmatpush1.msra.mxu0 0.0
        %5247 = vmatprep.subr.mxu0 0.0
        %5248 = vmatpush1.msra.mxu0 0.0
        %5249 = vmatprep.subr.mxu0 0.0
        %5250 = vmatpush1.msra.mxu0 0.0
        %5251 = vmatprep.subr.mxu0 0.0
        %5252 = vmatpush1.msra.mxu0 0.0
        %5253 = vmatprep.subr.mxu0 0.0
        %5254 = vmatpush1.msra.mxu0 0.0
        %5255 = vmatprep.subr.mxu0 0.0
        %5256 = vmatpush1.msra.mxu0 0.0
        %5257 = vmatprep.subr.mxu0 0.0
        %5258 = vmatpush1.msra.mxu0 0.0
        %5259 = vmatprep.subr.mxu0 0.0
        %5260 = vmatpush1.msra.mxu0 0.0
        %5261 = vmatprep.subr.mxu0 0.0
        %5262 = vmatpush1.msra.mxu0 0.0
        %5263 = vmatprep.subr.mxu0 0.0
        %5264 = vmatpush1.msra.mxu0 0.0
        %5265 = vmatprep.subr.mxu0 0.0
        %5266 = vmatpush1.msra.mxu0 0.0
        %5267 = vmatprep.subr.mxu0 0.0
        %5268 = vmatpush1.msra.mxu0 0.0
        %5269 = vmatprep.subr.mxu0 0.0
        %5270 = vmatpush1.msra.mxu0 0.0
        %5271 = vmatprep.subr.mxu0 0.0
        %5272 = vmatpush1.msra.mxu0 0.0
        %5273 = vmatprep.mubr.f32.mxu0 0.0
        %5274 = vmatmul.mubr.f32.gmra.mrb[0].mxu0 %v5207
        %v5275 = vpop.f32.mrb[0].mxu0
        %v5276 = vadd.f32 %v2022, %v5275
        %v5277 = vpop.f32.mrb[0].mxu0
        %5278 = vdwg.mxu0
        %v5279 = vmul.f32 %v5196, %v5195
        %v5280 = vsub.f32 1.0, %v5196
        %v5281 = vmul.f32 %v5280, %v5276
        %v5282 = vadd.f32 %v5279, %v5281
        %v5284 = vsel %vm695, %v5282, 0
        %5286 = vmatprep.subr.mxu0 0.0
        %5287 = vmatpush1.msra.mxu0 %v2011
        %5288 = vmatprep.subr.mxu0 0.0
        %5289 = vmatpush1.msra.mxu0 0.0
        %5290 = vmatprep.subr.mxu0 0.0
        %5291 = vmatpush1.msra.mxu0 0.0
        %5292 = vmatprep.subr.mxu0 0.0
        %5293 = vmatpush1.msra.mxu0 0.0
        %5294 = vmatprep.subr.mxu0 0.0
        %5295 = vmatpush1.msra.mxu0 0.0
        %5296 = vmatprep.subr.mxu0 0.0
        %5297 = vmatpush1.msra.mxu0 0.0
        %5298 = vmatprep.subr.mxu0 0.0
        %5299 = vmatpush1.msra.mxu0 0.0
        %5300 = vmatprep.subr.mxu0 0.0
        %5301 = vmatpush1.msra.mxu0 0.0
        %5302 = vmatprep.subr.mxu0 0.0
        %5303 = vmatpush1.msra.mxu0 0.0
        %5304 = vmatprep.subr.mxu0 0.0
        %5305 = vmatpush1.msra.mxu0 0.0
        %5306 = vmatprep.subr.mxu0 0.0
        %5307 = vmatpush1.msra.mxu0 0.0
        %5308 = vmatprep.subr.mxu0 0.0
        %5309 = vmatpush1.msra.mxu0 0.0
        %5310 = vmatprep.subr.mxu0 0.0
        %5311 = vmatpush1.msra.mxu0 0.0
        %5312 = vmatprep.subr.mxu0 0.0
        %5313 = vmatpush1.msra.mxu0 0.0
        %5314 = vmatprep.subr.mxu0 0.0
        %5315 = vmatpush1.msra.mxu0 0.0
        %5316 = vmatprep.subr.mxu0 0.0
        %5317 = vmatpush1.msra.mxu0 0.0
        %5318 = vmatprep.subr.mxu0 0.0
        %5319 = vmatpush1.msra.mxu0 0.0
        %5320 = vmatprep.subr.mxu0 0.0
        %5321 = vmatpush1.msra.mxu0 0.0
        %5322 = vmatprep.subr.mxu0 0.0
        %5323 = vmatpush1.msra.mxu0 0.0
        %5324 = vmatprep.subr.mxu0 0.0
        %5325 = vmatpush1.msra.mxu0 0.0
        %5326 = vmatprep.subr.mxu0 0.0
        %5327 = vmatpush1.msra.mxu0 0.0
        %5328 = vmatprep.subr.mxu0 0.0
        %5329 = vmatpush1.msra.mxu0 0.0
        %5330 = vmatprep.subr.mxu0 0.0
        %5331 = vmatpush1.msra.mxu0 0.0
        %5332 = vmatprep.subr.mxu0 0.0
        %5333 = vmatpush1.msra.mxu0 0.0
        %5334 = vmatprep.subr.mxu0 0.0
        %5335 = vmatpush1.msra.mxu0 0.0
        %5336 = vmatprep.subr.mxu0 0.0
        %5337 = vmatpush1.msra.mxu0 0.0
        %5338 = vmatprep.subr.mxu0 0.0
        %5339 = vmatpush1.msra.mxu0 0.0
        %5340 = vmatprep.subr.mxu0 0.0
        %5341 = vmatpush1.msra.mxu0 0.0
        %5342 = vmatprep.subr.mxu0 0.0
        %5343 = vmatpush1.msra.mxu0 0.0
        %5344 = vmatprep.subr.mxu0 0.0
        %5345 = vmatpush1.msra.mxu0 0.0
        %5346 = vmatprep.subr.mxu0 0.0
        %5347 = vmatpush1.msra.mxu0 0.0
        %5348 = vmatprep.subr.mxu0 0.0
        %5349 = vmatpush1.msra.mxu0 0.0
        %5350 = vmatprep.mubr.f32.mxu0 0.0
        %5351 = vmatmul.mubr.f32.gmra.mrb[0].mxu0 %v5284
        %v5352 = vpop.f32.mrb[0].mxu0
        %v5353 = vadd.f32 %v2029, %v5352
        %v5354 = vpop.f32.mrb[0].mxu0
        %5355 = vdwg.mxu0
        %v5356 = vld [vmem:[#allocation6 + $0x48] sm:$0xff]
        %v5357 = vmul.f32 %v5356, %v5353
        %v5358 = vsub.f32 1.0, %v5356
        %v5359 = vmul.f32 %v5358, %v5276
        %v5360 = vadd.f32 %v5357, %v5359
        %v5361 = vsub.f32 %v5195, %v5276
        %v5362 = vand.u32 2147483647, %v5361
        %v5363 = vsub.f32 %v5195, %v5353
        %v5364 = vand.u32 2147483647, %v5363
        %v5365 = vadd.f32 %v5362, %v5364
        %v5366 = vsub.f32 %v5195, %v5360
        %v5367 = vand.u32 2147483647, %v5366
        %v5368 = vadd.f32 %v5365, %v5367
        %v5369 = vmul.f32 %v5368, %v5197
        %v5370 = vadd.f32 %v5018, %v5369
        %v5371 = vmul.f32 %v5280, %v5360
        %v5372 = vadd.f32 %v5279, %v5371
        %5374 = vrot.lane.b32.xlu0 %v5372, 72
        %v5375 = vpop.permute.xlu0 %5374
        %vm5377 = vcmask 654912
        %5378 = vst.msk [vmem:[%s625] sm:$0xff] %vm5377, %v5375
        %5379 = vmatprep.subr.mxu0 0.0
        %5380 = vmatpush1.msra.mxu0 %v2013
        %5381 = vmatprep.subr.mxu0 0.0
        %5382 = vmatpush1.msra.mxu0 %v2014
        %5383 = vmatprep.subr.mxu0 0.0
        %5384 = vmatpush1.msra.mxu0 %v2015
        %5385 = vmatprep.subr.mxu0 0.0
        %5386 = vmatpush1.msra.mxu0 %v2016
        %5387 = vmatprep.subr.mxu0 0.0
        %5388 = vmatpush1.msra.mxu0 0.0
        %5389 = vmatprep.subr.mxu0 0.0
        %5390 = vmatpush1.msra.mxu0 0.0
        %5391 = vmatprep.subr.mxu0 0.0
        %5392 = vmatpush1.msra.mxu0 0.0
        %5393 = vmatprep.subr.mxu0 0.0
        %5394 = vmatpush1.msra.mxu0 0.0
        %5395 = vmatprep.subr.mxu0 0.0
        %5396 = vmatpush1.msra.mxu0 0.0
        %5397 = vmatprep.subr.mxu0 0.0
        %5398 = vmatpush1.msra.mxu0 0.0
        %5399 = vmatprep.subr.mxu0 0.0
        %5400 = vmatpush1.msra.mxu0 0.0
        %5401 = vmatprep.subr.mxu0 0.0
        %5402 = vmatpush1.msra.mxu0 0.0
        %5403 = vmatprep.subr.mxu0 0.0
        %5404 = vmatpush1.msra.mxu0 0.0
        %5405 = vmatprep.subr.mxu0 0.0
        %5406 = vmatpush1.msra.mxu0 0.0
        %5407 = vmatprep.subr.mxu0 0.0
        %5408 = vmatpush1.msra.mxu0 0.0
        %5409 = vmatprep.subr.mxu0 0.0
        %5410 = vmatpush1.msra.mxu0 0.0
        %5411 = vmatprep.subr.mxu0 0.0
        %5412 = vmatpush1.msra.mxu0 0.0
        %5413 = vmatprep.subr.mxu0 0.0
        %5414 = vmatpush1.msra.mxu0 0.0
        %5415 = vmatprep.subr.mxu0 0.0
        %5416 = vmatpush1.msra.mxu0 0.0
        %5417 = vmatprep.subr.mxu0 0.0
        %5418 = vmatpush1.msra.mxu0 0.0
        %5419 = vmatprep.subr.mxu0 0.0
        %5420 = vmatpush1.msra.mxu0 0.0
        %5421 = vmatprep.subr.mxu0 0.0
        %5422 = vmatpush1.msra.mxu0 0.0
        %5423 = vmatprep.subr.mxu0 0.0
        %5424 = vmatpush1.msra.mxu0 0.0
        %5425 = vmatprep.subr.mxu0 0.0
        %5426 = vmatpush1.msra.mxu0 0.0
        %5427 = vmatprep.subr.mxu0 0.0
        %5428 = vmatpush1.msra.mxu0 0.0
        %5429 = vmatprep.subr.mxu0 0.0
        %5430 = vmatpush1.msra.mxu0 0.0
        %5431 = vmatprep.subr.mxu0 0.0
        %5432 = vmatpush1.msra.mxu0 0.0
        %5433 = vmatprep.subr.mxu0 0.0
        %5434 = vmatpush1.msra.mxu0 0.0
        %5435 = vmatprep.subr.mxu0 0.0
        %5436 = vmatpush1.msra.mxu0 0.0
        %5437 = vmatprep.subr.mxu0 0.0
        %5438 = vmatpush1.msra.mxu0 0.0
        %5439 = vmatprep.subr.mxu0 0.0
        %5440 = vmatpush1.msra.mxu0 0.0
        %5441 = vmatprep.subr.mxu0 0.0
        %5442 = vmatpush1.msra.mxu0 0.0
        %5443 = vmatprep.mubr.f32.mxu0 0.0
        %5444 = vmatmul.mubr.f32.gmra.mrb[0].mxu0 %v5207
        %v5445 = vpop.f32.mrb[0].mxu0
        %v5446 = vadd.f32 0.0, %v5445
        %v5447 = vpop.f32.mrb[0].mxu0
        %5448 = vdwg.mxu0
        %v5449 = vsel %vm695, %v5372, 0
        %5451 = vmatprep.subr.mxu0 0.0
        %5452 = vmatpush1.msra.mxu0 %v2012
        %5453 = vmatprep.subr.mxu0 0.0
        %5454 = vmatpush1.msra.mxu0 0.0
        %5455 = vmatprep.subr.mxu0 0.0
        %5456 = vmatpush1.msra.mxu0 0.0
        %5457 = vmatprep.subr.mxu0 0.0
        %5458 = vmatpush1.msra.mxu0 0.0
        %5459 = vmatprep.subr.mxu0 0.0
        %5460 = vmatpush1.msra.mxu0 0.0
        %5461 = vmatprep.subr.mxu0 0.0
        %5462 = vmatpush1.msra.mxu0 0.0
        %5463 = vmatprep.subr.mxu0 0.0
        %5464 = vmatpush1.msra.mxu0 0.0
        %5465 = vmatprep.subr.mxu0 0.0
        %5466 = vmatpush1.msra.mxu0 0.0
        %5467 = vmatprep.subr.mxu0 0.0
        %5468 = vmatpush1.msra.mxu0 0.0
        %5469 = vmatprep.subr.mxu0 0.0
        %5470 = vmatpush1.msra.mxu0 0.0
        %5471 = vmatprep.subr.mxu0 0.0
        %5472 = vmatpush1.msra.mxu0 0.0
        %5473 = vmatprep.subr.mxu0 0.0
        %5474 = vmatpush1.msra.mxu0 0.0
        %5475 = vmatprep.subr.mxu0 0.0
        %5476 = vmatpush1.msra.mxu0 0.0
        %5477 = vmatprep.subr.mxu0 0.0
        %5478 = vmatpush1.msra.mxu0 0.0
        %5479 = vmatprep.subr.mxu0 0.0
        %5480 = vmatpush1.msra.mxu0 0.0
        %5481 = vmatprep.subr.mxu0 0.0
        %5482 = vmatpush1.msra.mxu0 0.0
        %5483 = vmatprep.subr.mxu0 0.0
        %5484 = vmatpush1.msra.mxu0 0.0
        %5485 = vmatprep.subr.mxu0 0.0
        %5486 = vmatpush1.msra.mxu0 0.0
        %5487 = vmatprep.subr.mxu0 0.0
        %5488 = vmatpush1.msra.mxu0 0.0
        %5489 = vmatprep.subr.mxu0 0.0
        %5490 = vmatpush1.msra.mxu0 0.0
        %5491 = vmatprep.subr.mxu0 0.0
        %5492 = vmatpush1.msra.mxu0 0.0
        %5493 = vmatprep.subr.mxu0 0.0
        %5494 = vmatpush1.msra.mxu0 0.0
        %5495 = vmatprep.subr.mxu0 0.0
        %5496 = vmatpush1.msra.mxu0 0.0
        %5497 = vmatprep.subr.mxu0 0.0
        %5498 = vmatpush1.msra.mxu0 0.0
        %5499 = vmatprep.subr.mxu0 0.0
        %5500 = vmatpush1.msra.mxu0 0.0
        %5501 = vmatprep.subr.mxu0 0.0
        %5502 = vmatpush1.msra.mxu0 0.0
        %5503 = vmatprep.subr.mxu0 0.0
        %5504 = vmatpush1.msra.mxu0 0.0
        %5505 = vmatprep.subr.mxu0 0.0
        %5506 = vmatpush1.msra.mxu0 0.0
        %5507 = vmatprep.subr.mxu0 0.0
        %5508 = vmatpush1.msra.mxu0 0.0
        %5509 = vmatprep.subr.mxu0 0.0
        %5510 = vmatpush1.msra.mxu0 0.0
        %5511 = vmatprep.subr.mxu0 0.0
        %5512 = vmatpush1.msra.mxu0 0.0
        %5513 = vmatprep.subr.mxu0 0.0
        %5514 = vmatpush1.msra.mxu0 0.0
        %5515 = vmatprep.mubr.f32.mxu0 0.0
        %5516 = vmatmul.mubr.f32.gmra.mrb[0].mxu0 %v5449
        %v5517 = vpop.f32.mrb[0].mxu0
        %v5518 = vadd.f32 %v5446, %v5517
        %v5519 = vpop.f32.mrb[0].mxu0
        %5520 = vdwg.mxu0
        %v5521 = vld [vmem:[#allocation7 + $0x48] sm:$0xff]
        %v5522 = vadd.f32 %v5518, %v5521
        %v5523 = vxor.u32 %v5522, 2147483648
        %v5524 = vmul.f32 %v5523, 1.442695
        %v5525 = vpow.pop %v5524
        %v5526 = vadd.f32 %v5525, 1.0
        %v5527 = vrcp.pop %v5526
        %v5528 = vmul.f32 1.0, %v5527
        %v5529 = vtanh.pop %v5522
        %v5530 = vmul.f32 %v5528, %v5188
        %5532 = vrot.lane.b32.xlu0 %v5529, 64
        %v5533 = vpop.permute.xlu0 %5532
        %v5535 = vmul.f32 %v5528, %v5533
        %5537 = vrot.lane.b32.xlu0 %v5535, 32
        %v5538 = vpop.permute.xlu0 %5537
        %v5540 = vadd.f32 %v5530, %v5538
        %v5541 = vtanh.pop %v5540
        %5543 = vrot.lane.b32.xlu0 %v5541, 64
        %v5544 = vpop.permute.xlu0 %5543
        %v5546 = vmul.f32 %v5528, %v5544
        %v5547 = vld [vmem:[%s632 + $0x50] sm:$0xff]
        %v5548 = vld [vmem:[%s638 + $0x50] sm:$0xff]
        %v5549 = vld [vmem:[#allocation8 + $0x50] sm:$0xff]
        %v5550 = vld [vmem:[#allocation5 + $0x50] sm:$0xff]
        %5552 = vrot.lane.b32.xlu0 %v5550, 96
        %v5553 = vpop.permute.xlu0 %5552
        %v5555 = vmul.f32 %v5546, %v5553
        %5557 = vrot.lane.b32.xlu0 %v5555, 32
        %v5558 = vpop.permute.xlu0 %5557
        %v5559 = vsel %vm953, %v5558, 0
        %5561 = vmatprep.subr.mxu0 0.0
        %5562 = vmatpush1.msra.mxu0 %v2007
        %5563 = vmatprep.subr.mxu0 0.0
        %5564 = vmatpush1.msra.mxu0 %v2008
        %5565 = vmatprep.subr.mxu0 0.0
        %5566 = vmatpush1.msra.mxu0 %v2009
        %5567 = vmatprep.subr.mxu0 0.0
        %5568 = vmatpush1.msra.mxu0 %v2010
        %5569 = vmatprep.subr.mxu0 0.0
        %5570 = vmatpush1.msra.mxu0 0.0
        %5571 = vmatprep.subr.mxu0 0.0
        %5572 = vmatpush1.msra.mxu0 0.0
        %5573 = vmatprep.subr.mxu0 0.0
        %5574 = vmatpush1.msra.mxu0 0.0
        %5575 = vmatprep.subr.mxu0 0.0
        %5576 = vmatpush1.msra.mxu0 0.0
        %5577 = vmatprep.subr.mxu0 0.0
        %5578 = vmatpush1.msra.mxu0 0.0
        %5579 = vmatprep.subr.mxu0 0.0
        %5580 = vmatpush1.msra.mxu0 0.0
        %5581 = vmatprep.subr.mxu0 0.0
        %5582 = vmatpush1.msra.mxu0 0.0
        %5583 = vmatprep.subr.mxu0 0.0
        %5584 = vmatpush1.msra.mxu0 0.0
        %5585 = vmatprep.subr.mxu0 0.0
        %5586 = vmatpush1.msra.mxu0 0.0
        %5587 = vmatprep.subr.mxu0 0.0
        %5588 = vmatpush1.msra.mxu0 0.0
        %5589 = vmatprep.subr.mxu0 0.0
        %5590 = vmatpush1.msra.mxu0 0.0
        %5591 = vmatprep.subr.mxu0 0.0
        %5592 = vmatpush1.msra.mxu0 0.0
        %5593 = vmatprep.subr.mxu0 0.0
        %5594 = vmatpush1.msra.mxu0 0.0
        %5595 = vmatprep.subr.mxu0 0.0
        %5596 = vmatpush1.msra.mxu0 0.0
        %5597 = vmatprep.subr.mxu0 0.0
        %5598 = vmatpush1.msra.mxu0 0.0
        %5599 = vmatprep.subr.mxu0 0.0
        %5600 = vmatpush1.msra.mxu0 0.0
        %5601 = vmatprep.subr.mxu0 0.0
        %5602 = vmatpush1.msra.mxu0 0.0
        %5603 = vmatprep.subr.mxu0 0.0
        %5604 = vmatpush1.msra.mxu0 0.0
        %5605 = vmatprep.subr.mxu0 0.0
        %5606 = vmatpush1.msra.mxu0 0.0
        %5607 = vmatprep.subr.mxu0 0.0
        %5608 = vmatpush1.msra.mxu0 0.0
        %5609 = vmatprep.subr.mxu0 0.0
        %5610 = vmatpush1.msra.mxu0 0.0
        %5611 = vmatprep.subr.mxu0 0.0
        %5612 = vmatpush1.msra.mxu0 0.0
        %5613 = vmatprep.subr.mxu0 0.0
        %5614 = vmatpush1.msra.mxu0 0.0
        %5615 = vmatprep.subr.mxu0 0.0
        %5616 = vmatpush1.msra.mxu0 0.0
        %5617 = vmatprep.subr.mxu0 0.0
        %5618 = vmatpush1.msra.mxu0 0.0
        %5619 = vmatprep.subr.mxu0 0.0
        %5620 = vmatpush1.msra.mxu0 0.0
        %5621 = vmatprep.subr.mxu0 0.0
        %5622 = vmatpush1.msra.mxu0 0.0
        %5623 = vmatprep.subr.mxu0 0.0
        %5624 = vmatpush1.msra.mxu0 0.0
        %5625 = vmatprep.mubr.f32.mxu0 0.0
        %5626 = vmatmul.mubr.f32.gmra.mrb[0].mxu0 %v5559
        %v5627 = vpop.f32.mrb[0].mxu0
        %v5628 = vadd.f32 %v2022, %v5627
        %v5629 = vpop.f32.mrb[0].mxu0
        %5630 = vdwg.mxu0
        %v5631 = vmul.f32 %v5548, %v5547
        %v5632 = vsub.f32 1.0, %v5548
        %v5633 = vmul.f32 %v5632, %v5628
        %v5634 = vadd.f32 %v5631, %v5633
        %v5636 = vsel %vm695, %v5634, 0
        %5638 = vmatprep.subr.mxu0 0.0
        %5639 = vmatpush1.msra.mxu0 %v2011
        %5640 = vmatprep.subr.mxu0 0.0
        %5641 = vmatpush1.msra.mxu0 0.0
        %5642 = vmatprep.subr.mxu0 0.0
        %5643 = vmatpush1.msra.mxu0 0.0
        %5644 = vmatprep.subr.mxu0 0.0
        %5645 = vmatpush1.msra.mxu0 0.0
        %5646 = vmatprep.subr.mxu0 0.0
        %5647 = vmatpush1.msra.mxu0 0.0
        %5648 = vmatprep.subr.mxu0 0.0
        %5649 = vmatpush1.msra.mxu0 0.0
        %5650 = vmatprep.subr.mxu0 0.0
        %5651 = vmatpush1.msra.mxu0 0.0
        %5652 = vmatprep.subr.mxu0 0.0
        %5653 = vmatpush1.msra.mxu0 0.0
        %5654 = vmatprep.subr.mxu0 0.0
        %5655 = vmatpush1.msra.mxu0 0.0
        %5656 = vmatprep.subr.mxu0 0.0
        %5657 = vmatpush1.msra.mxu0 0.0
        %5658 = vmatprep.subr.mxu0 0.0
        %5659 = vmatpush1.msra.mxu0 0.0
        %5660 = vmatprep.subr.mxu0 0.0
        %5661 = vmatpush1.msra.mxu0 0.0
        %5662 = vmatprep.subr.mxu0 0.0
        %5663 = vmatpush1.msra.mxu0 0.0
        %5664 = vmatprep.subr.mxu0 0.0
        %5665 = vmatpush1.msra.mxu0 0.0
        %5666 = vmatprep.subr.mxu0 0.0
        %5667 = vmatpush1.msra.mxu0 0.0
        %5668 = vmatprep.subr.mxu0 0.0
        %5669 = vmatpush1.msra.mxu0 0.0
        %5670 = vmatprep.subr.mxu0 0.0
        %5671 = vmatpush1.msra.mxu0 0.0
        %5672 = vmatprep.subr.mxu0 0.0
        %5673 = vmatpush1.msra.mxu0 0.0
        %5674 = vmatprep.subr.mxu0 0.0
        %5675 = vmatpush1.msra.mxu0 0.0
        %5676 = vmatprep.subr.mxu0 0.0
        %5677 = vmatpush1.msra.mxu0 0.0
        %5678 = vmatprep.subr.mxu0 0.0
        %5679 = vmatpush1.msra.mxu0 0.0
        %5680 = vmatprep.subr.mxu0 0.0
        %5681 = vmatpush1.msra.mxu0 0.0
        %5682 = vmatprep.subr.mxu0 0.0
        %5683 = vmatpush1.msra.mxu0 0.0
        %5684 = vmatprep.subr.mxu0 0.0
        %5685 = vmatpush1.msra.mxu0 0.0
        %5686 = vmatprep.subr.mxu0 0.0
        %5687 = vmatpush1.msra.mxu0 0.0
        %5688 = vmatprep.subr.mxu0 0.0
        %5689 = vmatpush1.msra.mxu0 0.0
        %5690 = vmatprep.subr.mxu0 0.0
        %5691 = vmatpush1.msra.mxu0 0.0
        %5692 = vmatprep.subr.mxu0 0.0
        %5693 = vmatpush1.msra.mxu0 0.0
        %5694 = vmatprep.subr.mxu0 0.0
        %5695 = vmatpush1.msra.mxu0 0.0
        %5696 = vmatprep.subr.mxu0 0.0
        %5697 = vmatpush1.msra.mxu0 0.0
        %5698 = vmatprep.subr.mxu0 0.0
        %5699 = vmatpush1.msra.mxu0 0.0
        %5700 = vmatprep.subr.mxu0 0.0
        %5701 = vmatpush1.msra.mxu0 0.0
        %5702 = vmatprep.mubr.f32.mxu0 0.0
        %5703 = vmatmul.mubr.f32.gmra.mrb[0].mxu0 %v5636
        %v5704 = vpop.f32.mrb[0].mxu0
        %v5705 = vadd.f32 %v2029, %v5704
        %v5706 = vpop.f32.mrb[0].mxu0
        %5707 = vdwg.mxu0
        %v5708 = vld [vmem:[#allocation6 + $0x50] sm:$0xff]
        %v5709 = vmul.f32 %v5708, %v5705
        %v5710 = vsub.f32 1.0, %v5708
        %v5711 = vmul.f32 %v5710, %v5628
        %v5712 = vadd.f32 %v5709, %v5711
        %v5713 = vsub.f32 %v5547, %v5628
        %v5714 = vand.u32 2147483647, %v5713
        %v5715 = vsub.f32 %v5547, %v5705
        %v5716 = vand.u32 2147483647, %v5715
        %v5717 = vadd.f32 %v5714, %v5716
        %v5718 = vsub.f32 %v5547, %v5712
        %v5719 = vand.u32 2147483647, %v5718
        %v5720 = vadd.f32 %v5717, %v5719
        %v5721 = vmul.f32 %v5720, %v5549
        %v5722 = vadd.f32 %v5370, %v5721
        %v5723 = vmul.f32 %v5632, %v5712
        %v5724 = vadd.f32 %v5631, %v5723
        %5726 = vrot.lane.b32.xlu0 %v5724, 80
        %v5727 = vpop.permute.xlu0 %5726
        %vm5729 = vcmask 720512
        %5730 = vst.msk [vmem:[%s625] sm:$0xff] %vm5729, %v5727
        %5731 = vmatprep.subr.mxu0 0.0
        %5732 = vmatpush1.msra.mxu0 %v2013
        %5733 = vmatprep.subr.mxu0 0.0
        %5734 = vmatpush1.msra.mxu0 %v2014
        %5735 = vmatprep.subr.mxu0 0.0
        %5736 = vmatpush1.msra.mxu0 %v2015
        %5737 = vmatprep.subr.mxu0 0.0
        %5738 = vmatpush1.msra.mxu0 %v2016
        %5739 = vmatprep.subr.mxu0 0.0
        %5740 = vmatpush1.msra.mxu0 0.0
        %5741 = vmatprep.subr.mxu0 0.0
        %5742 = vmatpush1.msra.mxu0 0.0
        %5743 = vmatprep.subr.mxu0 0.0
        %5744 = vmatpush1.msra.mxu0 0.0
        %5745 = vmatprep.subr.mxu0 0.0
        %5746 = vmatpush1.msra.mxu0 0.0
        %5747 = vmatprep.subr.mxu0 0.0
        %5748 = vmatpush1.msra.mxu0 0.0
        %5749 = vmatprep.subr.mxu0 0.0
        %5750 = vmatpush1.msra.mxu0 0.0
        %5751 = vmatprep.subr.mxu0 0.0
        %5752 = vmatpush1.msra.mxu0 0.0
        %5753 = vmatprep.subr.mxu0 0.0
        %5754 = vmatpush1.msra.mxu0 0.0
        %5755 = vmatprep.subr.mxu0 0.0
        %5756 = vmatpush1.msra.mxu0 0.0
        %5757 = vmatprep.subr.mxu0 0.0
        %5758 = vmatpush1.msra.mxu0 0.0
        %5759 = vmatprep.subr.mxu0 0.0
        %5760 = vmatpush1.msra.mxu0 0.0
        %5761 = vmatprep.subr.mxu0 0.0
        %5762 = vmatpush1.msra.mxu0 0.0
        %5763 = vmatprep.subr.mxu0 0.0
        %5764 = vmatpush1.msra.mxu0 0.0
        %5765 = vmatprep.subr.mxu0 0.0
        %5766 = vmatpush1.msra.mxu0 0.0
        %5767 = vmatprep.subr.mxu0 0.0
        %5768 = vmatpush1.msra.mxu0 0.0
        %5769 = vmatprep.subr.mxu0 0.0
        %5770 = vmatpush1.msra.mxu0 0.0
        %5771 = vmatprep.subr.mxu0 0.0
        %5772 = vmatpush1.msra.mxu0 0.0
        %5773 = vmatprep.subr.mxu0 0.0
        %5774 = vmatpush1.msra.mxu0 0.0
        %5775 = vmatprep.subr.mxu0 0.0
        %5776 = vmatpush1.msra.mxu0 0.0
        %5777 = vmatprep.subr.mxu0 0.0
        %5778 = vmatpush1.msra.mxu0 0.0
        %5779 = vmatprep.subr.mxu0 0.0
        %5780 = vmatpush1.msra.mxu0 0.0
        %5781 = vmatprep.subr.mxu0 0.0
        %5782 = vmatpush1.msra.mxu0 0.0
        %5783 = vmatprep.subr.mxu0 0.0
        %5784 = vmatpush1.msra.mxu0 0.0
        %5785 = vmatprep.subr.mxu0 0.0
        %5786 = vmatpush1.msra.mxu0 0.0
        %5787 = vmatprep.subr.mxu0 0.0
        %5788 = vmatpush1.msra.mxu0 0.0
        %5789 = vmatprep.subr.mxu0 0.0
        %5790 = vmatpush1.msra.mxu0 0.0
        %5791 = vmatprep.subr.mxu0 0.0
        %5792 = vmatpush1.msra.mxu0 0.0
        %5793 = vmatprep.subr.mxu0 0.0
        %5794 = vmatpush1.msra.mxu0 0.0
        %5795 = vmatprep.mubr.f32.mxu0 0.0
        %5796 = vmatmul.mubr.f32.gmra.mrb[0].mxu0 %v5559
        %v5797 = vpop.f32.mrb[0].mxu0
        %v5798 = vadd.f32 0.0, %v5797
        %v5799 = vpop.f32.mrb[0].mxu0
        %5800 = vdwg.mxu0
        %v5801 = vsel %vm695, %v5724, 0
        %5803 = vmatprep.subr.mxu0 0.0
        %5804 = vmatpush1.msra.mxu0 %v2012
        %5805 = vmatprep.subr.mxu0 0.0
        %5806 = vmatpush1.msra.mxu0 0.0
        %5807 = vmatprep.subr.mxu0 0.0
        %5808 = vmatpush1.msra.mxu0 0.0
        %5809 = vmatprep.subr.mxu0 0.0
        %5810 = vmatpush1.msra.mxu0 0.0
        %5811 = vmatprep.subr.mxu0 0.0
        %5812 = vmatpush1.msra.mxu0 0.0
        %5813 = vmatprep.subr.mxu0 0.0
        %5814 = vmatpush1.msra.mxu0 0.0
        %5815 = vmatprep.subr.mxu0 0.0
        %5816 = vmatpush1.msra.mxu0 0.0
        %5817 = vmatprep.subr.mxu0 0.0
        %5818 = vmatpush1.msra.mxu0 0.0
        %5819 = vmatprep.subr.mxu0 0.0
        %5820 = vmatpush1.msra.mxu0 0.0
        %5821 = vmatprep.subr.mxu0 0.0
        %5822 = vmatpush1.msra.mxu0 0.0
        %5823 = vmatprep.subr.mxu0 0.0
        %5824 = vmatpush1.msra.mxu0 0.0
        %5825 = vmatprep.subr.mxu0 0.0
        %5826 = vmatpush1.msra.mxu0 0.0
        %5827 = vmatprep.subr.mxu0 0.0
        %5828 = vmatpush1.msra.mxu0 0.0
        %5829 = vmatprep.subr.mxu0 0.0
        %5830 = vmatpush1.msra.mxu0 0.0
        %5831 = vmatprep.subr.mxu0 0.0
        %5832 = vmatpush1.msra.mxu0 0.0
        %5833 = vmatprep.subr.mxu0 0.0
        %5834 = vmatpush1.msra.mxu0 0.0
        %5835 = vmatprep.subr.mxu0 0.0
        %5836 = vmatpush1.msra.mxu0 0.0
        %5837 = vmatprep.subr.mxu0 0.0
        %5838 = vmatpush1.msra.mxu0 0.0
        %5839 = vmatprep.subr.mxu0 0.0
        %5840 = vmatpush1.msra.mxu0 0.0
        %5841 = vmatprep.subr.mxu0 0.0
        %5842 = vmatpush1.msra.mxu0 0.0
        %5843 = vmatprep.subr.mxu0 0.0
        %5844 = vmatpush1.msra.mxu0 0.0
        %5845 = vmatprep.subr.mxu0 0.0
        %5846 = vmatpush1.msra.mxu0 0.0
        %5847 = vmatprep.subr.mxu0 0.0
        %5848 = vmatpush1.msra.mxu0 0.0
        %5849 = vmatprep.subr.mxu0 0.0
        %5850 = vmatpush1.msra.mxu0 0.0
        %5851 = vmatprep.subr.mxu0 0.0
        %5852 = vmatpush1.msra.mxu0 0.0
        %5853 = vmatprep.subr.mxu0 0.0
        %5854 = vmatpush1.msra.mxu0 0.0
        %5855 = vmatprep.subr.mxu0 0.0
        %5856 = vmatpush1.msra.mxu0 0.0
        %5857 = vmatprep.subr.mxu0 0.0
        %5858 = vmatpush1.msra.mxu0 0.0
        %5859 = vmatprep.subr.mxu0 0.0
        %5860 = vmatpush1.msra.mxu0 0.0
        %5861 = vmatprep.subr.mxu0 0.0
        %5862 = vmatpush1.msra.mxu0 0.0
        %5863 = vmatprep.subr.mxu0 0.0
        %5864 = vmatpush1.msra.mxu0 0.0
        %5865 = vmatprep.subr.mxu0 0.0
        %5866 = vmatpush1.msra.mxu0 0.0
        %5867 = vmatprep.mubr.f32.mxu0 0.0
        %5868 = vmatmul.mubr.f32.gmra.mrb[0].mxu0 %v5801
        %v5869 = vpop.f32.mrb[0].mxu0
        %v5870 = vadd.f32 %v5798, %v5869
        %v5871 = vpop.f32.mrb[0].mxu0
        %5872 = vdwg.mxu0
        %v5873 = vld [vmem:[#allocation7 + $0x50] sm:$0xff]
        %v5874 = vadd.f32 %v5870, %v5873
        %v5875 = vxor.u32 %v5874, 2147483648
        %v5876 = vmul.f32 %v5875, 1.442695
        %v5877 = vpow.pop %v5876
        %v5878 = vadd.f32 %v5877, 1.0
        %v5879 = vrcp.pop %v5878
        %v5880 = vmul.f32 1.0, %v5879
        %v5881 = vtanh.pop %v5874
        %v5882 = vmul.f32 %v5880, %v5540
        %5884 = vrot.lane.b32.xlu0 %v5881, 64
        %v5885 = vpop.permute.xlu0 %5884
        %v5887 = vmul.f32 %v5880, %v5885
        %5889 = vrot.lane.b32.xlu0 %v5887, 32
        %v5890 = vpop.permute.xlu0 %5889
        %v5892 = vadd.f32 %v5882, %v5890
        %v5893 = vtanh.pop %v5892
        %5895 = vrot.lane.b32.xlu0 %v5893, 64
        %v5896 = vpop.permute.xlu0 %5895
        %v5898 = vmul.f32 %v5880, %v5896
        %v5899 = vld [vmem:[%s632 + $0x58] sm:$0xff]
        %v5900 = vld [vmem:[%s638 + $0x58] sm:$0xff]
        %v5901 = vld [vmem:[#allocation8 + $0x58] sm:$0xff]
        %v5902 = vld [vmem:[#allocation5 + $0x58] sm:$0xff]
        %5904 = vrot.lane.b32.xlu0 %v5902, 96
        %v5905 = vpop.permute.xlu0 %5904
        %v5907 = vmul.f32 %v5898, %v5905
        %5909 = vrot.lane.b32.xlu0 %v5907, 32
        %v5910 = vpop.permute.xlu0 %5909
        %v5911 = vsel %vm953, %v5910, 0
        %5913 = vmatprep.subr.mxu0 0.0
        %5914 = vmatpush1.msra.mxu0 %v2007
        %5915 = vmatprep.subr.mxu0 0.0
        %5916 = vmatpush1.msra.mxu0 %v2008
        %5917 = vmatprep.subr.mxu0 0.0
        %5918 = vmatpush1.msra.mxu0 %v2009
        %5919 = vmatprep.subr.mxu0 0.0
        %5920 = vmatpush1.msra.mxu0 %v2010
        %5921 = vmatprep.subr.mxu0 0.0
        %5922 = vmatpush1.msra.mxu0 0.0
        %5923 = vmatprep.subr.mxu0 0.0
        %5924 = vmatpush1.msra.mxu0 0.0
        %5925 = vmatprep.subr.mxu0 0.0
        %5926 = vmatpush1.msra.mxu0 0.0
        %5927 = vmatprep.subr.mxu0 0.0
        %5928 = vmatpush1.msra.mxu0 0.0
        %5929 = vmatprep.subr.mxu0 0.0
        %5930 = vmatpush1.msra.mxu0 0.0
        %5931 = vmatprep.subr.mxu0 0.0
        %5932 = vmatpush1.msra.mxu0 0.0
        %5933 = vmatprep.subr.mxu0 0.0
        %5934 = vmatpush1.msra.mxu0 0.0
        %5935 = vmatprep.subr.mxu0 0.0
        %5936 = vmatpush1.msra.mxu0 0.0
        %5937 = vmatprep.subr.mxu0 0.0
        %5938 = vmatpush1.msra.mxu0 0.0
        %5939 = vmatprep.subr.mxu0 0.0
        %5940 = vmatpush1.msra.mxu0 0.0
        %5941 = vmatprep.subr.mxu0 0.0
        %5942 = vmatpush1.msra.mxu0 0.0
        %5943 = vmatprep.subr.mxu0 0.0
        %5944 = vmatpush1.msra.mxu0 0.0
        %5945 = vmatprep.subr.mxu0 0.0
        %5946 = vmatpush1.msra.mxu0 0.0
        %5947 = vmatprep.subr.mxu0 0.0
        %5948 = vmatpush1.msra.mxu0 0.0
        %5949 = vmatprep.subr.mxu0 0.0
        %5950 = vmatpush1.msra.mxu0 0.0
        %5951 = vmatprep.subr.mxu0 0.0
        %5952 = vmatpush1.msra.mxu0 0.0
        %5953 = vmatprep.subr.mxu0 0.0
        %5954 = vmatpush1.msra.mxu0 0.0
        %5955 = vmatprep.subr.mxu0 0.0
        %5956 = vmatpush1.msra.mxu0 0.0
        %5957 = vmatprep.subr.mxu0 0.0
        %5958 = vmatpush1.msra.mxu0 0.0
        %5959 = vmatprep.subr.mxu0 0.0
        %5960 = vmatpush1.msra.mxu0 0.0
        %5961 = vmatprep.subr.mxu0 0.0
        %5962 = vmatpush1.msra.mxu0 0.0
        %5963 = vmatprep.subr.mxu0 0.0
        %5964 = vmatpush1.msra.mxu0 0.0
        %5965 = vmatprep.subr.mxu0 0.0
        %5966 = vmatpush1.msra.mxu0 0.0
        %5967 = vmatprep.subr.mxu0 0.0
        %5968 = vmatpush1.msra.mxu0 0.0
        %5969 = vmatprep.subr.mxu0 0.0
        %5970 = vmatpush1.msra.mxu0 0.0
        %5971 = vmatprep.subr.mxu0 0.0
        %5972 = vmatpush1.msra.mxu0 0.0
        %5973 = vmatprep.subr.mxu0 0.0
        %5974 = vmatpush1.msra.mxu0 0.0
        %5975 = vmatprep.subr.mxu0 0.0
        %5976 = vmatpush1.msra.mxu0 0.0
        %5977 = vmatprep.mubr.f32.mxu0 0.0
        %5978 = vmatmul.mubr.f32.gmra.mrb[0].mxu0 %v5911
        %v5979 = vpop.f32.mrb[0].mxu0
        %v5980 = vadd.f32 %v2022, %v5979
        %v5981 = vpop.f32.mrb[0].mxu0
        %5982 = vdwg.mxu0
        %v5983 = vmul.f32 %v5900, %v5899
        %v5984 = vsub.f32 1.0, %v5900
        %v5985 = vmul.f32 %v5984, %v5980
        %v5986 = vadd.f32 %v5983, %v5985
        %v5988 = vsel %vm695, %v5986, 0
        %5990 = vmatprep.subr.mxu0 0.0
        %5991 = vmatpush1.msra.mxu0 %v2011
        %5992 = vmatprep.subr.mxu0 0.0
        %5993 = vmatpush1.msra.mxu0 0.0
        %5994 = vmatprep.subr.mxu0 0.0
        %5995 = vmatpush1.msra.mxu0 0.0
        %5996 = vmatprep.subr.mxu0 0.0
        %5997 = vmatpush1.msra.mxu0 0.0
        %5998 = vmatprep.subr.mxu0 0.0
        %5999 = vmatpush1.msra.mxu0 0.0
        %6000 = vmatprep.subr.mxu0 0.0
        %6001 = vmatpush1.msra.mxu0 0.0
        %6002 = vmatprep.subr.mxu0 0.0
        %6003 = vmatpush1.msra.mxu0 0.0
        %6004 = vmatprep.subr.mxu0 0.0
        %6005 = vmatpush1.msra.mxu0 0.0
        %6006 = vmatprep.subr.mxu0 0.0
        %6007 = vmatpush1.msra.mxu0 0.0
        %6008 = vmatprep.subr.mxu0 0.0
        %6009 = vmatpush1.msra.mxu0 0.0
        %6010 = vmatprep.subr.mxu0 0.0
        %6011 = vmatpush1.msra.mxu0 0.0
        %6012 = vmatprep.subr.mxu0 0.0
        %6013 = vmatpush1.msra.mxu0 0.0
        %6014 = vmatprep.subr.mxu0 0.0
        %6015 = vmatpush1.msra.mxu0 0.0
        %6016 = vmatprep.subr.mxu0 0.0
        %6017 = vmatpush1.msra.mxu0 0.0
        %6018 = vmatprep.subr.mxu0 0.0
        %6019 = vmatpush1.msra.mxu0 0.0
        %6020 = vmatprep.subr.mxu0 0.0
        %6021 = vmatpush1.msra.mxu0 0.0
        %6022 = vmatprep.subr.mxu0 0.0
        %6023 = vmatpush1.msra.mxu0 0.0
        %6024 = vmatprep.subr.mxu0 0.0
        %6025 = vmatpush1.msra.mxu0 0.0
        %6026 = vmatprep.subr.mxu0 0.0
        %6027 = vmatpush1.msra.mxu0 0.0
        %6028 = vmatprep.subr.mxu0 0.0
        %6029 = vmatpush1.msra.mxu0 0.0
        %6030 = vmatprep.subr.mxu0 0.0
        %6031 = vmatpush1.msra.mxu0 0.0
        %6032 = vmatprep.subr.mxu0 0.0
        %6033 = vmatpush1.msra.mxu0 0.0
        %6034 = vmatprep.subr.mxu0 0.0
        %6035 = vmatpush1.msra.mxu0 0.0
        %6036 = vmatprep.subr.mxu0 0.0
        %6037 = vmatpush1.msra.mxu0 0.0
        %6038 = vmatprep.subr.mxu0 0.0
        %6039 = vmatpush1.msra.mxu0 0.0
        %6040 = vmatprep.subr.mxu0 0.0
        %6041 = vmatpush1.msra.mxu0 0.0
        %6042 = vmatprep.subr.mxu0 0.0
        %6043 = vmatpush1.msra.mxu0 0.0
        %6044 = vmatprep.subr.mxu0 0.0
        %6045 = vmatpush1.msra.mxu0 0.0
        %6046 = vmatprep.subr.mxu0 0.0
        %6047 = vmatpush1.msra.mxu0 0.0
        %6048 = vmatprep.subr.mxu0 0.0
        %6049 = vmatpush1.msra.mxu0 0.0
        %6050 = vmatprep.subr.mxu0 0.0
        %6051 = vmatpush1.msra.mxu0 0.0
        %6052 = vmatprep.subr.mxu0 0.0
        %6053 = vmatpush1.msra.mxu0 0.0
        %6054 = vmatprep.mubr.f32.mxu0 0.0
        %6055 = vmatmul.mubr.f32.gmra.mrb[0].mxu0 %v5988
        %v6056 = vpop.f32.mrb[0].mxu0
        %v6057 = vadd.f32 %v2029, %v6056
        %v6058 = vpop.f32.mrb[0].mxu0
        %6059 = vdwg.mxu0
        %v6060 = vld [vmem:[#allocation6 + $0x58] sm:$0xff]
        %v6061 = vmul.f32 %v6060, %v6057
        %v6062 = vsub.f32 1.0, %v6060
        %v6063 = vmul.f32 %v6062, %v5980
        %v6064 = vadd.f32 %v6061, %v6063
        %v6065 = vsub.f32 %v5899, %v5980
        %v6066 = vand.u32 2147483647, %v6065
        %v6067 = vsub.f32 %v5899, %v6057
        %v6068 = vand.u32 2147483647, %v6067
        %v6069 = vadd.f32 %v6066, %v6068
        %v6070 = vsub.f32 %v5899, %v6064
        %v6071 = vand.u32 2147483647, %v6070
        %v6072 = vadd.f32 %v6069, %v6071
        %v6073 = vmul.f32 %v6072, %v5901
        %v6074 = vadd.f32 %v5722, %v6073
        %v6075 = vmul.f32 %v5984, %v6064
        %v6076 = vadd.f32 %v5983, %v6075
        %6078 = vrot.lane.b32.xlu0 %v6076, 88
        %v6079 = vpop.permute.xlu0 %6078
        %vm6081 = vcmask 786112
        %6082 = vst.msk [vmem:[%s625] sm:$0xff] %vm6081, %v6079
        %6083 = vmatprep.subr.mxu0 0.0
        %6084 = vmatpush1.msra.mxu0 %v2013
        %6085 = vmatprep.subr.mxu0 0.0
        %6086 = vmatpush1.msra.mxu0 %v2014
        %6087 = vmatprep.subr.mxu0 0.0
        %6088 = vmatpush1.msra.mxu0 %v2015
        %6089 = vmatprep.subr.mxu0 0.0
        %6090 = vmatpush1.msra.mxu0 %v2016
        %6091 = vmatprep.subr.mxu0 0.0
        %6092 = vmatpush1.msra.mxu0 0.0
        %6093 = vmatprep.subr.mxu0 0.0
        %6094 = vmatpush1.msra.mxu0 0.0
        %6095 = vmatprep.subr.mxu0 0.0
        %6096 = vmatpush1.msra.mxu0 0.0
        %6097 = vmatprep.subr.mxu0 0.0
        %6098 = vmatpush1.msra.mxu0 0.0
        %6099 = vmatprep.subr.mxu0 0.0
        %6100 = vmatpush1.msra.mxu0 0.0
        %6101 = vmatprep.subr.mxu0 0.0
        %6102 = vmatpush1.msra.mxu0 0.0
        %6103 = vmatprep.subr.mxu0 0.0
        %6104 = vmatpush1.msra.mxu0 0.0
        %6105 = vmatprep.subr.mxu0 0.0
        %6106 = vmatpush1.msra.mxu0 0.0
        %6107 = vmatprep.subr.mxu0 0.0
        %6108 = vmatpush1.msra.mxu0 0.0
        %6109 = vmatprep.subr.mxu0 0.0
        %6110 = vmatpush1.msra.mxu0 0.0
        %6111 = vmatprep.subr.mxu0 0.0
        %6112 = vmatpush1.msra.mxu0 0.0
        %6113 = vmatprep.subr.mxu0 0.0
        %6114 = vmatpush1.msra.mxu0 0.0
        %6115 = vmatprep.subr.mxu0 0.0
        %6116 = vmatpush1.msra.mxu0 0.0
        %6117 = vmatprep.subr.mxu0 0.0
        %6118 = vmatpush1.msra.mxu0 0.0
        %6119 = vmatprep.subr.mxu0 0.0
        %6120 = vmatpush1.msra.mxu0 0.0
        %6121 = vmatprep.subr.mxu0 0.0
        %6122 = vmatpush1.msra.mxu0 0.0
        %6123 = vmatprep.subr.mxu0 0.0
        %6124 = vmatpush1.msra.mxu0 0.0
        %6125 = vmatprep.subr.mxu0 0.0
        %6126 = vmatpush1.msra.mxu0 0.0
        %6127 = vmatprep.subr.mxu0 0.0
        %6128 = vmatpush1.msra.mxu0 0.0
        %6129 = vmatprep.subr.mxu0 0.0
        %6130 = vmatpush1.msra.mxu0 0.0
        %6131 = vmatprep.subr.mxu0 0.0
        %6132 = vmatpush1.msra.mxu0 0.0
        %6133 = vmatprep.subr.mxu0 0.0
        %6134 = vmatpush1.msra.mxu0 0.0
        %6135 = vmatprep.subr.mxu0 0.0
        %6136 = vmatpush1.msra.mxu0 0.0
        %6137 = vmatprep.subr.mxu0 0.0
        %6138 = vmatpush1.msra.mxu0 0.0
        %6139 = vmatprep.subr.mxu0 0.0
        %6140 = vmatpush1.msra.mxu0 0.0
        %6141 = vmatprep.subr.mxu0 0.0
        %6142 = vmatpush1.msra.mxu0 0.0
        %6143 = vmatprep.subr.mxu0 0.0
        %6144 = vmatpush1.msra.mxu0 0.0
        %6145 = vmatprep.subr.mxu0 0.0
        %6146 = vmatpush1.msra.mxu0 0.0
        %6147 = vmatprep.mubr.f32.mxu0 0.0
        %6148 = vmatmul.mubr.f32.gmra.mrb[0].mxu0 %v5911
        %v6149 = vpop.f32.mrb[0].mxu0
        %v6150 = vadd.f32 0.0, %v6149
        %v6151 = vpop.f32.mrb[0].mxu0
        %6152 = vdwg.mxu0
        %v6153 = vsel %vm695, %v6076, 0
        %6155 = vmatprep.subr.mxu0 0.0
        %6156 = vmatpush1.msra.mxu0 %v2012
        %6157 = vmatprep.subr.mxu0 0.0
        %6158 = vmatpush1.msra.mxu0 0.0
        %6159 = vmatprep.subr.mxu0 0.0
        %6160 = vmatpush1.msra.mxu0 0.0
        %6161 = vmatprep.subr.mxu0 0.0
        %6162 = vmatpush1.msra.mxu0 0.0
        %6163 = vmatprep.subr.mxu0 0.0
        %6164 = vmatpush1.msra.mxu0 0.0
        %6165 = vmatprep.subr.mxu0 0.0
        %6166 = vmatpush1.msra.mxu0 0.0
        %6167 = vmatprep.subr.mxu0 0.0
        %6168 = vmatpush1.msra.mxu0 0.0
        %6169 = vmatprep.subr.mxu0 0.0
        %6170 = vmatpush1.msra.mxu0 0.0
        %6171 = vmatprep.subr.mxu0 0.0
        %6172 = vmatpush1.msra.mxu0 0.0
        %6173 = vmatprep.subr.mxu0 0.0
        %6174 = vmatpush1.msra.mxu0 0.0
        %6175 = vmatprep.subr.mxu0 0.0
        %6176 = vmatpush1.msra.mxu0 0.0
        %6177 = vmatprep.subr.mxu0 0.0
        %6178 = vmatpush1.msra.mxu0 0.0
        %6179 = vmatprep.subr.mxu0 0.0
        %6180 = vmatpush1.msra.mxu0 0.0
        %6181 = vmatprep.subr.mxu0 0.0
        %6182 = vmatpush1.msra.mxu0 0.0
        %6183 = vmatprep.subr.mxu0 0.0
        %6184 = vmatpush1.msra.mxu0 0.0
        %6185 = vmatprep.subr.mxu0 0.0
        %6186 = vmatpush1.msra.mxu0 0.0
        %6187 = vmatprep.subr.mxu0 0.0
        %6188 = vmatpush1.msra.mxu0 0.0
        %6189 = vmatprep.subr.mxu0 0.0
        %6190 = vmatpush1.msra.mxu0 0.0
        %6191 = vmatprep.subr.mxu0 0.0
        %6192 = vmatpush1.msra.mxu0 0.0
        %6193 = vmatprep.subr.mxu0 0.0
        %6194 = vmatpush1.msra.mxu0 0.0
        %6195 = vmatprep.subr.mxu0 0.0
        %6196 = vmatpush1.msra.mxu0 0.0
        %6197 = vmatprep.subr.mxu0 0.0
        %6198 = vmatpush1.msra.mxu0 0.0
        %6199 = vmatprep.subr.mxu0 0.0
        %6200 = vmatpush1.msra.mxu0 0.0
        %6201 = vmatprep.subr.mxu0 0.0
        %6202 = vmatpush1.msra.mxu0 0.0
        %6203 = vmatprep.subr.mxu0 0.0
        %6204 = vmatpush1.msra.mxu0 0.0
        %6205 = vmatprep.subr.mxu0 0.0
        %6206 = vmatpush1.msra.mxu0 0.0
        %6207 = vmatprep.subr.mxu0 0.0
        %6208 = vmatpush1.msra.mxu0 0.0
        %6209 = vmatprep.subr.mxu0 0.0
        %6210 = vmatpush1.msra.mxu0 0.0
        %6211 = vmatprep.subr.mxu0 0.0
        %6212 = vmatpush1.msra.mxu0 0.0
        %6213 = vmatprep.subr.mxu0 0.0
        %6214 = vmatpush1.msra.mxu0 0.0
        %6215 = vmatprep.subr.mxu0 0.0
        %6216 = vmatpush1.msra.mxu0 0.0
        %6217 = vmatprep.subr.mxu0 0.0
        %6218 = vmatpush1.msra.mxu0 0.0
        %6219 = vmatprep.mubr.f32.mxu0 0.0
        %6220 = vmatmul.mubr.f32.gmra.mrb[0].mxu0 %v6153
        %v6221 = vpop.f32.mrb[0].mxu0
        %v6222 = vadd.f32 %v6150, %v6221
        %v6223 = vpop.f32.mrb[0].mxu0
        %6224 = vdwg.mxu0
        %v6225 = vld [vmem:[#allocation7 + $0x58] sm:$0xff]
        %v6226 = vadd.f32 %v6222, %v6225
        %v6227 = vxor.u32 %v6226, 2147483648
        %v6228 = vmul.f32 %v6227, 1.442695
        %v6229 = vpow.pop %v6228
        %v6230 = vadd.f32 %v6229, 1.0
        %v6231 = vrcp.pop %v6230
        %v6232 = vmul.f32 1.0, %v6231
        %v6233 = vtanh.pop %v6226
        %v6234 = vmul.f32 %v6232, %v5892
        %6236 = vrot.lane.b32.xlu0 %v6233, 64
        %v6237 = vpop.permute.xlu0 %6236
        %v6239 = vmul.f32 %v6232, %v6237
        %6241 = vrot.lane.b32.xlu0 %v6239, 32
        %v6242 = vpop.permute.xlu0 %6241
        %v6244 = vadd.f32 %v6234, %v6242
        %v6245 = vtanh.pop %v6244
        %6247 = vrot.lane.b32.xlu0 %v6245, 64
        %v6248 = vpop.permute.xlu0 %6247
        %v6250 = vmul.f32 %v6232, %v6248
        %v6251 = vld [vmem:[%s632 + $0x60] sm:$0xff]
        %v6252 = vld [vmem:[%s638 + $0x60] sm:$0xff]
        %v6253 = vld [vmem:[#allocation8 + $0x60] sm:$0xff]
        %v6254 = vld [vmem:[#allocation5 + $0x60] sm:$0xff]
        %6256 = vrot.lane.b32.xlu0 %v6254, 96
        %v6257 = vpop.permute.xlu0 %6256
        %v6259 = vmul.f32 %v6250, %v6257
        %6261 = vrot.lane.b32.xlu0 %v6259, 32
        %v6262 = vpop.permute.xlu0 %6261
        %v6263 = vsel %vm953, %v6262, 0
        %6265 = vmatprep.subr.mxu0 0.0
        %6266 = vmatpush1.msra.mxu0 %v2007
        %6267 = vmatprep.subr.mxu0 0.0
        %6268 = vmatpush1.msra.mxu0 %v2008
        %6269 = vmatprep.subr.mxu0 0.0
        %6270 = vmatpush1.msra.mxu0 %v2009
        %6271 = vmatprep.subr.mxu0 0.0
        %6272 = vmatpush1.msra.mxu0 %v2010
        %6273 = vmatprep.subr.mxu0 0.0
        %6274 = vmatpush1.msra.mxu0 0.0
        %6275 = vmatprep.subr.mxu0 0.0
        %6276 = vmatpush1.msra.mxu0 0.0
        %6277 = vmatprep.subr.mxu0 0.0
        %6278 = vmatpush1.msra.mxu0 0.0
        %6279 = vmatprep.subr.mxu0 0.0
        %6280 = vmatpush1.msra.mxu0 0.0
        %6281 = vmatprep.subr.mxu0 0.0
        %6282 = vmatpush1.msra.mxu0 0.0
        %6283 = vmatprep.subr.mxu0 0.0
        %6284 = vmatpush1.msra.mxu0 0.0
        %6285 = vmatprep.subr.mxu0 0.0
        %6286 = vmatpush1.msra.mxu0 0.0
        %6287 = vmatprep.subr.mxu0 0.0
        %6288 = vmatpush1.msra.mxu0 0.0
        %6289 = vmatprep.subr.mxu0 0.0
        %6290 = vmatpush1.msra.mxu0 0.0
        %6291 = vmatprep.subr.mxu0 0.0
        %6292 = vmatpush1.msra.mxu0 0.0
        %6293 = vmatprep.subr.mxu0 0.0
        %6294 = vmatpush1.msra.mxu0 0.0
        %6295 = vmatprep.subr.mxu0 0.0
        %6296 = vmatpush1.msra.mxu0 0.0
        %6297 = vmatprep.subr.mxu0 0.0
        %6298 = vmatpush1.msra.mxu0 0.0
        %6299 = vmatprep.subr.mxu0 0.0
        %6300 = vmatpush1.msra.mxu0 0.0
        %6301 = vmatprep.subr.mxu0 0.0
        %6302 = vmatpush1.msra.mxu0 0.0
        %6303 = vmatprep.subr.mxu0 0.0
        %6304 = vmatpush1.msra.mxu0 0.0
        %6305 = vmatprep.subr.mxu0 0.0
        %6306 = vmatpush1.msra.mxu0 0.0
        %6307 = vmatprep.subr.mxu0 0.0
        %6308 = vmatpush1.msra.mxu0 0.0
        %6309 = vmatprep.subr.mxu0 0.0
        %6310 = vmatpush1.msra.mxu0 0.0
        %6311 = vmatprep.subr.mxu0 0.0
        %6312 = vmatpush1.msra.mxu0 0.0
        %6313 = vmatprep.subr.mxu0 0.0
        %6314 = vmatpush1.msra.mxu0 0.0
        %6315 = vmatprep.subr.mxu0 0.0
        %6316 = vmatpush1.msra.mxu0 0.0
        %6317 = vmatprep.subr.mxu0 0.0
        %6318 = vmatpush1.msra.mxu0 0.0
        %6319 = vmatprep.subr.mxu0 0.0
        %6320 = vmatpush1.msra.mxu0 0.0
        %6321 = vmatprep.subr.mxu0 0.0
        %6322 = vmatpush1.msra.mxu0 0.0
        %6323 = vmatprep.subr.mxu0 0.0
        %6324 = vmatpush1.msra.mxu0 0.0
        %6325 = vmatprep.subr.mxu0 0.0
        %6326 = vmatpush1.msra.mxu0 0.0
        %6327 = vmatprep.subr.mxu0 0.0
        %6328 = vmatpush1.msra.mxu0 0.0
        %6329 = vmatprep.mubr.f32.mxu0 0.0
        %6330 = vmatmul.mubr.f32.gmra.mrb[0].mxu0 %v6263
        %v6331 = vpop.f32.mrb[0].mxu0
        %v6332 = vadd.f32 %v2022, %v6331
        %v6333 = vpop.f32.mrb[0].mxu0
        %6334 = vdwg.mxu0
        %v6335 = vmul.f32 %v6252, %v6251
        %v6336 = vsub.f32 1.0, %v6252
        %v6337 = vmul.f32 %v6336, %v6332
        %v6338 = vadd.f32 %v6335, %v6337
        %v6340 = vsel %vm695, %v6338, 0
        %6342 = vmatprep.subr.mxu0 0.0
        %6343 = vmatpush1.msra.mxu0 %v2011
        %6344 = vmatprep.subr.mxu0 0.0
        %6345 = vmatpush1.msra.mxu0 0.0
        %6346 = vmatprep.subr.mxu0 0.0
        %6347 = vmatpush1.msra.mxu0 0.0
        %6348 = vmatprep.subr.mxu0 0.0
        %6349 = vmatpush1.msra.mxu0 0.0
        %6350 = vmatprep.subr.mxu0 0.0
        %6351 = vmatpush1.msra.mxu0 0.0
        %6352 = vmatprep.subr.mxu0 0.0
        %6353 = vmatpush1.msra.mxu0 0.0
        %6354 = vmatprep.subr.mxu0 0.0
        %6355 = vmatpush1.msra.mxu0 0.0
        %6356 = vmatprep.subr.mxu0 0.0
        %6357 = vmatpush1.msra.mxu0 0.0
        %6358 = vmatprep.subr.mxu0 0.0
        %6359 = vmatpush1.msra.mxu0 0.0
        %6360 = vmatprep.subr.mxu0 0.0
        %6361 = vmatpush1.msra.mxu0 0.0
        %6362 = vmatprep.subr.mxu0 0.0
        %6363 = vmatpush1.msra.mxu0 0.0
        %6364 = vmatprep.subr.mxu0 0.0
        %6365 = vmatpush1.msra.mxu0 0.0
        %6366 = vmatprep.subr.mxu0 0.0
        %6367 = vmatpush1.msra.mxu0 0.0
        %6368 = vmatprep.subr.mxu0 0.0
        %6369 = vmatpush1.msra.mxu0 0.0
        %6370 = vmatprep.subr.mxu0 0.0
        %6371 = vmatpush1.msra.mxu0 0.0
        %6372 = vmatprep.subr.mxu0 0.0
        %6373 = vmatpush1.msra.mxu0 0.0
        %6374 = vmatprep.subr.mxu0 0.0
        %6375 = vmatpush1.msra.mxu0 0.0
        %6376 = vmatprep.subr.mxu0 0.0
        %6377 = vmatpush1.msra.mxu0 0.0
        %6378 = vmatprep.subr.mxu0 0.0
        %6379 = vmatpush1.msra.mxu0 0.0
        %6380 = vmatprep.subr.mxu0 0.0
        %6381 = vmatpush1.msra.mxu0 0.0
        %6382 = vmatprep.subr.mxu0 0.0
        %6383 = vmatpush1.msra.mxu0 0.0
        %6384 = vmatprep.subr.mxu0 0.0
        %6385 = vmatpush1.msra.mxu0 0.0
        %6386 = vmatprep.subr.mxu0 0.0
        %6387 = vmatpush1.msra.mxu0 0.0
        %6388 = vmatprep.subr.mxu0 0.0
        %6389 = vmatpush1.msra.mxu0 0.0
        %6390 = vmatprep.subr.mxu0 0.0
        %6391 = vmatpush1.msra.mxu0 0.0
        %6392 = vmatprep.subr.mxu0 0.0
        %6393 = vmatpush1.msra.mxu0 0.0
        %6394 = vmatprep.subr.mxu0 0.0
        %6395 = vmatpush1.msra.mxu0 0.0
        %6396 = vmatprep.subr.mxu0 0.0
        %6397 = vmatpush1.msra.mxu0 0.0
        %6398 = vmatprep.subr.mxu0 0.0
        %6399 = vmatpush1.msra.mxu0 0.0
        %6400 = vmatprep.subr.mxu0 0.0
        %6401 = vmatpush1.msra.mxu0 0.0
        %6402 = vmatprep.subr.mxu0 0.0
        %6403 = vmatpush1.msra.mxu0 0.0
        %6404 = vmatprep.subr.mxu0 0.0
        %6405 = vmatpush1.msra.mxu0 0.0
        %6406 = vmatprep.mubr.f32.mxu0 0.0
        %6407 = vmatmul.mubr.f32.gmra.mrb[0].mxu0 %v6340
        %v6408 = vpop.f32.mrb[0].mxu0
        %v6409 = vadd.f32 %v2029, %v6408
        %v6410 = vpop.f32.mrb[0].mxu0
        %6411 = vdwg.mxu0
        %v6412 = vld [vmem:[#allocation6 + $0x60] sm:$0xff]
        %v6413 = vmul.f32 %v6412, %v6409
        %v6414 = vsub.f32 1.0, %v6412
        %v6415 = vmul.f32 %v6414, %v6332
        %v6416 = vadd.f32 %v6413, %v6415
        %v6417 = vsub.f32 %v6251, %v6332
        %v6418 = vand.u32 2147483647, %v6417
        %v6419 = vsub.f32 %v6251, %v6409
        %v6420 = vand.u32 2147483647, %v6419
        %v6421 = vadd.f32 %v6418, %v6420
        %v6422 = vsub.f32 %v6251, %v6416
        %v6423 = vand.u32 2147483647, %v6422
        %v6424 = vadd.f32 %v6421, %v6423
        %v6425 = vmul.f32 %v6424, %v6253
        %v6426 = vadd.f32 %v6074, %v6425
        %v6427 = vmul.f32 %v6336, %v6416
        %v6428 = vadd.f32 %v6335, %v6427
        %6430 = vrot.lane.b32.xlu0 %v6428, 96
        %v6431 = vpop.permute.xlu0 %6430
        %vm6433 = vcmask 851712
        %6434 = vst.msk [vmem:[%s625] sm:$0xff] %vm6433, %v6431
        %6435 = vmatprep.subr.mxu0 0.0
        %6436 = vmatpush1.msra.mxu0 %v2013
        %6437 = vmatprep.subr.mxu0 0.0
        %6438 = vmatpush1.msra.mxu0 %v2014
        %6439 = vmatprep.subr.mxu0 0.0
        %6440 = vmatpush1.msra.mxu0 %v2015
        %6441 = vmatprep.subr.mxu0 0.0
        %6442 = vmatpush1.msra.mxu0 %v2016
        %6443 = vmatprep.subr.mxu0 0.0
        %6444 = vmatpush1.msra.mxu0 0.0
        %6445 = vmatprep.subr.mxu0 0.0
        %6446 = vmatpush1.msra.mxu0 0.0
        %6447 = vmatprep.subr.mxu0 0.0
        %6448 = vmatpush1.msra.mxu0 0.0
        %6449 = vmatprep.subr.mxu0 0.0
        %6450 = vmatpush1.msra.mxu0 0.0
        %6451 = vmatprep.subr.mxu0 0.0
        %6452 = vmatpush1.msra.mxu0 0.0
        %6453 = vmatprep.subr.mxu0 0.0
        %6454 = vmatpush1.msra.mxu0 0.0
        %6455 = vmatprep.subr.mxu0 0.0
        %6456 = vmatpush1.msra.mxu0 0.0
        %6457 = vmatprep.subr.mxu0 0.0
        %6458 = vmatpush1.msra.mxu0 0.0
        %6459 = vmatprep.subr.mxu0 0.0
        %6460 = vmatpush1.msra.mxu0 0.0
        %6461 = vmatprep.subr.mxu0 0.0
        %6462 = vmatpush1.msra.mxu0 0.0
        %6463 = vmatprep.subr.mxu0 0.0
        %6464 = vmatpush1.msra.mxu0 0.0
        %6465 = vmatprep.subr.mxu0 0.0
        %6466 = vmatpush1.msra.mxu0 0.0
        %6467 = vmatprep.subr.mxu0 0.0
        %6468 = vmatpush1.msra.mxu0 0.0
        %6469 = vmatprep.subr.mxu0 0.0
        %6470 = vmatpush1.msra.mxu0 0.0
        %6471 = vmatprep.subr.mxu0 0.0
        %6472 = vmatpush1.msra.mxu0 0.0
        %6473 = vmatprep.subr.mxu0 0.0
        %6474 = vmatpush1.msra.mxu0 0.0
        %6475 = vmatprep.subr.mxu0 0.0
        %6476 = vmatpush1.msra.mxu0 0.0
        %6477 = vmatprep.subr.mxu0 0.0
        %6478 = vmatpush1.msra.mxu0 0.0
        %6479 = vmatprep.subr.mxu0 0.0
        %6480 = vmatpush1.msra.mxu0 0.0
        %6481 = vmatprep.subr.mxu0 0.0
        %6482 = vmatpush1.msra.mxu0 0.0
        %6483 = vmatprep.subr.mxu0 0.0
        %6484 = vmatpush1.msra.mxu0 0.0
        %6485 = vmatprep.subr.mxu0 0.0
        %6486 = vmatpush1.msra.mxu0 0.0
        %6487 = vmatprep.subr.mxu0 0.0
        %6488 = vmatpush1.msra.mxu0 0.0
        %6489 = vmatprep.subr.mxu0 0.0
        %6490 = vmatpush1.msra.mxu0 0.0
        %6491 = vmatprep.subr.mxu0 0.0
        %6492 = vmatpush1.msra.mxu0 0.0
        %6493 = vmatprep.subr.mxu0 0.0
        %6494 = vmatpush1.msra.mxu0 0.0
        %6495 = vmatprep.subr.mxu0 0.0
        %6496 = vmatpush1.msra.mxu0 0.0
        %6497 = vmatprep.subr.mxu0 0.0
        %6498 = vmatpush1.msra.mxu0 0.0
        %6499 = vmatprep.mubr.f32.mxu0 0.0
        %6500 = vmatmul.mubr.f32.gmra.mrb[0].mxu0 %v6263
        %v6501 = vpop.f32.mrb[0].mxu0
        %v6502 = vadd.f32 0.0, %v6501
        %v6503 = vpop.f32.mrb[0].mxu0
        %6504 = vdwg.mxu0
        %v6505 = vsel %vm695, %v6428, 0
        %6507 = vmatprep.subr.mxu0 0.0
        %6508 = vmatpush1.msra.mxu0 %v2012
        %6509 = vmatprep.subr.mxu0 0.0
        %6510 = vmatpush1.msra.mxu0 0.0
        %6511 = vmatprep.subr.mxu0 0.0
        %6512 = vmatpush1.msra.mxu0 0.0
        %6513 = vmatprep.subr.mxu0 0.0
        %6514 = vmatpush1.msra.mxu0 0.0
        %6515 = vmatprep.subr.mxu0 0.0
        %6516 = vmatpush1.msra.mxu0 0.0
        %6517 = vmatprep.subr.mxu0 0.0
        %6518 = vmatpush1.msra.mxu0 0.0
        %6519 = vmatprep.subr.mxu0 0.0
        %6520 = vmatpush1.msra.mxu0 0.0
        %6521 = vmatprep.subr.mxu0 0.0
        %6522 = vmatpush1.msra.mxu0 0.0
        %6523 = vmatprep.subr.mxu0 0.0
        %6524 = vmatpush1.msra.mxu0 0.0
        %6525 = vmatprep.subr.mxu0 0.0
        %6526 = vmatpush1.msra.mxu0 0.0
        %6527 = vmatprep.subr.mxu0 0.0
        %6528 = vmatpush1.msra.mxu0 0.0
        %6529 = vmatprep.subr.mxu0 0.0
        %6530 = vmatpush1.msra.mxu0 0.0
        %6531 = vmatprep.subr.mxu0 0.0
        %6532 = vmatpush1.msra.mxu0 0.0
        %6533 = vmatprep.subr.mxu0 0.0
        %6534 = vmatpush1.msra.mxu0 0.0
        %6535 = vmatprep.subr.mxu0 0.0
        %6536 = vmatpush1.msra.mxu0 0.0
        %6537 = vmatprep.subr.mxu0 0.0
        %6538 = vmatpush1.msra.mxu0 0.0
        %6539 = vmatprep.subr.mxu0 0.0
        %6540 = vmatpush1.msra.mxu0 0.0
        %6541 = vmatprep.subr.mxu0 0.0
        %6542 = vmatpush1.msra.mxu0 0.0
        %6543 = vmatprep.subr.mxu0 0.0
        %6544 = vmatpush1.msra.mxu0 0.0
        %6545 = vmatprep.subr.mxu0 0.0
        %6546 = vmatpush1.msra.mxu0 0.0
        %6547 = vmatprep.subr.mxu0 0.0
        %6548 = vmatpush1.msra.mxu0 0.0
        %6549 = vmatprep.subr.mxu0 0.0
        %6550 = vmatpush1.msra.mxu0 0.0
        %6551 = vmatprep.subr.mxu0 0.0
        %6552 = vmatpush1.msra.mxu0 0.0
        %6553 = vmatprep.subr.mxu0 0.0
        %6554 = vmatpush1.msra.mxu0 0.0
        %6555 = vmatprep.subr.mxu0 0.0
        %6556 = vmatpush1.msra.mxu0 0.0
        %6557 = vmatprep.subr.mxu0 0.0
        %6558 = vmatpush1.msra.mxu0 0.0
        %6559 = vmatprep.subr.mxu0 0.0
        %6560 = vmatpush1.msra.mxu0 0.0
        %6561 = vmatprep.subr.mxu0 0.0
        %6562 = vmatpush1.msra.mxu0 0.0
        %6563 = vmatprep.subr.mxu0 0.0
        %6564 = vmatpush1.msra.mxu0 0.0
        %6565 = vmatprep.subr.mxu0 0.0
        %6566 = vmatpush1.msra.mxu0 0.0
        %6567 = vmatprep.subr.mxu0 0.0
        %6568 = vmatpush1.msra.mxu0 0.0
        %6569 = vmatprep.subr.mxu0 0.0
        %6570 = vmatpush1.msra.mxu0 0.0
        %6571 = vmatprep.mubr.f32.mxu0 0.0
        %6572 = vmatmul.mubr.f32.gmra.mrb[0].mxu0 %v6505
        %v6573 = vpop.f32.mrb[0].mxu0
        %v6574 = vadd.f32 %v6502, %v6573
        %v6575 = vpop.f32.mrb[0].mxu0
        %6576 = vdwg.mxu0
        %v6577 = vld [vmem:[#allocation7 + $0x60] sm:$0xff]
        %v6578 = vadd.f32 %v6574, %v6577
        %v6579 = vxor.u32 %v6578, 2147483648
        %v6580 = vmul.f32 %v6579, 1.442695
        %v6581 = vpow.pop %v6580
        %v6582 = vadd.f32 %v6581, 1.0
        %v6583 = vrcp.pop %v6582
        %v6584 = vmul.f32 1.0, %v6583
        %v6585 = vtanh.pop %v6578
        %v6586 = vmul.f32 %v6584, %v6244
        %6588 = vrot.lane.b32.xlu0 %v6585, 64
        %v6589 = vpop.permute.xlu0 %6588
        %v6591 = vmul.f32 %v6584, %v6589
        %6593 = vrot.lane.b32.xlu0 %v6591, 32
        %v6594 = vpop.permute.xlu0 %6593
        %v6596 = vadd.f32 %v6586, %v6594
        %v6597 = vtanh.pop %v6596
        %6599 = vrot.lane.b32.xlu0 %v6597, 64
        %v6600 = vpop.permute.xlu0 %6599
        %v6602 = vmul.f32 %v6584, %v6600
        %v6603 = vld [vmem:[%s632 + $0x68] sm:$0xff]
        %v6604 = vld [vmem:[%s638 + $0x68] sm:$0xff]
        %v6605 = vld [vmem:[#allocation8 + $0x68] sm:$0xff]
        %v6606 = vld [vmem:[#allocation5 + $0x68] sm:$0xff]
        %6608 = vrot.lane.b32.xlu0 %v6606, 96
        %v6609 = vpop.permute.xlu0 %6608
        %v6611 = vmul.f32 %v6602, %v6609
        %6613 = vrot.lane.b32.xlu0 %v6611, 32
        %v6614 = vpop.permute.xlu0 %6613
        %v6615 = vsel %vm953, %v6614, 0
        %6617 = vmatprep.subr.mxu0 0.0
        %6618 = vmatpush1.msra.mxu0 %v2007
        %6619 = vmatprep.subr.mxu0 0.0
        %6620 = vmatpush1.msra.mxu0 %v2008
        %6621 = vmatprep.subr.mxu0 0.0
        %6622 = vmatpush1.msra.mxu0 %v2009
        %6623 = vmatprep.subr.mxu0 0.0
        %6624 = vmatpush1.msra.mxu0 %v2010
        %6625 = vmatprep.subr.mxu0 0.0
        %6626 = vmatpush1.msra.mxu0 0.0
        %6627 = vmatprep.subr.mxu0 0.0
        %6628 = vmatpush1.msra.mxu0 0.0
        %6629 = vmatprep.subr.mxu0 0.0
        %6630 = vmatpush1.msra.mxu0 0.0
        %6631 = vmatprep.subr.mxu0 0.0
        %6632 = vmatpush1.msra.mxu0 0.0
        %6633 = vmatprep.subr.mxu0 0.0
        %6634 = vmatpush1.msra.mxu0 0.0
        %6635 = vmatprep.subr.mxu0 0.0
        %6636 = vmatpush1.msra.mxu0 0.0
        %6637 = vmatprep.subr.mxu0 0.0
        %6638 = vmatpush1.msra.mxu0 0.0
        %6639 = vmatprep.subr.mxu0 0.0
        %6640 = vmatpush1.msra.mxu0 0.0
        %6641 = vmatprep.subr.mxu0 0.0
        %6642 = vmatpush1.msra.mxu0 0.0
        %6643 = vmatprep.subr.mxu0 0.0
        %6644 = vmatpush1.msra.mxu0 0.0
        %6645 = vmatprep.subr.mxu0 0.0
        %6646 = vmatpush1.msra.mxu0 0.0
        %6647 = vmatprep.subr.mxu0 0.0
        %6648 = vmatpush1.msra.mxu0 0.0
        %6649 = vmatprep.subr.mxu0 0.0
        %6650 = vmatpush1.msra.mxu0 0.0
        %6651 = vmatprep.subr.mxu0 0.0
        %6652 = vmatpush1.msra.mxu0 0.0
        %6653 = vmatprep.subr.mxu0 0.0
        %6654 = vmatpush1.msra.mxu0 0.0
        %6655 = vmatprep.subr.mxu0 0.0
        %6656 = vmatpush1.msra.mxu0 0.0
        %6657 = vmatprep.subr.mxu0 0.0
        %6658 = vmatpush1.msra.mxu0 0.0
        %6659 = vmatprep.subr.mxu0 0.0
        %6660 = vmatpush1.msra.mxu0 0.0
        %6661 = vmatprep.subr.mxu0 0.0
        %6662 = vmatpush1.msra.mxu0 0.0
        %6663 = vmatprep.subr.mxu0 0.0
        %6664 = vmatpush1.msra.mxu0 0.0
        %6665 = vmatprep.subr.mxu0 0.0
        %6666 = vmatpush1.msra.mxu0 0.0
        %6667 = vmatprep.subr.mxu0 0.0
        %6668 = vmatpush1.msra.mxu0 0.0
        %6669 = vmatprep.subr.mxu0 0.0
        %6670 = vmatpush1.msra.mxu0 0.0
        %6671 = vmatprep.subr.mxu0 0.0
        %6672 = vmatpush1.msra.mxu0 0.0
        %6673 = vmatprep.subr.mxu0 0.0
        %6674 = vmatpush1.msra.mxu0 0.0
        %6675 = vmatprep.subr.mxu0 0.0
        %6676 = vmatpush1.msra.mxu0 0.0
        %6677 = vmatprep.subr.mxu0 0.0
        %6678 = vmatpush1.msra.mxu0 0.0
        %6679 = vmatprep.subr.mxu0 0.0
        %6680 = vmatpush1.msra.mxu0 0.0
        %6681 = vmatprep.mubr.f32.mxu0 0.0
        %6682 = vmatmul.mubr.f32.gmra.mrb[0].mxu0 %v6615
        %v6683 = vpop.f32.mrb[0].mxu0
        %v6684 = vadd.f32 %v2022, %v6683
        %v6685 = vpop.f32.mrb[0].mxu0
        %6686 = vdwg.mxu0
        %v6687 = vmul.f32 %v6604, %v6603
        %v6688 = vsub.f32 1.0, %v6604
        %v6689 = vmul.f32 %v6688, %v6684
        %v6690 = vadd.f32 %v6687, %v6689
        %v6692 = vsel %vm695, %v6690, 0
        %6694 = vmatprep.subr.mxu0 0.0
        %6695 = vmatpush1.msra.mxu0 %v2011
        %6696 = vmatprep.subr.mxu0 0.0
        %6697 = vmatpush1.msra.mxu0 0.0
        %6698 = vmatprep.subr.mxu0 0.0
        %6699 = vmatpush1.msra.mxu0 0.0
        %6700 = vmatprep.subr.mxu0 0.0
        %6701 = vmatpush1.msra.mxu0 0.0
        %6702 = vmatprep.subr.mxu0 0.0
        %6703 = vmatpush1.msra.mxu0 0.0
        %6704 = vmatprep.subr.mxu0 0.0
        %6705 = vmatpush1.msra.mxu0 0.0
        %6706 = vmatprep.subr.mxu0 0.0
        %6707 = vmatpush1.msra.mxu0 0.0
        %6708 = vmatprep.subr.mxu0 0.0
        %6709 = vmatpush1.msra.mxu0 0.0
        %6710 = vmatprep.subr.mxu0 0.0
        %6711 = vmatpush1.msra.mxu0 0.0
        %6712 = vmatprep.subr.mxu0 0.0
        %6713 = vmatpush1.msra.mxu0 0.0
        %6714 = vmatprep.subr.mxu0 0.0
        %6715 = vmatpush1.msra.mxu0 0.0
        %6716 = vmatprep.subr.mxu0 0.0
        %6717 = vmatpush1.msra.mxu0 0.0
        %6718 = vmatprep.subr.mxu0 0.0
        %6719 = vmatpush1.msra.mxu0 0.0
        %6720 = vmatprep.subr.mxu0 0.0
        %6721 = vmatpush1.msra.mxu0 0.0
        %6722 = vmatprep.subr.mxu0 0.0
        %6723 = vmatpush1.msra.mxu0 0.0
        %6724 = vmatprep.subr.mxu0 0.0
        %6725 = vmatpush1.msra.mxu0 0.0
        %6726 = vmatprep.subr.mxu0 0.0
        %6727 = vmatpush1.msra.mxu0 0.0
        %6728 = vmatprep.subr.mxu0 0.0
        %6729 = vmatpush1.msra.mxu0 0.0
        %6730 = vmatprep.subr.mxu0 0.0
        %6731 = vmatpush1.msra.mxu0 0.0
        %6732 = vmatprep.subr.mxu0 0.0
        %6733 = vmatpush1.msra.mxu0 0.0
        %6734 = vmatprep.subr.mxu0 0.0
        %6735 = vmatpush1.msra.mxu0 0.0
        %6736 = vmatprep.subr.mxu0 0.0
        %6737 = vmatpush1.msra.mxu0 0.0
        %6738 = vmatprep.subr.mxu0 0.0
        %6739 = vmatpush1.msra.mxu0 0.0
        %6740 = vmatprep.subr.mxu0 0.0
        %6741 = vmatpush1.msra.mxu0 0.0
        %6742 = vmatprep.subr.mxu0 0.0
        %6743 = vmatpush1.msra.mxu0 0.0
        %6744 = vmatprep.subr.mxu0 0.0
        %6745 = vmatpush1.msra.mxu0 0.0
        %6746 = vmatprep.subr.mxu0 0.0
        %6747 = vmatpush1.msra.mxu0 0.0
        %6748 = vmatprep.subr.mxu0 0.0
        %6749 = vmatpush1.msra.mxu0 0.0
        %6750 = vmatprep.subr.mxu0 0.0
        %6751 = vmatpush1.msra.mxu0 0.0
        %6752 = vmatprep.subr.mxu0 0.0
        %6753 = vmatpush1.msra.mxu0 0.0
        %6754 = vmatprep.subr.mxu0 0.0
        %6755 = vmatpush1.msra.mxu0 0.0
        %6756 = vmatprep.subr.mxu0 0.0
        %6757 = vmatpush1.msra.mxu0 0.0
        %6758 = vmatprep.mubr.f32.mxu0 0.0
        %6759 = vmatmul.mubr.f32.gmra.mrb[0].mxu0 %v6692
        %v6760 = vpop.f32.mrb[0].mxu0
        %v6761 = vadd.f32 %v2029, %v6760
        %v6762 = vpop.f32.mrb[0].mxu0
        %6763 = vdwg.mxu0
        %v6764 = vld [vmem:[#allocation6 + $0x68] sm:$0xff]
        %v6765 = vmul.f32 %v6764, %v6761
        %v6766 = vsub.f32 1.0, %v6764
        %v6767 = vmul.f32 %v6766, %v6684
        %v6768 = vadd.f32 %v6765, %v6767
        %v6769 = vsub.f32 %v6603, %v6684
        %v6770 = vand.u32 2147483647, %v6769
        %v6771 = vsub.f32 %v6603, %v6761
        %v6772 = vand.u32 2147483647, %v6771
        %v6773 = vadd.f32 %v6770, %v6772
        %v6774 = vsub.f32 %v6603, %v6768
        %v6775 = vand.u32 2147483647, %v6774
        %v6776 = vadd.f32 %v6773, %v6775
        %v6777 = vmul.f32 %v6776, %v6605
        %v6778 = vadd.f32 %v6426, %v6777
        %v6779 = vmul.f32 %v6688, %v6768
        %v6780 = vadd.f32 %v6687, %v6779
        %6782 = vrot.lane.b32.xlu0 %v6780, 104
        %v6783 = vpop.permute.xlu0 %6782
        %vm6785 = vcmask 917312
        %6786 = vst.msk [vmem:[%s625] sm:$0xff] %vm6785, %v6783
        %6787 = vmatprep.subr.mxu0 0.0
        %6788 = vmatpush1.msra.mxu0 %v2013
        %6789 = vmatprep.subr.mxu0 0.0
        %6790 = vmatpush1.msra.mxu0 %v2014
        %6791 = vmatprep.subr.mxu0 0.0
        %6792 = vmatpush1.msra.mxu0 %v2015
        %6793 = vmatprep.subr.mxu0 0.0
        %6794 = vmatpush1.msra.mxu0 %v2016
        %6795 = vmatprep.subr.mxu0 0.0
        %6796 = vmatpush1.msra.mxu0 0.0
        %6797 = vmatprep.subr.mxu0 0.0
        %6798 = vmatpush1.msra.mxu0 0.0
        %6799 = vmatprep.subr.mxu0 0.0
        %6800 = vmatpush1.msra.mxu0 0.0
        %6801 = vmatprep.subr.mxu0 0.0
        %6802 = vmatpush1.msra.mxu0 0.0
        %6803 = vmatprep.subr.mxu0 0.0
        %6804 = vmatpush1.msra.mxu0 0.0
        %6805 = vmatprep.subr.mxu0 0.0
        %6806 = vmatpush1.msra.mxu0 0.0
        %6807 = vmatprep.subr.mxu0 0.0
        %6808 = vmatpush1.msra.mxu0 0.0
        %6809 = vmatprep.subr.mxu0 0.0
        %6810 = vmatpush1.msra.mxu0 0.0
        %6811 = vmatprep.subr.mxu0 0.0
        %6812 = vmatpush1.msra.mxu0 0.0
        %6813 = vmatprep.subr.mxu0 0.0
        %6814 = vmatpush1.msra.mxu0 0.0
        %6815 = vmatprep.subr.mxu0 0.0
        %6816 = vmatpush1.msra.mxu0 0.0
        %6817 = vmatprep.subr.mxu0 0.0
        %6818 = vmatpush1.msra.mxu0 0.0
        %6819 = vmatprep.subr.mxu0 0.0
        %6820 = vmatpush1.msra.mxu0 0.0
        %6821 = vmatprep.subr.mxu0 0.0
        %6822 = vmatpush1.msra.mxu0 0.0
        %6823 = vmatprep.subr.mxu0 0.0
        %6824 = vmatpush1.msra.mxu0 0.0
        %6825 = vmatprep.subr.mxu0 0.0
        %6826 = vmatpush1.msra.mxu0 0.0
        %6827 = vmatprep.subr.mxu0 0.0
        %6828 = vmatpush1.msra.mxu0 0.0
        %6829 = vmatprep.subr.mxu0 0.0
        %6830 = vmatpush1.msra.mxu0 0.0
        %6831 = vmatprep.subr.mxu0 0.0
        %6832 = vmatpush1.msra.mxu0 0.0
        %6833 = vmatprep.subr.mxu0 0.0
        %6834 = vmatpush1.msra.mxu0 0.0
        %6835 = vmatprep.subr.mxu0 0.0
        %6836 = vmatpush1.msra.mxu0 0.0
        %6837 = vmatprep.subr.mxu0 0.0
        %6838 = vmatpush1.msra.mxu0 0.0
        %6839 = vmatprep.subr.mxu0 0.0
        %6840 = vmatpush1.msra.mxu0 0.0
        %6841 = vmatprep.subr.mxu0 0.0
        %6842 = vmatpush1.msra.mxu0 0.0
        %6843 = vmatprep.subr.mxu0 0.0
        %6844 = vmatpush1.msra.mxu0 0.0
        %6845 = vmatprep.subr.mxu0 0.0
        %6846 = vmatpush1.msra.mxu0 0.0
        %6847 = vmatprep.subr.mxu0 0.0
        %6848 = vmatpush1.msra.mxu0 0.0
        %6849 = vmatprep.subr.mxu0 0.0
        %6850 = vmatpush1.msra.mxu0 0.0
        %6851 = vmatprep.mubr.f32.mxu0 0.0
        %6852 = vmatmul.mubr.f32.gmra.mrb[0].mxu0 %v6615
        %v6853 = vpop.f32.mrb[0].mxu0
        %v6854 = vadd.f32 0.0, %v6853
        %v6855 = vpop.f32.mrb[0].mxu0
        %6856 = vdwg.mxu0
        %v6857 = vsel %vm695, %v6780, 0
        %6859 = vmatprep.subr.mxu0 0.0
        %6860 = vmatpush1.msra.mxu0 %v2012
        %6861 = vmatprep.subr.mxu0 0.0
        %6862 = vmatpush1.msra.mxu0 0.0
        %6863 = vmatprep.subr.mxu0 0.0
        %6864 = vmatpush1.msra.mxu0 0.0
        %6865 = vmatprep.subr.mxu0 0.0
        %6866 = vmatpush1.msra.mxu0 0.0
        %6867 = vmatprep.subr.mxu0 0.0
        %6868 = vmatpush1.msra.mxu0 0.0
        %6869 = vmatprep.subr.mxu0 0.0
        %6870 = vmatpush1.msra.mxu0 0.0
        %6871 = vmatprep.subr.mxu0 0.0
        %6872 = vmatpush1.msra.mxu0 0.0
        %6873 = vmatprep.subr.mxu0 0.0
        %6874 = vmatpush1.msra.mxu0 0.0
        %6875 = vmatprep.subr.mxu0 0.0
        %6876 = vmatpush1.msra.mxu0 0.0
        %6877 = vmatprep.subr.mxu0 0.0
        %6878 = vmatpush1.msra.mxu0 0.0
        %6879 = vmatprep.subr.mxu0 0.0
        %6880 = vmatpush1.msra.mxu0 0.0
        %6881 = vmatprep.subr.mxu0 0.0
        %6882 = vmatpush1.msra.mxu0 0.0
        %6883 = vmatprep.subr.mxu0 0.0
        %6884 = vmatpush1.msra.mxu0 0.0
        %6885 = vmatprep.subr.mxu0 0.0
        %6886 = vmatpush1.msra.mxu0 0.0
        %6887 = vmatprep.subr.mxu0 0.0
        %6888 = vmatpush1.msra.mxu0 0.0
        %6889 = vmatprep.subr.mxu0 0.0
        %6890 = vmatpush1.msra.mxu0 0.0
        %6891 = vmatprep.subr.mxu0 0.0
        %6892 = vmatpush1.msra.mxu0 0.0
        %6893 = vmatprep.subr.mxu0 0.0
        %6894 = vmatpush1.msra.mxu0 0.0
        %6895 = vmatprep.subr.mxu0 0.0
        %6896 = vmatpush1.msra.mxu0 0.0
        %6897 = vmatprep.subr.mxu0 0.0
        %6898 = vmatpush1.msra.mxu0 0.0
        %6899 = vmatprep.subr.mxu0 0.0
        %6900 = vmatpush1.msra.mxu0 0.0
        %6901 = vmatprep.subr.mxu0 0.0
        %6902 = vmatpush1.msra.mxu0 0.0
        %6903 = vmatprep.subr.mxu0 0.0
        %6904 = vmatpush1.msra.mxu0 0.0
        %6905 = vmatprep.subr.mxu0 0.0
        %6906 = vmatpush1.msra.mxu0 0.0
        %6907 = vmatprep.subr.mxu0 0.0
        %6908 = vmatpush1.msra.mxu0 0.0
        %6909 = vmatprep.subr.mxu0 0.0
        %6910 = vmatpush1.msra.mxu0 0.0
        %6911 = vmatprep.subr.mxu0 0.0
        %6912 = vmatpush1.msra.mxu0 0.0
        %6913 = vmatprep.subr.mxu0 0.0
        %6914 = vmatpush1.msra.mxu0 0.0
        %6915 = vmatprep.subr.mxu0 0.0
        %6916 = vmatpush1.msra.mxu0 0.0
        %6917 = vmatprep.subr.mxu0 0.0
        %6918 = vmatpush1.msra.mxu0 0.0
        %6919 = vmatprep.subr.mxu0 0.0
        %6920 = vmatpush1.msra.mxu0 0.0
        %6921 = vmatprep.subr.mxu0 0.0
        %6922 = vmatpush1.msra.mxu0 0.0
        %6923 = vmatprep.mubr.f32.mxu0 0.0
        %6924 = vmatmul.mubr.f32.gmra.mrb[0].mxu0 %v6857
        %v6925 = vpop.f32.mrb[0].mxu0
        %v6926 = vadd.f32 %v6854, %v6925
        %v6927 = vpop.f32.mrb[0].mxu0
        %6928 = vdwg.mxu0
        %v6929 = vld [vmem:[#allocation7 + $0x68] sm:$0xff]
        %v6930 = vadd.f32 %v6926, %v6929
        %v6931 = vxor.u32 %v6930, 2147483648
        %v6932 = vmul.f32 %v6931, 1.442695
        %v6933 = vpow.pop %v6932
        %v6934 = vadd.f32 %v6933, 1.0
        %v6935 = vrcp.pop %v6934
        %v6936 = vmul.f32 1.0, %v6935
        %v6937 = vtanh.pop %v6930
        %v6938 = vmul.f32 %v6936, %v6596
        %6940 = vrot.lane.b32.xlu0 %v6937, 64
        %v6941 = vpop.permute.xlu0 %6940
        %v6943 = vmul.f32 %v6936, %v6941
        %6945 = vrot.lane.b32.xlu0 %v6943, 32
        %v6946 = vpop.permute.xlu0 %6945
        %v6948 = vadd.f32 %v6938, %v6946
        %v6949 = vtanh.pop %v6948
        %6951 = vrot.lane.b32.xlu0 %v6949, 64
        %v6952 = vpop.permute.xlu0 %6951
        %v6954 = vmul.f32 %v6936, %v6952
        %v6955 = vld [vmem:[%s632 + $0x70] sm:$0xff]
        %v6956 = vld [vmem:[%s638 + $0x70] sm:$0xff]
        %v6957 = vld [vmem:[#allocation8 + $0x70] sm:$0xff]
        %v6958 = vld [vmem:[#allocation5 + $0x70] sm:$0xff]
        %6960 = vrot.lane.b32.xlu0 %v6958, 96
        %v6961 = vpop.permute.xlu0 %6960
        %v6963 = vmul.f32 %v6954, %v6961
        %6965 = vrot.lane.b32.xlu0 %v6963, 32
        %v6966 = vpop.permute.xlu0 %6965
        %v6967 = vsel %vm953, %v6966, 0
        %6969 = vmatprep.subr.mxu0 0.0
        %6970 = vmatpush1.msra.mxu0 %v2007
        %6971 = vmatprep.subr.mxu0 0.0
        %6972 = vmatpush1.msra.mxu0 %v2008
        %6973 = vmatprep.subr.mxu0 0.0
        %6974 = vmatpush1.msra.mxu0 %v2009
        %6975 = vmatprep.subr.mxu0 0.0
        %6976 = vmatpush1.msra.mxu0 %v2010
        %6977 = vmatprep.subr.mxu0 0.0
        %6978 = vmatpush1.msra.mxu0 0.0
        %6979 = vmatprep.subr.mxu0 0.0
        %6980 = vmatpush1.msra.mxu0 0.0
        %6981 = vmatprep.subr.mxu0 0.0
        %6982 = vmatpush1.msra.mxu0 0.0
        %6983 = vmatprep.subr.mxu0 0.0
        %6984 = vmatpush1.msra.mxu0 0.0
        %6985 = vmatprep.subr.mxu0 0.0
        %6986 = vmatpush1.msra.mxu0 0.0
        %6987 = vmatprep.subr.mxu0 0.0
        %6988 = vmatpush1.msra.mxu0 0.0
        %6989 = vmatprep.subr.mxu0 0.0
        %6990 = vmatpush1.msra.mxu0 0.0
        %6991 = vmatprep.subr.mxu0 0.0
        %6992 = vmatpush1.msra.mxu0 0.0
        %6993 = vmatprep.subr.mxu0 0.0
        %6994 = vmatpush1.msra.mxu0 0.0
        %6995 = vmatprep.subr.mxu0 0.0
        %6996 = vmatpush1.msra.mxu0 0.0
        %6997 = vmatprep.subr.mxu0 0.0
        %6998 = vmatpush1.msra.mxu0 0.0
        %6999 = vmatprep.subr.mxu0 0.0
        %7000 = vmatpush1.msra.mxu0 0.0
        %7001 = vmatprep.subr.mxu0 0.0
        %7002 = vmatpush1.msra.mxu0 0.0
        %7003 = vmatprep.subr.mxu0 0.0
        %7004 = vmatpush1.msra.mxu0 0.0
        %7005 = vmatprep.subr.mxu0 0.0
        %7006 = vmatpush1.msra.mxu0 0.0
        %7007 = vmatprep.subr.mxu0 0.0
        %7008 = vmatpush1.msra.mxu0 0.0
        %7009 = vmatprep.subr.mxu0 0.0
        %7010 = vmatpush1.msra.mxu0 0.0
        %7011 = vmatprep.subr.mxu0 0.0
        %7012 = vmatpush1.msra.mxu0 0.0
        %7013 = vmatprep.subr.mxu0 0.0
        %7014 = vmatpush1.msra.mxu0 0.0
        %7015 = vmatprep.subr.mxu0 0.0
        %7016 = vmatpush1.msra.mxu0 0.0
        %7017 = vmatprep.subr.mxu0 0.0
        %7018 = vmatpush1.msra.mxu0 0.0
        %7019 = vmatprep.subr.mxu0 0.0
        %7020 = vmatpush1.msra.mxu0 0.0
        %7021 = vmatprep.subr.mxu0 0.0
        %7022 = vmatpush1.msra.mxu0 0.0
        %7023 = vmatprep.subr.mxu0 0.0
        %7024 = vmatpush1.msra.mxu0 0.0
        %7025 = vmatprep.subr.mxu0 0.0
        %7026 = vmatpush1.msra.mxu0 0.0
        %7027 = vmatprep.subr.mxu0 0.0
        %7028 = vmatpush1.msra.mxu0 0.0
        %7029 = vmatprep.subr.mxu0 0.0
        %7030 = vmatpush1.msra.mxu0 0.0
        %7031 = vmatprep.subr.mxu0 0.0
        %7032 = vmatpush1.msra.mxu0 0.0
        %7033 = vmatprep.mubr.f32.mxu0 0.0
        %7034 = vmatmul.mubr.f32.gmra.mrb[0].mxu0 %v6967
        %v7035 = vpop.f32.mrb[0].mxu0
        %v7036 = vadd.f32 %v2022, %v7035
        %v7037 = vpop.f32.mrb[0].mxu0
        %7038 = vdwg.mxu0
        %v7039 = vmul.f32 %v6956, %v6955
        %v7040 = vsub.f32 1.0, %v6956
        %v7041 = vmul.f32 %v7040, %v7036
        %v7042 = vadd.f32 %v7039, %v7041
        %v7044 = vsel %vm695, %v7042, 0
        %7046 = vmatprep.subr.mxu0 0.0
        %7047 = vmatpush1.msra.mxu0 %v2011
        %7048 = vmatprep.subr.mxu0 0.0
        %7049 = vmatpush1.msra.mxu0 0.0
        %7050 = vmatprep.subr.mxu0 0.0
        %7051 = vmatpush1.msra.mxu0 0.0
        %7052 = vmatprep.subr.mxu0 0.0
        %7053 = vmatpush1.msra.mxu0 0.0
        %7054 = vmatprep.subr.mxu0 0.0
        %7055 = vmatpush1.msra.mxu0 0.0
        %7056 = vmatprep.subr.mxu0 0.0
        %7057 = vmatpush1.msra.mxu0 0.0
        %7058 = vmatprep.subr.mxu0 0.0
        %7059 = vmatpush1.msra.mxu0 0.0
        %7060 = vmatprep.subr.mxu0 0.0
        %7061 = vmatpush1.msra.mxu0 0.0
        %7062 = vmatprep.subr.mxu0 0.0
        %7063 = vmatpush1.msra.mxu0 0.0
        %7064 = vmatprep.subr.mxu0 0.0
        %7065 = vmatpush1.msra.mxu0 0.0
        %7066 = vmatprep.subr.mxu0 0.0
        %7067 = vmatpush1.msra.mxu0 0.0
        %7068 = vmatprep.subr.mxu0 0.0
        %7069 = vmatpush1.msra.mxu0 0.0
        %7070 = vmatprep.subr.mxu0 0.0
        %7071 = vmatpush1.msra.mxu0 0.0
        %7072 = vmatprep.subr.mxu0 0.0
        %7073 = vmatpush1.msra.mxu0 0.0
        %7074 = vmatprep.subr.mxu0 0.0
        %7075 = vmatpush1.msra.mxu0 0.0
        %7076 = vmatprep.subr.mxu0 0.0
        %7077 = vmatpush1.msra.mxu0 0.0
        %7078 = vmatprep.subr.mxu0 0.0
        %7079 = vmatpush1.msra.mxu0 0.0
        %7080 = vmatprep.subr.mxu0 0.0
        %7081 = vmatpush1.msra.mxu0 0.0
        %7082 = vmatprep.subr.mxu0 0.0
        %7083 = vmatpush1.msra.mxu0 0.0
        %7084 = vmatprep.subr.mxu0 0.0
        %7085 = vmatpush1.msra.mxu0 0.0
        %7086 = vmatprep.subr.mxu0 0.0
        %7087 = vmatpush1.msra.mxu0 0.0
        %7088 = vmatprep.subr.mxu0 0.0
        %7089 = vmatpush1.msra.mxu0 0.0
        %7090 = vmatprep.subr.mxu0 0.0
        %7091 = vmatpush1.msra.mxu0 0.0
        %7092 = vmatprep.subr.mxu0 0.0
        %7093 = vmatpush1.msra.mxu0 0.0
        %7094 = vmatprep.subr.mxu0 0.0
        %7095 = vmatpush1.msra.mxu0 0.0
        %7096 = vmatprep.subr.mxu0 0.0
        %7097 = vmatpush1.msra.mxu0 0.0
        %7098 = vmatprep.subr.mxu0 0.0
        %7099 = vmatpush1.msra.mxu0 0.0
        %7100 = vmatprep.subr.mxu0 0.0
        %7101 = vmatpush1.msra.mxu0 0.0
        %7102 = vmatprep.subr.mxu0 0.0
        %7103 = vmatpush1.msra.mxu0 0.0
        %7104 = vmatprep.subr.mxu0 0.0
        %7105 = vmatpush1.msra.mxu0 0.0
        %7106 = vmatprep.subr.mxu0 0.0
        %7107 = vmatpush1.msra.mxu0 0.0
        %7108 = vmatprep.subr.mxu0 0.0
        %7109 = vmatpush1.msra.mxu0 0.0
        %7110 = vmatprep.mubr.f32.mxu0 0.0
        %7111 = vmatmul.mubr.f32.gmra.mrb[0].mxu0 %v7044
        %v7112 = vpop.f32.mrb[0].mxu0
        %v7113 = vadd.f32 %v2029, %v7112
        %v7114 = vpop.f32.mrb[0].mxu0
        %7115 = vdwg.mxu0
        %v7116 = vld [vmem:[#allocation6 + $0x70] sm:$0xff]
        %v7117 = vmul.f32 %v7116, %v7113
        %v7118 = vsub.f32 1.0, %v7116
        %v7119 = vmul.f32 %v7118, %v7036
        %v7120 = vadd.f32 %v7117, %v7119
        %v7121 = vsub.f32 %v6955, %v7036
        %v7122 = vand.u32 2147483647, %v7121
        %v7123 = vsub.f32 %v6955, %v7113
        %v7124 = vand.u32 2147483647, %v7123
        %v7125 = vadd.f32 %v7122, %v7124
        %v7126 = vsub.f32 %v6955, %v7120
        %v7127 = vand.u32 2147483647, %v7126
        %v7128 = vadd.f32 %v7125, %v7127
        %v7129 = vmul.f32 %v7128, %v6957
        %v7130 = vadd.f32 %v6778, %v7129
        %v7131 = vmul.f32 %v7040, %v7120
        %v7132 = vadd.f32 %v7039, %v7131
        %7134 = vrot.lane.b32.xlu0 %v7132, 112
        %v7135 = vpop.permute.xlu0 %7134
        %vm7137 = vcmask 982912
        %7138 = vst.msk [vmem:[%s625] sm:$0xff] %vm7137, %v7135
        %7139 = vmatprep.subr.mxu0 0.0
        %7140 = vmatpush1.msra.mxu0 %v2013
        %7141 = vmatprep.subr.mxu0 0.0
        %7142 = vmatpush1.msra.mxu0 %v2014
        %7143 = vmatprep.subr.mxu0 0.0
        %7144 = vmatpush1.msra.mxu0 %v2015
        %7145 = vmatprep.subr.mxu0 0.0
        %7146 = vmatpush1.msra.mxu0 %v2016
        %7147 = vmatprep.subr.mxu0 0.0
        %7148 = vmatpush1.msra.mxu0 0.0
        %7149 = vmatprep.subr.mxu0 0.0
        %7150 = vmatpush1.msra.mxu0 0.0
        %7151 = vmatprep.subr.mxu0 0.0
        %7152 = vmatpush1.msra.mxu0 0.0
        %7153 = vmatprep.subr.mxu0 0.0
        %7154 = vmatpush1.msra.mxu0 0.0
        %7155 = vmatprep.subr.mxu0 0.0
        %7156 = vmatpush1.msra.mxu0 0.0
        %7157 = vmatprep.subr.mxu0 0.0
        %7158 = vmatpush1.msra.mxu0 0.0
        %7159 = vmatprep.subr.mxu0 0.0
        %7160 = vmatpush1.msra.mxu0 0.0
        %7161 = vmatprep.subr.mxu0 0.0
        %7162 = vmatpush1.msra.mxu0 0.0
        %7163 = vmatprep.subr.mxu0 0.0
        %7164 = vmatpush1.msra.mxu0 0.0
        %7165 = vmatprep.subr.mxu0 0.0
        %7166 = vmatpush1.msra.mxu0 0.0
        %7167 = vmatprep.subr.mxu0 0.0
        %7168 = vmatpush1.msra.mxu0 0.0
        %7169 = vmatprep.subr.mxu0 0.0
        %7170 = vmatpush1.msra.mxu0 0.0
        %7171 = vmatprep.subr.mxu0 0.0
        %7172 = vmatpush1.msra.mxu0 0.0
        %7173 = vmatprep.subr.mxu0 0.0
        %7174 = vmatpush1.msra.mxu0 0.0
        %7175 = vmatprep.subr.mxu0 0.0
        %7176 = vmatpush1.msra.mxu0 0.0
        %7177 = vmatprep.subr.mxu0 0.0
        %7178 = vmatpush1.msra.mxu0 0.0
        %7179 = vmatprep.subr.mxu0 0.0
        %7180 = vmatpush1.msra.mxu0 0.0
        %7181 = vmatprep.subr.mxu0 0.0
        %7182 = vmatpush1.msra.mxu0 0.0
        %7183 = vmatprep.subr.mxu0 0.0
        %7184 = vmatpush1.msra.mxu0 0.0
        %7185 = vmatprep.subr.mxu0 0.0
        %7186 = vmatpush1.msra.mxu0 0.0
        %7187 = vmatprep.subr.mxu0 0.0
        %7188 = vmatpush1.msra.mxu0 0.0
        %7189 = vmatprep.subr.mxu0 0.0
        %7190 = vmatpush1.msra.mxu0 0.0
        %7191 = vmatprep.subr.mxu0 0.0
        %7192 = vmatpush1.msra.mxu0 0.0
        %7193 = vmatprep.subr.mxu0 0.0
        %7194 = vmatpush1.msra.mxu0 0.0
        %7195 = vmatprep.subr.mxu0 0.0
        %7196 = vmatpush1.msra.mxu0 0.0
        %7197 = vmatprep.subr.mxu0 0.0
        %7198 = vmatpush1.msra.mxu0 0.0
        %7199 = vmatprep.subr.mxu0 0.0
        %7200 = vmatpush1.msra.mxu0 0.0
        %7201 = vmatprep.subr.mxu0 0.0
        %7202 = vmatpush1.msra.mxu0 0.0
        %7203 = vmatprep.mubr.f32.mxu0 0.0
        %7204 = vmatmul.mubr.f32.gmra.mrb[0].mxu0 %v6967
        %v7205 = vpop.f32.mrb[0].mxu0
        %v7206 = vadd.f32 0.0, %v7205
        %v7207 = vpop.f32.mrb[0].mxu0
        %7208 = vdwg.mxu0
        %v7209 = vsel %vm695, %v7132, 0
        %7211 = vmatprep.subr.mxu0 0.0
        %7212 = vmatpush1.msra.mxu0 %v2012
        %7213 = vmatprep.subr.mxu0 0.0
        %7214 = vmatpush1.msra.mxu0 0.0
        %7215 = vmatprep.subr.mxu0 0.0
        %7216 = vmatpush1.msra.mxu0 0.0
        %7217 = vmatprep.subr.mxu0 0.0
        %7218 = vmatpush1.msra.mxu0 0.0
        %7219 = vmatprep.subr.mxu0 0.0
        %7220 = vmatpush1.msra.mxu0 0.0
        %7221 = vmatprep.subr.mxu0 0.0
        %7222 = vmatpush1.msra.mxu0 0.0
        %7223 = vmatprep.subr.mxu0 0.0
        %7224 = vmatpush1.msra.mxu0 0.0
        %7225 = vmatprep.subr.mxu0 0.0
        %7226 = vmatpush1.msra.mxu0 0.0
        %7227 = vmatprep.subr.mxu0 0.0
        %7228 = vmatpush1.msra.mxu0 0.0
        %7229 = vmatprep.subr.mxu0 0.0
        %7230 = vmatpush1.msra.mxu0 0.0
        %7231 = vmatprep.subr.mxu0 0.0
        %7232 = vmatpush1.msra.mxu0 0.0
        %7233 = vmatprep.subr.mxu0 0.0
        %7234 = vmatpush1.msra.mxu0 0.0
        %7235 = vmatprep.subr.mxu0 0.0
        %7236 = vmatpush1.msra.mxu0 0.0
        %7237 = vmatprep.subr.mxu0 0.0
        %7238 = vmatpush1.msra.mxu0 0.0
        %7239 = vmatprep.subr.mxu0 0.0
        %7240 = vmatpush1.msra.mxu0 0.0
        %7241 = vmatprep.subr.mxu0 0.0
        %7242 = vmatpush1.msra.mxu0 0.0
        %7243 = vmatprep.subr.mxu0 0.0
        %7244 = vmatpush1.msra.mxu0 0.0
        %7245 = vmatprep.subr.mxu0 0.0
        %7246 = vmatpush1.msra.mxu0 0.0
        %7247 = vmatprep.subr.mxu0 0.0
        %7248 = vmatpush1.msra.mxu0 0.0
        %7249 = vmatprep.subr.mxu0 0.0
        %7250 = vmatpush1.msra.mxu0 0.0
        %7251 = vmatprep.subr.mxu0 0.0
        %7252 = vmatpush1.msra.mxu0 0.0
        %7253 = vmatprep.subr.mxu0 0.0
        %7254 = vmatpush1.msra.mxu0 0.0
        %7255 = vmatprep.subr.mxu0 0.0
        %7256 = vmatpush1.msra.mxu0 0.0
        %7257 = vmatprep.subr.mxu0 0.0
        %7258 = vmatpush1.msra.mxu0 0.0
        %7259 = vmatprep.subr.mxu0 0.0
        %7260 = vmatpush1.msra.mxu0 0.0
        %7261 = vmatprep.subr.mxu0 0.0
        %7262 = vmatpush1.msra.mxu0 0.0
        %7263 = vmatprep.subr.mxu0 0.0
        %7264 = vmatpush1.msra.mxu0 0.0
        %7265 = vmatprep.subr.mxu0 0.0
        %7266 = vmatpush1.msra.mxu0 0.0
        %7267 = vmatprep.subr.mxu0 0.0
        %7268 = vmatpush1.msra.mxu0 0.0
        %7269 = vmatprep.subr.mxu0 0.0
        %7270 = vmatpush1.msra.mxu0 0.0
        %7271 = vmatprep.subr.mxu0 0.0
        %7272 = vmatpush1.msra.mxu0 0.0
        %7273 = vmatprep.subr.mxu0 0.0
        %7274 = vmatpush1.msra.mxu0 0.0
        %7275 = vmatprep.mubr.f32.mxu0 0.0
        %7276 = vmatmul.mubr.f32.gmra.mrb[0].mxu0 %v7209
        %v7277 = vpop.f32.mrb[0].mxu0
        %v7278 = vadd.f32 %v7206, %v7277
        %v7279 = vpop.f32.mrb[0].mxu0
        %7280 = vdwg.mxu0
        %v7281 = vld [vmem:[#allocation7 + $0x70] sm:$0xff]
        %v7282 = vadd.f32 %v7278, %v7281
        %v7283 = vxor.u32 %v7282, 2147483648
        %v7284 = vmul.f32 %v7283, 1.442695
        %v7285 = vpow.pop %v7284
        %v7286 = vadd.f32 %v7285, 1.0
        %v7287 = vrcp.pop %v7286
        %v7288 = vmul.f32 1.0, %v7287
        %v7289 = vtanh.pop %v7282
        %v7290 = vmul.f32 %v7288, %v6948
        %7292 = vrot.lane.b32.xlu0 %v7289, 64
        %v7293 = vpop.permute.xlu0 %7292
        %v7295 = vmul.f32 %v7288, %v7293
        %7297 = vrot.lane.b32.xlu0 %v7295, 32
        %v7298 = vpop.permute.xlu0 %7297
        %v7300 = vadd.f32 %v7290, %v7298
        %v7301 = vtanh.pop %v7300
        %7303 = vrot.lane.b32.xlu0 %v7301, 64
        %v7304 = vpop.permute.xlu0 %7303
        %v7306 = vmul.f32 %v7288, %v7304
        %v7307 = vld [vmem:[%s632 + $0x78] sm:$0xff]
        %v7308 = vld [vmem:[%s638 + $0x78] sm:$0xff]
        %v7309 = vld [vmem:[#allocation8 + $0x78] sm:$0xff]
        %v7310 = vld [vmem:[#allocation5 + $0x78] sm:$0xff]
        %7312 = vrot.lane.b32.xlu0 %v7310, 96
        %v7313 = vpop.permute.xlu0 %7312
        %v7315 = vmul.f32 %v7306, %v7313
        %7317 = vrot.lane.b32.xlu0 %v7315, 32
        %v7318 = vpop.permute.xlu0 %7317
        %v7319 = vsel %vm953, %v7318, 0
        %7321 = vmatprep.subr.mxu0 0.0
        %7322 = vmatpush1.msra.mxu0 %v2007
        %7323 = vmatprep.subr.mxu0 0.0
        %7324 = vmatpush1.msra.mxu0 %v2008
        %7325 = vmatprep.subr.mxu0 0.0
        %7326 = vmatpush1.msra.mxu0 %v2009
        %7327 = vmatprep.subr.mxu0 0.0
        %7328 = vmatpush1.msra.mxu0 %v2010
        %7329 = vmatprep.subr.mxu0 0.0
        %7330 = vmatpush1.msra.mxu0 0.0
        %7331 = vmatprep.subr.mxu0 0.0
        %7332 = vmatpush1.msra.mxu0 0.0
        %7333 = vmatprep.subr.mxu0 0.0
        %7334 = vmatpush1.msra.mxu0 0.0
        %7335 = vmatprep.subr.mxu0 0.0
        %7336 = vmatpush1.msra.mxu0 0.0
        %7337 = vmatprep.subr.mxu0 0.0
        %7338 = vmatpush1.msra.mxu0 0.0
        %7339 = vmatprep.subr.mxu0 0.0
        %7340 = vmatpush1.msra.mxu0 0.0
        %7341 = vmatprep.subr.mxu0 0.0
        %7342 = vmatpush1.msra.mxu0 0.0
        %7343 = vmatprep.subr.mxu0 0.0
        %7344 = vmatpush1.msra.mxu0 0.0
        %7345 = vmatprep.subr.mxu0 0.0
        %7346 = vmatpush1.msra.mxu0 0.0
        %7347 = vmatprep.subr.mxu0 0.0
        %7348 = vmatpush1.msra.mxu0 0.0
        %7349 = vmatprep.subr.mxu0 0.0
        %7350 = vmatpush1.msra.mxu0 0.0
        %7351 = vmatprep.subr.mxu0 0.0
        %7352 = vmatpush1.msra.mxu0 0.0
        %7353 = vmatprep.subr.mxu0 0.0
        %7354 = vmatpush1.msra.mxu0 0.0
        %7355 = vmatprep.subr.mxu0 0.0
        %7356 = vmatpush1.msra.mxu0 0.0
        %7357 = vmatprep.subr.mxu0 0.0
        %7358 = vmatpush1.msra.mxu0 0.0
        %7359 = vmatprep.subr.mxu0 0.0
        %7360 = vmatpush1.msra.mxu0 0.0
        %7361 = vmatprep.subr.mxu0 0.0
        %7362 = vmatpush1.msra.mxu0 0.0
        %7363 = vmatprep.subr.mxu0 0.0
        %7364 = vmatpush1.msra.mxu0 0.0
        %7365 = vmatprep.subr.mxu0 0.0
        %7366 = vmatpush1.msra.mxu0 0.0
        %7367 = vmatprep.subr.mxu0 0.0
        %7368 = vmatpush1.msra.mxu0 0.0
        %7369 = vmatprep.subr.mxu0 0.0
        %7370 = vmatpush1.msra.mxu0 0.0
        %7371 = vmatprep.subr.mxu0 0.0
        %7372 = vmatpush1.msra.mxu0 0.0
        %7373 = vmatprep.subr.mxu0 0.0
        %7374 = vmatpush1.msra.mxu0 0.0
        %7375 = vmatprep.subr.mxu0 0.0
        %7376 = vmatpush1.msra.mxu0 0.0
        %7377 = vmatprep.subr.mxu0 0.0
        %7378 = vmatpush1.msra.mxu0 0.0
        %7379 = vmatprep.subr.mxu0 0.0
        %7380 = vmatpush1.msra.mxu0 0.0
        %7381 = vmatprep.subr.mxu0 0.0
        %7382 = vmatpush1.msra.mxu0 0.0
        %7383 = vmatprep.subr.mxu0 0.0
        %7384 = vmatpush1.msra.mxu0 0.0
        %7385 = vmatprep.mubr.f32.mxu0 0.0
        %7386 = vmatmul.mubr.f32.gmra.mrb[0].mxu0 %v7319
        %v7387 = vpop.f32.mrb[0].mxu0
        %v7388 = vadd.f32 %v2022, %v7387
        %v7389 = vpop.f32.mrb[0].mxu0
        %7390 = vdwg.mxu0
        %v7391 = vmul.f32 %v7308, %v7307
        %v7392 = vsub.f32 1.0, %v7308
        %v7393 = vmul.f32 %v7392, %v7388
        %v7394 = vadd.f32 %v7391, %v7393
        %v7396 = vsel %vm695, %v7394, 0
        %7398 = vmatprep.subr.mxu0 0.0
        %7399 = vmatpush1.msra.mxu0 %v2011
        %7400 = vmatprep.subr.mxu0 0.0
        %7401 = vmatpush1.msra.mxu0 0.0
        %7402 = vmatprep.subr.mxu0 0.0
        %7403 = vmatpush1.msra.mxu0 0.0
        %7404 = vmatprep.subr.mxu0 0.0
        %7405 = vmatpush1.msra.mxu0 0.0
        %7406 = vmatprep.subr.mxu0 0.0
        %7407 = vmatpush1.msra.mxu0 0.0
        %7408 = vmatprep.subr.mxu0 0.0
        %7409 = vmatpush1.msra.mxu0 0.0
        %7410 = vmatprep.subr.mxu0 0.0
        %7411 = vmatpush1.msra.mxu0 0.0
        %7412 = vmatprep.subr.mxu0 0.0
        %7413 = vmatpush1.msra.mxu0 0.0
        %7414 = vmatprep.subr.mxu0 0.0
        %7415 = vmatpush1.msra.mxu0 0.0
        %7416 = vmatprep.subr.mxu0 0.0
        %7417 = vmatpush1.msra.mxu0 0.0
        %7418 = vmatprep.subr.mxu0 0.0
        %7419 = vmatpush1.msra.mxu0 0.0
        %7420 = vmatprep.subr.mxu0 0.0
        %7421 = vmatpush1.msra.mxu0 0.0
        %7422 = vmatprep.subr.mxu0 0.0
        %7423 = vmatpush1.msra.mxu0 0.0
        %7424 = vmatprep.subr.mxu0 0.0
        %7425 = vmatpush1.msra.mxu0 0.0
        %7426 = vmatprep.subr.mxu0 0.0
        %7427 = vmatpush1.msra.mxu0 0.0
        %7428 = vmatprep.subr.mxu0 0.0
        %7429 = vmatpush1.msra.mxu0 0.0
        %7430 = vmatprep.subr.mxu0 0.0
        %7431 = vmatpush1.msra.mxu0 0.0
        %7432 = vmatprep.subr.mxu0 0.0
        %7433 = vmatpush1.msra.mxu0 0.0
        %7434 = vmatprep.subr.mxu0 0.0
        %7435 = vmatpush1.msra.mxu0 0.0
        %7436 = vmatprep.subr.mxu0 0.0
        %7437 = vmatpush1.msra.mxu0 0.0
        %7438 = vmatprep.subr.mxu0 0.0
        %7439 = vmatpush1.msra.mxu0 0.0
        %7440 = vmatprep.subr.mxu0 0.0
        %7441 = vmatpush1.msra.mxu0 0.0
        %7442 = vmatprep.subr.mxu0 0.0
        %7443 = vmatpush1.msra.mxu0 0.0
        %7444 = vmatprep.subr.mxu0 0.0
        %7445 = vmatpush1.msra.mxu0 0.0
        %7446 = vmatprep.subr.mxu0 0.0
        %7447 = vmatpush1.msra.mxu0 0.0
        %7448 = vmatprep.subr.mxu0 0.0
        %7449 = vmatpush1.msra.mxu0 0.0
        %7450 = vmatprep.subr.mxu0 0.0
        %7451 = vmatpush1.msra.mxu0 0.0
        %7452 = vmatprep.subr.mxu0 0.0
        %7453 = vmatpush1.msra.mxu0 0.0
        %7454 = vmatprep.subr.mxu0 0.0
        %7455 = vmatpush1.msra.mxu0 0.0
        %7456 = vmatprep.subr.mxu0 0.0
        %7457 = vmatpush1.msra.mxu0 0.0
        %7458 = vmatprep.subr.mxu0 0.0
        %7459 = vmatpush1.msra.mxu0 0.0
        %7460 = vmatprep.subr.mxu0 0.0
        %7461 = vmatpush1.msra.mxu0 0.0
        %7462 = vmatprep.mubr.f32.mxu0 0.0
        %7463 = vmatmul.mubr.f32.gmra.mrb[0].mxu0 %v7396
        %v7464 = vpop.f32.mrb[0].mxu0
        %v7465 = vadd.f32 %v2029, %v7464
        %v7466 = vpop.f32.mrb[0].mxu0
        %7467 = vdwg.mxu0
        %v7468 = vld [vmem:[#allocation6 + $0x78] sm:$0xff]
        %v7469 = vmul.f32 %v7468, %v7465
        %v7470 = vsub.f32 1.0, %v7468
        %v7471 = vmul.f32 %v7470, %v7388
        %v7472 = vadd.f32 %v7469, %v7471
        %v7473 = vsub.f32 %v7307, %v7388
        %v7474 = vand.u32 2147483647, %v7473
        %v7475 = vsub.f32 %v7307, %v7465
        %v7476 = vand.u32 2147483647, %v7475
        %v7477 = vadd.f32 %v7474, %v7476
        %v7478 = vsub.f32 %v7307, %v7472
        %v7479 = vand.u32 2147483647, %v7478
        %v7480 = vadd.f32 %v7477, %v7479
        %v7481 = vmul.f32 %v7480, %v7309
        %v7482 = vadd.f32 %v7130, %v7481
        %v7483 = vmul.f32 %v7392, %v7472
        %v7484 = vadd.f32 %v7391, %v7483
        %7486 = vrot.lane.b32.xlu0 %v7484, 120
        %v7487 = vpop.permute.xlu0 %7486
        %vm7489 = vcmask 1048512
        %7490 = vst.msk [vmem:[%s625] sm:$0xff] %vm7489, %v7487
        %7491 = vmatprep.subr.mxu0 0.0
        %7492 = vmatpush1.msra.mxu0 %v2013
        %7493 = vmatprep.subr.mxu0 0.0
        %7494 = vmatpush1.msra.mxu0 %v2014
        %7495 = vmatprep.subr.mxu0 0.0
        %7496 = vmatpush1.msra.mxu0 %v2015
        %7497 = vmatprep.subr.mxu0 0.0
        %7498 = vmatpush1.msra.mxu0 %v2016
        %7499 = vmatprep.subr.mxu0 0.0
        %7500 = vmatpush1.msra.mxu0 0.0
        %7501 = vmatprep.subr.mxu0 0.0
        %7502 = vmatpush1.msra.mxu0 0.0
        %7503 = vmatprep.subr.mxu0 0.0
        %7504 = vmatpush1.msra.mxu0 0.0
        %7505 = vmatprep.subr.mxu0 0.0
        %7506 = vmatpush1.msra.mxu0 0.0
        %7507 = vmatprep.subr.mxu0 0.0
        %7508 = vmatpush1.msra.mxu0 0.0
        %7509 = vmatprep.subr.mxu0 0.0
        %7510 = vmatpush1.msra.mxu0 0.0
        %7511 = vmatprep.subr.mxu0 0.0
        %7512 = vmatpush1.msra.mxu0 0.0
        %7513 = vmatprep.subr.mxu0 0.0
        %7514 = vmatpush1.msra.mxu0 0.0
        %7515 = vmatprep.subr.mxu0 0.0
        %7516 = vmatpush1.msra.mxu0 0.0
        %7517 = vmatprep.subr.mxu0 0.0
        %7518 = vmatpush1.msra.mxu0 0.0
        %7519 = vmatprep.subr.mxu0 0.0
        %7520 = vmatpush1.msra.mxu0 0.0
        %7521 = vmatprep.subr.mxu0 0.0
        %7522 = vmatpush1.msra.mxu0 0.0
        %7523 = vmatprep.subr.mxu0 0.0
        %7524 = vmatpush1.msra.mxu0 0.0
        %7525 = vmatprep.subr.mxu0 0.0
        %7526 = vmatpush1.msra.mxu0 0.0
        %7527 = vmatprep.subr.mxu0 0.0
        %7528 = vmatpush1.msra.mxu0 0.0
        %7529 = vmatprep.subr.mxu0 0.0
        %7530 = vmatpush1.msra.mxu0 0.0
        %7531 = vmatprep.subr.mxu0 0.0
        %7532 = vmatpush1.msra.mxu0 0.0
        %7533 = vmatprep.subr.mxu0 0.0
        %7534 = vmatpush1.msra.mxu0 0.0
        %7535 = vmatprep.subr.mxu0 0.0
        %7536 = vmatpush1.msra.mxu0 0.0
        %7537 = vmatprep.subr.mxu0 0.0
        %7538 = vmatpush1.msra.mxu0 0.0
        %7539 = vmatprep.subr.mxu0 0.0
        %7540 = vmatpush1.msra.mxu0 0.0
        %7541 = vmatprep.subr.mxu0 0.0
        %7542 = vmatpush1.msra.mxu0 0.0
        %7543 = vmatprep.subr.mxu0 0.0
        %7544 = vmatpush1.msra.mxu0 0.0
        %7545 = vmatprep.subr.mxu0 0.0
        %7546 = vmatpush1.msra.mxu0 0.0
        %7547 = vmatprep.subr.mxu0 0.0
        %7548 = vmatpush1.msra.mxu0 0.0
        %7549 = vmatprep.subr.mxu0 0.0
        %7550 = vmatpush1.msra.mxu0 0.0
        %7551 = vmatprep.subr.mxu0 0.0
        %7552 = vmatpush1.msra.mxu0 0.0
        %7553 = vmatprep.subr.mxu0 0.0
        %7554 = vmatpush1.msra.mxu0 0.0
        %7555 = vmatprep.mubr.f32.mxu0 0.0
        %7556 = vmatmul.mubr.f32.gmra.mrb[0].mxu0 %v7319
        %v7557 = vpop.f32.mrb[0].mxu0
        %v7558 = vadd.f32 0.0, %v7557
        %v7559 = vpop.f32.mrb[0].mxu0
        %7560 = vdwg.mxu0
        %v7561 = vsel %vm695, %v7484, 0
        %7563 = vmatprep.subr.mxu0 0.0
        %7564 = vmatpush1.msra.mxu0 %v2012
        %7565 = vmatprep.subr.mxu0 0.0
        %7566 = vmatpush1.msra.mxu0 0.0
        %7567 = vmatprep.subr.mxu0 0.0
        %7568 = vmatpush1.msra.mxu0 0.0
        %7569 = vmatprep.subr.mxu0 0.0
        %7570 = vmatpush1.msra.mxu0 0.0
        %7571 = vmatprep.subr.mxu0 0.0
        %7572 = vmatpush1.msra.mxu0 0.0
        %7573 = vmatprep.subr.mxu0 0.0
        %7574 = vmatpush1.msra.mxu0 0.0
        %7575 = vmatprep.subr.mxu0 0.0
        %7576 = vmatpush1.msra.mxu0 0.0
        %7577 = vmatprep.subr.mxu0 0.0
        %7578 = vmatpush1.msra.mxu0 0.0
        %7579 = vmatprep.subr.mxu0 0.0
        %7580 = vmatpush1.msra.mxu0 0.0
        %7581 = vmatprep.subr.mxu0 0.0
        %7582 = vmatpush1.msra.mxu0 0.0
        %7583 = vmatprep.subr.mxu0 0.0
        %7584 = vmatpush1.msra.mxu0 0.0
        %7585 = vmatprep.subr.mxu0 0.0
        %7586 = vmatpush1.msra.mxu0 0.0
        %7587 = vmatprep.subr.mxu0 0.0
        %7588 = vmatpush1.msra.mxu0 0.0
        %7589 = vmatprep.subr.mxu0 0.0
        %7590 = vmatpush1.msra.mxu0 0.0
        %7591 = vmatprep.subr.mxu0 0.0
        %7592 = vmatpush1.msra.mxu0 0.0
        %7593 = vmatprep.subr.mxu0 0.0
        %7594 = vmatpush1.msra.mxu0 0.0
        %7595 = vmatprep.subr.mxu0 0.0
        %7596 = vmatpush1.msra.mxu0 0.0
        %7597 = vmatprep.subr.mxu0 0.0
        %7598 = vmatpush1.msra.mxu0 0.0
        %7599 = vmatprep.subr.mxu0 0.0
        %7600 = vmatpush1.msra.mxu0 0.0
        %7601 = vmatprep.subr.mxu0 0.0
        %7602 = vmatpush1.msra.mxu0 0.0
        %7603 = vmatprep.subr.mxu0 0.0
        %7604 = vmatpush1.msra.mxu0 0.0
        %7605 = vmatprep.subr.mxu0 0.0
        %7606 = vmatpush1.msra.mxu0 0.0
        %7607 = vmatprep.subr.mxu0 0.0
        %7608 = vmatpush1.msra.mxu0 0.0
        %7609 = vmatprep.subr.mxu0 0.0
        %7610 = vmatpush1.msra.mxu0 0.0
        %7611 = vmatprep.subr.mxu0 0.0
        %7612 = vmatpush1.msra.mxu0 0.0
        %7613 = vmatprep.subr.mxu0 0.0
        %7614 = vmatpush1.msra.mxu0 0.0
        %7615 = vmatprep.subr.mxu0 0.0
        %7616 = vmatpush1.msra.mxu0 0.0
        %7617 = vmatprep.subr.mxu0 0.0
        %7618 = vmatpush1.msra.mxu0 0.0
        %7619 = vmatprep.subr.mxu0 0.0
        %7620 = vmatpush1.msra.mxu0 0.0
        %7621 = vmatprep.subr.mxu0 0.0
        %7622 = vmatpush1.msra.mxu0 0.0
        %7623 = vmatprep.subr.mxu0 0.0
        %7624 = vmatpush1.msra.mxu0 0.0
        %7625 = vmatprep.subr.mxu0 0.0
        %7626 = vmatpush1.msra.mxu0 0.0
        %7627 = vmatprep.mubr.f32.mxu0 0.0
        %7628 = vmatmul.mubr.f32.gmra.mrb[0].mxu0 %v7561
        %v7629 = vpop.f32.mrb[0].mxu0
        %v7630 = vadd.f32 %v7558, %v7629
        %v7631 = vpop.f32.mrb[0].mxu0
        %7632 = vdwg.mxu0
        %v7633 = vld [vmem:[#allocation7 + $0x78] sm:$0xff]
        %v7634 = vadd.f32 %v7630, %v7633
        %v7635 = vxor.u32 %v7634, 2147483648
        %v7636 = vmul.f32 %v7635, 1.442695
        %v7637 = vpow.pop %v7636
        %v7638 = vadd.f32 %v7637, 1.0
        %v7639 = vrcp.pop %v7638
        %v7640 = vmul.f32 1.0, %v7639
        %v7641 = vtanh.pop %v7634
        %v7642 = vmul.f32 %v7640, %v7300
        %7644 = vrot.lane.b32.xlu0 %v7641, 64
        %v7645 = vpop.permute.xlu0 %7644
        %v7647 = vmul.f32 %v7640, %v7645
        %7649 = vrot.lane.b32.xlu0 %v7647, 32
        %v7650 = vpop.permute.xlu0 %7649
        %v7652 = vadd.f32 %v7642, %v7650
        %v7653 = vtanh.pop %v7652
        %7655 = vrot.lane.b32.xlu0 %v7653, 64
        %v7656 = vpop.permute.xlu0 %7655
        %v7658 = vmul.f32 %v7640, %v7656
        %7660 = vrot.lane.b32.xlu0 %v7658, 32
        %v7661 = vpop.permute.xlu0 %7660
        %7663 = vst.msk [vmem:[#allocation2] sm:$0xff] %vm953, %v7661
        %7665 = vrot.lane.b32.xlu0 %v7652, 96
        %v7666 = vpop.permute.xlu0 %7665
        %7668 = vst.msk [vmem:[#allocation3] sm:$0xff] %vm953, %v7666
        %v7669 = vld [vmem:[#allocation4] sm:$0x1]
        %v7670 = vsel %vm695, %v7482, 0.0
        %7671 = vadd.xlane.f32.xlu0 %v7670
        %v7672 = vpop.xlane.xlu0 %7671
        %v7673 = vrot.slane %v7672, 4
        %v7674 = vadd.f32 %v7672, %v7673
        %v7675 = vrot.slane %v7674, 2
        %v7676 = vadd.f32 %v7674, %v7675
        %v7677 = vrot.slane %v7676, 1
        %v7678 = vadd.f32 %v7676, %v7677
        %s7679 = vtos %v7678
        %v7680 = vstv %s7679
        %v7681 = vadd.f32 %v7669, %v7680
        %vm7682 = vcmask 0
        %7683 = vst.msk [vmem:[#allocation4] sm:$0x1] %vm7682, %v7681
        %7684 = vst.msk [vmem:[#allocation11] sm:$0x1] %vm7682, %v7681
        %s7685 = sand.u32 %s436, 1
        %s7686 = scalar_lea.sflag [#allocation10], %s7685
        %s7687 = sand.u32 %s436, 1
        %s7688 = smul.addr %s7687, 8
        %s7689 = scalar_lea.vmem [#allocation9], %s7688
        // Predicated region
        $region97: #{tpu_custom_call.1} parent=91 // pred_check
          %p7690 = pneg %p446
        $region98: #{tpu_custom_call.1} parent=91 // pred_check_branch
          %7692 = sbr.rel (%p7690) target = $region100
        $region99: #{tpu_custom_call.1} parent=91 // pred_region
          %s7694 = ssub.s32 128, 128
          %7695 = vsyncadd %s7686, %s7694
          %s7696 = smul.addr %s35, 128
          %s7697 = scalar_lea.hbm %s18, %s7696
          %s7699 = sshll.u32 %s7689, 4
          %s7700 = int_to_ptr.vmem [resolvable:$true] %s7699
          %7702 = dma.vmem_to_hbm [thread:$0]  %s7700, 128, %s7697, %s7686
        $region100: #{tpu_custom_call.1} parent=91 // pred_fallthru
          _
        // Predicated region
        $region101: #{tpu_custom_call.1} parent=91 // pred_check
          %p7703 = pneg %p467
        $region102: #{tpu_custom_call.1} parent=91 // pred_check_branch
          %7705 = sbr.rel (%p7703) target = $region104
        $region103: #{tpu_custom_call.1} parent=91 // pred_region
          %s7707 = ssub.s32 16, 16
          %7708 = vsyncadd [#allocation12], %s7707
          %s7710 = sshll.u32 [#allocation11], 4
          %s7711 = int_to_ptr.vmem [resolvable:$true] %s7710
          %7713 = dma.vmem_to_hbm [thread:$0]  %s7711, 16, %s19, [#allocation12]
        $region104: #{tpu_custom_call.1} parent=91 // pred_fallthru
          _
        // Predicated region
        $region105: #{tpu_custom_call.1} parent=91 // pred_check
          %p7714 = pneg %p467
        $region106: #{tpu_custom_call.1} parent=91 // pred_check_branch
          %7716 = sbr.rel (%p7714) target = $region108
        $region107: #{tpu_custom_call.1} parent=91 // pred_region
          %7717 = dma.done [#allocation12], 16
        $region108: #{tpu_custom_call.1} parent=91 // pred_fallthru
          _
      $region92: #{tpu_custom_call.1} parent=5 // pred_fallthru
        _
      %p7718 = scmp.le.s32.totalorder 2, %s30
      // Predicated region
      $region109: #{tpu_custom_call.1} parent=5 // pred_check
        %p7719 = pneg %p7718
      $region110: #{tpu_custom_call.1} parent=5 // pred_check_branch
        %7721 = sbr.rel (%p7719) target = $region112
      $region111: #{tpu_custom_call.1} parent=5 // pred_region
        %s7722 = ssub.s32 %s30, 2
        // Predicated region
        $region113: #{tpu_custom_call.1} parent=111 // pred_check
          %p7723 = pneg %p452
        $region114: #{tpu_custom_call.1} parent=111 // pred_check_branch
          %7725 = sbr.rel (%p7723) target = $region116
        $region115: #{tpu_custom_call.1} parent=111 // pred_region
          %s7726 = sand.u32 %s437, 1
          %s7727 = scalar_lea.sflag [#allocation10], %s7726
          %s7728 = sand.u32 %s437, 1
          %s7729 = smul.addr %s7728, 8
          %s7730 = scalar_lea.vmem [#allocation9], %s7729
          %7731 = dma.done %s7727, 128
        $region116: #{tpu_custom_call.1} parent=111 // pred_fallthru
          _
      $region112: #{tpu_custom_call.1} parent=5 // pred_fallthru
        _
    $region6: #{tpu_custom_call.1} parent=1 // loop_footer
      %s34 = sadd.s32 1, %s30
    $region7: #{tpu_custom_call.1} parent=1 // loop_footer_branch
      %29 = sbr.rel target = $region3
    $region8: #{tpu_custom_call.1} parent=1 // loop_exit
      _
    %7732 = vsyncpa [#allocation10], 1
    %s7733 = scalar_lea.sflag [#allocation10], 1
    %7734 = vsyncpa %s7733, 1
    %7735 = vsyncpa [#allocation12], 1

</llo_original>
